<compile_context>
chip_gen: v5e
topology: v5e:2x2
jax: 0.10.0
libtpu: 0.0.40
codegen_flags: <defaults>
</compile_context>

<pallas_src>
import functools
import math

import jax
import jax.numpy as jnp
from jax.experimental import pallas as pl
from jax.experimental.pallas import tpu as pltpu


# ----------------------------------------------------------------------------
# helpers usable inside kernels
# ----------------------------------------------------------------------------
def _layernorm(v, g, b, eps):
    mu = jnp.mean(v, axis=-1, keepdims=True)
    var = jnp.mean(jnp.square(v - mu), axis=-1, keepdims=True)
    return (v - mu) * jax.lax.rsqrt(var + eps) * g + b


def _gelu_tanh(x):
    c = math.sqrt(2.0 / math.pi)
    return 0.5 * x * (1.0 + jnp.tanh(c * (x + 0.044715 * x * x * x)))


def _bmm(a, b, contract_a, contract_b):
    # leading-batch 3-D matmul, f32 accumulation on the MXU
    return jax.lax.dot_general(
        a, b,
        dimension_numbers=(((contract_a,), (contract_b,)), ((0,), (0,))),
        preferred_element_type=jnp.float32,
    )


def _softmax(s):
    m = jnp.max(s, axis=-1, keepdims=True)
    e = jnp.exp(s - m)
    return e * pl.reciprocal(jnp.sum(e, axis=-1, keepdims=True), approx=True)


# ----------------------------------------------------------------------------
# the fused LongViT kernel (one grid step = one sample's full forward)
# ----------------------------------------------------------------------------
def _longvit_kernel(
    patches_ref, base_ref, prow_ref, pw_ref, pb_ref,
    lbias_ref, gbias_ref, grow_ref,
    hg_ref, hbe_ref, hw_ref, hb_ref,
    g1_ref, be1_ref, wqkv_ref, bqkv_ref,
    g2_ref, be2_ref, w1_ref, b1_ref, w2_ref, b2_ref,
    out_ref,
    *, heads, head_dim, depth, seq, ntok, dim, pool, eps,
):
    S, D, H, hd = seq, dim, heads, head_dim
    scale = jnp.float32(1.0 / math.sqrt(hd))

    # ---- patch embedding + cls token + pos embedding ----
    patches = patches_ref[0]                                        # (S, P)
    emb = (
        jnp.dot(patches.astype(jnp.bfloat16), pw_ref[...],
                preferred_element_type=jnp.float32)
        + pb_ref[...]
    )
    # base already holds cls+pos rows and zero pad rows; prow masks the (dummy)
    # cls/pad rows of the embedding matmul (their bias leak).
    x = base_ref[...] + prow_ref[...] * emb                         # (S, D) f32

    lbias = lbias_ref[...][None]                                    # (1,S,S)
    gbias = gbias_ref[...][None]                                    # (1,1,S)
    grow = grow_ref[...][None]                                      # (1,S,1)

    def to_heads(t):  # (S, D) f32 -> (H, S, hd) bf16, single relayout
        return jnp.transpose(t.reshape(S, H, hd), (1, 0, 2)).astype(jnp.bfloat16)

    for d in range(depth):
        # ---- attention branch: x + LongformerSelfAttention(LN(x)) ----
        xn = _layernorm(x, g1_ref[d], be1_ref[d], eps)
        qkv = (
            jnp.dot(xn.astype(jnp.bfloat16), wqkv_ref[d],
                    preferred_element_type=jnp.float32)
            + bqkv_ref[d]
        )                                                           # (S, 6D)
        q = to_heads(qkv[:, 0 * D:1 * D] * scale)
        k = to_heads(qkv[:, 1 * D:2 * D])
        v = to_heads(qkv[:, 2 * D:3 * D])
        kg = to_heads(qkv[:, 4 * D:5 * D])
        vg = to_heads(qkv[:, 5 * D:6 * D])
        # global query: only the cls row (row 0) is a global token
        qg = jnp.transpose((qkv[0:1, 3 * D:4 * D] * scale).reshape(1, H, hd),
                           (1, 0, 2)).astype(jnp.bfloat16)          # (H,1,hd)

        # local branch: band + global-column mask, all rows
        s = _bmm(q, k, 2, 2) + lbias                                # (H,S,S)
        p = _softmax(s)
        o_loc = _bmm(p.astype(jnp.bfloat16), v, 2, 1)               # (H,S,hd)

        # global branch: only the single global row per sequence
        sg = _bmm(qg, kg, 2, 2) + gbias                             # (H,1,S)
        pg = _softmax(sg)
        o_glb = _bmm(pg.astype(jnp.bfloat16), vg, 2, 1)             # (H,1,hd)

        o = o_loc + grow * (o_glb - o_loc)                          # row 0 -> global
        attn = jnp.transpose(o, (1, 0, 2)).reshape(S, D)            # merge heads
        x = x + attn

        # ---- feed-forward branch: x + FF(LN(x)) ----
        xn2 = _layernorm(x, g2_ref[d], be2_ref[d], eps)
        hid = (
            jnp.dot(xn2.astype(jnp.bfloat16), w1_ref[d],
                    preferred_element_type=jnp.float32)
            + b1_ref[d]
        )
        hid = _gelu_tanh(hid)
        ff = (
            jnp.dot(hid.astype(jnp.bfloat16), w2_ref[d],
                    preferred_element_type=jnp.float32)
            + b2_ref[d]
        )
        x = x + ff

    # ---- pool + mlp_head (LayerNorm + Linear) ----
    if pool == "mean":
        pooled = jnp.mean(x[:ntok, :], axis=0, keepdims=True)       # cls + patches
    else:  # 'cls'
        pooled = x[0:1, :]
    pn = _layernorm(pooled, hg_ref[...], hbe_ref[...], eps)
    out_ref[0] = (
        jnp.dot(pn.astype(jnp.bfloat16), hw_ref[...],
                preferred_element_type=jnp.float32)
        + hb_ref[...]
    )


def _const_spec(arr):
    nd = arr.ndim
    return pl.BlockSpec(arr.shape, lambda b, _nd=nd: (0,) * _nd)


# ----------------------------------------------------------------------------
# parameters + forward (host-side prep in plain JAX, all compute in one kernel)
# ----------------------------------------------------------------------------
def init_params(key, *, patch_dim, dim, depth, mlp_dim, num_classes, num_patches):
    keys = iter(jax.random.split(key, 64))

    def lin(din, dout):
        w = jax.random.normal(next(keys), (din, dout), jnp.float32) / jnp.sqrt(
            jnp.float32(din)
        )
        b = jnp.zeros((1, dout), jnp.float32)
        return w, b

    params = {}
    params["patch_w"], params["patch_b"] = lin(patch_dim, dim)
    params["pos_embedding"] = jax.random.normal(
        next(keys), (1, num_patches + 1, dim), jnp.float32
    )
    params["cls_token"] = jax.random.uniform(next(keys), (1, 1, dim), jnp.float32)

    layers = []
    for _ in range(depth):
        lp = {
            "g1": jnp.ones((1, dim), jnp.float32),
            "be1": jnp.zeros((1, dim), jnp.float32),
            "g2": jnp.ones((1, dim), jnp.float32),
            "be2": jnp.zeros((1, dim), jnp.float32),
        }
        for nm in ("q", "k", "v", "qg", "kg", "vg"):
            lp["w" + nm], lp["b" + nm] = lin(dim, dim)
        lp["w1"], lp["b1"] = lin(dim, mlp_dim)
        lp["w2"], lp["b2"] = lin(mlp_dim, dim)
        layers.append(lp)
    params["layers"] = layers

    params["head_g"] = jnp.ones((1, dim), jnp.float32)
    params["head_be"] = jnp.zeros((1, dim), jnp.float32)
    params["head_w"], params["head_b"] = lin(dim, num_classes)
    return params


def long_vit_forward(img, params, *, patch_size, heads, attention_window=1, pool="cls"):
    B, C, Him, Wim = img.shape
    p = patch_size
    hh, ww = Him // p, Wim // p
    n = hh * ww
    patch_dim = C * p * p
    D = params["patch_w"].shape[1]
    hd = D // heads
    depth = len(params["layers"])
    num_classes = params["head_w"].shape[1]

    # Rearrange 'b c (h p1) (w p2) -> b (h w) (p1 p2 c)'  (host-side glue)
    patches = img.reshape(B, C, hh, p, ww, p)
    patches = jnp.transpose(patches, (0, 2, 4, 3, 5, 1)).reshape(B, n, patch_dim)

    ntok = n + 1
    win2 = attention_window * 2                   # sliding_chunks doubling
    s_ref = ntok + ((-ntok) % win2)               # reference pad_to_window_size
    S = s_ref + ((-s_ref) % 8)                    # extra sublane alignment (masked)

    # patch rows scattered into the padded token grid (cls row 0, pad rows zero)
    patches_full = jnp.zeros((B, S, patch_dim), jnp.float32).at[:, 1:1 + n].set(patches)

    # base rows: row0 = cls + pos[0]; rows 1..n = pos[1..n]; pad rows = 0
    pos = params["pos_embedding"][0, :ntok]
    base = jnp.zeros((S, D), jnp.float32).at[:ntok].set(pos)
    base = base.at[0].add(params["cls_token"][0, 0])

    rows = jnp.arange(S)
    cols = jnp.arange(S)
    prow = ((rows >= 1) & (rows < ntok)).astype(jnp.float32)[:, None]   # (S,1)
    grow = (rows == 0).astype(jnp.float32)[:, None]                     # (S,1) global rows

    # Longformer mask (2 = global/cls, 1 = local, 0 = pad) -> additive biases,
    # per-sequence (batch is a real grid dim so no cross-batch blocks exist).
    col_valid = cols < ntok
    band = jnp.abs(rows[:, None] - cols[None, :]) <= attention_window
    col_glob = (cols == 0)[None, :]
    NEG = jnp.float32(-1e9)
    lbias = jnp.where(col_valid[None, :] & (band | col_glob), 0.0, NEG).astype(jnp.float32)
    gbias = jnp.where(col_valid, 0.0, NEG).astype(jnp.float32)[None, :]  # (1,S)

    # pack the six projections into one lane-dense (D, 6D) weight per layer
    L = params["layers"]

    def pack_w(lp):
        return jnp.concatenate(
            [lp["wq"], lp["wk"], lp["wv"], lp["wqg"], lp["wkg"], lp["wvg"]], axis=1
        ).astype(jnp.bfloat16)

    def pack_b(lp):
        return jnp.concatenate(
            [lp["bq"], lp["bk"], lp["bv"], lp["bqg"], lp["bkg"], lp["bvg"]], axis=1
        ).astype(jnp.float32)

    g1_s = jnp.stack([lp["g1"] for lp in L])
    be1_s = jnp.stack([lp["be1"] for lp in L])
    wqkv_s = jnp.stack([pack_w(lp) for lp in L])
    bqkv_s = jnp.stack([pack_b(lp) for lp in L])
    g2_s = jnp.stack([lp["g2"] for lp in L])
    be2_s = jnp.stack([lp["be2"] for lp in L])
    w1_s = jnp.stack([lp["w1"].astype(jnp.bfloat16) for lp in L])
    b1_s = jnp.stack([lp["b1"] for lp in L])
    w2_s = jnp.stack([lp["w2"].astype(jnp.bfloat16) for lp in L])
    b2_s = jnp.stack([lp["b2"] for lp in L])

    inputs = [
        patches_full, base, prow,
        params["patch_w"].astype(jnp.bfloat16), params["patch_b"],
        lbias, gbias, grow,
        params["head_g"], params["head_be"],
        params["head_w"].astype(jnp.bfloat16), params["head_b"],
        g1_s, be1_s, wqkv_s, bqkv_s, g2_s, be2_s, w1_s, b1_s, w2_s, b2_s,
    ]

    kern = functools.partial(
        _longvit_kernel,
        heads=heads, head_dim=hd, depth=depth, seq=S, ntok=ntok, dim=D,
        pool=pool, eps=1e-5,
    )

    in_specs = [pl.BlockSpec((1, S, patch_dim), lambda b: (b, 0, 0))]
    in_specs += [_const_spec(a) for a in inputs[1:]]

    out = pl.pallas_call(
        kern,
        out_shape=jax.ShapeDtypeStruct((B, 1, num_classes), jnp.float32),
        grid=(B,),
        in_specs=in_specs,
        out_specs=pl.BlockSpec((1, 1, num_classes), lambda b: (b, 0, 0)),
        compiler_params=pltpu.CompilerParams(
            # each grid step is one independent sample -> shard over TCs on v7x
            dimension_semantics=("parallel",),
        ),
    )(*inputs)
    return out.reshape(B, num_classes)


if __name__ == "__main__":
    # small config consistent with the module: image 16x16, patch 4 -> 16 patches
    B, C, IMG, PATCH = 2, 3, 16, 4
    DIM, DEPTH, HEADS, MLP_DIM, NUM_CLASSES = 32, 2, 4, 64, 10
    ATT_WINDOW = 1

    key = jax.random.PRNGKey(0)
    k_img, k_par = jax.random.split(key)
    img = jax.random.normal(k_img, (B, C, IMG, IMG), jnp.float32)

    num_patches = (IMG // PATCH) ** 2
    params = init_params(
        k_par,
        patch_dim=C * PATCH * PATCH,
        dim=DIM,
        depth=DEPTH,
        mlp_dim=MLP_DIM,
        num_classes=NUM_CLASSES,
        num_patches=num_patches,
    )

    out = long_vit_forward(
        img, params, patch_size=PATCH, heads=HEADS,
        attention_window=ATT_WINDOW, pool="cls",
    )
    out = jax.block_until_ready(out)
    assert out.shape == (B, NUM_CLASSES)
    assert bool(jnp.all(jnp.isfinite(out)))
    print("KERNEL_OK")
</pallas_src>

<mosaic_0001>
module attributes {stable_mosaic.version = 11 : i64} {
  func.func @_longvit_kernel(%arg0: i32, %arg1: memref<1x24x48xf32, #tpu.memory_space<vmem>>, %arg2: memref<24x32xf32, #tpu.memory_space<vmem>>, %arg3: memref<24x1xf32, #tpu.memory_space<vmem>>, %arg4: memref<48x32xbf16, #tpu.memory_space<vmem>>, %arg5: memref<1x32xf32, #tpu.memory_space<vmem>>, %arg6: memref<24x24xf32, #tpu.memory_space<vmem>>, %arg7: memref<1x24xf32, #tpu.memory_space<vmem>>, %arg8: memref<24x1xf32, #tpu.memory_space<vmem>>, %arg9: memref<1x32xf32, #tpu.memory_space<vmem>>, %arg10: memref<1x32xf32, #tpu.memory_space<vmem>>, %arg11: memref<32x10xbf16, #tpu.memory_space<vmem>>, %arg12: memref<1x10xf32, #tpu.memory_space<vmem>>, %arg13: memref<2x1x32xf32, #tpu.memory_space<vmem>>, %arg14: memref<2x1x32xf32, #tpu.memory_space<vmem>>, %arg15: memref<2x32x192xbf16, #tpu.memory_space<vmem>>, %arg16: memref<2x1x192xf32, #tpu.memory_space<vmem>>, %arg17: memref<2x1x32xf32, #tpu.memory_space<vmem>>, %arg18: memref<2x1x32xf32, #tpu.memory_space<vmem>>, %arg19: memref<2x32x64xbf16, #tpu.memory_space<vmem>>, %arg20: memref<2x1x64xf32, #tpu.memory_space<vmem>>, %arg21: memref<2x64x32xbf16, #tpu.memory_space<vmem>>, %arg22: memref<2x1x32xf32, #tpu.memory_space<vmem>>, %arg23: memref<1x1x10xf32, #tpu.memory_space<vmem>>) attributes {dimension_semantics = [#tpu.dimension_semantics<parallel>], iteration_bounds = array<i64: 2>, scalar_prefetch = 0 : i64, scratch_operands = 0 : i64, tpu.core_type = #tpu.core_type<tc>, window_params = [{transform_indices = @transform_0, window_bounds = array<i64: 1, 24, 48>}, {pipeline_mode = #tpu.pipeline_mode<synchronous>, transform_indices = @transform_1, window_bounds = array<i64: 24, 32>}, {pipeline_mode = #tpu.pipeline_mode<synchronous>, transform_indices = @transform_2, window_bounds = array<i64: 24, 1>}, {pipeline_mode = #tpu.pipeline_mode<synchronous>, transform_indices = @transform_3, window_bounds = array<i64: 48, 32>}, {pipeline_mode = #tpu.pipeline_mode<synchronous>, transform_indices = @transform_4, window_bounds = array<i64: 1, 32>}, {pipeline_mode = #tpu.pipeline_mode<synchronous>, transform_indices = @transform_5, window_bounds = array<i64: 24, 24>}, {pipeline_mode = #tpu.pipeline_mode<synchronous>, transform_indices = @transform_6, window_bounds = array<i64: 1, 24>}, {pipeline_mode = #tpu.pipeline_mode<synchronous>, transform_indices = @transform_7, window_bounds = array<i64: 24, 1>}, {pipeline_mode = #tpu.pipeline_mode<synchronous>, transform_indices = @transform_8, window_bounds = array<i64: 1, 32>}, {pipeline_mode = #tpu.pipeline_mode<synchronous>, transform_indices = @transform_9, window_bounds = array<i64: 1, 32>}, {pipeline_mode = #tpu.pipeline_mode<synchronous>, transform_indices = @transform_10, window_bounds = array<i64: 32, 10>}, {pipeline_mode = #tpu.pipeline_mode<synchronous>, transform_indices = @transform_11, window_bounds = array<i64: 1, 10>}, {pipeline_mode = #tpu.pipeline_mode<synchronous>, transform_indices = @transform_12, window_bounds = array<i64: 2, 1, 32>}, {pipeline_mode = #tpu.pipeline_mode<synchronous>, transform_indices = @transform_13, window_bounds = array<i64: 2, 1, 32>}, {pipeline_mode = #tpu.pipeline_mode<synchronous>, transform_indices = @transform_14, window_bounds = array<i64: 2, 32, 192>}, {pipeline_mode = #tpu.pipeline_mode<synchronous>, transform_indices = @transform_15, window_bounds = array<i64: 2, 1, 192>}, {pipeline_mode = #tpu.pipeline_mode<synchronous>, transform_indices = @transform_16, window_bounds = array<i64: 2, 1, 32>}, {pipeline_mode = #tpu.pipeline_mode<synchronous>, transform_indices = @transform_17, window_bounds = array<i64: 2, 1, 32>}, {pipeline_mode = #tpu.pipeline_mode<synchronous>, transform_indices = @transform_18, window_bounds = array<i64: 2, 32, 64>}, {pipeline_mode = #tpu.pipeline_mode<synchronous>, transform_indices = @transform_19, window_bounds = array<i64: 2, 1, 64>}, {pipeline_mode = #tpu.pipeline_mode<synchronous>, transform_indices = @transform_20, window_bounds = array<i64: 2, 64, 32>}, {pipeline_mode = #tpu.pipeline_mode<synchronous>, transform_indices = @transform_21, window_bounds = array<i64: 2, 1, 32>}, {transform_indices = @transform_22, window_bounds = array<i64: 1, 1, 10>}]} {
    %c0 = arith.constant 0 : index
    %c0_0 = arith.constant 0 : index
    %c0_1 = arith.constant 0 : index
    %0 = vector.load %arg1[%c0, %c0_0, %c0_1] : memref<1x24x48xf32, #tpu.memory_space<vmem>>, vector<1x24x48xf32>
    %1 = vector.shape_cast %0 : vector<1x24x48xf32> to vector<24x48xf32>
    %2 = arith.truncf %1 : vector<24x48xf32> to vector<24x48xbf16>
    %c0_2 = arith.constant 0 : index
    %c0_3 = arith.constant 0 : index
    %3 = vector.load %arg4[%c0_2, %c0_3] : memref<48x32xbf16, #tpu.memory_space<vmem>>, vector<48x32xbf16>
    %cst = arith.constant dense<0.000000e+00> : vector<24x32xf32>
    %4 = tpu.matmul %2, %3, %cst {dimension_numbers = #tpu.dot_dimension_numbers<[1], [0], [0], [1], [0, 0, 1, 1], [], []>} : vector<24x48xbf16>, vector<48x32xbf16>, vector<24x32xf32> -> vector<24x32xf32>
    %c0_4 = arith.constant 0 : index
    %c0_5 = arith.constant 0 : index
    %5 = vector.load %arg5[%c0_4, %c0_5] : memref<1x32xf32, #tpu.memory_space<vmem>>, vector<1x32xf32>
    %6 = vector.broadcast %5 : vector<1x32xf32> to vector<24x32xf32>
    %7 = arith.addf %4, %6 : vector<24x32xf32>
    %c0_6 = arith.constant 0 : index
    %c0_7 = arith.constant 0 : index
    %8 = vector.load %arg2[%c0_6, %c0_7] : memref<24x32xf32, #tpu.memory_space<vmem>>, vector<24x32xf32>
    %c0_8 = arith.constant 0 : index
    %c0_9 = arith.constant 0 : index
    %9 = vector.load %arg3[%c0_8, %c0_9] : memref<24x1xf32, #tpu.memory_space<vmem>>, vector<24x1xf32>
    %10 = vector.broadcast %9 : vector<24x1xf32> to vector<24x32xf32>
    %11 = arith.mulf %10, %7 : vector<24x32xf32>
    %12 = arith.addf %8, %11 : vector<24x32xf32>
    %c0_10 = arith.constant 0 : index
    %c0_11 = arith.constant 0 : index
    %13 = vector.load %arg6[%c0_10, %c0_11] : memref<24x24xf32, #tpu.memory_space<vmem>>, vector<24x24xf32>
    %14 = vector.shape_cast %13 : vector<24x24xf32> to vector<1x24x24xf32>
    %c0_12 = arith.constant 0 : index
    %c0_13 = arith.constant 0 : index
    %15 = vector.load %arg7[%c0_12, %c0_13] : memref<1x24xf32, #tpu.memory_space<vmem>>, vector<1x24xf32>
    %16 = vector.shape_cast %15 : vector<1x24xf32> to vector<1x1x24xf32>
    %c0_14 = arith.constant 0 : index
    %c0_15 = arith.constant 0 : index
    %17 = vector.load %arg8[%c0_14, %c0_15] : memref<24x1xf32, #tpu.memory_space<vmem>>, vector<24x1xf32>
    %18 = vector.shape_cast %17 : vector<24x1xf32> to vector<1x24x1xf32>
    %c0_16 = arith.constant 0 : index
    %c0_17 = arith.constant 0 : index
    %c0_18 = arith.constant 0 : index
    %19 = vector.load %arg13[%c0_16, %c0_17, %c0_18] : memref<2x1x32xf32, #tpu.memory_space<vmem>>, vector<1x1x32xf32>
    %20 = vector.shape_cast %19 : vector<1x1x32xf32> to vector<1x32xf32>
    %c0_19 = arith.constant 0 : index
    %c0_20 = arith.constant 0 : index
    %c0_21 = arith.constant 0 : index
    %21 = vector.load %arg14[%c0_19, %c0_20, %c0_21] : memref<2x1x32xf32, #tpu.memory_space<vmem>>, vector<1x1x32xf32>
    %22 = vector.shape_cast %21 : vector<1x1x32xf32> to vector<1x32xf32>
    %cst_22 = arith.constant dense<0.000000e+00> : vector<24xf32>
    %23 = vector.multi_reduction <add>, %12, %cst_22 [1] : vector<24x32xf32> to vector<24xf32>
    %24 = vector.shape_cast %23 : vector<24xf32> to vector<24x1xf32>
    %cst_23 = arith.constant 3.200000e+01 : f32
    %25 = vector.broadcast %cst_23 : f32 to vector<24x1xf32>
    %26 = arith.divf %24, %25 : vector<24x1xf32>
    %27 = vector.broadcast %26 : vector<24x1xf32> to vector<24x32xf32>
    %28 = arith.subf %12, %27 : vector<24x32xf32>
    %29 = arith.mulf %28, %28 : vector<24x32xf32>
    %cst_24 = arith.constant dense<0.000000e+00> : vector<24xf32>
    %30 = vector.multi_reduction <add>, %29, %cst_24 [1] : vector<24x32xf32> to vector<24xf32>
    %31 = vector.shape_cast %30 : vector<24xf32> to vector<24x1xf32>
    %cst_25 = arith.constant 3.200000e+01 : f32
    %32 = vector.broadcast %cst_25 : f32 to vector<24x1xf32>
    %33 = arith.divf %31, %32 : vector<24x1xf32>
    %34 = vector.broadcast %26 : vector<24x1xf32> to vector<24x32xf32>
    %35 = arith.subf %12, %34 : vector<24x32xf32>
    %cst_26 = arith.constant 9.99999974E-6 : f32
    %36 = vector.broadcast %cst_26 : f32 to vector<24x1xf32>
    %37 = arith.addf %33, %36 : vector<24x1xf32>
    %38 = math.rsqrt %37 : vector<24x1xf32>
    %39 = vector.broadcast %38 : vector<24x1xf32> to vector<24x32xf32>
    %40 = arith.mulf %35, %39 : vector<24x32xf32>
    %41 = vector.broadcast %20 : vector<1x32xf32> to vector<24x32xf32>
    %42 = arith.mulf %40, %41 : vector<24x32xf32>
    %43 = vector.broadcast %22 : vector<1x32xf32> to vector<24x32xf32>
    %44 = arith.addf %42, %43 : vector<24x32xf32>
    %45 = arith.truncf %44 : vector<24x32xf32> to vector<24x32xbf16>
    %c0_27 = arith.constant 0 : index
    %c0_28 = arith.constant 0 : index
    %c0_29 = arith.constant 0 : index
    %46 = vector.load %arg15[%c0_27, %c0_28, %c0_29] : memref<2x32x192xbf16, #tpu.memory_space<vmem>>, vector<1x32x192xbf16>
    %47 = vector.shape_cast %46 : vector<1x32x192xbf16> to vector<32x192xbf16>
    %cst_30 = arith.constant dense<0.000000e+00> : vector<24x192xf32>
    %48 = tpu.matmul %45, %47, %cst_30 {dimension_numbers = #tpu.dot_dimension_numbers<[1], [0], [0], [1], [0, 0, 1, 1], [], []>} : vector<24x32xbf16>, vector<32x192xbf16>, vector<24x192xf32> -> vector<24x192xf32>
    %c0_31 = arith.constant 0 : index
    %c0_32 = arith.constant 0 : index
    %c0_33 = arith.constant 0 : index
    %49 = vector.load %arg16[%c0_31, %c0_32, %c0_33] : memref<2x1x192xf32, #tpu.memory_space<vmem>>, vector<1x1x192xf32>
    %50 = vector.shape_cast %49 : vector<1x1x192xf32> to vector<1x192xf32>
    %51 = vector.broadcast %50 : vector<1x192xf32> to vector<24x192xf32>
    %52 = arith.addf %48, %51 : vector<24x192xf32>
    %53 = vector.extract_strided_slice %52 {offsets = [0, 0], sizes = [24, 32], strides = [1, 1]} : vector<24x192xf32> to vector<24x32xf32>
    %cst_34 = arith.constant 0.353553385 : f32
    %54 = vector.broadcast %cst_34 : f32 to vector<24x32xf32>
    %55 = arith.mulf %53, %54 : vector<24x32xf32>
    %56 = vector.shape_cast %55 : vector<24x32xf32> to vector<24x4x8xf32>
    %57 = tpu.transpose %56, [1, 0, 2] : vector<24x4x8xf32> -> vector<4x24x8xf32>
    %58 = arith.truncf %57 : vector<4x24x8xf32> to vector<4x24x8xbf16>
    %59 = vector.extract_strided_slice %52 {offsets = [0, 32], sizes = [24, 32], strides = [1, 1]} : vector<24x192xf32> to vector<24x32xf32>
    %60 = vector.shape_cast %59 : vector<24x32xf32> to vector<24x4x8xf32>
    %61 = tpu.transpose %60, [1, 0, 2] : vector<24x4x8xf32> -> vector<4x24x8xf32>
    %62 = arith.truncf %61 : vector<4x24x8xf32> to vector<4x24x8xbf16>
    %63 = vector.extract_strided_slice %52 {offsets = [0, 64], sizes = [24, 32], strides = [1, 1]} : vector<24x192xf32> to vector<24x32xf32>
    %64 = vector.shape_cast %63 : vector<24x32xf32> to vector<24x4x8xf32>
    %65 = tpu.transpose %64, [1, 0, 2] : vector<24x4x8xf32> -> vector<4x24x8xf32>
    %66 = arith.truncf %65 : vector<4x24x8xf32> to vector<4x24x8xbf16>
    %67 = vector.extract_strided_slice %52 {offsets = [0, 128], sizes = [24, 32], strides = [1, 1]} : vector<24x192xf32> to vector<24x32xf32>
    %68 = vector.shape_cast %67 : vector<24x32xf32> to vector<24x4x8xf32>
    %69 = tpu.transpose %68, [1, 0, 2] : vector<24x4x8xf32> -> vector<4x24x8xf32>
    %70 = arith.truncf %69 : vector<4x24x8xf32> to vector<4x24x8xbf16>
    %71 = vector.extract_strided_slice %52 {offsets = [0, 160], sizes = [24, 32], strides = [1, 1]} : vector<24x192xf32> to vector<24x32xf32>
    %72 = vector.shape_cast %71 : vector<24x32xf32> to vector<24x4x8xf32>
    %73 = tpu.transpose %72, [1, 0, 2] : vector<24x4x8xf32> -> vector<4x24x8xf32>
    %74 = arith.truncf %73 : vector<4x24x8xf32> to vector<4x24x8xbf16>
    %75 = vector.extract_strided_slice %52 {offsets = [0, 96], sizes = [1, 32], strides = [1, 1]} : vector<24x192xf32> to vector<1x32xf32>
    %cst_35 = arith.constant 0.353553385 : f32
    %76 = vector.broadcast %cst_35 : f32 to vector<1x32xf32>
    %77 = arith.mulf %75, %76 : vector<1x32xf32>
    %78 = vector.shape_cast %77 : vector<1x32xf32> to vector<1x4x8xf32>
    %79 = tpu.transpose %78, [1, 0, 2] : vector<1x4x8xf32> -> vector<4x1x8xf32>
    %80 = arith.truncf %79 : vector<4x1x8xf32> to vector<4x1x8xbf16>
    %cst_36 = arith.constant dense<0.000000e+00> : vector<4x24x24xf32>
    %81 = tpu.matmul %58, %62, %cst_36 {dimension_numbers = #tpu.dot_dimension_numbers<[2], [2], [1], [1], [0, 0, 0, 1, 1, 1], [0], [0]>} : vector<4x24x8xbf16>, vector<4x24x8xbf16>, vector<4x24x24xf32> -> vector<4x24x24xf32>
    %82 = vector.broadcast %14 : vector<1x24x24xf32> to vector<4x24x24xf32>
    %83 = arith.addf %81, %82 : vector<4x24x24xf32>
    %cst_37 = arith.constant dense<0xFF800000> : vector<4x24xf32>
    %84 = vector.multi_reduction <maximumf>, %83, %cst_37 [2] : vector<4x24x24xf32> to vector<4x24xf32>
    %85 = vector.shape_cast %84 : vector<4x24xf32> to vector<4x24x1xf32>
    %86 = vector.broadcast %85 : vector<4x24x1xf32> to vector<4x24x24xf32>
    %87 = arith.subf %83, %86 : vector<4x24x24xf32>
    %88 = math.exp %87 : vector<4x24x24xf32>
    %cst_38 = arith.constant dense<0.000000e+00> : vector<4x24xf32>
    %89 = vector.multi_reduction <add>, %88, %cst_38 [2] : vector<4x24x24xf32> to vector<4x24xf32>
    %90 = vector.shape_cast %89 : vector<4x24xf32> to vector<4x24x1xf32>
    %91 = tpu.reciprocal %90 {approx = true} : vector<4x24x1xf32> -> vector<4x24x1xf32>
    %92 = vector.broadcast %91 : vector<4x24x1xf32> to vector<4x24x24xf32>
    %93 = arith.mulf %88, %92 : vector<4x24x24xf32>
    %94 = arith.truncf %93 : vector<4x24x24xf32> to vector<4x24x24xbf16>
    %cst_39 = arith.constant dense<0.000000e+00> : vector<4x24x8xf32>
    %95 = tpu.matmul %94, %66, %cst_39 {dimension_numbers = #tpu.dot_dimension_numbers<[2], [1], [1], [2], [0, 0, 0, 1, 1, 2], [0], [0]>} : vector<4x24x24xbf16>, vector<4x24x8xbf16>, vector<4x24x8xf32> -> vector<4x24x8xf32>
    %cst_40 = arith.constant dense<0.000000e+00> : vector<4x1x24xf32>
    %96 = tpu.matmul %80, %70, %cst_40 {dimension_numbers = #tpu.dot_dimension_numbers<[2], [2], [1], [1], [0, 0, 0, 1, 1, 1], [0], [0]>} : vector<4x1x8xbf16>, vector<4x24x8xbf16>, vector<4x1x24xf32> -> vector<4x1x24xf32>
    %97 = vector.broadcast %16 : vector<1x1x24xf32> to vector<4x1x24xf32>
    %98 = arith.addf %96, %97 : vector<4x1x24xf32>
    %cst_41 = arith.constant dense<0xFF800000> : vector<4x1xf32>
    %99 = vector.multi_reduction <maximumf>, %98, %cst_41 [2] : vector<4x1x24xf32> to vector<4x1xf32>
    %100 = vector.shape_cast %99 : vector<4x1xf32> to vector<4x1x1xf32>
    %101 = vector.broadcast %100 : vector<4x1x1xf32> to vector<4x1x24xf32>
    %102 = arith.subf %98, %101 : vector<4x1x24xf32>
    %103 = math.exp %102 : vector<4x1x24xf32>
    %cst_42 = arith.constant dense<0.000000e+00> : vector<4x1xf32>
    %104 = vector.multi_reduction <add>, %103, %cst_42 [2] : vector<4x1x24xf32> to vector<4x1xf32>
    %105 = vector.shape_cast %104 : vector<4x1xf32> to vector<4x1x1xf32>
    %106 = tpu.reciprocal %105 {approx = true} : vector<4x1x1xf32> -> vector<4x1x1xf32>
    %107 = vector.broadcast %106 : vector<4x1x1xf32> to vector<4x1x24xf32>
    %108 = arith.mulf %103, %107 : vector<4x1x24xf32>
    %109 = arith.truncf %108 : vector<4x1x24xf32> to vector<4x1x24xbf16>
    %cst_43 = arith.constant dense<0.000000e+00> : vector<4x1x8xf32>
    %110 = tpu.matmul %109, %74, %cst_43 {dimension_numbers = #tpu.dot_dimension_numbers<[2], [1], [1], [2], [0, 0, 0, 1, 1, 2], [0], [0]>} : vector<4x1x24xbf16>, vector<4x24x8xbf16>, vector<4x1x8xf32> -> vector<4x1x8xf32>
    %111 = vector.broadcast %110 : vector<4x1x8xf32> to vector<4x24x8xf32>
    %112 = arith.subf %111, %95 : vector<4x24x8xf32>
    %113 = vector.broadcast %18 : vector<1x24x1xf32> to vector<4x24x8xf32>
    %114 = arith.mulf %113, %112 : vector<4x24x8xf32>
    %115 = arith.addf %95, %114 : vector<4x24x8xf32>
    %116 = tpu.transpose %115, [1, 0, 2] : vector<4x24x8xf32> -> vector<24x4x8xf32>
    %117 = vector.shape_cast %116 : vector<24x4x8xf32> to vector<24x32xf32>
    %118 = arith.addf %12, %117 : vector<24x32xf32>
    %c0_44 = arith.constant 0 : index
    %c0_45 = arith.constant 0 : index
    %c0_46 = arith.constant 0 : index
    %119 = vector.load %arg17[%c0_44, %c0_45, %c0_46] : memref<2x1x32xf32, #tpu.memory_space<vmem>>, vector<1x1x32xf32>
    %120 = vector.shape_cast %119 : vector<1x1x32xf32> to vector<1x32xf32>
    %c0_47 = arith.constant 0 : index
    %c0_48 = arith.constant 0 : index
    %c0_49 = arith.constant 0 : index
    %121 = vector.load %arg18[%c0_47, %c0_48, %c0_49] : memref<2x1x32xf32, #tpu.memory_space<vmem>>, vector<1x1x32xf32>
    %122 = vector.shape_cast %121 : vector<1x1x32xf32> to vector<1x32xf32>
    %cst_50 = arith.constant dense<0.000000e+00> : vector<24xf32>
    %123 = vector.multi_reduction <add>, %118, %cst_50 [1] : vector<24x32xf32> to vector<24xf32>
    %124 = vector.shape_cast %123 : vector<24xf32> to vector<24x1xf32>
    %cst_51 = arith.constant 3.200000e+01 : f32
    %125 = vector.broadcast %cst_51 : f32 to vector<24x1xf32>
    %126 = arith.divf %124, %125 : vector<24x1xf32>
    %127 = vector.broadcast %126 : vector<24x1xf32> to vector<24x32xf32>
    %128 = arith.subf %118, %127 : vector<24x32xf32>
    %129 = arith.mulf %128, %128 : vector<24x32xf32>
    %cst_52 = arith.constant dense<0.000000e+00> : vector<24xf32>
    %130 = vector.multi_reduction <add>, %129, %cst_52 [1] : vector<24x32xf32> to vector<24xf32>
    %131 = vector.shape_cast %130 : vector<24xf32> to vector<24x1xf32>
    %cst_53 = arith.constant 3.200000e+01 : f32
    %132 = vector.broadcast %cst_53 : f32 to vector<24x1xf32>
    %133 = arith.divf %131, %132 : vector<24x1xf32>
    %134 = vector.broadcast %126 : vector<24x1xf32> to vector<24x32xf32>
    %135 = arith.subf %118, %134 : vector<24x32xf32>
    %cst_54 = arith.constant 9.99999974E-6 : f32
    %136 = vector.broadcast %cst_54 : f32 to vector<24x1xf32>
    %137 = arith.addf %133, %136 : vector<24x1xf32>
    %138 = math.rsqrt %137 : vector<24x1xf32>
    %139 = vector.broadcast %138 : vector<24x1xf32> to vector<24x32xf32>
    %140 = arith.mulf %135, %139 : vector<24x32xf32>
    %141 = vector.broadcast %120 : vector<1x32xf32> to vector<24x32xf32>
    %142 = arith.mulf %140, %141 : vector<24x32xf32>
    %143 = vector.broadcast %122 : vector<1x32xf32> to vector<24x32xf32>
    %144 = arith.addf %142, %143 : vector<24x32xf32>
    %145 = arith.truncf %144 : vector<24x32xf32> to vector<24x32xbf16>
    %c0_55 = arith.constant 0 : index
    %c0_56 = arith.constant 0 : index
    %c0_57 = arith.constant 0 : index
    %146 = vector.load %arg19[%c0_55, %c0_56, %c0_57] : memref<2x32x64xbf16, #tpu.memory_space<vmem>>, vector<1x32x64xbf16>
    %147 = vector.shape_cast %146 : vector<1x32x64xbf16> to vector<32x64xbf16>
    %cst_58 = arith.constant dense<0.000000e+00> : vector<24x64xf32>
    %148 = tpu.matmul %145, %147, %cst_58 {dimension_numbers = #tpu.dot_dimension_numbers<[1], [0], [0], [1], [0, 0, 1, 1], [], []>} : vector<24x32xbf16>, vector<32x64xbf16>, vector<24x64xf32> -> vector<24x64xf32>
    %c0_59 = arith.constant 0 : index
    %c0_60 = arith.constant 0 : index
    %c0_61 = arith.constant 0 : index
    %149 = vector.load %arg20[%c0_59, %c0_60, %c0_61] : memref<2x1x64xf32, #tpu.memory_space<vmem>>, vector<1x1x64xf32>
    %150 = vector.shape_cast %149 : vector<1x1x64xf32> to vector<1x64xf32>
    %151 = vector.broadcast %150 : vector<1x64xf32> to vector<24x64xf32>
    %152 = arith.addf %148, %151 : vector<24x64xf32>
    %cst_62 = arith.constant 5.000000e-01 : f32
    %153 = vector.broadcast %cst_62 : f32 to vector<24x64xf32>
    %154 = arith.mulf %153, %152 : vector<24x64xf32>
    %cst_63 = arith.constant 4.471500e-02 : f32
    %155 = vector.broadcast %cst_63 : f32 to vector<24x64xf32>
    %156 = arith.mulf %155, %152 : vector<24x64xf32>
    %157 = arith.mulf %156, %152 : vector<24x64xf32>
    %158 = arith.mulf %157, %152 : vector<24x64xf32>
    %159 = arith.addf %152, %158 : vector<24x64xf32>
    %cst_64 = arith.constant 0.797884583 : f32
    %160 = vector.broadcast %cst_64 : f32 to vector<24x64xf32>
    %161 = arith.mulf %160, %159 : vector<24x64xf32>
    %162 = math.tanh %161 : vector<24x64xf32>
    %cst_65 = arith.constant 1.000000e+00 : f32
    %163 = vector.broadcast %cst_65 : f32 to vector<24x64xf32>
    %164 = arith.addf %163, %162 : vector<24x64xf32>
    %165 = arith.mulf %154, %164 : vector<24x64xf32>
    %166 = arith.truncf %165 : vector<24x64xf32> to vector<24x64xbf16>
    %c0_66 = arith.constant 0 : index
    %c0_67 = arith.constant 0 : index
    %c0_68 = arith.constant 0 : index
    %167 = vector.load %arg21[%c0_66, %c0_67, %c0_68] : memref<2x64x32xbf16, #tpu.memory_space<vmem>>, vector<1x64x32xbf16>
    %168 = vector.shape_cast %167 : vector<1x64x32xbf16> to vector<64x32xbf16>
    %cst_69 = arith.constant dense<0.000000e+00> : vector<24x32xf32>
    %169 = tpu.matmul %166, %168, %cst_69 {dimension_numbers = #tpu.dot_dimension_numbers<[1], [0], [0], [1], [0, 0, 1, 1], [], []>} : vector<24x64xbf16>, vector<64x32xbf16>, vector<24x32xf32> -> vector<24x32xf32>
    %c0_70 = arith.constant 0 : index
    %c0_71 = arith.constant 0 : index
    %c0_72 = arith.constant 0 : index
    %170 = vector.load %arg22[%c0_70, %c0_71, %c0_72] : memref<2x1x32xf32, #tpu.memory_space<vmem>>, vector<1x1x32xf32>
    %171 = vector.shape_cast %170 : vector<1x1x32xf32> to vector<1x32xf32>
    %172 = vector.broadcast %171 : vector<1x32xf32> to vector<24x32xf32>
    %173 = arith.addf %169, %172 : vector<24x32xf32>
    %174 = arith.addf %118, %173 : vector<24x32xf32>
    %c1 = arith.constant 1 : index
    %c0_73 = arith.constant 0 : index
    %c0_74 = arith.constant 0 : index
    %175 = vector.load %arg13[%c1, %c0_73, %c0_74] : memref<2x1x32xf32, #tpu.memory_space<vmem>>, vector<1x1x32xf32>
    %176 = vector.shape_cast %175 : vector<1x1x32xf32> to vector<1x32xf32>
    %c1_75 = arith.constant 1 : index
    %c0_76 = arith.constant 0 : index
    %c0_77 = arith.constant 0 : index
    %177 = vector.load %arg14[%c1_75, %c0_76, %c0_77] : memref<2x1x32xf32, #tpu.memory_space<vmem>>, vector<1x1x32xf32>
    %178 = vector.shape_cast %177 : vector<1x1x32xf32> to vector<1x32xf32>
    %cst_78 = arith.constant dense<0.000000e+00> : vector<24xf32>
    %179 = vector.multi_reduction <add>, %174, %cst_78 [1] : vector<24x32xf32> to vector<24xf32>
    %180 = vector.shape_cast %179 : vector<24xf32> to vector<24x1xf32>
    %cst_79 = arith.constant 3.200000e+01 : f32
    %181 = vector.broadcast %cst_79 : f32 to vector<24x1xf32>
    %182 = arith.divf %180, %181 : vector<24x1xf32>
    %183 = vector.broadcast %182 : vector<24x1xf32> to vector<24x32xf32>
    %184 = arith.subf %174, %183 : vector<24x32xf32>
    %185 = arith.mulf %184, %184 : vector<24x32xf32>
    %cst_80 = arith.constant dense<0.000000e+00> : vector<24xf32>
    %186 = vector.multi_reduction <add>, %185, %cst_80 [1] : vector<24x32xf32> to vector<24xf32>
    %187 = vector.shape_cast %186 : vector<24xf32> to vector<24x1xf32>
    %cst_81 = arith.constant 3.200000e+01 : f32
    %188 = vector.broadcast %cst_81 : f32 to vector<24x1xf32>
    %189 = arith.divf %187, %188 : vector<24x1xf32>
    %190 = vector.broadcast %182 : vector<24x1xf32> to vector<24x32xf32>
    %191 = arith.subf %174, %190 : vector<24x32xf32>
    %cst_82 = arith.constant 9.99999974E-6 : f32
    %192 = vector.broadcast %cst_82 : f32 to vector<24x1xf32>
    %193 = arith.addf %189, %192 : vector<24x1xf32>
    %194 = math.rsqrt %193 : vector<24x1xf32>
    %195 = vector.broadcast %194 : vector<24x1xf32> to vector<24x32xf32>
    %196 = arith.mulf %191, %195 : vector<24x32xf32>
    %197 = vector.broadcast %176 : vector<1x32xf32> to vector<24x32xf32>
    %198 = arith.mulf %196, %197 : vector<24x32xf32>
    %199 = vector.broadcast %178 : vector<1x32xf32> to vector<24x32xf32>
    %200 = arith.addf %198, %199 : vector<24x32xf32>
    %201 = arith.truncf %200 : vector<24x32xf32> to vector<24x32xbf16>
    %c1_83 = arith.constant 1 : index
    %c0_84 = arith.constant 0 : index
    %c0_85 = arith.constant 0 : index
    %202 = vector.load %arg15[%c1_83, %c0_84, %c0_85] : memref<2x32x192xbf16, #tpu.memory_space<vmem>>, vector<1x32x192xbf16>
    %203 = vector.shape_cast %202 : vector<1x32x192xbf16> to vector<32x192xbf16>
    %cst_86 = arith.constant dense<0.000000e+00> : vector<24x192xf32>
    %204 = tpu.matmul %201, %203, %cst_86 {dimension_numbers = #tpu.dot_dimension_numbers<[1], [0], [0], [1], [0, 0, 1, 1], [], []>} : vector<24x32xbf16>, vector<32x192xbf16>, vector<24x192xf32> -> vector<24x192xf32>
    %c1_87 = arith.constant 1 : index
    %c0_88 = arith.constant 0 : index
    %c0_89 = arith.constant 0 : index
    %205 = vector.load %arg16[%c1_87, %c0_88, %c0_89] : memref<2x1x192xf32, #tpu.memory_space<vmem>>, vector<1x1x192xf32>
    %206 = vector.shape_cast %205 : vector<1x1x192xf32> to vector<1x192xf32>
    %207 = vector.broadcast %206 : vector<1x192xf32> to vector<24x192xf32>
    %208 = arith.addf %204, %207 : vector<24x192xf32>
    %209 = vector.extract_strided_slice %208 {offsets = [0, 0], sizes = [24, 32], strides = [1, 1]} : vector<24x192xf32> to vector<24x32xf32>
    %cst_90 = arith.constant 0.353553385 : f32
    %210 = vector.broadcast %cst_90 : f32 to vector<24x32xf32>
    %211 = arith.mulf %209, %210 : vector<24x32xf32>
    %212 = vector.shape_cast %211 : vector<24x32xf32> to vector<24x4x8xf32>
    %213 = tpu.transpose %212, [1, 0, 2] : vector<24x4x8xf32> -> vector<4x24x8xf32>
    %214 = arith.truncf %213 : vector<4x24x8xf32> to vector<4x24x8xbf16>
    %215 = vector.extract_strided_slice %208 {offsets = [0, 32], sizes = [24, 32], strides = [1, 1]} : vector<24x192xf32> to vector<24x32xf32>
    %216 = vector.shape_cast %215 : vector<24x32xf32> to vector<24x4x8xf32>
    %217 = tpu.transpose %216, [1, 0, 2] : vector<24x4x8xf32> -> vector<4x24x8xf32>
    %218 = arith.truncf %217 : vector<4x24x8xf32> to vector<4x24x8xbf16>
    %219 = vector.extract_strided_slice %208 {offsets = [0, 64], sizes = [24, 32], strides = [1, 1]} : vector<24x192xf32> to vector<24x32xf32>
    %220 = vector.shape_cast %219 : vector<24x32xf32> to vector<24x4x8xf32>
    %221 = tpu.transpose %220, [1, 0, 2] : vector<24x4x8xf32> -> vector<4x24x8xf32>
    %222 = arith.truncf %221 : vector<4x24x8xf32> to vector<4x24x8xbf16>
    %223 = vector.extract_strided_slice %208 {offsets = [0, 128], sizes = [24, 32], strides = [1, 1]} : vector<24x192xf32> to vector<24x32xf32>
    %224 = vector.shape_cast %223 : vector<24x32xf32> to vector<24x4x8xf32>
    %225 = tpu.transpose %224, [1, 0, 2] : vector<24x4x8xf32> -> vector<4x24x8xf32>
    %226 = arith.truncf %225 : vector<4x24x8xf32> to vector<4x24x8xbf16>
    %227 = vector.extract_strided_slice %208 {offsets = [0, 160], sizes = [24, 32], strides = [1, 1]} : vector<24x192xf32> to vector<24x32xf32>
    %228 = vector.shape_cast %227 : vector<24x32xf32> to vector<24x4x8xf32>
    %229 = tpu.transpose %228, [1, 0, 2] : vector<24x4x8xf32> -> vector<4x24x8xf32>
    %230 = arith.truncf %229 : vector<4x24x8xf32> to vector<4x24x8xbf16>
    %231 = vector.extract_strided_slice %208 {offsets = [0, 96], sizes = [1, 32], strides = [1, 1]} : vector<24x192xf32> to vector<1x32xf32>
    %cst_91 = arith.constant 0.353553385 : f32
    %232 = vector.broadcast %cst_91 : f32 to vector<1x32xf32>
    %233 = arith.mulf %231, %232 : vector<1x32xf32>
    %234 = vector.shape_cast %233 : vector<1x32xf32> to vector<1x4x8xf32>
    %235 = tpu.transpose %234, [1, 0, 2] : vector<1x4x8xf32> -> vector<4x1x8xf32>
    %236 = arith.truncf %235 : vector<4x1x8xf32> to vector<4x1x8xbf16>
    %cst_92 = arith.constant dense<0.000000e+00> : vector<4x24x24xf32>
    %237 = tpu.matmul %214, %218, %cst_92 {dimension_numbers = #tpu.dot_dimension_numbers<[2], [2], [1], [1], [0, 0, 0, 1, 1, 1], [0], [0]>} : vector<4x24x8xbf16>, vector<4x24x8xbf16>, vector<4x24x24xf32> -> vector<4x24x24xf32>
    %238 = vector.broadcast %14 : vector<1x24x24xf32> to vector<4x24x24xf32>
    %239 = arith.addf %237, %238 : vector<4x24x24xf32>
    %cst_93 = arith.constant dense<0xFF800000> : vector<4x24xf32>
    %240 = vector.multi_reduction <maximumf>, %239, %cst_93 [2] : vector<4x24x24xf32> to vector<4x24xf32>
    %241 = vector.shape_cast %240 : vector<4x24xf32> to vector<4x24x1xf32>
    %242 = vector.broadcast %241 : vector<4x24x1xf32> to vector<4x24x24xf32>
    %243 = arith.subf %239, %242 : vector<4x24x24xf32>
    %244 = math.exp %243 : vector<4x24x24xf32>
    %cst_94 = arith.constant dense<0.000000e+00> : vector<4x24xf32>
    %245 = vector.multi_reduction <add>, %244, %cst_94 [2] : vector<4x24x24xf32> to vector<4x24xf32>
    %246 = vector.shape_cast %245 : vector<4x24xf32> to vector<4x24x1xf32>
    %247 = tpu.reciprocal %246 {approx = true} : vector<4x24x1xf32> -> vector<4x24x1xf32>
    %248 = vector.broadcast %247 : vector<4x24x1xf32> to vector<4x24x24xf32>
    %249 = arith.mulf %244, %248 : vector<4x24x24xf32>
    %250 = arith.truncf %249 : vector<4x24x24xf32> to vector<4x24x24xbf16>
    %cst_95 = arith.constant dense<0.000000e+00> : vector<4x24x8xf32>
    %251 = tpu.matmul %250, %222, %cst_95 {dimension_numbers = #tpu.dot_dimension_numbers<[2], [1], [1], [2], [0, 0, 0, 1, 1, 2], [0], [0]>} : vector<4x24x24xbf16>, vector<4x24x8xbf16>, vector<4x24x8xf32> -> vector<4x24x8xf32>
    %cst_96 = arith.constant dense<0.000000e+00> : vector<4x1x24xf32>
    %252 = tpu.matmul %236, %226, %cst_96 {dimension_numbers = #tpu.dot_dimension_numbers<[2], [2], [1], [1], [0, 0, 0, 1, 1, 1], [0], [0]>} : vector<4x1x8xbf16>, vector<4x24x8xbf16>, vector<4x1x24xf32> -> vector<4x1x24xf32>
    %253 = vector.broadcast %16 : vector<1x1x24xf32> to vector<4x1x24xf32>
    %254 = arith.addf %252, %253 : vector<4x1x24xf32>
    %cst_97 = arith.constant dense<0xFF800000> : vector<4x1xf32>
    %255 = vector.multi_reduction <maximumf>, %254, %cst_97 [2] : vector<4x1x24xf32> to vector<4x1xf32>
    %256 = vector.shape_cast %255 : vector<4x1xf32> to vector<4x1x1xf32>
    %257 = vector.broadcast %256 : vector<4x1x1xf32> to vector<4x1x24xf32>
    %258 = arith.subf %254, %257 : vector<4x1x24xf32>
    %259 = math.exp %258 : vector<4x1x24xf32>
    %cst_98 = arith.constant dense<0.000000e+00> : vector<4x1xf32>
    %260 = vector.multi_reduction <add>, %259, %cst_98 [2] : vector<4x1x24xf32> to vector<4x1xf32>
    %261 = vector.shape_cast %260 : vector<4x1xf32> to vector<4x1x1xf32>
    %262 = tpu.reciprocal %261 {approx = true} : vector<4x1x1xf32> -> vector<4x1x1xf32>
    %263 = vector.broadcast %262 : vector<4x1x1xf32> to vector<4x1x24xf32>
    %264 = arith.mulf %259, %263 : vector<4x1x24xf32>
    %265 = arith.truncf %264 : vector<4x1x24xf32> to vector<4x1x24xbf16>
    %cst_99 = arith.constant dense<0.000000e+00> : vector<4x1x8xf32>
    %266 = tpu.matmul %265, %230, %cst_99 {dimension_numbers = #tpu.dot_dimension_numbers<[2], [1], [1], [2], [0, 0, 0, 1, 1, 2], [0], [0]>} : vector<4x1x24xbf16>, vector<4x24x8xbf16>, vector<4x1x8xf32> -> vector<4x1x8xf32>
    %267 = vector.broadcast %266 : vector<4x1x8xf32> to vector<4x24x8xf32>
    %268 = arith.subf %267, %251 : vector<4x24x8xf32>
    %269 = vector.broadcast %18 : vector<1x24x1xf32> to vector<4x24x8xf32>
    %270 = arith.mulf %269, %268 : vector<4x24x8xf32>
    %271 = arith.addf %251, %270 : vector<4x24x8xf32>
    %272 = tpu.transpose %271, [1, 0, 2] : vector<4x24x8xf32> -> vector<24x4x8xf32>
    %273 = vector.shape_cast %272 : vector<24x4x8xf32> to vector<24x32xf32>
    %274 = arith.addf %174, %273 : vector<24x32xf32>
    %c1_100 = arith.constant 1 : index
    %c0_101 = arith.constant 0 : index
    %c0_102 = arith.constant 0 : index
    %275 = vector.load %arg17[%c1_100, %c0_101, %c0_102] : memref<2x1x32xf32, #tpu.memory_space<vmem>>, vector<1x1x32xf32>
    %276 = vector.shape_cast %275 : vector<1x1x32xf32> to vector<1x32xf32>
    %c1_103 = arith.constant 1 : index
    %c0_104 = arith.constant 0 : index
    %c0_105 = arith.constant 0 : index
    %277 = vector.load %arg18[%c1_103, %c0_104, %c0_105] : memref<2x1x32xf32, #tpu.memory_space<vmem>>, vector<1x1x32xf32>
    %278 = vector.shape_cast %277 : vector<1x1x32xf32> to vector<1x32xf32>
    %cst_106 = arith.constant dense<0.000000e+00> : vector<24xf32>
    %279 = vector.multi_reduction <add>, %274, %cst_106 [1] : vector<24x32xf32> to vector<24xf32>
    %280 = vector.shape_cast %279 : vector<24xf32> to vector<24x1xf32>
    %cst_107 = arith.constant 3.200000e+01 : f32
    %281 = vector.broadcast %cst_107 : f32 to vector<24x1xf32>
    %282 = arith.divf %280, %281 : vector<24x1xf32>
    %283 = vector.broadcast %282 : vector<24x1xf32> to vector<24x32xf32>
    %284 = arith.subf %274, %283 : vector<24x32xf32>
    %285 = arith.mulf %284, %284 : vector<24x32xf32>
    %cst_108 = arith.constant dense<0.000000e+00> : vector<24xf32>
    %286 = vector.multi_reduction <add>, %285, %cst_108 [1] : vector<24x32xf32> to vector<24xf32>
    %287 = vector.shape_cast %286 : vector<24xf32> to vector<24x1xf32>
    %cst_109 = arith.constant 3.200000e+01 : f32
    %288 = vector.broadcast %cst_109 : f32 to vector<24x1xf32>
    %289 = arith.divf %287, %288 : vector<24x1xf32>
    %290 = vector.broadcast %282 : vector<24x1xf32> to vector<24x32xf32>
    %291 = arith.subf %274, %290 : vector<24x32xf32>
    %cst_110 = arith.constant 9.99999974E-6 : f32
    %292 = vector.broadcast %cst_110 : f32 to vector<24x1xf32>
    %293 = arith.addf %289, %292 : vector<24x1xf32>
    %294 = math.rsqrt %293 : vector<24x1xf32>
    %295 = vector.broadcast %294 : vector<24x1xf32> to vector<24x32xf32>
    %296 = arith.mulf %291, %295 : vector<24x32xf32>
    %297 = vector.broadcast %276 : vector<1x32xf32> to vector<24x32xf32>
    %298 = arith.mulf %296, %297 : vector<24x32xf32>
    %299 = vector.broadcast %278 : vector<1x32xf32> to vector<24x32xf32>
    %300 = arith.addf %298, %299 : vector<24x32xf32>
    %301 = arith.truncf %300 : vector<24x32xf32> to vector<24x32xbf16>
    %c1_111 = arith.constant 1 : index
    %c0_112 = arith.constant 0 : index
    %c0_113 = arith.constant 0 : index
    %302 = vector.load %arg19[%c1_111, %c0_112, %c0_113] : memref<2x32x64xbf16, #tpu.memory_space<vmem>>, vector<1x32x64xbf16>
    %303 = vector.shape_cast %302 : vector<1x32x64xbf16> to vector<32x64xbf16>
    %cst_114 = arith.constant dense<0.000000e+00> : vector<24x64xf32>
    %304 = tpu.matmul %301, %303, %cst_114 {dimension_numbers = #tpu.dot_dimension_numbers<[1], [0], [0], [1], [0, 0, 1, 1], [], []>} : vector<24x32xbf16>, vector<32x64xbf16>, vector<24x64xf32> -> vector<24x64xf32>
    %c1_115 = arith.constant 1 : index
    %c0_116 = arith.constant 0 : index
    %c0_117 = arith.constant 0 : index
    %305 = vector.load %arg20[%c1_115, %c0_116, %c0_117] : memref<2x1x64xf32, #tpu.memory_space<vmem>>, vector<1x1x64xf32>
    %306 = vector.shape_cast %305 : vector<1x1x64xf32> to vector<1x64xf32>
    %307 = vector.broadcast %306 : vector<1x64xf32> to vector<24x64xf32>
    %308 = arith.addf %304, %307 : vector<24x64xf32>
    %cst_118 = arith.constant 5.000000e-01 : f32
    %309 = vector.broadcast %cst_118 : f32 to vector<24x64xf32>
    %310 = arith.mulf %309, %308 : vector<24x64xf32>
    %cst_119 = arith.constant 4.471500e-02 : f32
    %311 = vector.broadcast %cst_119 : f32 to vector<24x64xf32>
    %312 = arith.mulf %311, %308 : vector<24x64xf32>
    %313 = arith.mulf %312, %308 : vector<24x64xf32>
    %314 = arith.mulf %313, %308 : vector<24x64xf32>
    %315 = arith.addf %308, %314 : vector<24x64xf32>
    %cst_120 = arith.constant 0.797884583 : f32
    %316 = vector.broadcast %cst_120 : f32 to vector<24x64xf32>
    %317 = arith.mulf %316, %315 : vector<24x64xf32>
    %318 = math.tanh %317 : vector<24x64xf32>
    %cst_121 = arith.constant 1.000000e+00 : f32
    %319 = vector.broadcast %cst_121 : f32 to vector<24x64xf32>
    %320 = arith.addf %319, %318 : vector<24x64xf32>
    %321 = arith.mulf %310, %320 : vector<24x64xf32>
    %322 = arith.truncf %321 : vector<24x64xf32> to vector<24x64xbf16>
    %c1_122 = arith.constant 1 : index
    %c0_123 = arith.constant 0 : index
    %c0_124 = arith.constant 0 : index
    %323 = vector.load %arg21[%c1_122, %c0_123, %c0_124] : memref<2x64x32xbf16, #tpu.memory_space<vmem>>, vector<1x64x32xbf16>
    %324 = vector.shape_cast %323 : vector<1x64x32xbf16> to vector<64x32xbf16>
    %cst_125 = arith.constant dense<0.000000e+00> : vector<24x32xf32>
    %325 = tpu.matmul %322, %324, %cst_125 {dimension_numbers = #tpu.dot_dimension_numbers<[1], [0], [0], [1], [0, 0, 1, 1], [], []>} : vector<24x64xbf16>, vector<64x32xbf16>, vector<24x32xf32> -> vector<24x32xf32>
    %c1_126 = arith.constant 1 : index
    %c0_127 = arith.constant 0 : index
    %c0_128 = arith.constant 0 : index
    %326 = vector.load %arg22[%c1_126, %c0_127, %c0_128] : memref<2x1x32xf32, #tpu.memory_space<vmem>>, vector<1x1x32xf32>
    %327 = vector.shape_cast %326 : vector<1x1x32xf32> to vector<1x32xf32>
    %328 = vector.broadcast %327 : vector<1x32xf32> to vector<24x32xf32>
    %329 = arith.addf %325, %328 : vector<24x32xf32>
    %330 = arith.addf %274, %329 : vector<24x32xf32>
    %331 = vector.extract_strided_slice %330 {offsets = [0, 0], sizes = [1, 32], strides = [1, 1]} : vector<24x32xf32> to vector<1x32xf32>
    %c0_129 = arith.constant 0 : index
    %c0_130 = arith.constant 0 : index
    %332 = vector.load %arg9[%c0_129, %c0_130] : memref<1x32xf32, #tpu.memory_space<vmem>>, vector<1x32xf32>
    %c0_131 = arith.constant 0 : index
    %c0_132 = arith.constant 0 : index
    %333 = vector.load %arg10[%c0_131, %c0_132] : memref<1x32xf32, #tpu.memory_space<vmem>>, vector<1x32xf32>
    %cst_133 = arith.constant dense<0.000000e+00> : vector<1xf32>
    %334 = vector.multi_reduction <add>, %331, %cst_133 [1] : vector<1x32xf32> to vector<1xf32>
    %335 = vector.shape_cast %334 : vector<1xf32> to vector<1x1xf32>
    %cst_134 = arith.constant 3.200000e+01 : f32
    %336 = vector.broadcast %cst_134 : f32 to vector<1x1xf32>
    %337 = arith.divf %335, %336 : vector<1x1xf32>
    %338 = vector.broadcast %337 : vector<1x1xf32> to vector<1x32xf32>
    %339 = arith.subf %331, %338 : vector<1x32xf32>
    %340 = arith.mulf %339, %339 : vector<1x32xf32>
    %cst_135 = arith.constant dense<0.000000e+00> : vector<1xf32>
    %341 = vector.multi_reduction <add>, %340, %cst_135 [1] : vector<1x32xf32> to vector<1xf32>
    %342 = vector.shape_cast %341 : vector<1xf32> to vector<1x1xf32>
    %cst_136 = arith.constant 3.200000e+01 : f32
    %343 = vector.broadcast %cst_136 : f32 to vector<1x1xf32>
    %344 = arith.divf %342, %343 : vector<1x1xf32>
    %345 = vector.broadcast %337 : vector<1x1xf32> to vector<1x32xf32>
    %346 = arith.subf %331, %345 : vector<1x32xf32>
    %cst_137 = arith.constant 9.99999974E-6 : f32
    %347 = vector.broadcast %cst_137 : f32 to vector<1x1xf32>
    %348 = arith.addf %344, %347 : vector<1x1xf32>
    %349 = math.rsqrt %348 : vector<1x1xf32>
    %350 = vector.broadcast %349 : vector<1x1xf32> to vector<1x32xf32>
    %351 = arith.mulf %346, %350 : vector<1x32xf32>
    %352 = arith.mulf %351, %332 : vector<1x32xf32>
    %353 = arith.addf %352, %333 : vector<1x32xf32>
    %354 = arith.truncf %353 : vector<1x32xf32> to vector<1x32xbf16>
    %c0_138 = arith.constant 0 : index
    %c0_139 = arith.constant 0 : index
    %355 = vector.load %arg11[%c0_138, %c0_139] : memref<32x10xbf16, #tpu.memory_space<vmem>>, vector<32x10xbf16>
    %cst_140 = arith.constant dense<0.000000e+00> : vector<1x10xf32>
    %356 = tpu.matmul %354, %355, %cst_140 {dimension_numbers = #tpu.dot_dimension_numbers<[1], [0], [0], [1], [0, 0, 1, 1], [], []>} : vector<1x32xbf16>, vector<32x10xbf16>, vector<1x10xf32> -> vector<1x10xf32>
    %c0_141 = arith.constant 0 : index
    %c0_142 = arith.constant 0 : index
    %357 = vector.load %arg12[%c0_141, %c0_142] : memref<1x10xf32, #tpu.memory_space<vmem>>, vector<1x10xf32>
    %358 = arith.addf %356, %357 : vector<1x10xf32>
    %c0_143 = arith.constant 0 : index
    %c0_144 = arith.constant 0 : index
    %c0_145 = arith.constant 0 : index
    %359 = vector.load %arg23[%c0_143, %c0_144, %c0_145] : memref<1x1x10xf32, #tpu.memory_space<vmem>>, vector<1x1x10xf32>
    %360 = vector.shape_cast %359 : vector<1x1x10xf32> to vector<1x10xf32>
    %361 = vector.shape_cast %358 : vector<1x10xf32> to vector<1x1x10xf32>
    tpu.vector_store %arg23[%c0_143, %c0_144, %c0_145], %361 {strides = array<i32>} : memref<1x1x10xf32, #tpu.memory_space<vmem>>, vector<1x1x10xf32>,
    return
  }
  func.func @transform_0(%arg0: i32) -> (i32, i32, i32) {
    %c0_i32 = arith.constant 0 : i32
    %c0_i32_0 = arith.constant 0 : i32
    %c0_i32_1 = arith.constant 0 : i32
    return %arg0, %c0_i32, %c0_i32_0 : i32, i32, i32
  }
  func.func @transform_1(%arg0: i32) -> (i32, i32) {
    %c0_i32 = arith.constant 0 : i32
    %c0_i32_0 = arith.constant 0 : i32
    %c0_i32_1 = arith.constant 0 : i32
    return %c0_i32, %c0_i32_0 : i32, i32
  }
  func.func @transform_2(%arg0: i32) -> (i32, i32) {
    %c0_i32 = arith.constant 0 : i32
    %c0_i32_0 = arith.constant 0 : i32
    %c0_i32_1 = arith.constant 0 : i32
    return %c0_i32, %c0_i32_0 : i32, i32
  }
  func.func @transform_3(%arg0: i32) -> (i32, i32) {
    %c0_i32 = arith.constant 0 : i32
    %c0_i32_0 = arith.constant 0 : i32
    %c0_i32_1 = arith.constant 0 : i32
    return %c0_i32, %c0_i32_0 : i32, i32
  }
  func.func @transform_4(%arg0: i32) -> (i32, i32) {
    %c0_i32 = arith.constant 0 : i32
    %c0_i32_0 = arith.constant 0 : i32
    %c0_i32_1 = arith.constant 0 : i32
    return %c0_i32, %c0_i32_0 : i32, i32
  }
  func.func @transform_5(%arg0: i32) -> (i32, i32) {
    %c0_i32 = arith.constant 0 : i32
    %c0_i32_0 = arith.constant 0 : i32
    %c0_i32_1 = arith.constant 0 : i32
    return %c0_i32, %c0_i32_0 : i32, i32
  }
  func.func @transform_6(%arg0: i32) -> (i32, i32) {
    %c0_i32 = arith.constant 0 : i32
    %c0_i32_0 = arith.constant 0 : i32
    %c0_i32_1 = arith.constant 0 : i32
    return %c0_i32, %c0_i32_0 : i32, i32
  }
  func.func @transform_7(%arg0: i32) -> (i32, i32) {
    %c0_i32 = arith.constant 0 : i32
    %c0_i32_0 = arith.constant 0 : i32
    %c0_i32_1 = arith.constant 0 : i32
    return %c0_i32, %c0_i32_0 : i32, i32
  }
  func.func @transform_8(%arg0: i32) -> (i32, i32) {
    %c0_i32 = arith.constant 0 : i32
    %c0_i32_0 = arith.constant 0 : i32
    %c0_i32_1 = arith.constant 0 : i32
    return %c0_i32, %c0_i32_0 : i32, i32
  }
  func.func @transform_9(%arg0: i32) -> (i32, i32) {
    %c0_i32 = arith.constant 0 : i32
    %c0_i32_0 = arith.constant 0 : i32
    %c0_i32_1 = arith.constant 0 : i32
    return %c0_i32, %c0_i32_0 : i32, i32
  }
  func.func @transform_10(%arg0: i32) -> (i32, i32) {
    %c0_i32 = arith.constant 0 : i32
    %c0_i32_0 = arith.constant 0 : i32
    %c0_i32_1 = arith.constant 0 : i32
    return %c0_i32, %c0_i32_0 : i32, i32
  }
  func.func @transform_11(%arg0: i32) -> (i32, i32) {
    %c0_i32 = arith.constant 0 : i32
    %c0_i32_0 = arith.constant 0 : i32
    %c0_i32_1 = arith.constant 0 : i32
    return %c0_i32, %c0_i32_0 : i32, i32
  }
  func.func @transform_12(%arg0: i32) -> (i32, i32, i32) {
    %c0_i32 = arith.constant 0 : i32
    %c0_i32_0 = arith.constant 0 : i32
    %c0_i32_1 = arith.constant 0 : i32
    %c0_i32_2 = arith.constant 0 : i32
    return %c0_i32, %c0_i32_0, %c0_i32_1 : i32, i32, i32
  }
  func.func @transform_13(%arg0: i32) -> (i32, i32, i32) {
    %c0_i32 = arith.constant 0 : i32
    %c0_i32_0 = arith.constant 0 : i32
    %c0_i32_1 = arith.constant 0 : i32
    %c0_i32_2 = arith.constant 0 : i32
    return %c0_i32, %c0_i32_0, %c0_i32_1 : i32, i32, i32
  }
  func.func @transform_14(%arg0: i32) -> (i32, i32, i32) {
    %c0_i32 = arith.constant 0 : i32
    %c0_i32_0 = arith.constant 0 : i32
    %c0_i32_1 = arith.constant 0 : i32
    %c0_i32_2 = arith.constant 0 : i32
    return %c0_i32, %c0_i32_0, %c0_i32_1 : i32, i32, i32
  }
  func.func @transform_15(%arg0: i32) -> (i32, i32, i32) {
    %c0_i32 = arith.constant 0 : i32
    %c0_i32_0 = arith.constant 0 : i32
    %c0_i32_1 = arith.constant 0 : i32
    %c0_i32_2 = arith.constant 0 : i32
    return %c0_i32, %c0_i32_0, %c0_i32_1 : i32, i32, i32
  }
  func.func @transform_16(%arg0: i32) -> (i32, i32, i32) {
    %c0_i32 = arith.constant 0 : i32
    %c0_i32_0 = arith.constant 0 : i32
    %c0_i32_1 = arith.constant 0 : i32
    %c0_i32_2 = arith.constant 0 : i32
    return %c0_i32, %c0_i32_0, %c0_i32_1 : i32, i32, i32
  }
  func.func @transform_17(%arg0: i32) -> (i32, i32, i32) {
    %c0_i32 = arith.constant 0 : i32
    %c0_i32_0 = arith.constant 0 : i32
    %c0_i32_1 = arith.constant 0 : i32
    %c0_i32_2 = arith.constant 0 : i32
    return %c0_i32, %c0_i32_0, %c0_i32_1 : i32, i32, i32
  }
  func.func @transform_18(%arg0: i32) -> (i32, i32, i32) {
    %c0_i32 = arith.constant 0 : i32
    %c0_i32_0 = arith.constant 0 : i32
    %c0_i32_1 = arith.constant 0 : i32
    %c0_i32_2 = arith.constant 0 : i32
    return %c0_i32, %c0_i32_0, %c0_i32_1 : i32, i32, i32
  }
  func.func @transform_19(%arg0: i32) -> (i32, i32, i32) {
    %c0_i32 = arith.constant 0 : i32
    %c0_i32_0 = arith.constant 0 : i32
    %c0_i32_1 = arith.constant 0 : i32
    %c0_i32_2 = arith.constant 0 : i32
    return %c0_i32, %c0_i32_0, %c0_i32_1 : i32, i32, i32
  }
  func.func @transform_20(%arg0: i32) -> (i32, i32, i32) {
    %c0_i32 = arith.constant 0 : i32
    %c0_i32_0 = arith.constant 0 : i32
    %c0_i32_1 = arith.constant 0 : i32
    %c0_i32_2 = arith.constant 0 : i32
    return %c0_i32, %c0_i32_0, %c0_i32_1 : i32, i32, i32
  }
  func.func @transform_21(%arg0: i32) -> (i32, i32, i32) {
    %c0_i32 = arith.constant 0 : i32
    %c0_i32_0 = arith.constant 0 : i32
    %c0_i32_1 = arith.constant 0 : i32
    %c0_i32_2 = arith.constant 0 : i32
    return %c0_i32, %c0_i32_0, %c0_i32_1 : i32, i32, i32
  }
  func.func @transform_22(%arg0: i32) -> (i32, i32, i32) {
    %c0_i32 = arith.constant 0 : i32
    %c0_i32_0 = arith.constant 0 : i32
    %c0_i32_1 = arith.constant 0 : i32
    return %arg0, %c0_i32, %c0_i32_0 : i32, i32, i32
  }
}

</mosaic_0001>

<llo_original>
// kernel: tpu_custom_call.1
$region0: #{tpu_custom_call.1}
  #allocation0 [shape = 'u32[]', space=smem, size = 0x4, offset = 0x4, fixed_abs, tag = 'smem constant byte address 0x4 - core index']
  #allocation1 [shape = 'u32[72,128]{1,0:T(1,128)}', space=vmem, size = 0x9000, scoped, tag = 'internal scratch']
  %s0 = inlined_call_operand.vmem [shape: f32[2,24,48], index: 0, kind: input, shape index: {}]
  %s1 = inlined_call_operand.hbm [shape: f32[24,32], index: 1, kind: input, shape index: {}]
  %s2 = inlined_call_operand.vmem [shape: f32[24,1], index: 2, kind: input, shape index: {}]
  %s3 = inlined_call_operand.vmem [shape: bf16[48,32], index: 3, kind: input, shape index: {}]
  %s4 = inlined_call_operand.vmem [shape: f32[1,32], index: 4, kind: input, shape index: {}]
  %s5 = inlined_call_operand.hbm [shape: f32[24,24], index: 5, kind: input, shape index: {}]
  %s6 = inlined_call_operand.hbm [shape: f32[1,24], index: 6, kind: input, shape index: {}]
  %s7 = inlined_call_operand.vmem [shape: f32[24,1], index: 7, kind: input, shape index: {}]
  %s8 = inlined_call_operand.hbm [shape: f32[1,32], index: 8, kind: input, shape index: {}]
  %s9 = inlined_call_operand.hbm [shape: f32[1,32], index: 9, kind: input, shape index: {}]
  %s10 = inlined_call_operand.vmem [shape: bf16[32,10], index: 10, kind: input, shape index: {}]
  %s11 = inlined_call_operand.hbm [shape: f32[1,10], index: 11, kind: input, shape index: {}]
  %s12 = inlined_call_operand.vmem [shape: f32[2,1,32], index: 12, kind: input, shape index: {}]
  %s13 = inlined_call_operand.vmem [shape: f32[2,1,32], index: 13, kind: input, shape index: {}]
  %s14 = inlined_call_operand.vmem [shape: bf16[2,32,192], index: 14, kind: input, shape index: {}]
  %s15 = inlined_call_operand.vmem [shape: f32[2,1,192], index: 15, kind: input, shape index: {}]
  %s16 = inlined_call_operand.vmem [shape: f32[2,1,32], index: 16, kind: input, shape index: {}]
  %s17 = inlined_call_operand.vmem [shape: f32[2,1,32], index: 17, kind: input, shape index: {}]
  %s18 = inlined_call_operand.vmem [shape: bf16[2,32,64], index: 18, kind: input, shape index: {}]
  %s19 = inlined_call_operand.vmem [shape: f32[2,1,64], index: 19, kind: input, shape index: {}]
  %s20 = inlined_call_operand.vmem [shape: bf16[2,64,32], index: 20, kind: input, shape index: {}]
  %s21 = inlined_call_operand.vmem [shape: f32[2,1,32], index: 21, kind: input, shape index: {}]
  %s22 = inlined_call_operand.hbm [shape: f32[2,1,10], index: 22, kind: output, shape index: {}]
  %s23 = sld [smem:[#allocation0]]
  $region145: #{tpu_custom_call.1} parent=0
    _
  %s25 = ssub.s32 1, %s23
  %s26 = scalar_select 0, %s25, %s23
  $region1: #{tpu_custom_call.1} parent=0
    #allocation2 [shape = 'u8[12288]{0}', space=vmem, size = 0x3000, scoped, tag = 'input window, operand 1, single buffered']
    #allocation3 [shape = 's32[2]{0}', space=sflag, size = 0x8, scoped, tag = 'scoped memory for tpu_custom_call.1']
    #allocation4 [shape = 's32[2]{0}', space=sflag, size = 0x8, scoped, tag = 'scoped memory for tpu_custom_call.1']
    #allocation5 [shape = 'u8[12288]{0}', space=vmem, size = 0x3000, scoped, tag = 'input window, operand 5, single buffered']
    #allocation6 [shape = 's32[1]{0}', space=sflag, size = 0x4, scoped, tag = 'scoped memory for tpu_custom_call.1']
    #allocation7 [shape = 'u8[512]{0}', space=vmem, size = 0x400, scoped, tag = 'input window, operand 6, single buffered']
    #allocation8 [shape = 'u8[512]{0}', space=vmem, size = 0x400, scoped, tag = 'input window, operand 8, single buffered']
    #allocation9 [shape = 's32[1]{0}', space=sflag, size = 0x4, scoped, tag = 'scoped memory for tpu_custom_call.1']
    #allocation10 [shape = 'u8[512]{0}', space=vmem, size = 0x400, scoped, tag = 'input window, operand 9, single buffered']
    #allocation11 [shape = 'u8[512]{0}', space=vmem, size = 0x400, scoped, tag = 'input window, operand 11, single buffered']
    #allocation12 [shape = 's32[1]{0}', space=sflag, size = 0x4, scoped, tag = 'scoped memory for tpu_custom_call.1']
    #allocation13 [shape = 'u8[1024]{0}', space=vmem, size = 0x400, scoped, tag = 'output window, operand 0']
    %27 = vsyncpa [#allocation3], 0
    %28 = vsyncpa [#allocation6], 0
    %29 = vsyncpa [#allocation9], 0
    %30 = vsyncpa [#allocation12], 0
    %31 = vsyncpa [#allocation4], 0
    %s32 = scalar_lea.sflag [#allocation4], 1
    %33 = vsyncpa %s32, 0
    loop: start=0, step=1, limit=4
    $region2: #{tpu_custom_call.1} parent=1 // loop_pre_header
      _
    $region3: #{tpu_custom_call.1} parent=1 // loop_header
      %s35 = sphi 0, %s39
      %p36 = scmp.ge.s32.totalorder %s35, 4
      %s45 = sphi 0, %s47
      %s48 = sphi 0, %s45
      %s49 = sphi 0, %s48
      %s65 = sphi 0, %s49
      %s69 = sphi 0, %s69
      %s71 = sphi 0, %s69
      %s72 = sphi 0, %s71
      %s86 = sphi 0, %s72
      %s90 = sphi 0, %s90
      %s92 = sphi 0, %s90
      %s93 = sphi 0, %s92
      %s107 = sphi 0, %s93
      %s111 = sphi 0, %s111
      %s113 = sphi 0, %s111
      %s114 = sphi 0, %s113
      %s128 = sphi 0, %s114
      %s132 = sphi 0, %s132
      %s134 = sphi 0, %s132
      %s135 = sphi 0, %s134
      %s149 = sphi 0, %s135
      %s153 = sphi 0, %s153
      %s155 = sphi 0, %s153
      %s156 = sphi 0, %s155
      %s170 = sphi 0, %s156
      %s174 = sphi 0, %s174
      %s176 = sphi 0, %s174
      %s177 = sphi 0, %s176
      %s191 = sphi 0, %s177
      %s195 = sphi 0, %s195
      %s197 = sphi 0, %s195
      %s198 = sphi 0, %s197
      %s212 = sphi 0, %s198
      %s216 = sphi 0, %s216
      %s218 = sphi 0, %s216
      %s219 = sphi 0, %s218
      %s233 = sphi 0, %s219
      %s237 = sphi 0, %s237
      %s239 = sphi 0, %s237
      %s240 = sphi 0, %s239
      %s254 = sphi 0, %s240
      %s258 = sphi 0, %s258
      %s260 = sphi 0, %s258
      %s261 = sphi 0, %s260
      %s275 = sphi 0, %s261
      %s279 = sphi 0, %s279
      %s281 = sphi 0, %s279
      %s282 = sphi 0, %s281
      %s296 = sphi 0, %s282
      %s300 = sphi 0, %s300
      %s302 = sphi 0, %s300
      %s303 = sphi 0, %s302
      %s317 = sphi 0, %s303
      %s321 = sphi 0, %s321
      %s323 = sphi 0, %s321
      %s324 = sphi 0, %s323
      %s338 = sphi 0, %s324
      %s342 = sphi 0, %s342
      %s344 = sphi 0, %s342
      %s345 = sphi 0, %s344
      %s359 = sphi 0, %s345
      %s363 = sphi 0, %s363
      %s365 = sphi 0, %s363
      %s366 = sphi 0, %s365
      %s380 = sphi 0, %s366
      %s384 = sphi 0, %s384
      %s386 = sphi 0, %s384
      %s387 = sphi 0, %s386
      %s401 = sphi 0, %s387
      %s405 = sphi 0, %s405
      %s407 = sphi 0, %s405
      %s408 = sphi 0, %s407
      %s422 = sphi 0, %s408
      %s426 = sphi 0, %s426
      %s428 = sphi 0, %s426
      %s429 = sphi 0, %s428
      %s443 = sphi 0, %s429
      %s447 = sphi 0, %s447
      %s449 = sphi 0, %s447
      %s450 = sphi 0, %s449
      %s464 = sphi 0, %s450
      %s468 = sphi 0, %s468
      %s470 = sphi 0, %s468
      %s471 = sphi 0, %s470
      %s485 = sphi 0, %s471
      %s489 = sphi 0, %s489
      %s491 = sphi 0, %s489
      %s492 = sphi 0, %s491
      %s506 = sphi 0, %s492
      %s512 = sphi 0, %s514
      %s515 = sphi 0, %s512
      %s516 = sphi 0, %s515
      %s532 = sphi 0, %s516
    $region4: #{tpu_custom_call.1} parent=1 // loop_header_branch
      %38 = sbr.rel (%p36) target = $region8
    $region5: #{tpu_custom_call.1} parent=1 // loop_body
      %s40 = ssub.s32 %s35, 1
      %s41 = ssub.s32 %s35, 2
      %s42 = sadd.s32 %s35, 1
      %s43 = ssub.s32 %s35, %s42
      %p44 = scmp.eq.s32.totalorder %s43, 0
      %s46 = sadd.s32 %s45, 1
      %s47 = scalar_select %p44, %s45, %s46
      %p50 = pneg %p44
      %p51 = scmp.eq.s32.totalorder %s35, 1
      %p52 = por %p50, %p51
      %p53 = scmp.ne.s32.totalorder %s45, %s48
      %p54 = scmp.eq.s32.totalorder %s35, 0
      %p55 = por %p53, %p54
      %p56 = scmp.ne.s32.totalorder %s45, %s48
      %p57 = scmp.eq.s32.totalorder %s40, 1
      %p58 = por %p56, %p57
      %p59 = scmp.ne.s32.totalorder %s48, %s49
      %p60 = scmp.eq.s32.totalorder %s40, 0
      %p61 = por %p59, %p60
      %p62 = scmp.ne.s32.totalorder %s48, %s49
      %p63 = scmp.eq.s32.totalorder %s41, 1
      %p64 = por %p62, %p63
      %p66 = scmp.ne.s32.totalorder %s49, %s65
      %p67 = scmp.eq.s32.totalorder %s41, 0
      %p68 = por %p66, %p67
      %s70 = sadd.s32 %s69, 1
      %p73 = scmp.eq.s32.totalorder %s35, 1
      %p74 = scmp.ne.s32.totalorder %s69, %s71
      %p75 = scmp.eq.s32.totalorder %s35, 0
      %p76 = por %p74, %p75
      %p77 = scmp.ne.s32.totalorder %s69, %s71
      %p78 = scmp.eq.s32.totalorder %s40, 1
      %p79 = por %p77, %p78
      %p80 = scmp.ne.s32.totalorder %s71, %s72
      %p81 = scmp.eq.s32.totalorder %s40, 0
      %p82 = por %p80, %p81
      %p83 = scmp.ne.s32.totalorder %s71, %s72
      %p84 = scmp.eq.s32.totalorder %s41, 1
      %p85 = por %p83, %p84
      %p87 = scmp.ne.s32.totalorder %s72, %s86
      %p88 = scmp.eq.s32.totalorder %s41, 0
      %p89 = por %p87, %p88
      %s91 = sadd.s32 %s90, 1
      %p94 = scmp.eq.s32.totalorder %s35, 1
      %p95 = scmp.ne.s32.totalorder %s90, %s92
      %p96 = scmp.eq.s32.totalorder %s35, 0
      %p97 = por %p95, %p96
      %p98 = scmp.ne.s32.totalorder %s90, %s92
      %p99 = scmp.eq.s32.totalorder %s40, 1
      %p100 = por %p98, %p99
      %p101 = scmp.ne.s32.totalorder %s92, %s93
      %p102 = scmp.eq.s32.totalorder %s40, 0
      %p103 = por %p101, %p102
      %p104 = scmp.ne.s32.totalorder %s92, %s93
      %p105 = scmp.eq.s32.totalorder %s41, 1
      %p106 = por %p104, %p105
      %p108 = scmp.ne.s32.totalorder %s93, %s107
      %p109 = scmp.eq.s32.totalorder %s41, 0
      %p110 = por %p108, %p109
      %s112 = sadd.s32 %s111, 1
      %p115 = scmp.eq.s32.totalorder %s35, 1
      %p116 = scmp.ne.s32.totalorder %s111, %s113
      %p117 = scmp.eq.s32.totalorder %s35, 0
      %p118 = por %p116, %p117
      %p119 = scmp.ne.s32.totalorder %s111, %s113
      %p120 = scmp.eq.s32.totalorder %s40, 1
      %p121 = por %p119, %p120
      %p122 = scmp.ne.s32.totalorder %s113, %s114
      %p123 = scmp.eq.s32.totalorder %s40, 0
      %p124 = por %p122, %p123
      %p125 = scmp.ne.s32.totalorder %s113, %s114
      %p126 = scmp.eq.s32.totalorder %s41, 1
      %p127 = por %p125, %p126
      %p129 = scmp.ne.s32.totalorder %s114, %s128
      %p130 = scmp.eq.s32.totalorder %s41, 0
      %p131 = por %p129, %p130
      %s133 = sadd.s32 %s132, 1
      %p136 = scmp.eq.s32.totalorder %s35, 1
      %p137 = scmp.ne.s32.totalorder %s132, %s134
      %p138 = scmp.eq.s32.totalorder %s35, 0
      %p139 = por %p137, %p138
      %p140 = scmp.ne.s32.totalorder %s132, %s134
      %p141 = scmp.eq.s32.totalorder %s40, 1
      %p142 = por %p140, %p141
      %p143 = scmp.ne.s32.totalorder %s134, %s135
      %p144 = scmp.eq.s32.totalorder %s40, 0
      %p145 = por %p143, %p144
      %p146 = scmp.ne.s32.totalorder %s134, %s135
      %p147 = scmp.eq.s32.totalorder %s41, 1
      %p148 = por %p146, %p147
      %p150 = scmp.ne.s32.totalorder %s135, %s149
      %p151 = scmp.eq.s32.totalorder %s41, 0
      %p152 = por %p150, %p151
      %s154 = sadd.s32 %s153, 1
      %p157 = scmp.eq.s32.totalorder %s35, 1
      %p158 = scmp.ne.s32.totalorder %s153, %s155
      %p159 = scmp.eq.s32.totalorder %s35, 0
      %p160 = por %p158, %p159
      %p161 = scmp.ne.s32.totalorder %s153, %s155
      %p162 = scmp.eq.s32.totalorder %s40, 1
      %p163 = por %p161, %p162
      %p164 = scmp.ne.s32.totalorder %s155, %s156
      %p165 = scmp.eq.s32.totalorder %s40, 0
      %p166 = por %p164, %p165
      %p167 = scmp.ne.s32.totalorder %s155, %s156
      %p168 = scmp.eq.s32.totalorder %s41, 1
      %p169 = por %p167, %p168
      %p171 = scmp.ne.s32.totalorder %s156, %s170
      %p172 = scmp.eq.s32.totalorder %s41, 0
      %p173 = por %p171, %p172
      %s175 = sadd.s32 %s174, 1
      %p178 = scmp.eq.s32.totalorder %s35, 1
      %p179 = scmp.ne.s32.totalorder %s174, %s176
      %p180 = scmp.eq.s32.totalorder %s35, 0
      %p181 = por %p179, %p180
      %p182 = scmp.ne.s32.totalorder %s174, %s176
      %p183 = scmp.eq.s32.totalorder %s40, 1
      %p184 = por %p182, %p183
      %p185 = scmp.ne.s32.totalorder %s176, %s177
      %p186 = scmp.eq.s32.totalorder %s40, 0
      %p187 = por %p185, %p186
      %p188 = scmp.ne.s32.totalorder %s176, %s177
      %p189 = scmp.eq.s32.totalorder %s41, 1
      %p190 = por %p188, %p189
      %p192 = scmp.ne.s32.totalorder %s177, %s191
      %p193 = scmp.eq.s32.totalorder %s41, 0
      %p194 = por %p192, %p193
      %s196 = sadd.s32 %s195, 1
      %p199 = scmp.eq.s32.totalorder %s35, 1
      %p200 = scmp.ne.s32.totalorder %s195, %s197
      %p201 = scmp.eq.s32.totalorder %s35, 0
      %p202 = por %p200, %p201
      %p203 = scmp.ne.s32.totalorder %s195, %s197
      %p204 = scmp.eq.s32.totalorder %s40, 1
      %p205 = por %p203, %p204
      %p206 = scmp.ne.s32.totalorder %s197, %s198
      %p207 = scmp.eq.s32.totalorder %s40, 0
      %p208 = por %p206, %p207
      %p209 = scmp.ne.s32.totalorder %s197, %s198
      %p210 = scmp.eq.s32.totalorder %s41, 1
      %p211 = por %p209, %p210
      %p213 = scmp.ne.s32.totalorder %s198, %s212
      %p214 = scmp.eq.s32.totalorder %s41, 0
      %p215 = por %p213, %p214
      %s217 = sadd.s32 %s216, 1
      %p220 = scmp.eq.s32.totalorder %s35, 1
      %p221 = scmp.ne.s32.totalorder %s216, %s218
      %p222 = scmp.eq.s32.totalorder %s35, 0
      %p223 = por %p221, %p222
      %p224 = scmp.ne.s32.totalorder %s216, %s218
      %p225 = scmp.eq.s32.totalorder %s40, 1
      %p226 = por %p224, %p225
      %p227 = scmp.ne.s32.totalorder %s218, %s219
      %p228 = scmp.eq.s32.totalorder %s40, 0
      %p229 = por %p227, %p228
      %p230 = scmp.ne.s32.totalorder %s218, %s219
      %p231 = scmp.eq.s32.totalorder %s41, 1
      %p232 = por %p230, %p231
      %p234 = scmp.ne.s32.totalorder %s219, %s233
      %p235 = scmp.eq.s32.totalorder %s41, 0
      %p236 = por %p234, %p235
      %s238 = sadd.s32 %s237, 1
      %p241 = scmp.eq.s32.totalorder %s35, 1
      %p242 = scmp.ne.s32.totalorder %s237, %s239
      %p243 = scmp.eq.s32.totalorder %s35, 0
      %p244 = por %p242, %p243
      %p245 = scmp.ne.s32.totalorder %s237, %s239
      %p246 = scmp.eq.s32.totalorder %s40, 1
      %p247 = por %p245, %p246
      %p248 = scmp.ne.s32.totalorder %s239, %s240
      %p249 = scmp.eq.s32.totalorder %s40, 0
      %p250 = por %p248, %p249
      %p251 = scmp.ne.s32.totalorder %s239, %s240
      %p252 = scmp.eq.s32.totalorder %s41, 1
      %p253 = por %p251, %p252
      %p255 = scmp.ne.s32.totalorder %s240, %s254
      %p256 = scmp.eq.s32.totalorder %s41, 0
      %p257 = por %p255, %p256
      %s259 = sadd.s32 %s258, 1
      %p262 = scmp.eq.s32.totalorder %s35, 1
      %p263 = scmp.ne.s32.totalorder %s258, %s260
      %p264 = scmp.eq.s32.totalorder %s35, 0
      %p265 = por %p263, %p264
      %p266 = scmp.ne.s32.totalorder %s258, %s260
      %p267 = scmp.eq.s32.totalorder %s40, 1
      %p268 = por %p266, %p267
      %p269 = scmp.ne.s32.totalorder %s260, %s261
      %p270 = scmp.eq.s32.totalorder %s40, 0
      %p271 = por %p269, %p270
      %p272 = scmp.ne.s32.totalorder %s260, %s261
      %p273 = scmp.eq.s32.totalorder %s41, 1
      %p274 = por %p272, %p273
      %p276 = scmp.ne.s32.totalorder %s261, %s275
      %p277 = scmp.eq.s32.totalorder %s41, 0
      %p278 = por %p276, %p277
      %s280 = sadd.s32 %s279, 1
      %p283 = scmp.eq.s32.totalorder %s35, 1
      %p284 = scmp.ne.s32.totalorder %s279, %s281
      %p285 = scmp.eq.s32.totalorder %s35, 0
      %p286 = por %p284, %p285
      %p287 = scmp.ne.s32.totalorder %s279, %s281
      %p288 = scmp.eq.s32.totalorder %s40, 1
      %p289 = por %p287, %p288
      %p290 = scmp.ne.s32.totalorder %s281, %s282
      %p291 = scmp.eq.s32.totalorder %s40, 0
      %p292 = por %p290, %p291
      %p293 = scmp.ne.s32.totalorder %s281, %s282
      %p294 = scmp.eq.s32.totalorder %s41, 1
      %p295 = por %p293, %p294
      %p297 = scmp.ne.s32.totalorder %s282, %s296
      %p298 = scmp.eq.s32.totalorder %s41, 0
      %p299 = por %p297, %p298
      %s301 = sadd.s32 %s300, 1
      %p304 = scmp.eq.s32.totalorder %s35, 1
      %p305 = scmp.ne.s32.totalorder %s300, %s302
      %p306 = scmp.eq.s32.totalorder %s35, 0
      %p307 = por %p305, %p306
      %p308 = scmp.ne.s32.totalorder %s300, %s302
      %p309 = scmp.eq.s32.totalorder %s40, 1
      %p310 = por %p308, %p309
      %p311 = scmp.ne.s32.totalorder %s302, %s303
      %p312 = scmp.eq.s32.totalorder %s40, 0
      %p313 = por %p311, %p312
      %p314 = scmp.ne.s32.totalorder %s302, %s303
      %p315 = scmp.eq.s32.totalorder %s41, 1
      %p316 = por %p314, %p315
      %p318 = scmp.ne.s32.totalorder %s303, %s317
      %p319 = scmp.eq.s32.totalorder %s41, 0
      %p320 = por %p318, %p319
      %s322 = sadd.s32 %s321, 1
      %p325 = scmp.eq.s32.totalorder %s35, 1
      %p326 = scmp.ne.s32.totalorder %s321, %s323
      %p327 = scmp.eq.s32.totalorder %s35, 0
      %p328 = por %p326, %p327
      %p329 = scmp.ne.s32.totalorder %s321, %s323
      %p330 = scmp.eq.s32.totalorder %s40, 1
      %p331 = por %p329, %p330
      %p332 = scmp.ne.s32.totalorder %s323, %s324
      %p333 = scmp.eq.s32.totalorder %s40, 0
      %p334 = por %p332, %p333
      %p335 = scmp.ne.s32.totalorder %s323, %s324
      %p336 = scmp.eq.s32.totalorder %s41, 1
      %p337 = por %p335, %p336
      %p339 = scmp.ne.s32.totalorder %s324, %s338
      %p340 = scmp.eq.s32.totalorder %s41, 0
      %p341 = por %p339, %p340
      %s343 = sadd.s32 %s342, 1
      %p346 = scmp.eq.s32.totalorder %s35, 1
      %p347 = scmp.ne.s32.totalorder %s342, %s344
      %p348 = scmp.eq.s32.totalorder %s35, 0
      %p349 = por %p347, %p348
      %p350 = scmp.ne.s32.totalorder %s342, %s344
      %p351 = scmp.eq.s32.totalorder %s40, 1
      %p352 = por %p350, %p351
      %p353 = scmp.ne.s32.totalorder %s344, %s345
      %p354 = scmp.eq.s32.totalorder %s40, 0
      %p355 = por %p353, %p354
      %p356 = scmp.ne.s32.totalorder %s344, %s345
      %p357 = scmp.eq.s32.totalorder %s41, 1
      %p358 = por %p356, %p357
      %p360 = scmp.ne.s32.totalorder %s345, %s359
      %p361 = scmp.eq.s32.totalorder %s41, 0
      %p362 = por %p360, %p361
      %s364 = sadd.s32 %s363, 1
      %p367 = scmp.eq.s32.totalorder %s35, 1
      %p368 = scmp.ne.s32.totalorder %s363, %s365
      %p369 = scmp.eq.s32.totalorder %s35, 0
      %p370 = por %p368, %p369
      %p371 = scmp.ne.s32.totalorder %s363, %s365
      %p372 = scmp.eq.s32.totalorder %s40, 1
      %p373 = por %p371, %p372
      %p374 = scmp.ne.s32.totalorder %s365, %s366
      %p375 = scmp.eq.s32.totalorder %s40, 0
      %p376 = por %p374, %p375
      %p377 = scmp.ne.s32.totalorder %s365, %s366
      %p378 = scmp.eq.s32.totalorder %s41, 1
      %p379 = por %p377, %p378
      %p381 = scmp.ne.s32.totalorder %s366, %s380
      %p382 = scmp.eq.s32.totalorder %s41, 0
      %p383 = por %p381, %p382
      %s385 = sadd.s32 %s384, 1
      %p388 = scmp.eq.s32.totalorder %s35, 1
      %p389 = scmp.ne.s32.totalorder %s384, %s386
      %p390 = scmp.eq.s32.totalorder %s35, 0
      %p391 = por %p389, %p390
      %p392 = scmp.ne.s32.totalorder %s384, %s386
      %p393 = scmp.eq.s32.totalorder %s40, 1
      %p394 = por %p392, %p393
      %p395 = scmp.ne.s32.totalorder %s386, %s387
      %p396 = scmp.eq.s32.totalorder %s40, 0
      %p397 = por %p395, %p396
      %p398 = scmp.ne.s32.totalorder %s386, %s387
      %p399 = scmp.eq.s32.totalorder %s41, 1
      %p400 = por %p398, %p399
      %p402 = scmp.ne.s32.totalorder %s387, %s401
      %p403 = scmp.eq.s32.totalorder %s41, 0
      %p404 = por %p402, %p403
      %s406 = sadd.s32 %s405, 1
      %p409 = scmp.eq.s32.totalorder %s35, 1
      %p410 = scmp.ne.s32.totalorder %s405, %s407
      %p411 = scmp.eq.s32.totalorder %s35, 0
      %p412 = por %p410, %p411
      %p413 = scmp.ne.s32.totalorder %s405, %s407
      %p414 = scmp.eq.s32.totalorder %s40, 1
      %p415 = por %p413, %p414
      %p416 = scmp.ne.s32.totalorder %s407, %s408
      %p417 = scmp.eq.s32.totalorder %s40, 0
      %p418 = por %p416, %p417
      %p419 = scmp.ne.s32.totalorder %s407, %s408
      %p420 = scmp.eq.s32.totalorder %s41, 1
      %p421 = por %p419, %p420
      %p423 = scmp.ne.s32.totalorder %s408, %s422
      %p424 = scmp.eq.s32.totalorder %s41, 0
      %p425 = por %p423, %p424
      %s427 = sadd.s32 %s426, 1
      %p430 = scmp.eq.s32.totalorder %s35, 1
      %p431 = scmp.ne.s32.totalorder %s426, %s428
      %p432 = scmp.eq.s32.totalorder %s35, 0
      %p433 = por %p431, %p432
      %p434 = scmp.ne.s32.totalorder %s426, %s428
      %p435 = scmp.eq.s32.totalorder %s40, 1
      %p436 = por %p434, %p435
      %p437 = scmp.ne.s32.totalorder %s428, %s429
      %p438 = scmp.eq.s32.totalorder %s40, 0
      %p439 = por %p437, %p438
      %p440 = scmp.ne.s32.totalorder %s428, %s429
      %p441 = scmp.eq.s32.totalorder %s41, 1
      %p442 = por %p440, %p441
      %p444 = scmp.ne.s32.totalorder %s429, %s443
      %p445 = scmp.eq.s32.totalorder %s41, 0
      %p446 = por %p444, %p445
      %s448 = sadd.s32 %s447, 1
      %p451 = scmp.eq.s32.totalorder %s35, 1
      %p452 = scmp.ne.s32.totalorder %s447, %s449
      %p453 = scmp.eq.s32.totalorder %s35, 0
      %p454 = por %p452, %p453
      %p455 = scmp.ne.s32.totalorder %s447, %s449
      %p456 = scmp.eq.s32.totalorder %s40, 1
      %p457 = por %p455, %p456
      %p458 = scmp.ne.s32.totalorder %s449, %s450
      %p459 = scmp.eq.s32.totalorder %s40, 0
      %p460 = por %p458, %p459
      %p461 = scmp.ne.s32.totalorder %s449, %s450
      %p462 = scmp.eq.s32.totalorder %s41, 1
      %p463 = por %p461, %p462
      %p465 = scmp.ne.s32.totalorder %s450, %s464
      %p466 = scmp.eq.s32.totalorder %s41, 0
      %p467 = por %p465, %p466
      %s469 = sadd.s32 %s468, 1
      %p472 = scmp.eq.s32.totalorder %s35, 1
      %p473 = scmp.ne.s32.totalorder %s468, %s470
      %p474 = scmp.eq.s32.totalorder %s35, 0
      %p475 = por %p473, %p474
      %p476 = scmp.ne.s32.totalorder %s468, %s470
      %p477 = scmp.eq.s32.totalorder %s40, 1
      %p478 = por %p476, %p477
      %p479 = scmp.ne.s32.totalorder %s470, %s471
      %p480 = scmp.eq.s32.totalorder %s40, 0
      %p481 = por %p479, %p480
      %p482 = scmp.ne.s32.totalorder %s470, %s471
      %p483 = scmp.eq.s32.totalorder %s41, 1
      %p484 = por %p482, %p483
      %p486 = scmp.ne.s32.totalorder %s471, %s485
      %p487 = scmp.eq.s32.totalorder %s41, 0
      %p488 = por %p486, %p487
      %s490 = sadd.s32 %s489, 1
      %p493 = scmp.eq.s32.totalorder %s35, 1
      %p494 = scmp.ne.s32.totalorder %s489, %s491
      %p495 = scmp.eq.s32.totalorder %s35, 0
      %p496 = por %p494, %p495
      %p497 = scmp.ne.s32.totalorder %s489, %s491
      %p498 = scmp.eq.s32.totalorder %s40, 1
      %p499 = por %p497, %p498
      %p500 = scmp.ne.s32.totalorder %s491, %s492
      %p501 = scmp.eq.s32.totalorder %s40, 0
      %p502 = por %p500, %p501
      %p503 = scmp.ne.s32.totalorder %s491, %s492
      %p504 = scmp.eq.s32.totalorder %s41, 1
      %p505 = por %p503, %p504
      %p507 = scmp.ne.s32.totalorder %s492, %s506
      %p508 = scmp.eq.s32.totalorder %s41, 0
      %p509 = por %p507, %p508
      %s510 = ssub.s32 %s35, %s42
      %p511 = scmp.eq.s32.totalorder %s510, 0
      %s513 = sadd.s32 %s512, 1
      %s514 = scalar_select %p511, %s512, %s513
      %p517 = pneg %p511
      %p518 = scmp.eq.s32.totalorder %s35, 1
      %p519 = por %p517, %p518
      %p520 = scmp.ne.s32.totalorder %s512, %s515
      %p521 = scmp.eq.s32.totalorder %s35, 0
      %p522 = por %p520, %p521
      %p523 = scmp.ne.s32.totalorder %s512, %s515
      %p524 = scmp.eq.s32.totalorder %s40, 1
      %p525 = por %p523, %p524
      %p526 = scmp.ne.s32.totalorder %s515, %s516
      %p527 = scmp.eq.s32.totalorder %s40, 0
      %p528 = por %p526, %p527
      %p529 = scmp.ne.s32.totalorder %s515, %s516
      %p530 = scmp.eq.s32.totalorder %s41, 1
      %p531 = por %p529, %p530
      %p533 = scmp.ne.s32.totalorder %s516, %s532
      %p534 = scmp.eq.s32.totalorder %s41, 0
      %p535 = por %p533, %p534
      %p536 = scmp.le.s32.totalorder 1, %s35
      %p537 = scmp.lt.s32.totalorder %s35, 3
      %p538 = pnand %p536, %p537
      %p539 = pneg %p538
      // Predicated region
      $region9: #{tpu_custom_call.1} parent=5 // pred_check
        _
      $region10: #{tpu_custom_call.1} parent=5 // pred_check_branch
        %541 = sbr.rel (%p538) target = $region12
      $region11: #{tpu_custom_call.1} parent=5 // pred_region
        %s542 = ssub.s32 %s35, 1
        // Predicated region
        $region13: #{tpu_custom_call.1} parent=11 // pred_check
          %p543 = pneg %p82
        $region14: #{tpu_custom_call.1} parent=11 // pred_check_branch
          %545 = sbr.rel (%p543) target = $region16
        $region15: #{tpu_custom_call.1} parent=11 // pred_region
          %547 = vsyncadd [#allocation3], 0
          %s548 = sshll.u32 %s1, 4
          %s549 = int_to_ptr.hbm [resolvable:$true] %s548
          %s550 = sshll.u32 [#allocation2], 4
          %s551 = int_to_ptr.vmem [resolvable:$true] %s550
          %556 = dma.hbm_to_vmem [thread:$0]  %s549, 384, %s551, [#allocation3], 128, 128, 8
        $region16: #{tpu_custom_call.1} parent=11 // pred_fallthru
          _
        // Predicated region
        $region17: #{tpu_custom_call.1} parent=11 // pred_check
          %p557 = pneg %p103
        $region18: #{tpu_custom_call.1} parent=11 // pred_check_branch
          %559 = sbr.rel (%p557) target = $region20
        $region19: #{tpu_custom_call.1} parent=11 // pred_region
          _
        $region20: #{tpu_custom_call.1} parent=11 // pred_fallthru
          _
        // Predicated region
        $region21: #{tpu_custom_call.1} parent=11 // pred_check
          %p560 = pneg %p124
        $region22: #{tpu_custom_call.1} parent=11 // pred_check_branch
          %562 = sbr.rel (%p560) target = $region24
        $region23: #{tpu_custom_call.1} parent=11 // pred_region
          _
        $region24: #{tpu_custom_call.1} parent=11 // pred_fallthru
          _
        // Predicated region
        $region25: #{tpu_custom_call.1} parent=11 // pred_check
          %p563 = pneg %p145
        $region26: #{tpu_custom_call.1} parent=11 // pred_check_branch
          %565 = sbr.rel (%p563) target = $region28
        $region27: #{tpu_custom_call.1} parent=11 // pred_region
          _
        $region28: #{tpu_custom_call.1} parent=11 // pred_fallthru
          _
        // Predicated region
        $region29: #{tpu_custom_call.1} parent=11 // pred_check
          %p566 = pneg %p166
        $region30: #{tpu_custom_call.1} parent=11 // pred_check_branch
          %568 = sbr.rel (%p566) target = $region32
        $region31: #{tpu_custom_call.1} parent=11 // pred_region
          %570 = vsyncadd [#allocation6], 0
          %s571 = sshll.u32 %s5, 4
          %s572 = int_to_ptr.hbm [resolvable:$true] %s571
          %s573 = sshll.u32 [#allocation5], 4
          %s574 = int_to_ptr.vmem [resolvable:$true] %s573
          %579 = dma.hbm_to_vmem [thread:$0]  %s572, 384, %s574, [#allocation6], 128, 128, 8
        $region32: #{tpu_custom_call.1} parent=11 // pred_fallthru
          _
        // Predicated region
        $region33: #{tpu_custom_call.1} parent=11 // pred_check
          %p580 = pneg %p187
        $region34: #{tpu_custom_call.1} parent=11 // pred_check_branch
          %582 = sbr.rel (%p580) target = $region36
        $region35: #{tpu_custom_call.1} parent=11 // pred_region
          %584 = vsyncadd [#allocation6], 0
          %s586 = sshll.u32 %s6, 4
          %s587 = int_to_ptr.hbm [resolvable:$true] %s586
          %s588 = sshll.u32 [#allocation7], 4
          %s589 = int_to_ptr.vmem [resolvable:$true] %s588
          %591 = dma.hbm_to_vmem [thread:$0]  %s587, 16, %s589, [#allocation6]
        $region36: #{tpu_custom_call.1} parent=11 // pred_fallthru
          _
        // Predicated region
        $region37: #{tpu_custom_call.1} parent=11 // pred_check
          %p592 = pneg %p208
        $region38: #{tpu_custom_call.1} parent=11 // pred_check_branch
          %594 = sbr.rel (%p592) target = $region40
        $region39: #{tpu_custom_call.1} parent=11 // pred_region
          _
        $region40: #{tpu_custom_call.1} parent=11 // pred_fallthru
          _
        // Predicated region
        $region41: #{tpu_custom_call.1} parent=11 // pred_check
          %p595 = pneg %p229
        $region42: #{tpu_custom_call.1} parent=11 // pred_check_branch
          %597 = sbr.rel (%p595) target = $region44
        $region43: #{tpu_custom_call.1} parent=11 // pred_region
          %599 = vsyncadd [#allocation9], 0
          %s601 = sshll.u32 %s8, 4
          %s602 = int_to_ptr.hbm [resolvable:$true] %s601
          %s603 = sshll.u32 [#allocation8], 4
          %s604 = int_to_ptr.vmem [resolvable:$true] %s603
          %606 = dma.hbm_to_vmem [thread:$0]  %s602, 16, %s604, [#allocation9]
        $region44: #{tpu_custom_call.1} parent=11 // pred_fallthru
          _
        // Predicated region
        $region45: #{tpu_custom_call.1} parent=11 // pred_check
          %p607 = pneg %p250
        $region46: #{tpu_custom_call.1} parent=11 // pred_check_branch
          %609 = sbr.rel (%p607) target = $region48
        $region47: #{tpu_custom_call.1} parent=11 // pred_region
          %611 = vsyncadd [#allocation9], 0
          %s613 = sshll.u32 %s9, 4
          %s614 = int_to_ptr.hbm [resolvable:$true] %s613
          %s615 = sshll.u32 [#allocation10], 4
          %s616 = int_to_ptr.vmem [resolvable:$true] %s615
          %618 = dma.hbm_to_vmem [thread:$0]  %s614, 16, %s616, [#allocation9]
        $region48: #{tpu_custom_call.1} parent=11 // pred_fallthru
          _
        // Predicated region
        $region49: #{tpu_custom_call.1} parent=11 // pred_check
          %p619 = pneg %p271
        $region50: #{tpu_custom_call.1} parent=11 // pred_check_branch
          %621 = sbr.rel (%p619) target = $region52
        $region51: #{tpu_custom_call.1} parent=11 // pred_region
          _
        $region52: #{tpu_custom_call.1} parent=11 // pred_fallthru
          _
        // Predicated region
        $region53: #{tpu_custom_call.1} parent=11 // pred_check
          %p622 = pneg %p292
        $region54: #{tpu_custom_call.1} parent=11 // pred_check_branch
          %624 = sbr.rel (%p622) target = $region56
        $region55: #{tpu_custom_call.1} parent=11 // pred_region
          %626 = vsyncadd [#allocation12], 0
          %s628 = sshll.u32 %s11, 4
          %s629 = int_to_ptr.hbm [resolvable:$true] %s628
          %s630 = sshll.u32 [#allocation11], 4
          %s631 = int_to_ptr.vmem [resolvable:$true] %s630
          %633 = dma.hbm_to_vmem [thread:$0]  %s629, 16, %s631, [#allocation12]
        $region56: #{tpu_custom_call.1} parent=11 // pred_fallthru
          _
        // Predicated region
        $region57: #{tpu_custom_call.1} parent=11 // pred_check
          %p634 = pneg %p313
        $region58: #{tpu_custom_call.1} parent=11 // pred_check_branch
          %636 = sbr.rel (%p634) target = $region60
        $region59: #{tpu_custom_call.1} parent=11 // pred_region
          _
        $region60: #{tpu_custom_call.1} parent=11 // pred_fallthru
          _
        // Predicated region
        $region61: #{tpu_custom_call.1} parent=11 // pred_check
          %p637 = pneg %p334
        $region62: #{tpu_custom_call.1} parent=11 // pred_check_branch
          %639 = sbr.rel (%p637) target = $region64
        $region63: #{tpu_custom_call.1} parent=11 // pred_region
          _
        $region64: #{tpu_custom_call.1} parent=11 // pred_fallthru
          _
        // Predicated region
        $region65: #{tpu_custom_call.1} parent=11 // pred_check
          %p640 = pneg %p355
        $region66: #{tpu_custom_call.1} parent=11 // pred_check_branch
          %642 = sbr.rel (%p640) target = $region68
        $region67: #{tpu_custom_call.1} parent=11 // pred_region
          _
        $region68: #{tpu_custom_call.1} parent=11 // pred_fallthru
          _
        // Predicated region
        $region69: #{tpu_custom_call.1} parent=11 // pred_check
          %p643 = pneg %p376
        $region70: #{tpu_custom_call.1} parent=11 // pred_check_branch
          %645 = sbr.rel (%p643) target = $region72
        $region71: #{tpu_custom_call.1} parent=11 // pred_region
          _
        $region72: #{tpu_custom_call.1} parent=11 // pred_fallthru
          _
        // Predicated region
        $region73: #{tpu_custom_call.1} parent=11 // pred_check
          %p646 = pneg %p397
        $region74: #{tpu_custom_call.1} parent=11 // pred_check_branch
          %648 = sbr.rel (%p646) target = $region76
        $region75: #{tpu_custom_call.1} parent=11 // pred_region
          _
        $region76: #{tpu_custom_call.1} parent=11 // pred_fallthru
          _
        // Predicated region
        $region77: #{tpu_custom_call.1} parent=11 // pred_check
          %p649 = pneg %p418
        $region78: #{tpu_custom_call.1} parent=11 // pred_check_branch
          %651 = sbr.rel (%p649) target = $region80
        $region79: #{tpu_custom_call.1} parent=11 // pred_region
          _
        $region80: #{tpu_custom_call.1} parent=11 // pred_fallthru
          _
        // Predicated region
        $region81: #{tpu_custom_call.1} parent=11 // pred_check
          %p652 = pneg %p439
        $region82: #{tpu_custom_call.1} parent=11 // pred_check_branch
          %654 = sbr.rel (%p652) target = $region84
        $region83: #{tpu_custom_call.1} parent=11 // pred_region
          _
        $region84: #{tpu_custom_call.1} parent=11 // pred_fallthru
          _
        // Predicated region
        $region85: #{tpu_custom_call.1} parent=11 // pred_check
          %p655 = pneg %p460
        $region86: #{tpu_custom_call.1} parent=11 // pred_check_branch
          %657 = sbr.rel (%p655) target = $region88
        $region87: #{tpu_custom_call.1} parent=11 // pred_region
          _
        $region88: #{tpu_custom_call.1} parent=11 // pred_fallthru
          _
        // Predicated region
        $region89: #{tpu_custom_call.1} parent=11 // pred_check
          %p658 = pneg %p481
        $region90: #{tpu_custom_call.1} parent=11 // pred_check_branch
          %660 = sbr.rel (%p658) target = $region92
        $region91: #{tpu_custom_call.1} parent=11 // pred_region
          _
        $region92: #{tpu_custom_call.1} parent=11 // pred_fallthru
          _
        // Predicated region
        $region93: #{tpu_custom_call.1} parent=11 // pred_check
          %p661 = pneg %p502
        $region94: #{tpu_custom_call.1} parent=11 // pred_check_branch
          %663 = sbr.rel (%p661) target = $region96
        $region95: #{tpu_custom_call.1} parent=11 // pred_region
          _
        $region96: #{tpu_custom_call.1} parent=11 // pred_fallthru
          _
      $region12: #{tpu_custom_call.1} parent=5 // pred_fallthru
        _
      %p664 = scmp.lt.s32.totalorder %s35, 2
      // Predicated region
      $region97: #{tpu_custom_call.1} parent=5 // pred_check
        %p665 = pneg %p664
      $region98: #{tpu_custom_call.1} parent=5 // pred_check_branch
        %667 = sbr.rel (%p665) target = $region100
      $region99: #{tpu_custom_call.1} parent=5 // pred_region
        // Predicated region
        $region101: #{tpu_custom_call.1} parent=99 // pred_check
          %p668 = pneg %p55
        $region102: #{tpu_custom_call.1} parent=99 // pred_check_branch
          %670 = sbr.rel (%p668) target = $region104
        $region103: #{tpu_custom_call.1} parent=99 // pred_region
          %p671 = scmp.lt.s32.totalorder %s35, 1
          %s672 = scalar_select %p671, %s35, 1
          %s673 = smul.addr %s672, 3
          %s674 = smul.addr %s673, 8
          %s675 = scalar_lea.vmem %s0, %s674
        $region104: #{tpu_custom_call.1} parent=99 // pred_fallthru
          _
      $region100: #{tpu_custom_call.1} parent=5 // pred_fallthru
        _
      %p676 = scmp.le.s32.totalorder 1, %s35
      %p677 = scmp.lt.s32.totalorder %s35, 3
      %p678 = pnand %p676, %p677
      %p679 = pneg %p678
      // Predicated region
      $region105: #{tpu_custom_call.1} parent=5 // pred_check
        _
      $region106: #{tpu_custom_call.1} parent=5 // pred_check_branch
        %681 = sbr.rel (%p678) target = $region108
      $region107: #{tpu_custom_call.1} parent=5 // pred_region
        %s682 = ssub.s32 %s35, 1
        // Predicated region
        $region109: #{tpu_custom_call.1} parent=107 // pred_check
          %p683 = pneg %p82
        $region110: #{tpu_custom_call.1} parent=107 // pred_check_branch
          %685 = sbr.rel (%p683) target = $region112
        $region111: #{tpu_custom_call.1} parent=107 // pred_region
          %687 = dma.done [#allocation3], 384
        $region112: #{tpu_custom_call.1} parent=107 // pred_fallthru
          _
        // Predicated region
        $region113: #{tpu_custom_call.1} parent=107 // pred_check
          %p688 = pneg %p166
        $region114: #{tpu_custom_call.1} parent=107 // pred_check_branch
          %690 = sbr.rel (%p688) target = $region116
        $region115: #{tpu_custom_call.1} parent=107 // pred_region
          %692 = dma.done [#allocation6], 384
        $region116: #{tpu_custom_call.1} parent=107 // pred_fallthru
          _
        // Predicated region
        $region117: #{tpu_custom_call.1} parent=107 // pred_check
          %p693 = pneg %p187
        $region118: #{tpu_custom_call.1} parent=107 // pred_check_branch
          %695 = sbr.rel (%p693) target = $region120
        $region119: #{tpu_custom_call.1} parent=107 // pred_region
          %697 = dma.done [#allocation6], 16
        $region120: #{tpu_custom_call.1} parent=107 // pred_fallthru
          _
        // Predicated region
        $region121: #{tpu_custom_call.1} parent=107 // pred_check
          %p698 = pneg %p229
        $region122: #{tpu_custom_call.1} parent=107 // pred_check_branch
          %700 = sbr.rel (%p698) target = $region124
        $region123: #{tpu_custom_call.1} parent=107 // pred_region
          %702 = dma.done [#allocation9], 16
        $region124: #{tpu_custom_call.1} parent=107 // pred_fallthru
          _
        // Predicated region
        $region125: #{tpu_custom_call.1} parent=107 // pred_check
          %p703 = pneg %p250
        $region126: #{tpu_custom_call.1} parent=107 // pred_check_branch
          %705 = sbr.rel (%p703) target = $region128
        $region127: #{tpu_custom_call.1} parent=107 // pred_region
          %707 = dma.done [#allocation9], 16
        $region128: #{tpu_custom_call.1} parent=107 // pred_fallthru
          _
        // Predicated region
        $region129: #{tpu_custom_call.1} parent=107 // pred_check
          %p708 = pneg %p292
        $region130: #{tpu_custom_call.1} parent=107 // pred_check_branch
          %710 = sbr.rel (%p708) target = $region132
        $region131: #{tpu_custom_call.1} parent=107 // pred_region
          %712 = dma.done [#allocation12], 16
        $region132: #{tpu_custom_call.1} parent=107 // pred_fallthru
          _
        %p713 = scmp.lt.s32.totalorder %s40, 1
        %s714 = scalar_select %p713, %s40, 1
        %s715 = smul.addr %s714, 3
        %s716 = smul.addr %s715, 8
        %s717 = scalar_lea.vmem %s0, %s716
        %p718 = pneg %p61
        %p719 = pneg %p58
        %p720 = pneg %p82
        %p721 = pneg %p79
        %p722 = pneg %p103
        %p723 = pneg %p100
        %p724 = pneg %p124
        %p725 = pneg %p121
        %p726 = pneg %p145
        %p727 = pneg %p142
        %p728 = pneg %p166
        %p729 = pneg %p163
        %p730 = pneg %p187
        %p731 = pneg %p184
        %p732 = pneg %p208
        %p733 = pneg %p205
        %p734 = pneg %p229
        %p735 = pneg %p226
        %p736 = pneg %p250
        %p737 = pneg %p247
        %p738 = pneg %p271
        %p739 = pneg %p268
        %p740 = pneg %p292
        %p741 = pneg %p289
        %p742 = pneg %p313
        %p743 = pneg %p310
        %p744 = pneg %p334
        %p745 = pneg %p331
        %p746 = pneg %p355
        %p747 = pneg %p352
        %p748 = pneg %p376
        %p749 = pneg %p373
        %p750 = pneg %p397
        %p751 = pneg %p394
        %p752 = pneg %p418
        %p753 = pneg %p415
        %p754 = pneg %p439
        %p755 = pneg %p436
        %p756 = pneg %p460
        %p757 = pneg %p457
        %p758 = pneg %p481
        %p759 = pneg %p478
        %p760 = pneg %p502
        %p761 = pneg %p499
        %p762 = pneg %p528
        %p763 = pneg %p525
        %s764 = sand.u32 %s515, 1
        %s765 = scalar_lea.sflag [#allocation4], %s764
        %s766 = sand.u32 %s515, 1
        %s767 = scalar_lea.vmem [#allocation13], %s766
        %p768 = scmp.lt.s32.totalorder %s40, 1
        %s769 = scalar_select %p768, %s40, 1
        %s770 = smul.addr %s769, 3
        %s771 = smul.addr %s770, 8
        %s772 = scalar_lea.vmem %s0, %s771
        %v774 = vld [vmem:[%s772] sm:$0xff]
        %v775 = vld [vmem:[%s772 + $0x8] sm:$0xff]
        %v776 = vld [vmem:[%s772 + $0x10] sm:$0xff]
        %v777 = vpack.c.bf16 %v775, %v774
        %v778 = vpack.c.bf16 %v776, %v776
        %v779 = vld [vmem:[%s3] sm:$0xf]
        %v780 = vld [vmem:[%s3 + $0x4] sm:$0xf]
        %v781 = vld [vmem:[%s3 + $0x8] sm:$0xf]
        %v782 = vld [vmem:[%s3 + $0xc] sm:$0xf]
        %v783 = vld [vmem:[%s3 + $0x10] sm:$0xf]
        %v784 = vld [vmem:[%s3 + $0x14] sm:$0xf]
        %v785 = vld [vmem:[%s4] sm:$0x1]
        %v787 = vperm.slane %v785, 0
        %v795 = vunpack.c.l.b16 %v779
        %v796 = vunpack.c.l.b16 %v780
        %v797 = vunpack.c.l.b16 %v781
        %v798 = vunpack.c.l.b16 %v782
        %v799 = vunpack.c.l.b16 %v783
        %v800 = vunpack.c.l.b16 %v784
        %v801 = vpack.c.b16 %v796, %v795
        %v802 = vpack.c.b16 %v798, %v797
        %v803 = vpack.c.b16 %v800, %v799
        %vm807 = vcmask 392192
        %v809 = vsel %vm807, %v777, 0
        %v812 = vsel %vm807, %v778, 0
        %814 = vmatpush.bf16.msra.mxu0 0
        %815 = vmatpush.bf16.msra.mxu0 0
        %816 = vmatpush.bf16.msra.mxu0 0
        %817 = vmatpush.bf16.msra.mxu0 0
        %818 = vmatpush.bf16.msra.mxu0 0
        %819 = vmatpush.bf16.msra.mxu0 %v803
        %820 = vmatpush.bf16.msra.mxu0 %v802
        %821 = vmatpush.bf16.msra.mxu0 %v801
        %822 = vmatmul.bf16.gmra.mxu0 %v809
        %v823 = vpop.f32.mrf.mxu0
        %v824 = vadd.f32 %v787, %v823
        %v825 = vpop.f32.mrf.mxu0
        %v826 = vadd.f32 %v787, %v825
        %827 = vmatmul.bf16.gmra.mxu0 %v812
        %v828 = vpop.f32.mrf.mxu0
        %v829 = vadd.f32 %v787, %v828
        %v830 = vpop.f32.mrf.mxu0
        %831 = vdwg.mxu0
        %v832 = vld [vmem:[#allocation2] sm:$0xff]
        %v833 = vld [vmem:[#allocation2 + $0x8] sm:$0xff]
        %v834 = vld [vmem:[#allocation2 + $0x10] sm:$0xff]
        %v835 = vld [vmem:[%s2] sm:$0xff]
        %v836 = vld [vmem:[%s2 + $0x8] sm:$0xff]
        %v837 = vld [vmem:[%s2 + $0x10] sm:$0xff]
        %839 = vset.pattern.permute.xlu0 0
        %840 = vperm.xlu0 %839, %v835
        %v841 = vpop.permute.xlu0 %840
        %844 = vset.pattern.permute.xlu0 0
        %845 = vperm.xlu0 %844, %v836
        %v846 = vpop.permute.xlu0 %845
        %849 = vset.pattern.permute.xlu0 0
        %850 = vperm.xlu0 %849, %v837
        %v851 = vpop.permute.xlu0 %850
        %v853 = vmul.f32 %v841, %v824
        %v854 = vmul.f32 %v846, %v826
        %v855 = vmul.f32 %v851, %v829
        %v856 = vadd.f32 %v832, %v853
        %v857 = vadd.f32 %v833, %v854
        %v858 = vadd.f32 %v834, %v855
        %v859 = vld [vmem:[#allocation5] sm:$0xff]
        %v860 = vld [vmem:[#allocation5 + $0x8] sm:$0xff]
        %v861 = vld [vmem:[#allocation5 + $0x10] sm:$0xff]
        %v862 = vld [vmem:[#allocation7] sm:$0x1]
        %v863 = vld [vmem:[%s7] sm:$0xff]
        %v864 = vld [vmem:[%s7 + $0x8] sm:$0xff]
        %v865 = vld [vmem:[%s7 + $0x10] sm:$0xff]
        %v866 = vld [vmem:[%s12] sm:$0x1]
        %v867 = vld [vmem:[%s13] sm:$0x1]
        %vm868 = vcmask 261120
        %v869 = vsel %vm868, %v856, 0.0
        %870 = vadd.xlane.f32.xlu0 %v869
        %v871 = vpop.xlane.xlu0 %870
        %v872 = vsel %vm868, %v857, 0.0
        %873 = vadd.xlane.f32.xlu0 %v872
        %v874 = vpop.xlane.xlu0 %873
        %v875 = vsel %vm868, %v858, 0.0
        %876 = vadd.xlane.f32.xlu0 %v875
        %v877 = vpop.xlane.xlu0 %876
        %v878 = vrcp.pop 32.0
        %v879 = vmul.f32 32.0, %v878
        %v880 = vsub.f32 1.0, %v879
        %v881 = vmul.f32 %v878, %v880
        %v882 = vadd.f32 %v878, %v881
        %vm883 = vweird.f32 %v878
        %v884 = vsel %vm883, %v878, %v882
        %v885 = vmul.f32 %v871, %v884
        %v886 = vmul.f32 %v874, %v884
        %v887 = vmul.f32 %v877, %v884
        %v888 = vsub.f32 %v856, %v885
        %v889 = vsub.f32 %v857, %v886
        %v890 = vsub.f32 %v858, %v887
        %v891 = vmul.f32 %v888, %v888
        %v892 = vmul.f32 %v889, %v889
        %v893 = vmul.f32 %v890, %v890
        %v894 = vsel %vm868, %v891, 0.0
        %895 = vadd.xlane.f32.xlu0 %v894
        %v896 = vpop.xlane.xlu0 %895
        %v897 = vsel %vm868, %v892, 0.0
        %898 = vadd.xlane.f32.xlu0 %v897
        %v899 = vpop.xlane.xlu0 %898
        %v900 = vsel %vm868, %v893, 0.0
        %901 = vadd.xlane.f32.xlu0 %v900
        %v902 = vpop.xlane.xlu0 %901
        %v903 = vmul.f32 %v896, %v884
        %v904 = vmul.f32 %v899, %v884
        %v905 = vmul.f32 %v902, %v884
        %v906 = vadd.f32 %v903, 1e-05
        %v907 = vadd.f32 %v904, 1e-05
        %v908 = vadd.f32 %v905, 1e-05
        %v909 = vrsqrt.pop %v906
        %v910 = vmul.f32 %v909, %v906
        %v911 = vmul.f32 %v910, %v909
        %v912 = vmul.f32 0.5, %v911
        %v913 = vsub.f32 1.5, %v912
        %v914 = vmul.f32 %v909, %v913
        %vm915 = vweird.f32 %v906
        %vm916 = vweird.f32 %v909
        %vm917 = vmor %vm915, %vm916
        %v918 = vsel %vm917, %v909, %v914
        %v919 = vrsqrt.pop %v907
        %v920 = vmul.f32 %v919, %v907
        %v921 = vmul.f32 %v920, %v919
        %v922 = vmul.f32 0.5, %v921
        %v923 = vsub.f32 1.5, %v922
        %v924 = vmul.f32 %v919, %v923
        %vm925 = vweird.f32 %v907
        %vm926 = vweird.f32 %v919
        %vm927 = vmor %vm925, %vm926
        %v928 = vsel %vm927, %v919, %v924
        %v929 = vrsqrt.pop %v908
        %v930 = vmul.f32 %v929, %v908
        %v931 = vmul.f32 %v930, %v929
        %v932 = vmul.f32 0.5, %v931
        %v933 = vsub.f32 1.5, %v932
        %v934 = vmul.f32 %v929, %v933
        %vm935 = vweird.f32 %v908
        %vm936 = vweird.f32 %v929
        %vm937 = vmor %vm935, %vm936
        %v938 = vsel %vm937, %v929, %v934
        %v939 = vmul.f32 %v888, %v918
        %v940 = vmul.f32 %v889, %v928
        %v941 = vmul.f32 %v890, %v938
        %v943 = vperm.slane %v866, 0
        %v945 = vmul.f32 %v939, %v943
        %v946 = vmul.f32 %v940, %v943
        %v947 = vmul.f32 %v941, %v943
        %v949 = vperm.slane %v867, 0
        %v951 = vadd.f32 %v945, %v949
        %v952 = vadd.f32 %v946, %v949
        %v953 = vadd.f32 %v947, %v949
        %v954 = vpack.c.bf16 %v952, %v951
        %v955 = vpack.c.bf16 %v953, %v953
        %v956 = vld [vmem:[%s14] sm:$0xff]
        %v957 = vld [vmem:[%s14 + $0x8] sm:$0xff]
        %v958 = vld [vmem:[%s14 + $0x10] sm:$0xff]
        %v959 = vld [vmem:[%s14 + $0x18] sm:$0xff]
        %v960 = vld [vmem:[%s15] sm:$0x3]
        %v962 = vperm.slane %v960, 0
        %v963 = vperm.slane %v960, 1
        %v970 = vunpack.c.l.b16 %v956
        %v971 = vunpack.c.h.b16 %v956
        %v972 = vunpack.c.l.b16 %v957
        %v973 = vunpack.c.h.b16 %v957
        %v974 = vunpack.c.l.b16 %v958
        %v975 = vunpack.c.h.b16 %v958
        %v976 = vunpack.c.l.b16 %v959
        %v977 = vunpack.c.h.b16 %v959
        %v978 = vpack.c.b16 %v972, %v970
        %v979 = vpack.c.b16 %v973, %v971
        %v980 = vpack.c.b16 %v976, %v974
        %v981 = vpack.c.b16 %v977, %v975
        %v987 = vsel %vm868, %v954, 0
        %v990 = vsel %vm868, %v955, 0
        %992 = vmatpush.bf16.msra.mxu0 0
        %993 = vmatpush.bf16.msra.mxu0 0
        %994 = vmatpush.bf16.msra.mxu0 0
        %995 = vmatpush.bf16.msra.mxu0 0
        %996 = vmatpush.bf16.msra.mxu0 0
        %997 = vmatpush.bf16.msra.mxu0 0
        %998 = vmatpush.bf16.msra.mxu0 %v980
        %999 = vmatpush.bf16.msra.mxu0 %v978
        %1000 = vmatmul.bf16.gmra.mxu0 %v987
        %v1001 = vpop.f32.mrf.mxu0
        %v1002 = vadd.f32 %v962, %v1001
        %v1003 = vpop.f32.mrf.mxu0
        %v1004 = vadd.f32 %v962, %v1003
        %1005 = vmatmul.bf16.gmra.mxu0 %v990
        %v1006 = vpop.f32.mrf.mxu0
        %v1007 = vadd.f32 %v962, %v1006
        %v1008 = vpop.f32.mrf.mxu0
        %1009 = vdwg.mxu0
        %1010 = vmatpush.bf16.msra.mxu0 0
        %1011 = vmatpush.bf16.msra.mxu0 0
        %1012 = vmatpush.bf16.msra.mxu0 0
        %1013 = vmatpush.bf16.msra.mxu0 0
        %1014 = vmatpush.bf16.msra.mxu0 0
        %1015 = vmatpush.bf16.msra.mxu0 0
        %1016 = vmatpush.bf16.msra.mxu0 %v981
        %1017 = vmatpush.bf16.msra.mxu0 %v979
        %1018 = vmatmul.bf16.gmra.mxu0 %v987
        %v1019 = vpop.f32.mrf.mxu0
        %v1020 = vadd.f32 %v963, %v1019
        %v1021 = vpop.f32.mrf.mxu0
        %v1022 = vadd.f32 %v963, %v1021
        %1023 = vmatmul.bf16.gmra.mxu0 %v990
        %v1024 = vpop.f32.mrf.mxu0
        %v1025 = vadd.f32 %v963, %v1024
        %v1026 = vpop.f32.mrf.mxu0
        %1027 = vdwg.mxu0
        %v1028 = vmul.f32 %v1002, 0.35355338
        %v1029 = vmul.f32 %v1004, 0.35355338
        %v1030 = vmul.f32 %v1007, 0.35355338
        %1034 = vrot.lane.b32.xlu0 %v1028, 120
        %v1035 = vpop.permute.xlu0 %1034
        %1036 = vrot.lane.b32.xlu0 %v1029, 120
        %v1037 = vpop.permute.xlu0 %1036
        %1038 = vrot.lane.b32.xlu0 %v1030, 120
        %v1039 = vpop.permute.xlu0 %1038
        %1043 = vrot.lane.b32.xlu0 %v1028, 112
        %v1044 = vpop.permute.xlu0 %1043
        %1045 = vrot.lane.b32.xlu0 %v1029, 112
        %v1046 = vpop.permute.xlu0 %1045
        %1047 = vrot.lane.b32.xlu0 %v1030, 112
        %v1048 = vpop.permute.xlu0 %1047
        %1052 = vrot.lane.b32.xlu0 %v1028, 104
        %v1053 = vpop.permute.xlu0 %1052
        %1054 = vrot.lane.b32.xlu0 %v1029, 104
        %v1055 = vpop.permute.xlu0 %1054
        %1056 = vrot.lane.b32.xlu0 %v1030, 104
        %v1057 = vpop.permute.xlu0 %1056
        %v1061 = vrot.slane %v1044, 4
        %vm1062 = vcmask 1047556
        %v1063 = vsel %vm1062, %v1061, %v1028
        %v1064 = vrot.slane %v1028, 4
        %v1065 = vsel %vm1062, %v1044, %v1064
        %v1067 = vunpack.c.l.s4 1983009808
        %v1068 = vunpack.c.0.s8 %v1067
        %v1069 = vperm.slane %v1063, %v1068
        %v1071 = vunpack.c.l.s4 1983009808
        %v1072 = vunpack.c.0.s8 %v1071
        %v1073 = vperm.slane %v1065, %v1072
        %v1074 = vrot.slane %v1053, 4
        %v1075 = vsel %vm1062, %v1074, %v1035
        %v1076 = vrot.slane %v1035, 4
        %v1077 = vsel %vm1062, %v1053, %v1076
        %v1079 = vunpack.c.l.s4 1983009808
        %v1080 = vunpack.c.0.s8 %v1079
        %v1081 = vperm.slane %v1075, %v1080
        %v1083 = vunpack.c.l.s4 1983009808
        %v1084 = vunpack.c.0.s8 %v1083
        %v1085 = vperm.slane %v1077, %v1084
        %v1086 = vrot.slane %v1081, 4
        %v1087 = vsel %vm1062, %v1086, %v1069
        %v1088 = vrot.slane %v1069, 4
        %v1089 = vsel %vm1062, %v1081, %v1088
        %v1091 = vunpack.c.l.s4 1934713408
        %v1092 = vunpack.c.0.s8 %v1091
        %v1093 = vperm.slane %v1087, %v1092
        %v1095 = vunpack.c.l.s4 1934713408
        %v1096 = vunpack.c.0.s8 %v1095
        %v1097 = vperm.slane %v1089, %v1096
        %v1098 = vrot.slane %v1085, 4
        %v1099 = vsel %vm1062, %v1098, %v1073
        %v1100 = vrot.slane %v1073, 4
        %v1101 = vsel %vm1062, %v1085, %v1100
        %v1103 = vunpack.c.l.s4 1934713408
        %v1104 = vunpack.c.0.s8 %v1103
        %v1105 = vperm.slane %v1099, %v1104
        %v1107 = vunpack.c.l.s4 1934713408
        %v1108 = vunpack.c.0.s8 %v1107
        %v1109 = vperm.slane %v1101, %v1108
        %v1110 = vrot.slane %v1093, 4
        %v1111 = vsel %vm1062, 0.0, %v1110
        %v1112 = vrot.slane %v1097, 4
        %v1113 = vsel %vm1062, 0.0, %v1112
        %v1114 = vrot.slane %v1105, 4
        %v1115 = vsel %vm1062, 0.0, %v1114
        %v1116 = vrot.slane %v1109, 4
        %v1117 = vsel %vm1062, 0.0, %v1116
        %v1118 = vrot.slane %v1046, 4
        %v1119 = vsel %vm1062, %v1118, %v1029
        %v1120 = vrot.slane %v1029, 4
        %v1121 = vsel %vm1062, %v1046, %v1120
        %v1123 = vunpack.c.l.s4 1983009808
        %v1124 = vunpack.c.0.s8 %v1123
        %v1125 = vperm.slane %v1119, %v1124
        %v1127 = vunpack.c.l.s4 1983009808
        %v1128 = vunpack.c.0.s8 %v1127
        %v1129 = vperm.slane %v1121, %v1128
        %v1130 = vrot.slane %v1055, 4
        %v1131 = vsel %vm1062, %v1130, %v1037
        %v1132 = vrot.slane %v1037, 4
        %v1133 = vsel %vm1062, %v1055, %v1132
        %v1135 = vunpack.c.l.s4 1983009808
        %v1136 = vunpack.c.0.s8 %v1135
        %v1137 = vperm.slane %v1131, %v1136
        %v1139 = vunpack.c.l.s4 1983009808
        %v1140 = vunpack.c.0.s8 %v1139
        %v1141 = vperm.slane %v1133, %v1140
        %v1142 = vrot.slane %v1137, 4
        %v1143 = vsel %vm1062, %v1142, %v1125
        %v1144 = vrot.slane %v1125, 4
        %v1145 = vsel %vm1062, %v1137, %v1144
        %v1147 = vunpack.c.l.s4 1934713408
        %v1148 = vunpack.c.0.s8 %v1147
        %v1149 = vperm.slane %v1143, %v1148
        %v1151 = vunpack.c.l.s4 1934713408
        %v1152 = vunpack.c.0.s8 %v1151
        %v1153 = vperm.slane %v1145, %v1152
        %v1154 = vrot.slane %v1141, 4
        %v1155 = vsel %vm1062, %v1154, %v1129
        %v1156 = vrot.slane %v1129, 4
        %v1157 = vsel %vm1062, %v1141, %v1156
        %v1159 = vunpack.c.l.s4 1934713408
        %v1160 = vunpack.c.0.s8 %v1159
        %v1161 = vperm.slane %v1155, %v1160
        %v1163 = vunpack.c.l.s4 1934713408
        %v1164 = vunpack.c.0.s8 %v1163
        %v1165 = vperm.slane %v1157, %v1164
        %v1166 = vrot.slane %v1149, 4
        %v1167 = vsel %vm1062, 0.0, %v1166
        %v1168 = vrot.slane %v1153, 4
        %v1169 = vsel %vm1062, 0.0, %v1168
        %v1170 = vrot.slane %v1161, 4
        %v1171 = vsel %vm1062, 0.0, %v1170
        %v1172 = vrot.slane %v1165, 4
        %v1173 = vsel %vm1062, 0.0, %v1172
        %v1174 = vrot.slane %v1048, 4
        %v1175 = vsel %vm1062, %v1174, %v1030
        %v1176 = vrot.slane %v1030, 4
        %v1177 = vsel %vm1062, %v1048, %v1176
        %v1179 = vunpack.c.l.s4 1983009808
        %v1180 = vunpack.c.0.s8 %v1179
        %v1181 = vperm.slane %v1175, %v1180
        %v1183 = vunpack.c.l.s4 1983009808
        %v1184 = vunpack.c.0.s8 %v1183
        %v1185 = vperm.slane %v1177, %v1184
        %v1186 = vrot.slane %v1057, 4
        %v1187 = vsel %vm1062, %v1186, %v1039
        %v1188 = vrot.slane %v1039, 4
        %v1189 = vsel %vm1062, %v1057, %v1188
        %v1191 = vunpack.c.l.s4 1983009808
        %v1192 = vunpack.c.0.s8 %v1191
        %v1193 = vperm.slane %v1187, %v1192
        %v1195 = vunpack.c.l.s4 1983009808
        %v1196 = vunpack.c.0.s8 %v1195
        %v1197 = vperm.slane %v1189, %v1196
        %v1198 = vrot.slane %v1193, 4
        %v1199 = vsel %vm1062, %v1198, %v1181
        %v1200 = vrot.slane %v1181, 4
        %v1201 = vsel %vm1062, %v1193, %v1200
        %v1203 = vunpack.c.l.s4 1934713408
        %v1204 = vunpack.c.0.s8 %v1203
        %v1205 = vperm.slane %v1199, %v1204
        %v1207 = vunpack.c.l.s4 1934713408
        %v1208 = vunpack.c.0.s8 %v1207
        %v1209 = vperm.slane %v1201, %v1208
        %v1210 = vrot.slane %v1197, 4
        %v1211 = vsel %vm1062, %v1210, %v1185
        %v1212 = vrot.slane %v1185, 4
        %v1213 = vsel %vm1062, %v1197, %v1212
        %v1215 = vunpack.c.l.s4 1934713408
        %v1216 = vunpack.c.0.s8 %v1215
        %v1217 = vperm.slane %v1211, %v1216
        %v1219 = vunpack.c.l.s4 1934713408
        %v1220 = vunpack.c.0.s8 %v1219
        %v1221 = vperm.slane %v1213, %v1220
        %v1222 = vrot.slane %v1205, 4
        %v1223 = vsel %vm1062, 0.0, %v1222
        %v1224 = vrot.slane %v1209, 4
        %v1225 = vsel %vm1062, 0.0, %v1224
        %v1226 = vrot.slane %v1217, 4
        %v1227 = vsel %vm1062, 0.0, %v1226
        %v1228 = vrot.slane %v1221, 4
        %v1229 = vsel %vm1062, 0.0, %v1228
        %v1230 = vsel %vm1062, %v1112, %v1093
        %v1232 = vunpack.c.l.s4 1983009808
        %v1233 = vunpack.c.0.s8 %v1232
        %v1234 = vperm.slane %v1230, %v1233
        %v1235 = vrot.slane %v1113, 4
        %v1236 = vsel %vm1062, %v1235, %v1111
        %v1238 = vunpack.c.l.s4 1983009808
        %v1239 = vunpack.c.0.s8 %v1238
        %v1240 = vperm.slane %v1236, %v1239
        %v1241 = vsel %vm1062, %v1116, %v1105
        %v1243 = vunpack.c.l.s4 1983009808
        %v1244 = vunpack.c.0.s8 %v1243
        %v1245 = vperm.slane %v1241, %v1244
        %v1246 = vrot.slane %v1117, 4
        %v1247 = vsel %vm1062, %v1246, %v1115
        %v1249 = vunpack.c.l.s4 1983009808
        %v1250 = vunpack.c.0.s8 %v1249
        %v1251 = vperm.slane %v1247, %v1250
        %v1252 = vrot.slane %v1240, 4
        %v1253 = vsel %vm1062, %v1252, %v1234
        %v1254 = vrot.slane %v1234, 4
        %v1255 = vsel %vm1062, %v1240, %v1254
        %v1257 = vunpack.c.l.s4 1934713408
        %v1258 = vunpack.c.0.s8 %v1257
        %v1259 = vperm.slane %v1253, %v1258
        %v1261 = vunpack.c.l.s4 1934713408
        %v1262 = vunpack.c.0.s8 %v1261
        %v1263 = vperm.slane %v1255, %v1262
        %v1264 = vrot.slane %v1251, 4
        %v1265 = vsel %vm1062, %v1264, %v1245
        %v1266 = vrot.slane %v1245, 4
        %v1267 = vsel %vm1062, %v1251, %v1266
        %v1269 = vunpack.c.l.s4 1934713408
        %v1270 = vunpack.c.0.s8 %v1269
        %v1271 = vperm.slane %v1265, %v1270
        %v1273 = vunpack.c.l.s4 1934713408
        %v1274 = vunpack.c.0.s8 %v1273
        %v1275 = vperm.slane %v1267, %v1274
        %v1276 = vrot.slane %v1271, 4
        %v1277 = vsel %vm1062, %v1276, %v1259
        %v1278 = vrot.slane %v1259, 4
        %v1279 = vsel %vm1062, %v1271, %v1278
        %v1280 = vrot.slane %v1275, 4
        %v1281 = vsel %vm1062, %v1280, %v1263
        %v1282 = vrot.slane %v1263, 4
        %v1283 = vsel %vm1062, %v1275, %v1282
        %v1284 = vsel %vm1062, %v1168, %v1149
        %v1286 = vunpack.c.l.s4 1983009808
        %v1287 = vunpack.c.0.s8 %v1286
        %v1288 = vperm.slane %v1284, %v1287
        %v1289 = vrot.slane %v1169, 4
        %v1290 = vsel %vm1062, %v1289, %v1167
        %v1292 = vunpack.c.l.s4 1983009808
        %v1293 = vunpack.c.0.s8 %v1292
        %v1294 = vperm.slane %v1290, %v1293
        %v1295 = vsel %vm1062, %v1172, %v1161
        %v1297 = vunpack.c.l.s4 1983009808
        %v1298 = vunpack.c.0.s8 %v1297
        %v1299 = vperm.slane %v1295, %v1298
        %v1300 = vrot.slane %v1173, 4
        %v1301 = vsel %vm1062, %v1300, %v1171
        %v1303 = vunpack.c.l.s4 1983009808
        %v1304 = vunpack.c.0.s8 %v1303
        %v1305 = vperm.slane %v1301, %v1304
        %v1306 = vrot.slane %v1294, 4
        %v1307 = vsel %vm1062, %v1306, %v1288
        %v1308 = vrot.slane %v1288, 4
        %v1309 = vsel %vm1062, %v1294, %v1308
        %v1311 = vunpack.c.l.s4 1934713408
        %v1312 = vunpack.c.0.s8 %v1311
        %v1313 = vperm.slane %v1307, %v1312
        %v1315 = vunpack.c.l.s4 1934713408
        %v1316 = vunpack.c.0.s8 %v1315
        %v1317 = vperm.slane %v1309, %v1316
        %v1318 = vrot.slane %v1305, 4
        %v1319 = vsel %vm1062, %v1318, %v1299
        %v1320 = vrot.slane %v1299, 4
        %v1321 = vsel %vm1062, %v1305, %v1320
        %v1323 = vunpack.c.l.s4 1934713408
        %v1324 = vunpack.c.0.s8 %v1323
        %v1325 = vperm.slane %v1319, %v1324
        %v1327 = vunpack.c.l.s4 1934713408
        %v1328 = vunpack.c.0.s8 %v1327
        %v1329 = vperm.slane %v1321, %v1328
        %v1330 = vrot.slane %v1325, 4
        %v1331 = vsel %vm1062, %v1330, %v1313
        %v1332 = vrot.slane %v1313, 4
        %v1333 = vsel %vm1062, %v1325, %v1332
        %v1334 = vrot.slane %v1329, 4
        %v1335 = vsel %vm1062, %v1334, %v1317
        %v1336 = vrot.slane %v1317, 4
        %v1337 = vsel %vm1062, %v1329, %v1336
        %v1338 = vsel %vm1062, %v1224, %v1205
        %v1340 = vunpack.c.l.s4 1983009808
        %v1341 = vunpack.c.0.s8 %v1340
        %v1342 = vperm.slane %v1338, %v1341
        %v1343 = vrot.slane %v1225, 4
        %v1344 = vsel %vm1062, %v1343, %v1223
        %v1346 = vunpack.c.l.s4 1983009808
        %v1347 = vunpack.c.0.s8 %v1346
        %v1348 = vperm.slane %v1344, %v1347
        %v1349 = vsel %vm1062, %v1228, %v1217
        %v1351 = vunpack.c.l.s4 1983009808
        %v1352 = vunpack.c.0.s8 %v1351
        %v1353 = vperm.slane %v1349, %v1352
        %v1354 = vrot.slane %v1229, 4
        %v1355 = vsel %vm1062, %v1354, %v1227
        %v1357 = vunpack.c.l.s4 1983009808
        %v1358 = vunpack.c.0.s8 %v1357
        %v1359 = vperm.slane %v1355, %v1358
        %v1360 = vrot.slane %v1348, 4
        %v1361 = vsel %vm1062, %v1360, %v1342
        %v1362 = vrot.slane %v1342, 4
        %v1363 = vsel %vm1062, %v1348, %v1362
        %v1365 = vunpack.c.l.s4 1934713408
        %v1366 = vunpack.c.0.s8 %v1365
        %v1367 = vperm.slane %v1361, %v1366
        %v1369 = vunpack.c.l.s4 1934713408
        %v1370 = vunpack.c.0.s8 %v1369
        %v1371 = vperm.slane %v1363, %v1370
        %v1372 = vrot.slane %v1359, 4
        %v1373 = vsel %vm1062, %v1372, %v1353
        %v1374 = vrot.slane %v1353, 4
        %v1375 = vsel %vm1062, %v1359, %v1374
        %v1377 = vunpack.c.l.s4 1934713408
        %v1378 = vunpack.c.0.s8 %v1377
        %v1379 = vperm.slane %v1373, %v1378
        %v1381 = vunpack.c.l.s4 1934713408
        %v1382 = vunpack.c.0.s8 %v1381
        %v1383 = vperm.slane %v1375, %v1382
        %v1384 = vrot.slane %v1379, 4
        %v1385 = vsel %vm1062, %v1384, %v1367
        %v1386 = vrot.slane %v1367, 4
        %v1387 = vsel %vm1062, %v1379, %v1386
        %v1388 = vrot.slane %v1383, 4
        %v1389 = vsel %vm1062, %v1388, %v1371
        %v1390 = vrot.slane %v1371, 4
        %v1391 = vsel %vm1062, %v1383, %v1390
        %v1392 = vpack.c.bf16 %v1277, %v1277
        %v1393 = vpack.c.bf16 %v1331, %v1331
        %v1394 = vpack.c.bf16 %v1385, %v1385
        %v1395 = vpack.c.bf16 %v1279, %v1279
        %v1396 = vpack.c.bf16 %v1333, %v1333
        %v1397 = vpack.c.bf16 %v1387, %v1387
        %v1398 = vpack.c.bf16 %v1281, %v1281
        %v1399 = vpack.c.bf16 %v1335, %v1335
        %v1400 = vpack.c.bf16 %v1389, %v1389
        %v1401 = vpack.c.bf16 %v1283, %v1283
        %v1402 = vpack.c.bf16 %v1337, %v1337
        %v1403 = vpack.c.bf16 %v1391, %v1391
        %1407 = vrot.lane.b32.xlu0 %v1002, 120
        %v1408 = vpop.permute.xlu0 %1407
        %1409 = vrot.lane.b32.xlu0 %v1004, 120
        %v1410 = vpop.permute.xlu0 %1409
        %1411 = vrot.lane.b32.xlu0 %v1007, 120
        %v1412 = vpop.permute.xlu0 %1411
        %1413 = vrot.lane.b32.xlu0 %v1002, 112
        %v1414 = vpop.permute.xlu0 %1413
        %1415 = vrot.lane.b32.xlu0 %v1004, 112
        %v1416 = vpop.permute.xlu0 %1415
        %1417 = vrot.lane.b32.xlu0 %v1007, 112
        %v1418 = vpop.permute.xlu0 %1417
        %1419 = vrot.lane.b32.xlu0 %v1002, 104
        %v1420 = vpop.permute.xlu0 %1419
        %1421 = vrot.lane.b32.xlu0 %v1004, 104
        %v1422 = vpop.permute.xlu0 %1421
        %1423 = vrot.lane.b32.xlu0 %v1007, 104
        %v1424 = vpop.permute.xlu0 %1423
        %1425 = vrot.lane.b32.xlu0 %v1002, 96
        %v1426 = vpop.permute.xlu0 %1425
        %1427 = vrot.lane.b32.xlu0 %v1004, 96
        %v1428 = vpop.permute.xlu0 %1427
        %1429 = vrot.lane.b32.xlu0 %v1007, 96
        %v1430 = vpop.permute.xlu0 %1429
        %1431 = vrot.lane.b32.xlu0 %v1408, 96
        %v1432 = vpop.permute.xlu0 %1431
        %1433 = vrot.lane.b32.xlu0 %v1410, 96
        %v1434 = vpop.permute.xlu0 %1433
        %1435 = vrot.lane.b32.xlu0 %v1412, 96
        %v1436 = vpop.permute.xlu0 %1435
        %1437 = vrot.lane.b32.xlu0 %v1414, 96
        %v1438 = vpop.permute.xlu0 %1437
        %1439 = vrot.lane.b32.xlu0 %v1416, 96
        %v1440 = vpop.permute.xlu0 %1439
        %1441 = vrot.lane.b32.xlu0 %v1418, 96
        %v1442 = vpop.permute.xlu0 %1441
        %1443 = vrot.lane.b32.xlu0 %v1420, 96
        %v1444 = vpop.permute.xlu0 %1443
        %1445 = vrot.lane.b32.xlu0 %v1422, 96
        %v1446 = vpop.permute.xlu0 %1445
        %1447 = vrot.lane.b32.xlu0 %v1424, 96
        %v1448 = vpop.permute.xlu0 %1447
        %v1461 = vrot.slane %v1438, 4
        %v1462 = vsel %vm1062, %v1461, %v1426
        %v1463 = vrot.slane %v1426, 4
        %v1464 = vsel %vm1062, %v1438, %v1463
        %v1466 = vunpack.c.l.s4 1983009808
        %v1467 = vunpack.c.0.s8 %v1466
        %v1468 = vperm.slane %v1462, %v1467
        %v1470 = vunpack.c.l.s4 1983009808
        %v1471 = vunpack.c.0.s8 %v1470
        %v1472 = vperm.slane %v1464, %v1471
        %v1473 = vrot.slane %v1444, 4
        %v1474 = vsel %vm1062, %v1473, %v1432
        %v1475 = vrot.slane %v1432, 4
        %v1476 = vsel %vm1062, %v1444, %v1475
        %v1478 = vunpack.c.l.s4 1983009808
        %v1479 = vunpack.c.0.s8 %v1478
        %v1480 = vperm.slane %v1474, %v1479
        %v1482 = vunpack.c.l.s4 1983009808
        %v1483 = vunpack.c.0.s8 %v1482
        %v1484 = vperm.slane %v1476, %v1483
        %v1485 = vrot.slane %v1480, 4
        %v1486 = vsel %vm1062, %v1485, %v1468
        %v1487 = vrot.slane %v1468, 4
        %v1488 = vsel %vm1062, %v1480, %v1487
        %v1490 = vunpack.c.l.s4 1934713408
        %v1491 = vunpack.c.0.s8 %v1490
        %v1492 = vperm.slane %v1486, %v1491
        %v1494 = vunpack.c.l.s4 1934713408
        %v1495 = vunpack.c.0.s8 %v1494
        %v1496 = vperm.slane %v1488, %v1495
        %v1497 = vrot.slane %v1484, 4
        %v1498 = vsel %vm1062, %v1497, %v1472
        %v1499 = vrot.slane %v1472, 4
        %v1500 = vsel %vm1062, %v1484, %v1499
        %v1502 = vunpack.c.l.s4 1934713408
        %v1503 = vunpack.c.0.s8 %v1502
        %v1504 = vperm.slane %v1498, %v1503
        %v1506 = vunpack.c.l.s4 1934713408
        %v1507 = vunpack.c.0.s8 %v1506
        %v1508 = vperm.slane %v1500, %v1507
        %v1509 = vrot.slane %v1492, 4
        %v1510 = vsel %vm1062, 0.0, %v1509
        %v1511 = vrot.slane %v1496, 4
        %v1512 = vsel %vm1062, 0.0, %v1511
        %v1513 = vrot.slane %v1504, 4
        %v1514 = vsel %vm1062, 0.0, %v1513
        %v1515 = vrot.slane %v1508, 4
        %v1516 = vsel %vm1062, 0.0, %v1515
        %v1517 = vrot.slane %v1440, 4
        %v1518 = vsel %vm1062, %v1517, %v1428
        %v1519 = vrot.slane %v1428, 4
        %v1520 = vsel %vm1062, %v1440, %v1519
        %v1522 = vunpack.c.l.s4 1983009808
        %v1523 = vunpack.c.0.s8 %v1522
        %v1524 = vperm.slane %v1518, %v1523
        %v1526 = vunpack.c.l.s4 1983009808
        %v1527 = vunpack.c.0.s8 %v1526
        %v1528 = vperm.slane %v1520, %v1527
        %v1529 = vrot.slane %v1446, 4
        %v1530 = vsel %vm1062, %v1529, %v1434
        %v1531 = vrot.slane %v1434, 4
        %v1532 = vsel %vm1062, %v1446, %v1531
        %v1534 = vunpack.c.l.s4 1983009808
        %v1535 = vunpack.c.0.s8 %v1534
        %v1536 = vperm.slane %v1530, %v1535
        %v1538 = vunpack.c.l.s4 1983009808
        %v1539 = vunpack.c.0.s8 %v1538
        %v1540 = vperm.slane %v1532, %v1539
        %v1541 = vrot.slane %v1536, 4
        %v1542 = vsel %vm1062, %v1541, %v1524
        %v1543 = vrot.slane %v1524, 4
        %v1544 = vsel %vm1062, %v1536, %v1543
        %v1546 = vunpack.c.l.s4 1934713408
        %v1547 = vunpack.c.0.s8 %v1546
        %v1548 = vperm.slane %v1542, %v1547
        %v1550 = vunpack.c.l.s4 1934713408
        %v1551 = vunpack.c.0.s8 %v1550
        %v1552 = vperm.slane %v1544, %v1551
        %v1553 = vrot.slane %v1540, 4
        %v1554 = vsel %vm1062, %v1553, %v1528
        %v1555 = vrot.slane %v1528, 4
        %v1556 = vsel %vm1062, %v1540, %v1555
        %v1558 = vunpack.c.l.s4 1934713408
        %v1559 = vunpack.c.0.s8 %v1558
        %v1560 = vperm.slane %v1554, %v1559
        %v1562 = vunpack.c.l.s4 1934713408
        %v1563 = vunpack.c.0.s8 %v1562
        %v1564 = vperm.slane %v1556, %v1563
        %v1565 = vrot.slane %v1548, 4
        %v1566 = vsel %vm1062, 0.0, %v1565
        %v1567 = vrot.slane %v1552, 4
        %v1568 = vsel %vm1062, 0.0, %v1567
        %v1569 = vrot.slane %v1560, 4
        %v1570 = vsel %vm1062, 0.0, %v1569
        %v1571 = vrot.slane %v1564, 4
        %v1572 = vsel %vm1062, 0.0, %v1571
        %v1573 = vrot.slane %v1442, 4
        %v1574 = vsel %vm1062, %v1573, %v1430
        %v1575 = vrot.slane %v1430, 4
        %v1576 = vsel %vm1062, %v1442, %v1575
        %v1578 = vunpack.c.l.s4 1983009808
        %v1579 = vunpack.c.0.s8 %v1578
        %v1580 = vperm.slane %v1574, %v1579
        %v1582 = vunpack.c.l.s4 1983009808
        %v1583 = vunpack.c.0.s8 %v1582
        %v1584 = vperm.slane %v1576, %v1583
        %v1585 = vrot.slane %v1448, 4
        %v1586 = vsel %vm1062, %v1585, %v1436
        %v1587 = vrot.slane %v1436, 4
        %v1588 = vsel %vm1062, %v1448, %v1587
        %v1590 = vunpack.c.l.s4 1983009808
        %v1591 = vunpack.c.0.s8 %v1590
        %v1592 = vperm.slane %v1586, %v1591
        %v1594 = vunpack.c.l.s4 1983009808
        %v1595 = vunpack.c.0.s8 %v1594
        %v1596 = vperm.slane %v1588, %v1595
        %v1597 = vrot.slane %v1592, 4
        %v1598 = vsel %vm1062, %v1597, %v1580
        %v1599 = vrot.slane %v1580, 4
        %v1600 = vsel %vm1062, %v1592, %v1599
        %v1602 = vunpack.c.l.s4 1934713408
        %v1603 = vunpack.c.0.s8 %v1602
        %v1604 = vperm.slane %v1598, %v1603
        %v1606 = vunpack.c.l.s4 1934713408
        %v1607 = vunpack.c.0.s8 %v1606
        %v1608 = vperm.slane %v1600, %v1607
        %v1609 = vrot.slane %v1596, 4
        %v1610 = vsel %vm1062, %v1609, %v1584
        %v1611 = vrot.slane %v1584, 4
        %v1612 = vsel %vm1062, %v1596, %v1611
        %v1614 = vunpack.c.l.s4 1934713408
        %v1615 = vunpack.c.0.s8 %v1614
        %v1616 = vperm.slane %v1610, %v1615
        %v1618 = vunpack.c.l.s4 1934713408
        %v1619 = vunpack.c.0.s8 %v1618
        %v1620 = vperm.slane %v1612, %v1619
        %v1621 = vrot.slane %v1604, 4
        %v1622 = vsel %vm1062, 0.0, %v1621
        %v1623 = vrot.slane %v1608, 4
        %v1624 = vsel %vm1062, 0.0, %v1623
        %v1625 = vrot.slane %v1616, 4
        %v1626 = vsel %vm1062, 0.0, %v1625
        %v1627 = vrot.slane %v1620, 4
        %v1628 = vsel %vm1062, 0.0, %v1627
        %v1629 = vsel %vm1062, %v1511, %v1492
        %v1631 = vunpack.c.l.s4 1983009808
        %v1632 = vunpack.c.0.s8 %v1631
        %v1633 = vperm.slane %v1629, %v1632
        %v1634 = vrot.slane %v1512, 4
        %v1635 = vsel %vm1062, %v1634, %v1510
        %v1637 = vunpack.c.l.s4 1983009808
        %v1638 = vunpack.c.0.s8 %v1637
        %v1639 = vperm.slane %v1635, %v1638
        %v1640 = vsel %vm1062, %v1515, %v1504
        %v1642 = vunpack.c.l.s4 1983009808
        %v1643 = vunpack.c.0.s8 %v1642
        %v1644 = vperm.slane %v1640, %v1643
        %v1645 = vrot.slane %v1516, 4
        %v1646 = vsel %vm1062, %v1645, %v1514
        %v1648 = vunpack.c.l.s4 1983009808
        %v1649 = vunpack.c.0.s8 %v1648
        %v1650 = vperm.slane %v1646, %v1649
        %v1651 = vrot.slane %v1639, 4
        %v1652 = vsel %vm1062, %v1651, %v1633
        %v1653 = vrot.slane %v1633, 4
        %v1654 = vsel %vm1062, %v1639, %v1653
        %v1656 = vunpack.c.l.s4 1934713408
        %v1657 = vunpack.c.0.s8 %v1656
        %v1658 = vperm.slane %v1652, %v1657
        %v1660 = vunpack.c.l.s4 1934713408
        %v1661 = vunpack.c.0.s8 %v1660
        %v1662 = vperm.slane %v1654, %v1661
        %v1663 = vrot.slane %v1650, 4
        %v1664 = vsel %vm1062, %v1663, %v1644
        %v1665 = vrot.slane %v1644, 4
        %v1666 = vsel %vm1062, %v1650, %v1665
        %v1668 = vunpack.c.l.s4 1934713408
        %v1669 = vunpack.c.0.s8 %v1668
        %v1670 = vperm.slane %v1664, %v1669
        %v1672 = vunpack.c.l.s4 1934713408
        %v1673 = vunpack.c.0.s8 %v1672
        %v1674 = vperm.slane %v1666, %v1673
        %v1675 = vrot.slane %v1670, 4
        %v1676 = vsel %vm1062, %v1675, %v1658
        %v1677 = vrot.slane %v1658, 4
        %v1678 = vsel %vm1062, %v1670, %v1677
        %v1679 = vrot.slane %v1674, 4
        %v1680 = vsel %vm1062, %v1679, %v1662
        %v1681 = vrot.slane %v1662, 4
        %v1682 = vsel %vm1062, %v1674, %v1681
        %v1683 = vsel %vm1062, %v1567, %v1548
        %v1685 = vunpack.c.l.s4 1983009808
        %v1686 = vunpack.c.0.s8 %v1685
        %v1687 = vperm.slane %v1683, %v1686
        %v1688 = vrot.slane %v1568, 4
        %v1689 = vsel %vm1062, %v1688, %v1566
        %v1691 = vunpack.c.l.s4 1983009808
        %v1692 = vunpack.c.0.s8 %v1691
        %v1693 = vperm.slane %v1689, %v1692
        %v1694 = vsel %vm1062, %v1571, %v1560
        %v1696 = vunpack.c.l.s4 1983009808
        %v1697 = vunpack.c.0.s8 %v1696
        %v1698 = vperm.slane %v1694, %v1697
        %v1699 = vrot.slane %v1572, 4
        %v1700 = vsel %vm1062, %v1699, %v1570
        %v1702 = vunpack.c.l.s4 1983009808
        %v1703 = vunpack.c.0.s8 %v1702
        %v1704 = vperm.slane %v1700, %v1703
        %v1705 = vrot.slane %v1693, 4
        %v1706 = vsel %vm1062, %v1705, %v1687
        %v1707 = vrot.slane %v1687, 4
        %v1708 = vsel %vm1062, %v1693, %v1707
        %v1710 = vunpack.c.l.s4 1934713408
        %v1711 = vunpack.c.0.s8 %v1710
        %v1712 = vperm.slane %v1706, %v1711
        %v1714 = vunpack.c.l.s4 1934713408
        %v1715 = vunpack.c.0.s8 %v1714
        %v1716 = vperm.slane %v1708, %v1715
        %v1717 = vrot.slane %v1704, 4
        %v1718 = vsel %vm1062, %v1717, %v1698
        %v1719 = vrot.slane %v1698, 4
        %v1720 = vsel %vm1062, %v1704, %v1719
        %v1722 = vunpack.c.l.s4 1934713408
        %v1723 = vunpack.c.0.s8 %v1722
        %v1724 = vperm.slane %v1718, %v1723
        %v1726 = vunpack.c.l.s4 1934713408
        %v1727 = vunpack.c.0.s8 %v1726
        %v1728 = vperm.slane %v1720, %v1727
        %v1729 = vrot.slane %v1724, 4
        %v1730 = vsel %vm1062, %v1729, %v1712
        %v1731 = vrot.slane %v1712, 4
        %v1732 = vsel %vm1062, %v1724, %v1731
        %v1733 = vrot.slane %v1728, 4
        %v1734 = vsel %vm1062, %v1733, %v1716
        %v1735 = vrot.slane %v1716, 4
        %v1736 = vsel %vm1062, %v1728, %v1735
        %v1737 = vsel %vm1062, %v1623, %v1604
        %v1739 = vunpack.c.l.s4 1983009808
        %v1740 = vunpack.c.0.s8 %v1739
        %v1741 = vperm.slane %v1737, %v1740
        %v1742 = vrot.slane %v1624, 4
        %v1743 = vsel %vm1062, %v1742, %v1622
        %v1745 = vunpack.c.l.s4 1983009808
        %v1746 = vunpack.c.0.s8 %v1745
        %v1747 = vperm.slane %v1743, %v1746
        %v1748 = vsel %vm1062, %v1627, %v1616
        %v1750 = vunpack.c.l.s4 1983009808
        %v1751 = vunpack.c.0.s8 %v1750
        %v1752 = vperm.slane %v1748, %v1751
        %v1753 = vrot.slane %v1628, 4
        %v1754 = vsel %vm1062, %v1753, %v1626
        %v1756 = vunpack.c.l.s4 1983009808
        %v1757 = vunpack.c.0.s8 %v1756
        %v1758 = vperm.slane %v1754, %v1757
        %v1759 = vrot.slane %v1747, 4
        %v1760 = vsel %vm1062, %v1759, %v1741
        %v1761 = vrot.slane %v1741, 4
        %v1762 = vsel %vm1062, %v1747, %v1761
        %v1764 = vunpack.c.l.s4 1934713408
        %v1765 = vunpack.c.0.s8 %v1764
        %v1766 = vperm.slane %v1760, %v1765
        %v1768 = vunpack.c.l.s4 1934713408
        %v1769 = vunpack.c.0.s8 %v1768
        %v1770 = vperm.slane %v1762, %v1769
        %v1771 = vrot.slane %v1758, 4
        %v1772 = vsel %vm1062, %v1771, %v1752
        %v1773 = vrot.slane %v1752, 4
        %v1774 = vsel %vm1062, %v1758, %v1773
        %v1776 = vunpack.c.l.s4 1934713408
        %v1777 = vunpack.c.0.s8 %v1776
        %v1778 = vperm.slane %v1772, %v1777
        %v1780 = vunpack.c.l.s4 1934713408
        %v1781 = vunpack.c.0.s8 %v1780
        %v1782 = vperm.slane %v1774, %v1781
        %v1783 = vrot.slane %v1778, 4
        %v1784 = vsel %vm1062, %v1783, %v1766
        %v1785 = vrot.slane %v1766, 4
        %v1786 = vsel %vm1062, %v1778, %v1785
        %v1787 = vrot.slane %v1782, 4
        %v1788 = vsel %vm1062, %v1787, %v1770
        %v1789 = vrot.slane %v1770, 4
        %v1790 = vsel %vm1062, %v1782, %v1789
        %v1791 = vpack.c.bf16 %v1676, %v1676
        %v1792 = vpack.c.bf16 %v1730, %v1730
        %v1793 = vpack.c.bf16 %v1784, %v1784
        %v1794 = vpack.c.bf16 %v1678, %v1678
        %v1795 = vpack.c.bf16 %v1732, %v1732
        %v1796 = vpack.c.bf16 %v1786, %v1786
        %v1797 = vpack.c.bf16 %v1680, %v1680
        %v1798 = vpack.c.bf16 %v1734, %v1734
        %v1799 = vpack.c.bf16 %v1788, %v1788
        %v1800 = vpack.c.bf16 %v1682, %v1682
        %v1801 = vpack.c.bf16 %v1736, %v1736
        %v1802 = vpack.c.bf16 %v1790, %v1790
        %1803 = vrot.lane.b32.xlu0 %v1002, 64
        %v1804 = vpop.permute.xlu0 %1803
        %1805 = vrot.lane.b32.xlu0 %v1004, 64
        %v1806 = vpop.permute.xlu0 %1805
        %1807 = vrot.lane.b32.xlu0 %v1007, 64
        %v1808 = vpop.permute.xlu0 %1807
        %1809 = vrot.lane.b32.xlu0 %v1408, 64
        %v1810 = vpop.permute.xlu0 %1809
        %1811 = vrot.lane.b32.xlu0 %v1410, 64
        %v1812 = vpop.permute.xlu0 %1811
        %1813 = vrot.lane.b32.xlu0 %v1412, 64
        %v1814 = vpop.permute.xlu0 %1813
        %1815 = vrot.lane.b32.xlu0 %v1414, 64
        %v1816 = vpop.permute.xlu0 %1815
        %1817 = vrot.lane.b32.xlu0 %v1416, 64
        %v1818 = vpop.permute.xlu0 %1817
        %1819 = vrot.lane.b32.xlu0 %v1418, 64
        %v1820 = vpop.permute.xlu0 %1819
        %1821 = vrot.lane.b32.xlu0 %v1420, 64
        %v1822 = vpop.permute.xlu0 %1821
        %1823 = vrot.lane.b32.xlu0 %v1422, 64
        %v1824 = vpop.permute.xlu0 %1823
        %1825 = vrot.lane.b32.xlu0 %v1424, 64
        %v1826 = vpop.permute.xlu0 %1825
        %v1839 = vrot.slane %v1816, 4
        %v1840 = vsel %vm1062, %v1839, %v1804
        %v1841 = vrot.slane %v1804, 4
        %v1842 = vsel %vm1062, %v1816, %v1841
        %v1844 = vunpack.c.l.s4 1983009808
        %v1845 = vunpack.c.0.s8 %v1844
        %v1846 = vperm.slane %v1840, %v1845
        %v1848 = vunpack.c.l.s4 1983009808
        %v1849 = vunpack.c.0.s8 %v1848
        %v1850 = vperm.slane %v1842, %v1849
        %v1851 = vrot.slane %v1822, 4
        %v1852 = vsel %vm1062, %v1851, %v1810
        %v1853 = vrot.slane %v1810, 4
        %v1854 = vsel %vm1062, %v1822, %v1853
        %v1856 = vunpack.c.l.s4 1983009808
        %v1857 = vunpack.c.0.s8 %v1856
        %v1858 = vperm.slane %v1852, %v1857
        %v1860 = vunpack.c.l.s4 1983009808
        %v1861 = vunpack.c.0.s8 %v1860
        %v1862 = vperm.slane %v1854, %v1861
        %v1863 = vrot.slane %v1858, 4
        %v1864 = vsel %vm1062, %v1863, %v1846
        %v1865 = vrot.slane %v1846, 4
        %v1866 = vsel %vm1062, %v1858, %v1865
        %v1868 = vunpack.c.l.s4 1934713408
        %v1869 = vunpack.c.0.s8 %v1868
        %v1870 = vperm.slane %v1864, %v1869
        %v1872 = vunpack.c.l.s4 1934713408
        %v1873 = vunpack.c.0.s8 %v1872
        %v1874 = vperm.slane %v1866, %v1873
        %v1875 = vrot.slane %v1862, 4
        %v1876 = vsel %vm1062, %v1875, %v1850
        %v1877 = vrot.slane %v1850, 4
        %v1878 = vsel %vm1062, %v1862, %v1877
        %v1880 = vunpack.c.l.s4 1934713408
        %v1881 = vunpack.c.0.s8 %v1880
        %v1882 = vperm.slane %v1876, %v1881
        %v1884 = vunpack.c.l.s4 1934713408
        %v1885 = vunpack.c.0.s8 %v1884
        %v1886 = vperm.slane %v1878, %v1885
        %v1887 = vrot.slane %v1870, 4
        %v1888 = vsel %vm1062, 0.0, %v1887
        %v1889 = vrot.slane %v1874, 4
        %v1890 = vsel %vm1062, 0.0, %v1889
        %v1891 = vrot.slane %v1882, 4
        %v1892 = vsel %vm1062, 0.0, %v1891
        %v1893 = vrot.slane %v1886, 4
        %v1894 = vsel %vm1062, 0.0, %v1893
        %v1895 = vrot.slane %v1818, 4
        %v1896 = vsel %vm1062, %v1895, %v1806
        %v1897 = vrot.slane %v1806, 4
        %v1898 = vsel %vm1062, %v1818, %v1897
        %v1900 = vunpack.c.l.s4 1983009808
        %v1901 = vunpack.c.0.s8 %v1900
        %v1902 = vperm.slane %v1896, %v1901
        %v1904 = vunpack.c.l.s4 1983009808
        %v1905 = vunpack.c.0.s8 %v1904
        %v1906 = vperm.slane %v1898, %v1905
        %v1907 = vrot.slane %v1824, 4
        %v1908 = vsel %vm1062, %v1907, %v1812
        %v1909 = vrot.slane %v1812, 4
        %v1910 = vsel %vm1062, %v1824, %v1909
        %v1912 = vunpack.c.l.s4 1983009808
        %v1913 = vunpack.c.0.s8 %v1912
        %v1914 = vperm.slane %v1908, %v1913
        %v1916 = vunpack.c.l.s4 1983009808
        %v1917 = vunpack.c.0.s8 %v1916
        %v1918 = vperm.slane %v1910, %v1917
        %v1919 = vrot.slane %v1914, 4
        %v1920 = vsel %vm1062, %v1919, %v1902
        %v1921 = vrot.slane %v1902, 4
        %v1922 = vsel %vm1062, %v1914, %v1921
        %v1924 = vunpack.c.l.s4 1934713408
        %v1925 = vunpack.c.0.s8 %v1924
        %v1926 = vperm.slane %v1920, %v1925
        %v1928 = vunpack.c.l.s4 1934713408
        %v1929 = vunpack.c.0.s8 %v1928
        %v1930 = vperm.slane %v1922, %v1929
        %v1931 = vrot.slane %v1918, 4
        %v1932 = vsel %vm1062, %v1931, %v1906
        %v1933 = vrot.slane %v1906, 4
        %v1934 = vsel %vm1062, %v1918, %v1933
        %v1936 = vunpack.c.l.s4 1934713408
        %v1937 = vunpack.c.0.s8 %v1936
        %v1938 = vperm.slane %v1932, %v1937
        %v1940 = vunpack.c.l.s4 1934713408
        %v1941 = vunpack.c.0.s8 %v1940
        %v1942 = vperm.slane %v1934, %v1941
        %v1943 = vrot.slane %v1926, 4
        %v1944 = vsel %vm1062, 0.0, %v1943
        %v1945 = vrot.slane %v1930, 4
        %v1946 = vsel %vm1062, 0.0, %v1945
        %v1947 = vrot.slane %v1938, 4
        %v1948 = vsel %vm1062, 0.0, %v1947
        %v1949 = vrot.slane %v1942, 4
        %v1950 = vsel %vm1062, 0.0, %v1949
        %v1951 = vrot.slane %v1820, 4
        %v1952 = vsel %vm1062, %v1951, %v1808
        %v1953 = vrot.slane %v1808, 4
        %v1954 = vsel %vm1062, %v1820, %v1953
        %v1956 = vunpack.c.l.s4 1983009808
        %v1957 = vunpack.c.0.s8 %v1956
        %v1958 = vperm.slane %v1952, %v1957
        %v1960 = vunpack.c.l.s4 1983009808
        %v1961 = vunpack.c.0.s8 %v1960
        %v1962 = vperm.slane %v1954, %v1961
        %v1963 = vrot.slane %v1826, 4
        %v1964 = vsel %vm1062, %v1963, %v1814
        %v1965 = vrot.slane %v1814, 4
        %v1966 = vsel %vm1062, %v1826, %v1965
        %v1968 = vunpack.c.l.s4 1983009808
        %v1969 = vunpack.c.0.s8 %v1968
        %v1970 = vperm.slane %v1964, %v1969
        %v1972 = vunpack.c.l.s4 1983009808
        %v1973 = vunpack.c.0.s8 %v1972
        %v1974 = vperm.slane %v1966, %v1973
        %v1975 = vrot.slane %v1970, 4
        %v1976 = vsel %vm1062, %v1975, %v1958
        %v1977 = vrot.slane %v1958, 4
        %v1978 = vsel %vm1062, %v1970, %v1977
        %v1980 = vunpack.c.l.s4 1934713408
        %v1981 = vunpack.c.0.s8 %v1980
        %v1982 = vperm.slane %v1976, %v1981
        %v1984 = vunpack.c.l.s4 1934713408
        %v1985 = vunpack.c.0.s8 %v1984
        %v1986 = vperm.slane %v1978, %v1985
        %v1987 = vrot.slane %v1974, 4
        %v1988 = vsel %vm1062, %v1987, %v1962
        %v1989 = vrot.slane %v1962, 4
        %v1990 = vsel %vm1062, %v1974, %v1989
        %v1992 = vunpack.c.l.s4 1934713408
        %v1993 = vunpack.c.0.s8 %v1992
        %v1994 = vperm.slane %v1988, %v1993
        %v1996 = vunpack.c.l.s4 1934713408
        %v1997 = vunpack.c.0.s8 %v1996
        %v1998 = vperm.slane %v1990, %v1997
        %v1999 = vrot.slane %v1982, 4
        %v2000 = vsel %vm1062, 0.0, %v1999
        %v2001 = vrot.slane %v1986, 4
        %v2002 = vsel %vm1062, 0.0, %v2001
        %v2003 = vrot.slane %v1994, 4
        %v2004 = vsel %vm1062, 0.0, %v2003
        %v2005 = vrot.slane %v1998, 4
        %v2006 = vsel %vm1062, 0.0, %v2005
        %v2007 = vsel %vm1062, %v1889, %v1870
        %v2009 = vunpack.c.l.s4 1983009808
        %v2010 = vunpack.c.0.s8 %v2009
        %v2011 = vperm.slane %v2007, %v2010
        %v2012 = vrot.slane %v1890, 4
        %v2013 = vsel %vm1062, %v2012, %v1888
        %v2015 = vunpack.c.l.s4 1983009808
        %v2016 = vunpack.c.0.s8 %v2015
        %v2017 = vperm.slane %v2013, %v2016
        %v2018 = vsel %vm1062, %v1893, %v1882
        %v2020 = vunpack.c.l.s4 1983009808
        %v2021 = vunpack.c.0.s8 %v2020
        %v2022 = vperm.slane %v2018, %v2021
        %v2023 = vrot.slane %v1894, 4
        %v2024 = vsel %vm1062, %v2023, %v1892
        %v2026 = vunpack.c.l.s4 1983009808
        %v2027 = vunpack.c.0.s8 %v2026
        %v2028 = vperm.slane %v2024, %v2027
        %v2029 = vrot.slane %v2017, 4
        %v2030 = vsel %vm1062, %v2029, %v2011
        %v2031 = vrot.slane %v2011, 4
        %v2032 = vsel %vm1062, %v2017, %v2031
        %v2034 = vunpack.c.l.s4 1934713408
        %v2035 = vunpack.c.0.s8 %v2034
        %v2036 = vperm.slane %v2030, %v2035
        %v2038 = vunpack.c.l.s4 1934713408
        %v2039 = vunpack.c.0.s8 %v2038
        %v2040 = vperm.slane %v2032, %v2039
        %v2041 = vrot.slane %v2028, 4
        %v2042 = vsel %vm1062, %v2041, %v2022
        %v2043 = vrot.slane %v2022, 4
        %v2044 = vsel %vm1062, %v2028, %v2043
        %v2046 = vunpack.c.l.s4 1934713408
        %v2047 = vunpack.c.0.s8 %v2046
        %v2048 = vperm.slane %v2042, %v2047
        %v2050 = vunpack.c.l.s4 1934713408
        %v2051 = vunpack.c.0.s8 %v2050
        %v2052 = vperm.slane %v2044, %v2051
        %v2053 = vrot.slane %v2048, 4
        %v2054 = vsel %vm1062, %v2053, %v2036
        %v2055 = vrot.slane %v2036, 4
        %v2056 = vsel %vm1062, %v2048, %v2055
        %v2057 = vrot.slane %v2052, 4
        %v2058 = vsel %vm1062, %v2057, %v2040
        %v2059 = vrot.slane %v2040, 4
        %v2060 = vsel %vm1062, %v2052, %v2059
        %v2061 = vsel %vm1062, %v1945, %v1926
        %v2063 = vunpack.c.l.s4 1983009808
        %v2064 = vunpack.c.0.s8 %v2063
        %v2065 = vperm.slane %v2061, %v2064
        %v2066 = vrot.slane %v1946, 4
        %v2067 = vsel %vm1062, %v2066, %v1944
        %v2069 = vunpack.c.l.s4 1983009808
        %v2070 = vunpack.c.0.s8 %v2069
        %v2071 = vperm.slane %v2067, %v2070
        %v2072 = vsel %vm1062, %v1949, %v1938
        %v2074 = vunpack.c.l.s4 1983009808
        %v2075 = vunpack.c.0.s8 %v2074
        %v2076 = vperm.slane %v2072, %v2075
        %v2077 = vrot.slane %v1950, 4
        %v2078 = vsel %vm1062, %v2077, %v1948
        %v2080 = vunpack.c.l.s4 1983009808
        %v2081 = vunpack.c.0.s8 %v2080
        %v2082 = vperm.slane %v2078, %v2081
        %v2083 = vrot.slane %v2071, 4
        %v2084 = vsel %vm1062, %v2083, %v2065
        %v2085 = vrot.slane %v2065, 4
        %v2086 = vsel %vm1062, %v2071, %v2085
        %v2088 = vunpack.c.l.s4 1934713408
        %v2089 = vunpack.c.0.s8 %v2088
        %v2090 = vperm.slane %v2084, %v2089
        %v2092 = vunpack.c.l.s4 1934713408
        %v2093 = vunpack.c.0.s8 %v2092
        %v2094 = vperm.slane %v2086, %v2093
        %v2095 = vrot.slane %v2082, 4
        %v2096 = vsel %vm1062, %v2095, %v2076
        %v2097 = vrot.slane %v2076, 4
        %v2098 = vsel %vm1062, %v2082, %v2097
        %v2100 = vunpack.c.l.s4 1934713408
        %v2101 = vunpack.c.0.s8 %v2100
        %v2102 = vperm.slane %v2096, %v2101
        %v2104 = vunpack.c.l.s4 1934713408
        %v2105 = vunpack.c.0.s8 %v2104
        %v2106 = vperm.slane %v2098, %v2105
        %v2107 = vrot.slane %v2102, 4
        %v2108 = vsel %vm1062, %v2107, %v2090
        %v2109 = vrot.slane %v2090, 4
        %v2110 = vsel %vm1062, %v2102, %v2109
        %v2111 = vrot.slane %v2106, 4
        %v2112 = vsel %vm1062, %v2111, %v2094
        %v2113 = vrot.slane %v2094, 4
        %v2114 = vsel %vm1062, %v2106, %v2113
        %v2115 = vsel %vm1062, %v2001, %v1982
        %v2117 = vunpack.c.l.s4 1983009808
        %v2118 = vunpack.c.0.s8 %v2117
        %v2119 = vperm.slane %v2115, %v2118
        %v2120 = vrot.slane %v2002, 4
        %v2121 = vsel %vm1062, %v2120, %v2000
        %v2123 = vunpack.c.l.s4 1983009808
        %v2124 = vunpack.c.0.s8 %v2123
        %v2125 = vperm.slane %v2121, %v2124
        %v2126 = vsel %vm1062, %v2005, %v1994
        %v2128 = vunpack.c.l.s4 1983009808
        %v2129 = vunpack.c.0.s8 %v2128
        %v2130 = vperm.slane %v2126, %v2129
        %v2131 = vrot.slane %v2006, 4
        %v2132 = vsel %vm1062, %v2131, %v2004
        %v2134 = vunpack.c.l.s4 1983009808
        %v2135 = vunpack.c.0.s8 %v2134
        %v2136 = vperm.slane %v2132, %v2135
        %v2137 = vrot.slane %v2125, 4
        %v2138 = vsel %vm1062, %v2137, %v2119
        %v2139 = vrot.slane %v2119, 4
        %v2140 = vsel %vm1062, %v2125, %v2139
        %v2142 = vunpack.c.l.s4 1934713408
        %v2143 = vunpack.c.0.s8 %v2142
        %v2144 = vperm.slane %v2138, %v2143
        %v2146 = vunpack.c.l.s4 1934713408
        %v2147 = vunpack.c.0.s8 %v2146
        %v2148 = vperm.slane %v2140, %v2147
        %v2149 = vrot.slane %v2136, 4
        %v2150 = vsel %vm1062, %v2149, %v2130
        %v2151 = vrot.slane %v2130, 4
        %v2152 = vsel %vm1062, %v2136, %v2151
        %v2154 = vunpack.c.l.s4 1934713408
        %v2155 = vunpack.c.0.s8 %v2154
        %v2156 = vperm.slane %v2150, %v2155
        %v2158 = vunpack.c.l.s4 1934713408
        %v2159 = vunpack.c.0.s8 %v2158
        %v2160 = vperm.slane %v2152, %v2159
        %v2161 = vrot.slane %v2156, 4
        %v2162 = vsel %vm1062, %v2161, %v2144
        %v2163 = vrot.slane %v2144, 4
        %v2164 = vsel %vm1062, %v2156, %v2163
        %v2165 = vrot.slane %v2160, 4
        %v2166 = vsel %vm1062, %v2165, %v2148
        %v2167 = vrot.slane %v2148, 4
        %v2168 = vsel %vm1062, %v2160, %v2167
        %v2169 = vpack.c.bf16 %v2054, %v2054
        %v2170 = vpack.c.bf16 %v2108, %v2108
        %v2171 = vpack.c.bf16 %v2162, %v2162
        %v2172 = vpack.c.bf16 %v2056, %v2056
        %v2173 = vpack.c.bf16 %v2110, %v2110
        %v2174 = vpack.c.bf16 %v2164, %v2164
        %v2175 = vpack.c.bf16 %v2058, %v2058
        %v2176 = vpack.c.bf16 %v2112, %v2112
        %v2177 = vpack.c.bf16 %v2166, %v2166
        %v2178 = vpack.c.bf16 %v2060, %v2060
        %v2179 = vpack.c.bf16 %v2114, %v2114
        %v2180 = vpack.c.bf16 %v2168, %v2168
        %2184 = vrot.lane.b32.xlu0 %v1020, 120
        %v2185 = vpop.permute.xlu0 %2184
        %2186 = vrot.lane.b32.xlu0 %v1022, 120
        %v2187 = vpop.permute.xlu0 %2186
        %2188 = vrot.lane.b32.xlu0 %v1025, 120
        %v2189 = vpop.permute.xlu0 %2188
        %2193 = vrot.lane.b32.xlu0 %v1020, 112
        %v2194 = vpop.permute.xlu0 %2193
        %2195 = vrot.lane.b32.xlu0 %v1022, 112
        %v2196 = vpop.permute.xlu0 %2195
        %2197 = vrot.lane.b32.xlu0 %v1025, 112
        %v2198 = vpop.permute.xlu0 %2197
        %2202 = vrot.lane.b32.xlu0 %v1020, 104
        %v2203 = vpop.permute.xlu0 %2202
        %2204 = vrot.lane.b32.xlu0 %v1022, 104
        %v2205 = vpop.permute.xlu0 %2204
        %2206 = vrot.lane.b32.xlu0 %v1025, 104
        %v2207 = vpop.permute.xlu0 %2206
        %v2211 = vrot.slane %v2194, 4
        %v2212 = vsel %vm1062, %v2211, %v1020
        %v2213 = vrot.slane %v1020, 4
        %v2214 = vsel %vm1062, %v2194, %v2213
        %v2216 = vunpack.c.l.s4 1983009808
        %v2217 = vunpack.c.0.s8 %v2216
        %v2218 = vperm.slane %v2212, %v2217
        %v2220 = vunpack.c.l.s4 1983009808
        %v2221 = vunpack.c.0.s8 %v2220
        %v2222 = vperm.slane %v2214, %v2221
        %v2223 = vrot.slane %v2203, 4
        %v2224 = vsel %vm1062, %v2223, %v2185
        %v2225 = vrot.slane %v2185, 4
        %v2226 = vsel %vm1062, %v2203, %v2225
        %v2228 = vunpack.c.l.s4 1983009808
        %v2229 = vunpack.c.0.s8 %v2228
        %v2230 = vperm.slane %v2224, %v2229
        %v2232 = vunpack.c.l.s4 1983009808
        %v2233 = vunpack.c.0.s8 %v2232
        %v2234 = vperm.slane %v2226, %v2233
        %v2235 = vrot.slane %v2230, 4
        %v2236 = vsel %vm1062, %v2235, %v2218
        %v2237 = vrot.slane %v2218, 4
        %v2238 = vsel %vm1062, %v2230, %v2237
        %v2240 = vunpack.c.l.s4 1934713408
        %v2241 = vunpack.c.0.s8 %v2240
        %v2242 = vperm.slane %v2236, %v2241
        %v2244 = vunpack.c.l.s4 1934713408
        %v2245 = vunpack.c.0.s8 %v2244
        %v2246 = vperm.slane %v2238, %v2245
        %v2247 = vrot.slane %v2234, 4
        %v2248 = vsel %vm1062, %v2247, %v2222
        %v2249 = vrot.slane %v2222, 4
        %v2250 = vsel %vm1062, %v2234, %v2249
        %v2252 = vunpack.c.l.s4 1934713408
        %v2253 = vunpack.c.0.s8 %v2252
        %v2254 = vperm.slane %v2248, %v2253
        %v2256 = vunpack.c.l.s4 1934713408
        %v2257 = vunpack.c.0.s8 %v2256
        %v2258 = vperm.slane %v2250, %v2257
        %v2259 = vrot.slane %v2242, 4
        %v2260 = vsel %vm1062, 0.0, %v2259
        %v2261 = vrot.slane %v2246, 4
        %v2262 = vsel %vm1062, 0.0, %v2261
        %v2263 = vrot.slane %v2254, 4
        %v2264 = vsel %vm1062, 0.0, %v2263
        %v2265 = vrot.slane %v2258, 4
        %v2266 = vsel %vm1062, 0.0, %v2265
        %v2267 = vrot.slane %v2196, 4
        %v2268 = vsel %vm1062, %v2267, %v1022
        %v2269 = vrot.slane %v1022, 4
        %v2270 = vsel %vm1062, %v2196, %v2269
        %v2272 = vunpack.c.l.s4 1983009808
        %v2273 = vunpack.c.0.s8 %v2272
        %v2274 = vperm.slane %v2268, %v2273
        %v2276 = vunpack.c.l.s4 1983009808
        %v2277 = vunpack.c.0.s8 %v2276
        %v2278 = vperm.slane %v2270, %v2277
        %v2279 = vrot.slane %v2205, 4
        %v2280 = vsel %vm1062, %v2279, %v2187
        %v2281 = vrot.slane %v2187, 4
        %v2282 = vsel %vm1062, %v2205, %v2281
        %v2284 = vunpack.c.l.s4 1983009808
        %v2285 = vunpack.c.0.s8 %v2284
        %v2286 = vperm.slane %v2280, %v2285
        %v2288 = vunpack.c.l.s4 1983009808
        %v2289 = vunpack.c.0.s8 %v2288
        %v2290 = vperm.slane %v2282, %v2289
        %v2291 = vrot.slane %v2286, 4
        %v2292 = vsel %vm1062, %v2291, %v2274
        %v2293 = vrot.slane %v2274, 4
        %v2294 = vsel %vm1062, %v2286, %v2293
        %v2296 = vunpack.c.l.s4 1934713408
        %v2297 = vunpack.c.0.s8 %v2296
        %v2298 = vperm.slane %v2292, %v2297
        %v2300 = vunpack.c.l.s4 1934713408
        %v2301 = vunpack.c.0.s8 %v2300
        %v2302 = vperm.slane %v2294, %v2301
        %v2303 = vrot.slane %v2290, 4
        %v2304 = vsel %vm1062, %v2303, %v2278
        %v2305 = vrot.slane %v2278, 4
        %v2306 = vsel %vm1062, %v2290, %v2305
        %v2308 = vunpack.c.l.s4 1934713408
        %v2309 = vunpack.c.0.s8 %v2308
        %v2310 = vperm.slane %v2304, %v2309
        %v2312 = vunpack.c.l.s4 1934713408
        %v2313 = vunpack.c.0.s8 %v2312
        %v2314 = vperm.slane %v2306, %v2313
        %v2315 = vrot.slane %v2298, 4
        %v2316 = vsel %vm1062, 0.0, %v2315
        %v2317 = vrot.slane %v2302, 4
        %v2318 = vsel %vm1062, 0.0, %v2317
        %v2319 = vrot.slane %v2310, 4
        %v2320 = vsel %vm1062, 0.0, %v2319
        %v2321 = vrot.slane %v2314, 4
        %v2322 = vsel %vm1062, 0.0, %v2321
        %v2323 = vrot.slane %v2198, 4
        %v2324 = vsel %vm1062, %v2323, %v1025
        %v2325 = vrot.slane %v1025, 4
        %v2326 = vsel %vm1062, %v2198, %v2325
        %v2328 = vunpack.c.l.s4 1983009808
        %v2329 = vunpack.c.0.s8 %v2328
        %v2330 = vperm.slane %v2324, %v2329
        %v2332 = vunpack.c.l.s4 1983009808
        %v2333 = vunpack.c.0.s8 %v2332
        %v2334 = vperm.slane %v2326, %v2333
        %v2335 = vrot.slane %v2207, 4
        %v2336 = vsel %vm1062, %v2335, %v2189
        %v2337 = vrot.slane %v2189, 4
        %v2338 = vsel %vm1062, %v2207, %v2337
        %v2340 = vunpack.c.l.s4 1983009808
        %v2341 = vunpack.c.0.s8 %v2340
        %v2342 = vperm.slane %v2336, %v2341
        %v2344 = vunpack.c.l.s4 1983009808
        %v2345 = vunpack.c.0.s8 %v2344
        %v2346 = vperm.slane %v2338, %v2345
        %v2347 = vrot.slane %v2342, 4
        %v2348 = vsel %vm1062, %v2347, %v2330
        %v2349 = vrot.slane %v2330, 4
        %v2350 = vsel %vm1062, %v2342, %v2349
        %v2352 = vunpack.c.l.s4 1934713408
        %v2353 = vunpack.c.0.s8 %v2352
        %v2354 = vperm.slane %v2348, %v2353
        %v2356 = vunpack.c.l.s4 1934713408
        %v2357 = vunpack.c.0.s8 %v2356
        %v2358 = vperm.slane %v2350, %v2357
        %v2359 = vrot.slane %v2346, 4
        %v2360 = vsel %vm1062, %v2359, %v2334
        %v2361 = vrot.slane %v2334, 4
        %v2362 = vsel %vm1062, %v2346, %v2361
        %v2364 = vunpack.c.l.s4 1934713408
        %v2365 = vunpack.c.0.s8 %v2364
        %v2366 = vperm.slane %v2360, %v2365
        %v2368 = vunpack.c.l.s4 1934713408
        %v2369 = vunpack.c.0.s8 %v2368
        %v2370 = vperm.slane %v2362, %v2369
        %v2371 = vrot.slane %v2354, 4
        %v2372 = vsel %vm1062, 0.0, %v2371
        %v2373 = vrot.slane %v2358, 4
        %v2374 = vsel %vm1062, 0.0, %v2373
        %v2375 = vrot.slane %v2366, 4
        %v2376 = vsel %vm1062, 0.0, %v2375
        %v2377 = vrot.slane %v2370, 4
        %v2378 = vsel %vm1062, 0.0, %v2377
        %v2379 = vsel %vm1062, %v2261, %v2242
        %v2381 = vunpack.c.l.s4 1983009808
        %v2382 = vunpack.c.0.s8 %v2381
        %v2383 = vperm.slane %v2379, %v2382
        %v2384 = vrot.slane %v2262, 4
        %v2385 = vsel %vm1062, %v2384, %v2260
        %v2387 = vunpack.c.l.s4 1983009808
        %v2388 = vunpack.c.0.s8 %v2387
        %v2389 = vperm.slane %v2385, %v2388
        %v2390 = vsel %vm1062, %v2265, %v2254
        %v2392 = vunpack.c.l.s4 1983009808
        %v2393 = vunpack.c.0.s8 %v2392
        %v2394 = vperm.slane %v2390, %v2393
        %v2395 = vrot.slane %v2266, 4
        %v2396 = vsel %vm1062, %v2395, %v2264
        %v2398 = vunpack.c.l.s4 1983009808
        %v2399 = vunpack.c.0.s8 %v2398
        %v2400 = vperm.slane %v2396, %v2399
        %v2401 = vrot.slane %v2389, 4
        %v2402 = vsel %vm1062, %v2401, %v2383
        %v2403 = vrot.slane %v2383, 4
        %v2404 = vsel %vm1062, %v2389, %v2403
        %v2406 = vunpack.c.l.s4 1934713408
        %v2407 = vunpack.c.0.s8 %v2406
        %v2408 = vperm.slane %v2402, %v2407
        %v2410 = vunpack.c.l.s4 1934713408
        %v2411 = vunpack.c.0.s8 %v2410
        %v2412 = vperm.slane %v2404, %v2411
        %v2413 = vrot.slane %v2400, 4
        %v2414 = vsel %vm1062, %v2413, %v2394
        %v2415 = vrot.slane %v2394, 4
        %v2416 = vsel %vm1062, %v2400, %v2415
        %v2418 = vunpack.c.l.s4 1934713408
        %v2419 = vunpack.c.0.s8 %v2418
        %v2420 = vperm.slane %v2414, %v2419
        %v2422 = vunpack.c.l.s4 1934713408
        %v2423 = vunpack.c.0.s8 %v2422
        %v2424 = vperm.slane %v2416, %v2423
        %v2425 = vrot.slane %v2420, 4
        %v2426 = vsel %vm1062, %v2425, %v2408
        %v2427 = vrot.slane %v2408, 4
        %v2428 = vsel %vm1062, %v2420, %v2427
        %v2429 = vrot.slane %v2424, 4
        %v2430 = vsel %vm1062, %v2429, %v2412
        %v2431 = vrot.slane %v2412, 4
        %v2432 = vsel %vm1062, %v2424, %v2431
        %v2433 = vsel %vm1062, %v2317, %v2298
        %v2435 = vunpack.c.l.s4 1983009808
        %v2436 = vunpack.c.0.s8 %v2435
        %v2437 = vperm.slane %v2433, %v2436
        %v2438 = vrot.slane %v2318, 4
        %v2439 = vsel %vm1062, %v2438, %v2316
        %v2441 = vunpack.c.l.s4 1983009808
        %v2442 = vunpack.c.0.s8 %v2441
        %v2443 = vperm.slane %v2439, %v2442
        %v2444 = vsel %vm1062, %v2321, %v2310
        %v2446 = vunpack.c.l.s4 1983009808
        %v2447 = vunpack.c.0.s8 %v2446
        %v2448 = vperm.slane %v2444, %v2447
        %v2449 = vrot.slane %v2322, 4
        %v2450 = vsel %vm1062, %v2449, %v2320
        %v2452 = vunpack.c.l.s4 1983009808
        %v2453 = vunpack.c.0.s8 %v2452
        %v2454 = vperm.slane %v2450, %v2453
        %v2455 = vrot.slane %v2443, 4
        %v2456 = vsel %vm1062, %v2455, %v2437
        %v2457 = vrot.slane %v2437, 4
        %v2458 = vsel %vm1062, %v2443, %v2457
        %v2460 = vunpack.c.l.s4 1934713408
        %v2461 = vunpack.c.0.s8 %v2460
        %v2462 = vperm.slane %v2456, %v2461
        %v2464 = vunpack.c.l.s4 1934713408
        %v2465 = vunpack.c.0.s8 %v2464
        %v2466 = vperm.slane %v2458, %v2465
        %v2467 = vrot.slane %v2454, 4
        %v2468 = vsel %vm1062, %v2467, %v2448
        %v2469 = vrot.slane %v2448, 4
        %v2470 = vsel %vm1062, %v2454, %v2469
        %v2472 = vunpack.c.l.s4 1934713408
        %v2473 = vunpack.c.0.s8 %v2472
        %v2474 = vperm.slane %v2468, %v2473
        %v2476 = vunpack.c.l.s4 1934713408
        %v2477 = vunpack.c.0.s8 %v2476
        %v2478 = vperm.slane %v2470, %v2477
        %v2479 = vrot.slane %v2474, 4
        %v2480 = vsel %vm1062, %v2479, %v2462
        %v2481 = vrot.slane %v2462, 4
        %v2482 = vsel %vm1062, %v2474, %v2481
        %v2483 = vrot.slane %v2478, 4
        %v2484 = vsel %vm1062, %v2483, %v2466
        %v2485 = vrot.slane %v2466, 4
        %v2486 = vsel %vm1062, %v2478, %v2485
        %v2487 = vsel %vm1062, %v2373, %v2354
        %v2489 = vunpack.c.l.s4 1983009808
        %v2490 = vunpack.c.0.s8 %v2489
        %v2491 = vperm.slane %v2487, %v2490
        %v2492 = vrot.slane %v2374, 4
        %v2493 = vsel %vm1062, %v2492, %v2372
        %v2495 = vunpack.c.l.s4 1983009808
        %v2496 = vunpack.c.0.s8 %v2495
        %v2497 = vperm.slane %v2493, %v2496
        %v2498 = vsel %vm1062, %v2377, %v2366
        %v2500 = vunpack.c.l.s4 1983009808
        %v2501 = vunpack.c.0.s8 %v2500
        %v2502 = vperm.slane %v2498, %v2501
        %v2503 = vrot.slane %v2378, 4
        %v2504 = vsel %vm1062, %v2503, %v2376
        %v2506 = vunpack.c.l.s4 1983009808
        %v2507 = vunpack.c.0.s8 %v2506
        %v2508 = vperm.slane %v2504, %v2507
        %v2509 = vrot.slane %v2497, 4
        %v2510 = vsel %vm1062, %v2509, %v2491
        %v2511 = vrot.slane %v2491, 4
        %v2512 = vsel %vm1062, %v2497, %v2511
        %v2514 = vunpack.c.l.s4 1934713408
        %v2515 = vunpack.c.0.s8 %v2514
        %v2516 = vperm.slane %v2510, %v2515
        %v2518 = vunpack.c.l.s4 1934713408
        %v2519 = vunpack.c.0.s8 %v2518
        %v2520 = vperm.slane %v2512, %v2519
        %v2521 = vrot.slane %v2508, 4
        %v2522 = vsel %vm1062, %v2521, %v2502
        %v2523 = vrot.slane %v2502, 4
        %v2524 = vsel %vm1062, %v2508, %v2523
        %v2526 = vunpack.c.l.s4 1934713408
        %v2527 = vunpack.c.0.s8 %v2526
        %v2528 = vperm.slane %v2522, %v2527
        %v2530 = vunpack.c.l.s4 1934713408
        %v2531 = vunpack.c.0.s8 %v2530
        %v2532 = vperm.slane %v2524, %v2531
        %v2533 = vrot.slane %v2528, 4
        %v2534 = vsel %vm1062, %v2533, %v2516
        %v2535 = vrot.slane %v2516, 4
        %v2536 = vsel %vm1062, %v2528, %v2535
        %v2537 = vrot.slane %v2532, 4
        %v2538 = vsel %vm1062, %v2537, %v2520
        %v2539 = vrot.slane %v2520, 4
        %v2540 = vsel %vm1062, %v2532, %v2539
        %v2541 = vpack.c.bf16 %v2426, %v2426
        %v2542 = vpack.c.bf16 %v2480, %v2480
        %v2543 = vpack.c.bf16 %v2534, %v2534
        %v2544 = vpack.c.bf16 %v2428, %v2428
        %v2545 = vpack.c.bf16 %v2482, %v2482
        %v2546 = vpack.c.bf16 %v2536, %v2536
        %v2547 = vpack.c.bf16 %v2430, %v2430
        %v2548 = vpack.c.bf16 %v2484, %v2484
        %v2549 = vpack.c.bf16 %v2538, %v2538
        %v2550 = vpack.c.bf16 %v2432, %v2432
        %v2551 = vpack.c.bf16 %v2486, %v2486
        %v2552 = vpack.c.bf16 %v2540, %v2540
        %2553 = vrot.lane.b32.xlu0 %v1020, 96
        %v2554 = vpop.permute.xlu0 %2553
        %2555 = vrot.lane.b32.xlu0 %v1022, 96
        %v2556 = vpop.permute.xlu0 %2555
        %2557 = vrot.lane.b32.xlu0 %v1025, 96
        %v2558 = vpop.permute.xlu0 %2557
        %2559 = vrot.lane.b32.xlu0 %v2185, 96
        %v2560 = vpop.permute.xlu0 %2559
        %2561 = vrot.lane.b32.xlu0 %v2187, 96
        %v2562 = vpop.permute.xlu0 %2561
        %2563 = vrot.lane.b32.xlu0 %v2189, 96
        %v2564 = vpop.permute.xlu0 %2563
        %2565 = vrot.lane.b32.xlu0 %v2194, 96
        %v2566 = vpop.permute.xlu0 %2565
        %2567 = vrot.lane.b32.xlu0 %v2196, 96
        %v2568 = vpop.permute.xlu0 %2567
        %2569 = vrot.lane.b32.xlu0 %v2198, 96
        %v2570 = vpop.permute.xlu0 %2569
        %2571 = vrot.lane.b32.xlu0 %v2203, 96
        %v2572 = vpop.permute.xlu0 %2571
        %2573 = vrot.lane.b32.xlu0 %v2205, 96
        %v2574 = vpop.permute.xlu0 %2573
        %2575 = vrot.lane.b32.xlu0 %v2207, 96
        %v2576 = vpop.permute.xlu0 %2575
        %v2589 = vrot.slane %v2566, 4
        %v2590 = vsel %vm1062, %v2589, %v2554
        %v2591 = vrot.slane %v2554, 4
        %v2592 = vsel %vm1062, %v2566, %v2591
        %v2594 = vunpack.c.l.s4 1983009808
        %v2595 = vunpack.c.0.s8 %v2594
        %v2596 = vperm.slane %v2590, %v2595
        %v2598 = vunpack.c.l.s4 1983009808
        %v2599 = vunpack.c.0.s8 %v2598
        %v2600 = vperm.slane %v2592, %v2599
        %v2601 = vrot.slane %v2572, 4
        %v2602 = vsel %vm1062, %v2601, %v2560
        %v2603 = vrot.slane %v2560, 4
        %v2604 = vsel %vm1062, %v2572, %v2603
        %v2606 = vunpack.c.l.s4 1983009808
        %v2607 = vunpack.c.0.s8 %v2606
        %v2608 = vperm.slane %v2602, %v2607
        %v2610 = vunpack.c.l.s4 1983009808
        %v2611 = vunpack.c.0.s8 %v2610
        %v2612 = vperm.slane %v2604, %v2611
        %v2613 = vrot.slane %v2608, 4
        %v2614 = vsel %vm1062, %v2613, %v2596
        %v2615 = vrot.slane %v2596, 4
        %v2616 = vsel %vm1062, %v2608, %v2615
        %v2618 = vunpack.c.l.s4 1934713408
        %v2619 = vunpack.c.0.s8 %v2618
        %v2620 = vperm.slane %v2614, %v2619
        %v2622 = vunpack.c.l.s4 1934713408
        %v2623 = vunpack.c.0.s8 %v2622
        %v2624 = vperm.slane %v2616, %v2623
        %v2625 = vrot.slane %v2612, 4
        %v2626 = vsel %vm1062, %v2625, %v2600
        %v2627 = vrot.slane %v2600, 4
        %v2628 = vsel %vm1062, %v2612, %v2627
        %v2630 = vunpack.c.l.s4 1934713408
        %v2631 = vunpack.c.0.s8 %v2630
        %v2632 = vperm.slane %v2626, %v2631
        %v2634 = vunpack.c.l.s4 1934713408
        %v2635 = vunpack.c.0.s8 %v2634
        %v2636 = vperm.slane %v2628, %v2635
        %v2637 = vrot.slane %v2620, 4
        %v2638 = vsel %vm1062, 0.0, %v2637
        %v2639 = vrot.slane %v2624, 4
        %v2640 = vsel %vm1062, 0.0, %v2639
        %v2641 = vrot.slane %v2632, 4
        %v2642 = vsel %vm1062, 0.0, %v2641
        %v2643 = vrot.slane %v2636, 4
        %v2644 = vsel %vm1062, 0.0, %v2643
        %v2645 = vrot.slane %v2568, 4
        %v2646 = vsel %vm1062, %v2645, %v2556
        %v2647 = vrot.slane %v2556, 4
        %v2648 = vsel %vm1062, %v2568, %v2647
        %v2650 = vunpack.c.l.s4 1983009808
        %v2651 = vunpack.c.0.s8 %v2650
        %v2652 = vperm.slane %v2646, %v2651
        %v2654 = vunpack.c.l.s4 1983009808
        %v2655 = vunpack.c.0.s8 %v2654
        %v2656 = vperm.slane %v2648, %v2655
        %v2657 = vrot.slane %v2574, 4
        %v2658 = vsel %vm1062, %v2657, %v2562
        %v2659 = vrot.slane %v2562, 4
        %v2660 = vsel %vm1062, %v2574, %v2659
        %v2662 = vunpack.c.l.s4 1983009808
        %v2663 = vunpack.c.0.s8 %v2662
        %v2664 = vperm.slane %v2658, %v2663
        %v2666 = vunpack.c.l.s4 1983009808
        %v2667 = vunpack.c.0.s8 %v2666
        %v2668 = vperm.slane %v2660, %v2667
        %v2669 = vrot.slane %v2664, 4
        %v2670 = vsel %vm1062, %v2669, %v2652
        %v2671 = vrot.slane %v2652, 4
        %v2672 = vsel %vm1062, %v2664, %v2671
        %v2674 = vunpack.c.l.s4 1934713408
        %v2675 = vunpack.c.0.s8 %v2674
        %v2676 = vperm.slane %v2670, %v2675
        %v2678 = vunpack.c.l.s4 1934713408
        %v2679 = vunpack.c.0.s8 %v2678
        %v2680 = vperm.slane %v2672, %v2679
        %v2681 = vrot.slane %v2668, 4
        %v2682 = vsel %vm1062, %v2681, %v2656
        %v2683 = vrot.slane %v2656, 4
        %v2684 = vsel %vm1062, %v2668, %v2683
        %v2686 = vunpack.c.l.s4 1934713408
        %v2687 = vunpack.c.0.s8 %v2686
        %v2688 = vperm.slane %v2682, %v2687
        %v2690 = vunpack.c.l.s4 1934713408
        %v2691 = vunpack.c.0.s8 %v2690
        %v2692 = vperm.slane %v2684, %v2691
        %v2693 = vrot.slane %v2676, 4
        %v2694 = vsel %vm1062, 0.0, %v2693
        %v2695 = vrot.slane %v2680, 4
        %v2696 = vsel %vm1062, 0.0, %v2695
        %v2697 = vrot.slane %v2688, 4
        %v2698 = vsel %vm1062, 0.0, %v2697
        %v2699 = vrot.slane %v2692, 4
        %v2700 = vsel %vm1062, 0.0, %v2699
        %v2701 = vrot.slane %v2570, 4
        %v2702 = vsel %vm1062, %v2701, %v2558
        %v2703 = vrot.slane %v2558, 4
        %v2704 = vsel %vm1062, %v2570, %v2703
        %v2706 = vunpack.c.l.s4 1983009808
        %v2707 = vunpack.c.0.s8 %v2706
        %v2708 = vperm.slane %v2702, %v2707
        %v2710 = vunpack.c.l.s4 1983009808
        %v2711 = vunpack.c.0.s8 %v2710
        %v2712 = vperm.slane %v2704, %v2711
        %v2713 = vrot.slane %v2576, 4
        %v2714 = vsel %vm1062, %v2713, %v2564
        %v2715 = vrot.slane %v2564, 4
        %v2716 = vsel %vm1062, %v2576, %v2715
        %v2718 = vunpack.c.l.s4 1983009808
        %v2719 = vunpack.c.0.s8 %v2718
        %v2720 = vperm.slane %v2714, %v2719
        %v2722 = vunpack.c.l.s4 1983009808
        %v2723 = vunpack.c.0.s8 %v2722
        %v2724 = vperm.slane %v2716, %v2723
        %v2725 = vrot.slane %v2720, 4
        %v2726 = vsel %vm1062, %v2725, %v2708
        %v2727 = vrot.slane %v2708, 4
        %v2728 = vsel %vm1062, %v2720, %v2727
        %v2730 = vunpack.c.l.s4 1934713408
        %v2731 = vunpack.c.0.s8 %v2730
        %v2732 = vperm.slane %v2726, %v2731
        %v2734 = vunpack.c.l.s4 1934713408
        %v2735 = vunpack.c.0.s8 %v2734
        %v2736 = vperm.slane %v2728, %v2735
        %v2737 = vrot.slane %v2724, 4
        %v2738 = vsel %vm1062, %v2737, %v2712
        %v2739 = vrot.slane %v2712, 4
        %v2740 = vsel %vm1062, %v2724, %v2739
        %v2742 = vunpack.c.l.s4 1934713408
        %v2743 = vunpack.c.0.s8 %v2742
        %v2744 = vperm.slane %v2738, %v2743
        %v2746 = vunpack.c.l.s4 1934713408
        %v2747 = vunpack.c.0.s8 %v2746
        %v2748 = vperm.slane %v2740, %v2747
        %v2749 = vrot.slane %v2732, 4
        %v2750 = vsel %vm1062, 0.0, %v2749
        %v2751 = vrot.slane %v2736, 4
        %v2752 = vsel %vm1062, 0.0, %v2751
        %v2753 = vrot.slane %v2744, 4
        %v2754 = vsel %vm1062, 0.0, %v2753
        %v2755 = vrot.slane %v2748, 4
        %v2756 = vsel %vm1062, 0.0, %v2755
        %v2757 = vsel %vm1062, %v2639, %v2620
        %v2759 = vunpack.c.l.s4 1983009808
        %v2760 = vunpack.c.0.s8 %v2759
        %v2761 = vperm.slane %v2757, %v2760
        %v2762 = vrot.slane %v2640, 4
        %v2763 = vsel %vm1062, %v2762, %v2638
        %v2765 = vunpack.c.l.s4 1983009808
        %v2766 = vunpack.c.0.s8 %v2765
        %v2767 = vperm.slane %v2763, %v2766
        %v2768 = vsel %vm1062, %v2643, %v2632
        %v2770 = vunpack.c.l.s4 1983009808
        %v2771 = vunpack.c.0.s8 %v2770
        %v2772 = vperm.slane %v2768, %v2771
        %v2773 = vrot.slane %v2644, 4
        %v2774 = vsel %vm1062, %v2773, %v2642
        %v2776 = vunpack.c.l.s4 1983009808
        %v2777 = vunpack.c.0.s8 %v2776
        %v2778 = vperm.slane %v2774, %v2777
        %v2779 = vrot.slane %v2767, 4
        %v2780 = vsel %vm1062, %v2779, %v2761
        %v2781 = vrot.slane %v2761, 4
        %v2782 = vsel %vm1062, %v2767, %v2781
        %v2784 = vunpack.c.l.s4 1934713408
        %v2785 = vunpack.c.0.s8 %v2784
        %v2786 = vperm.slane %v2780, %v2785
        %v2788 = vunpack.c.l.s4 1934713408
        %v2789 = vunpack.c.0.s8 %v2788
        %v2790 = vperm.slane %v2782, %v2789
        %v2791 = vrot.slane %v2778, 4
        %v2792 = vsel %vm1062, %v2791, %v2772
        %v2793 = vrot.slane %v2772, 4
        %v2794 = vsel %vm1062, %v2778, %v2793
        %v2796 = vunpack.c.l.s4 1934713408
        %v2797 = vunpack.c.0.s8 %v2796
        %v2798 = vperm.slane %v2792, %v2797
        %v2800 = vunpack.c.l.s4 1934713408
        %v2801 = vunpack.c.0.s8 %v2800
        %v2802 = vperm.slane %v2794, %v2801
        %v2803 = vrot.slane %v2798, 4
        %v2804 = vsel %vm1062, %v2803, %v2786
        %v2805 = vrot.slane %v2786, 4
        %v2806 = vsel %vm1062, %v2798, %v2805
        %v2807 = vrot.slane %v2802, 4
        %v2808 = vsel %vm1062, %v2807, %v2790
        %v2809 = vrot.slane %v2790, 4
        %v2810 = vsel %vm1062, %v2802, %v2809
        %v2811 = vsel %vm1062, %v2695, %v2676
        %v2813 = vunpack.c.l.s4 1983009808
        %v2814 = vunpack.c.0.s8 %v2813
        %v2815 = vperm.slane %v2811, %v2814
        %v2816 = vrot.slane %v2696, 4
        %v2817 = vsel %vm1062, %v2816, %v2694
        %v2819 = vunpack.c.l.s4 1983009808
        %v2820 = vunpack.c.0.s8 %v2819
        %v2821 = vperm.slane %v2817, %v2820
        %v2822 = vsel %vm1062, %v2699, %v2688
        %v2824 = vunpack.c.l.s4 1983009808
        %v2825 = vunpack.c.0.s8 %v2824
        %v2826 = vperm.slane %v2822, %v2825
        %v2827 = vrot.slane %v2700, 4
        %v2828 = vsel %vm1062, %v2827, %v2698
        %v2830 = vunpack.c.l.s4 1983009808
        %v2831 = vunpack.c.0.s8 %v2830
        %v2832 = vperm.slane %v2828, %v2831
        %v2833 = vrot.slane %v2821, 4
        %v2834 = vsel %vm1062, %v2833, %v2815
        %v2835 = vrot.slane %v2815, 4
        %v2836 = vsel %vm1062, %v2821, %v2835
        %v2838 = vunpack.c.l.s4 1934713408
        %v2839 = vunpack.c.0.s8 %v2838
        %v2840 = vperm.slane %v2834, %v2839
        %v2842 = vunpack.c.l.s4 1934713408
        %v2843 = vunpack.c.0.s8 %v2842
        %v2844 = vperm.slane %v2836, %v2843
        %v2845 = vrot.slane %v2832, 4
        %v2846 = vsel %vm1062, %v2845, %v2826
        %v2847 = vrot.slane %v2826, 4
        %v2848 = vsel %vm1062, %v2832, %v2847
        %v2850 = vunpack.c.l.s4 1934713408
        %v2851 = vunpack.c.0.s8 %v2850
        %v2852 = vperm.slane %v2846, %v2851
        %v2854 = vunpack.c.l.s4 1934713408
        %v2855 = vunpack.c.0.s8 %v2854
        %v2856 = vperm.slane %v2848, %v2855
        %v2857 = vrot.slane %v2852, 4
        %v2858 = vsel %vm1062, %v2857, %v2840
        %v2859 = vrot.slane %v2840, 4
        %v2860 = vsel %vm1062, %v2852, %v2859
        %v2861 = vrot.slane %v2856, 4
        %v2862 = vsel %vm1062, %v2861, %v2844
        %v2863 = vrot.slane %v2844, 4
        %v2864 = vsel %vm1062, %v2856, %v2863
        %v2865 = vsel %vm1062, %v2751, %v2732
        %v2867 = vunpack.c.l.s4 1983009808
        %v2868 = vunpack.c.0.s8 %v2867
        %v2869 = vperm.slane %v2865, %v2868
        %v2870 = vrot.slane %v2752, 4
        %v2871 = vsel %vm1062, %v2870, %v2750
        %v2873 = vunpack.c.l.s4 1983009808
        %v2874 = vunpack.c.0.s8 %v2873
        %v2875 = vperm.slane %v2871, %v2874
        %v2876 = vsel %vm1062, %v2755, %v2744
        %v2878 = vunpack.c.l.s4 1983009808
        %v2879 = vunpack.c.0.s8 %v2878
        %v2880 = vperm.slane %v2876, %v2879
        %v2881 = vrot.slane %v2756, 4
        %v2882 = vsel %vm1062, %v2881, %v2754
        %v2884 = vunpack.c.l.s4 1983009808
        %v2885 = vunpack.c.0.s8 %v2884
        %v2886 = vperm.slane %v2882, %v2885
        %v2887 = vrot.slane %v2875, 4
        %v2888 = vsel %vm1062, %v2887, %v2869
        %v2889 = vrot.slane %v2869, 4
        %v2890 = vsel %vm1062, %v2875, %v2889
        %v2892 = vunpack.c.l.s4 1934713408
        %v2893 = vunpack.c.0.s8 %v2892
        %v2894 = vperm.slane %v2888, %v2893
        %v2896 = vunpack.c.l.s4 1934713408
        %v2897 = vunpack.c.0.s8 %v2896
        %v2898 = vperm.slane %v2890, %v2897
        %v2899 = vrot.slane %v2886, 4
        %v2900 = vsel %vm1062, %v2899, %v2880
        %v2901 = vrot.slane %v2880, 4
        %v2902 = vsel %vm1062, %v2886, %v2901
        %v2904 = vunpack.c.l.s4 1934713408
        %v2905 = vunpack.c.0.s8 %v2904
        %v2906 = vperm.slane %v2900, %v2905
        %v2908 = vunpack.c.l.s4 1934713408
        %v2909 = vunpack.c.0.s8 %v2908
        %v2910 = vperm.slane %v2902, %v2909
        %v2911 = vrot.slane %v2906, 4
        %v2912 = vsel %vm1062, %v2911, %v2894
        %v2913 = vrot.slane %v2894, 4
        %v2914 = vsel %vm1062, %v2906, %v2913
        %v2915 = vrot.slane %v2910, 4
        %v2916 = vsel %vm1062, %v2915, %v2898
        %v2917 = vrot.slane %v2898, 4
        %v2918 = vsel %vm1062, %v2910, %v2917
        %v2919 = vpack.c.bf16 %v2804, %v2804
        %v2920 = vpack.c.bf16 %v2858, %v2858
        %v2921 = vpack.c.bf16 %v2912, %v2912
        %v2922 = vpack.c.bf16 %v2806, %v2806
        %v2923 = vpack.c.bf16 %v2860, %v2860
        %v2924 = vpack.c.bf16 %v2914, %v2914
        %v2925 = vpack.c.bf16 %v2808, %v2808
        %v2926 = vpack.c.bf16 %v2862, %v2862
        %v2927 = vpack.c.bf16 %v2916, %v2916
        %v2928 = vpack.c.bf16 %v2810, %v2810
        %v2929 = vpack.c.bf16 %v2864, %v2864
        %v2930 = vpack.c.bf16 %v2918, %v2918
        %2931 = vrot.lane.b32.xlu0 %v1028, 32
        %v2932 = vpop.permute.xlu0 %2931
        %2933 = vrot.lane.b32.xlu0 %v1035, 32
        %v2934 = vpop.permute.xlu0 %2933
        %2935 = vrot.lane.b32.xlu0 %v1044, 32
        %v2936 = vpop.permute.xlu0 %2935
        %2937 = vrot.lane.b32.xlu0 %v1053, 32
        %v2938 = vpop.permute.xlu0 %2937
        %v2943 = vrot.slane %v2936, 4
        %v2944 = vsel %vm1062, %v2943, %v2932
        %v2946 = vunpack.c.l.s4 1983009808
        %v2947 = vunpack.c.0.s8 %v2946
        %v2948 = vperm.slane %v2944, %v2947
        %v2949 = vrot.slane %v2938, 4
        %v2950 = vsel %vm1062, %v2949, %v2934
        %v2952 = vunpack.c.l.s4 1983009808
        %v2953 = vunpack.c.0.s8 %v2952
        %v2954 = vperm.slane %v2950, %v2953
        %v2955 = vrot.slane %v2954, 4
        %v2956 = vsel %vm1062, %v2955, %v2948
        %v2958 = vunpack.c.l.s4 1934713408
        %v2959 = vunpack.c.0.s8 %v2958
        %v2960 = vperm.slane %v2956, %v2959
        %v2962 = vunpack.c.l.s4 1983009808
        %v2963 = vunpack.c.0.s8 %v2962
        %v2964 = vperm.slane %v2960, %v2963
        %v2965 = vrot.slane %v2964, 4
        %v2966 = vsel %vm1062, 0.0, %v2965
        %v2968 = vunpack.c.l.s4 1934713408
        %v2969 = vunpack.c.0.s8 %v2968
        %v2970 = vperm.slane %v2964, %v2969
        %v2972 = vunpack.c.l.s4 1934713408
        %v2973 = vunpack.c.0.s8 %v2972
        %v2974 = vperm.slane %v2966, %v2973
        %v2975 = vrot.slane %v2970, 4
        %v2976 = vsel %vm1062, 0.0, %v2975
        %v2977 = vrot.slane %v2974, 4
        %v2978 = vsel %vm1062, 0.0, %v2977
        %v2979 = vpack.c.bf16 %v2970, %v2970
        %v2980 = vpack.c.bf16 %v2976, %v2976
        %v2981 = vpack.c.bf16 %v2974, %v2974
        %v2982 = vpack.c.bf16 %v2978, %v2978
        %v2986 = vunpack.c.l.b16 %v1392
        %v2987 = vunpack.c.l.b16 %v1393
        %v2988 = vunpack.c.l.b16 %v1394
        %v2989 = vpack.c.b16 %v2987, %v2986
        %v2990 = vpack.c.b16 %v2988, %v2988
        %v2994 = vunpack.c.l.b16 %v1791
        %v2995 = vunpack.c.l.b16 %v1792
        %v2996 = vunpack.c.l.b16 %v1793
        %v2997 = vpack.c.b16 %v2995, %v2994
        %v2998 = vpack.c.b16 %v2996, %v2996
        %vm2999 = vcmask 64512
        %v3001 = vsel %vm2999, %v2989, 0
        %v3004 = vsel %vm2999, %v2990, 0
        %v3007 = vsel %vm2999, %v2997, 0
        %v3010 = vsel %vm2999, %v2998, 0
        %3012 = vmatpush.bf16.xpose.msra.mxu0 0
        %3013 = vmatpush.bf16.xpose.msra.mxu0 0
        %3014 = vmatpush.bf16.xpose.msra.mxu0 0
        %3015 = vmatpush.bf16.xpose.msra.mxu0 0
        %3016 = vmatpush.bf16.xpose.msra.mxu0 0
        %3017 = vmatpush.bf16.xpose.msra.mxu0 0
        %3018 = vmatpush.bf16.xpose.msra.mxu0 %v3010
        %3019 = vmatpush.bf16.xpose.msra.mxu0 %v3007
        %3020 = vmatmul.bf16.gmra.mxu0 %v3001
        %v3021 = vpop.f32.mrf.mxu0
        %v3022 = vadd.f32 %v859, %v3021
        %v3023 = vpop.f32.mrf.mxu0
        %v3024 = vadd.f32 %v860, %v3023
        %3025 = vmatmul.bf16.gmra.mxu0 %v3004
        %v3026 = vpop.f32.mrf.mxu0
        %v3027 = vadd.f32 %v861, %v3026
        %v3028 = vpop.f32.mrf.mxu0
        %3029 = vdwg.mxu0
        %v3033 = vunpack.c.l.b16 %v1395
        %v3034 = vunpack.c.l.b16 %v1396
        %v3035 = vunpack.c.l.b16 %v1397
        %v3036 = vpack.c.b16 %v3034, %v3033
        %v3037 = vpack.c.b16 %v3035, %v3035
        %v3041 = vunpack.c.l.b16 %v1794
        %v3042 = vunpack.c.l.b16 %v1795
        %v3043 = vunpack.c.l.b16 %v1796
        %v3044 = vpack.c.b16 %v3042, %v3041
        %v3045 = vpack.c.b16 %v3043, %v3043
        %v3047 = vsel %vm2999, %v3036, 0
        %v3050 = vsel %vm2999, %v3037, 0
        %v3053 = vsel %vm2999, %v3044, 0
        %v3056 = vsel %vm2999, %v3045, 0
        %3058 = vmatpush.bf16.xpose.msra.mxu0 0
        %3059 = vmatpush.bf16.xpose.msra.mxu0 0
        %3060 = vmatpush.bf16.xpose.msra.mxu0 0
        %3061 = vmatpush.bf16.xpose.msra.mxu0 0
        %3062 = vmatpush.bf16.xpose.msra.mxu0 0
        %3063 = vmatpush.bf16.xpose.msra.mxu0 0
        %3064 = vmatpush.bf16.xpose.msra.mxu0 %v3056
        %3065 = vmatpush.bf16.xpose.msra.mxu0 %v3053
        %3066 = vmatmul.bf16.gmra.mxu0 %v3047
        %v3067 = vpop.f32.mrf.mxu0
        %v3068 = vadd.f32 %v859, %v3067
        %v3069 = vpop.f32.mrf.mxu0
        %v3070 = vadd.f32 %v860, %v3069
        %3071 = vmatmul.bf16.gmra.mxu0 %v3050
        %v3072 = vpop.f32.mrf.mxu0
        %v3073 = vadd.f32 %v861, %v3072
        %v3074 = vpop.f32.mrf.mxu0
        %3075 = vdwg.mxu0
        %v3079 = vunpack.c.l.b16 %v1398
        %v3080 = vunpack.c.l.b16 %v1399
        %v3081 = vunpack.c.l.b16 %v1400
        %v3082 = vpack.c.b16 %v3080, %v3079
        %v3083 = vpack.c.b16 %v3081, %v3081
        %v3087 = vunpack.c.l.b16 %v1797
        %v3088 = vunpack.c.l.b16 %v1798
        %v3089 = vunpack.c.l.b16 %v1799
        %v3090 = vpack.c.b16 %v3088, %v3087
        %v3091 = vpack.c.b16 %v3089, %v3089
        %v3093 = vsel %vm2999, %v3082, 0
        %v3096 = vsel %vm2999, %v3083, 0
        %v3099 = vsel %vm2999, %v3090, 0
        %v3102 = vsel %vm2999, %v3091, 0
        %3104 = vmatpush.bf16.xpose.msra.mxu0 0
        %3105 = vmatpush.bf16.xpose.msra.mxu0 0
        %3106 = vmatpush.bf16.xpose.msra.mxu0 0
        %3107 = vmatpush.bf16.xpose.msra.mxu0 0
        %3108 = vmatpush.bf16.xpose.msra.mxu0 0
        %3109 = vmatpush.bf16.xpose.msra.mxu0 0
        %3110 = vmatpush.bf16.xpose.msra.mxu0 %v3102
        %3111 = vmatpush.bf16.xpose.msra.mxu0 %v3099
        %3112 = vmatmul.bf16.gmra.mxu0 %v3093
        %v3113 = vpop.f32.mrf.mxu0
        %v3114 = vadd.f32 %v859, %v3113
        %v3115 = vpop.f32.mrf.mxu0
        %v3116 = vadd.f32 %v860, %v3115
        %3117 = vmatmul.bf16.gmra.mxu0 %v3096
        %v3118 = vpop.f32.mrf.mxu0
        %v3119 = vadd.f32 %v861, %v3118
        %v3120 = vpop.f32.mrf.mxu0
        %3121 = vdwg.mxu0
        %v3125 = vunpack.c.l.b16 %v1401
        %v3126 = vunpack.c.l.b16 %v1402
        %v3127 = vunpack.c.l.b16 %v1403
        %v3128 = vpack.c.b16 %v3126, %v3125
        %v3129 = vpack.c.b16 %v3127, %v3127
        %v3133 = vunpack.c.l.b16 %v1800
        %v3134 = vunpack.c.l.b16 %v1801
        %v3135 = vunpack.c.l.b16 %v1802
        %v3136 = vpack.c.b16 %v3134, %v3133
        %v3137 = vpack.c.b16 %v3135, %v3135
        %v3139 = vsel %vm2999, %v3128, 0
        %v3142 = vsel %vm2999, %v3129, 0
        %v3145 = vsel %vm2999, %v3136, 0
        %v3148 = vsel %vm2999, %v3137, 0
        %3150 = vmatpush.bf16.xpose.msra.mxu0 0
        %3151 = vmatpush.bf16.xpose.msra.mxu0 0
        %3152 = vmatpush.bf16.xpose.msra.mxu0 0
        %3153 = vmatpush.bf16.xpose.msra.mxu0 0
        %3154 = vmatpush.bf16.xpose.msra.mxu0 0
        %3155 = vmatpush.bf16.xpose.msra.mxu0 0
        %3156 = vmatpush.bf16.xpose.msra.mxu0 %v3148
        %3157 = vmatpush.bf16.xpose.msra.mxu0 %v3145
        %3158 = vmatmul.bf16.gmra.mxu0 %v3139
        %v3159 = vpop.f32.mrf.mxu0
        %v3160 = vadd.f32 %v859, %v3159
        %v3161 = vpop.f32.mrf.mxu0
        %v3162 = vadd.f32 %v860, %v3161
        %3163 = vmatmul.bf16.gmra.mxu0 %v3142
        %v3164 = vpop.f32.mrf.mxu0
        %v3165 = vadd.f32 %v861, %v3164
        %v3166 = vpop.f32.mrf.mxu0
        %3167 = vdwg.mxu0
        %vm3168 = vcmask 195584
        %v3169 = vsel %vm3168, %v3022, -inf
        %3170 = vmax.xlane.f32.xlu0 %v3169
        %v3171 = vpop.xlane.xlu0 %3170
        %v3172 = vsel %vm3168, %v3024, -inf
        %3173 = vmax.xlane.f32.xlu0 %v3172
        %v3174 = vpop.xlane.xlu0 %3173
        %v3175 = vsel %vm3168, %v3027, -inf
        %3176 = vmax.xlane.f32.xlu0 %v3175
        %v3177 = vpop.xlane.xlu0 %3176
        %v3178 = vsel %vm3168, %v3068, -inf
        %3179 = vmax.xlane.f32.xlu0 %v3178
        %v3180 = vpop.xlane.xlu0 %3179
        %v3181 = vsel %vm3168, %v3070, -inf
        %3182 = vmax.xlane.f32.xlu0 %v3181
        %v3183 = vpop.xlane.xlu0 %3182
        %v3184 = vsel %vm3168, %v3073, -inf
        %3185 = vmax.xlane.f32.xlu0 %v3184
        %v3186 = vpop.xlane.xlu0 %3185
        %v3187 = vsel %vm3168, %v3114, -inf
        %3188 = vmax.xlane.f32.xlu0 %v3187
        %v3189 = vpop.xlane.xlu0 %3188
        %v3190 = vsel %vm3168, %v3116, -inf
        %3191 = vmax.xlane.f32.xlu0 %v3190
        %v3192 = vpop.xlane.xlu0 %3191
        %v3193 = vsel %vm3168, %v3119, -inf
        %3194 = vmax.xlane.f32.xlu0 %v3193
        %v3195 = vpop.xlane.xlu0 %3194
        %v3196 = vsel %vm3168, %v3160, -inf
        %3197 = vmax.xlane.f32.xlu0 %v3196
        %v3198 = vpop.xlane.xlu0 %3197
        %v3199 = vsel %vm3168, %v3162, -inf
        %3200 = vmax.xlane.f32.xlu0 %v3199
        %v3201 = vpop.xlane.xlu0 %3200
        %v3202 = vsel %vm3168, %v3165, -inf
        %3203 = vmax.xlane.f32.xlu0 %v3202
        %v3204 = vpop.xlane.xlu0 %3203
        %v3205 = vsub.f32 %v3022, %v3171
        %v3206 = vsub.f32 %v3024, %v3174
        %v3207 = vsub.f32 %v3027, %v3177
        %v3208 = vsub.f32 %v3068, %v3180
        %v3209 = vsub.f32 %v3070, %v3183
        %v3210 = vsub.f32 %v3073, %v3186
        %v3211 = vsub.f32 %v3114, %v3189
        %v3212 = vsub.f32 %v3116, %v3192
        %v3213 = vsub.f32 %v3119, %v3195
        %v3214 = vsub.f32 %v3160, %v3198
        %v3215 = vsub.f32 %v3162, %v3201
        %v3216 = vsub.f32 %v3165, %v3204
        %v3217 = vmul.f32 %v3205, 1.442695
        %v3218 = vpow.pop %v3217
        %v3219 = vmul.f32 %v3206, 1.442695
        %v3220 = vpow.pop %v3219
        %v3221 = vmul.f32 %v3207, 1.442695
        %v3222 = vpow.pop %v3221
        %v3223 = vmul.f32 %v3208, 1.442695
        %v3224 = vpow.pop %v3223
        %v3225 = vmul.f32 %v3209, 1.442695
        %v3226 = vpow.pop %v3225
        %v3227 = vmul.f32 %v3210, 1.442695
        %v3228 = vpow.pop %v3227
        %v3229 = vmul.f32 %v3211, 1.442695
        %v3230 = vpow.pop %v3229
        %v3231 = vmul.f32 %v3212, 1.442695
        %v3232 = vpow.pop %v3231
        %v3233 = vmul.f32 %v3213, 1.442695
        %v3234 = vpow.pop %v3233
        %v3235 = vmul.f32 %v3214, 1.442695
        %v3236 = vpow.pop %v3235
        %v3237 = vmul.f32 %v3215, 1.442695
        %v3238 = vpow.pop %v3237
        %v3239 = vmul.f32 %v3216, 1.442695
        %v3240 = vpow.pop %v3239
        %v3241 = vsel %vm3168, %v3218, 0.0
        %3242 = vadd.xlane.f32.xlu0 %v3241
        %v3243 = vpop.xlane.xlu0 %3242
        %v3244 = vsel %vm3168, %v3220, 0.0
        %3245 = vadd.xlane.f32.xlu0 %v3244
        %v3246 = vpop.xlane.xlu0 %3245
        %v3247 = vsel %vm3168, %v3222, 0.0
        %3248 = vadd.xlane.f32.xlu0 %v3247
        %v3249 = vpop.xlane.xlu0 %3248
        %v3250 = vsel %vm3168, %v3224, 0.0
        %3251 = vadd.xlane.f32.xlu0 %v3250
        %v3252 = vpop.xlane.xlu0 %3251
        %v3253 = vsel %vm3168, %v3226, 0.0
        %3254 = vadd.xlane.f32.xlu0 %v3253
        %v3255 = vpop.xlane.xlu0 %3254
        %v3256 = vsel %vm3168, %v3228, 0.0
        %3257 = vadd.xlane.f32.xlu0 %v3256
        %v3258 = vpop.xlane.xlu0 %3257
        %v3259 = vsel %vm3168, %v3230, 0.0
        %3260 = vadd.xlane.f32.xlu0 %v3259
        %v3261 = vpop.xlane.xlu0 %3260
        %v3262 = vsel %vm3168, %v3232, 0.0
        %3263 = vadd.xlane.f32.xlu0 %v3262
        %v3264 = vpop.xlane.xlu0 %3263
        %v3265 = vsel %vm3168, %v3234, 0.0
        %3266 = vadd.xlane.f32.xlu0 %v3265
        %v3267 = vpop.xlane.xlu0 %3266
        %v3268 = vsel %vm3168, %v3236, 0.0
        %3269 = vadd.xlane.f32.xlu0 %v3268
        %v3270 = vpop.xlane.xlu0 %3269
        %v3271 = vsel %vm3168, %v3238, 0.0
        %3272 = vadd.xlane.f32.xlu0 %v3271
        %v3273 = vpop.xlane.xlu0 %3272
        %v3274 = vsel %vm3168, %v3240, 0.0
        %3275 = vadd.xlane.f32.xlu0 %v3274
        %v3276 = vpop.xlane.xlu0 %3275
        %v3277 = vrcp.pop %v3243
        %v3278 = vrcp.pop %v3246
        %v3279 = vrcp.pop %v3249
        %v3280 = vrcp.pop %v3252
        %v3281 = vrcp.pop %v3255
        %v3282 = vrcp.pop %v3258
        %v3283 = vrcp.pop %v3261
        %v3284 = vrcp.pop %v3264
        %v3285 = vrcp.pop %v3267
        %v3286 = vrcp.pop %v3270
        %v3287 = vrcp.pop %v3273
        %v3288 = vrcp.pop %v3276
        %v3289 = vmul.f32 %v3218, %v3277
        %v3290 = vmul.f32 %v3220, %v3278
        %v3291 = vmul.f32 %v3222, %v3279
        %v3292 = vmul.f32 %v3224, %v3280
        %v3293 = vmul.f32 %v3226, %v3281
        %v3294 = vmul.f32 %v3228, %v3282
        %v3295 = vmul.f32 %v3230, %v3283
        %v3296 = vmul.f32 %v3232, %v3284
        %v3297 = vmul.f32 %v3234, %v3285
        %v3298 = vmul.f32 %v3236, %v3286
        %v3299 = vmul.f32 %v3238, %v3287
        %v3300 = vmul.f32 %v3240, %v3288
        %v3301 = vpack.c.bf16 %v3289, %v3289
        %v3302 = vpack.c.bf16 %v3290, %v3290
        %v3303 = vpack.c.bf16 %v3291, %v3291
        %v3304 = vpack.c.bf16 %v3292, %v3292
        %v3305 = vpack.c.bf16 %v3293, %v3293
        %v3306 = vpack.c.bf16 %v3294, %v3294
        %v3307 = vpack.c.bf16 %v3295, %v3295
        %v3308 = vpack.c.bf16 %v3296, %v3296
        %v3309 = vpack.c.bf16 %v3297, %v3297
        %v3310 = vpack.c.bf16 %v3298, %v3298
        %v3311 = vpack.c.bf16 %v3299, %v3299
        %v3312 = vpack.c.bf16 %v3300, %v3300
        %v3316 = vunpack.c.l.b16 %v3301
        %v3317 = vunpack.c.l.b16 %v3302
        %v3318 = vunpack.c.l.b16 %v3303
        %v3319 = vpack.c.b16 %v3317, %v3316
        %v3320 = vpack.c.b16 %v3318, %v3318
        %v3324 = vunpack.c.l.b16 %v2169
        %v3325 = vunpack.c.l.b16 %v2170
        %v3326 = vunpack.c.l.b16 %v2171
        %v3327 = vpack.c.b16 %v3325, %v3324
        %v3328 = vpack.c.b16 %v3326, %v3326
        %v3331 = vsel %vm3168, %v3319, 0
        %v3334 = vsel %vm3168, %v3320, 0
        %vm3336 = vcmask 1043456
        %v3338 = vsel %vm3336, %v3328, 0
        %3340 = vmatpush.bf16.msra.mxu0 0
        %3341 = vmatpush.bf16.msra.mxu0 0
        %3342 = vmatpush.bf16.msra.mxu0 0
        %3343 = vmatpush.bf16.msra.mxu0 0
        %3344 = vmatpush.bf16.msra.mxu0 0
        %3345 = vmatpush.bf16.msra.mxu0 0
        %3346 = vmatpush.bf16.msra.mxu0 %v3338
        %3347 = vmatpush.bf16.msra.mxu0 %v3327
        %3348 = vmatmul.bf16.gmra.mxu0 %v3331
        %v3349 = vpop.f32.mrf.mxu0
        %v3350 = vadd.f32 0.0, %v3349
        %v3351 = vpop.f32.mrf.mxu0
        %v3352 = vadd.f32 0.0, %v3351
        %3353 = vmatmul.bf16.gmra.mxu0 %v3334
        %v3354 = vpop.f32.mrf.mxu0
        %v3355 = vadd.f32 0.0, %v3354
        %v3356 = vpop.f32.mrf.mxu0
        %3357 = vdwg.mxu0
        %v3361 = vunpack.c.l.b16 %v3304
        %v3362 = vunpack.c.l.b16 %v3305
        %v3363 = vunpack.c.l.b16 %v3306
        %v3364 = vpack.c.b16 %v3362, %v3361
        %v3365 = vpack.c.b16 %v3363, %v3363
        %v3369 = vunpack.c.l.b16 %v2172
        %v3370 = vunpack.c.l.b16 %v2173
        %v3371 = vunpack.c.l.b16 %v2174
        %v3372 = vpack.c.b16 %v3370, %v3369
        %v3373 = vpack.c.b16 %v3371, %v3371
        %v3376 = vsel %vm3168, %v3364, 0
        %v3379 = vsel %vm3168, %v3365, 0
        %v3382 = vsel %vm3336, %v3373, 0
        %3384 = vmatpush.bf16.msra.mxu0 0
        %3385 = vmatpush.bf16.msra.mxu0 0
        %3386 = vmatpush.bf16.msra.mxu0 0
        %3387 = vmatpush.bf16.msra.mxu0 0
        %3388 = vmatpush.bf16.msra.mxu0 0
        %3389 = vmatpush.bf16.msra.mxu0 0
        %3390 = vmatpush.bf16.msra.mxu0 %v3382
        %3391 = vmatpush.bf16.msra.mxu0 %v3372
        %3392 = vmatmul.bf16.gmra.mxu0 %v3376
        %v3393 = vpop.f32.mrf.mxu0
        %v3394 = vadd.f32 0.0, %v3393
        %v3395 = vpop.f32.mrf.mxu0
        %v3396 = vadd.f32 0.0, %v3395
        %3397 = vmatmul.bf16.gmra.mxu0 %v3379
        %v3398 = vpop.f32.mrf.mxu0
        %v3399 = vadd.f32 0.0, %v3398
        %v3400 = vpop.f32.mrf.mxu0
        %3401 = vdwg.mxu0
        %v3405 = vunpack.c.l.b16 %v3307
        %v3406 = vunpack.c.l.b16 %v3308
        %v3407 = vunpack.c.l.b16 %v3309
        %v3408 = vpack.c.b16 %v3406, %v3405
        %v3409 = vpack.c.b16 %v3407, %v3407
        %v3413 = vunpack.c.l.b16 %v2175
        %v3414 = vunpack.c.l.b16 %v2176
        %v3415 = vunpack.c.l.b16 %v2177
        %v3416 = vpack.c.b16 %v3414, %v3413
        %v3417 = vpack.c.b16 %v3415, %v3415
        %v3420 = vsel %vm3168, %v3408, 0
        %v3423 = vsel %vm3168, %v3409, 0
        %v3426 = vsel %vm3336, %v3417, 0
        %3428 = vmatpush.bf16.msra.mxu0 0
        %3429 = vmatpush.bf16.msra.mxu0 0
        %3430 = vmatpush.bf16.msra.mxu0 0
        %3431 = vmatpush.bf16.msra.mxu0 0
        %3432 = vmatpush.bf16.msra.mxu0 0
        %3433 = vmatpush.bf16.msra.mxu0 0
        %3434 = vmatpush.bf16.msra.mxu0 %v3426
        %3435 = vmatpush.bf16.msra.mxu0 %v3416
        %3436 = vmatmul.bf16.gmra.mxu0 %v3420
        %v3437 = vpop.f32.mrf.mxu0
        %v3438 = vadd.f32 0.0, %v3437
        %v3439 = vpop.f32.mrf.mxu0
        %v3440 = vadd.f32 0.0, %v3439
        %3441 = vmatmul.bf16.gmra.mxu0 %v3423
        %v3442 = vpop.f32.mrf.mxu0
        %v3443 = vadd.f32 0.0, %v3442
        %v3444 = vpop.f32.mrf.mxu0
        %3445 = vdwg.mxu0
        %v3449 = vunpack.c.l.b16 %v3310
        %v3450 = vunpack.c.l.b16 %v3311
        %v3451 = vunpack.c.l.b16 %v3312
        %v3452 = vpack.c.b16 %v3450, %v3449
        %v3453 = vpack.c.b16 %v3451, %v3451
        %v3457 = vunpack.c.l.b16 %v2178
        %v3458 = vunpack.c.l.b16 %v2179
        %v3459 = vunpack.c.l.b16 %v2180
        %v3460 = vpack.c.b16 %v3458, %v3457
        %v3461 = vpack.c.b16 %v3459, %v3459
        %v3464 = vsel %vm3168, %v3452, 0
        %v3467 = vsel %vm3168, %v3453, 0
        %v3470 = vsel %vm3336, %v3461, 0
        %3472 = vmatpush.bf16.msra.mxu0 0
        %3473 = vmatpush.bf16.msra.mxu0 0
        %3474 = vmatpush.bf16.msra.mxu0 0
        %3475 = vmatpush.bf16.msra.mxu0 0
        %3476 = vmatpush.bf16.msra.mxu0 0
        %3477 = vmatpush.bf16.msra.mxu0 0
        %3478 = vmatpush.bf16.msra.mxu0 %v3470
        %3479 = vmatpush.bf16.msra.mxu0 %v3460
        %3480 = vmatmul.bf16.gmra.mxu0 %v3464
        %v3481 = vpop.f32.mrf.mxu0
        %v3482 = vadd.f32 0.0, %v3481
        %v3483 = vpop.f32.mrf.mxu0
        %v3484 = vadd.f32 0.0, %v3483
        %3485 = vmatmul.bf16.gmra.mxu0 %v3467
        %v3486 = vpop.f32.mrf.mxu0
        %v3487 = vadd.f32 0.0, %v3486
        %v3488 = vpop.f32.mrf.mxu0
        %3489 = vdwg.mxu0
        %v3493 = vunpack.c.l.b16 %v2541
        %v3494 = vunpack.c.l.b16 %v2542
        %v3495 = vunpack.c.l.b16 %v2543
        %v3496 = vpack.c.b16 %v3494, %v3493
        %v3497 = vpack.c.b16 %v3495, %v3495
        %v3499 = vsel %vm2999, %v2979, 0
        %v3502 = vsel %vm2999, %v3496, 0
        %v3505 = vsel %vm2999, %v3497, 0
        %3507 = vmatpush.bf16.xpose.msra.mxu0 0
        %3508 = vmatpush.bf16.xpose.msra.mxu0 0
        %3509 = vmatpush.bf16.xpose.msra.mxu0 0
        %3510 = vmatpush.bf16.xpose.msra.mxu0 0
        %3511 = vmatpush.bf16.xpose.msra.mxu0 0
        %3512 = vmatpush.bf16.xpose.msra.mxu0 0
        %3513 = vmatpush.bf16.xpose.msra.mxu0 %v3505
        %3514 = vmatpush.bf16.xpose.msra.mxu0 %v3502
        %3515 = vmatmul.bf16.gmra.mxu0 %v3499
        %v3516 = vpop.f32.mrf.mxu0
        %v3517 = vadd.f32 %v862, %v3516
        %v3518 = vpop.f32.mrf.mxu0
        %3519 = vdwg.mxu0
        %v3523 = vunpack.c.l.b16 %v2544
        %v3524 = vunpack.c.l.b16 %v2545
        %v3525 = vunpack.c.l.b16 %v2546
        %v3526 = vpack.c.b16 %v3524, %v3523
        %v3527 = vpack.c.b16 %v3525, %v3525
        %v3529 = vsel %vm2999, %v2980, 0
        %v3532 = vsel %vm2999, %v3526, 0
        %v3535 = vsel %vm2999, %v3527, 0
        %3537 = vmatpush.bf16.xpose.msra.mxu0 0
        %3538 = vmatpush.bf16.xpose.msra.mxu0 0
        %3539 = vmatpush.bf16.xpose.msra.mxu0 0
        %3540 = vmatpush.bf16.xpose.msra.mxu0 0
        %3541 = vmatpush.bf16.xpose.msra.mxu0 0
        %3542 = vmatpush.bf16.xpose.msra.mxu0 0
        %3543 = vmatpush.bf16.xpose.msra.mxu0 %v3535
        %3544 = vmatpush.bf16.xpose.msra.mxu0 %v3532
        %3545 = vmatmul.bf16.gmra.mxu0 %v3529
        %v3546 = vpop.f32.mrf.mxu0
        %v3547 = vadd.f32 %v862, %v3546
        %v3548 = vpop.f32.mrf.mxu0
        %3549 = vdwg.mxu0
        %v3553 = vunpack.c.l.b16 %v2547
        %v3554 = vunpack.c.l.b16 %v2548
        %v3555 = vunpack.c.l.b16 %v2549
        %v3556 = vpack.c.b16 %v3554, %v3553
        %v3557 = vpack.c.b16 %v3555, %v3555
        %v3559 = vsel %vm2999, %v2981, 0
        %v3562 = vsel %vm2999, %v3556, 0
        %v3565 = vsel %vm2999, %v3557, 0
        %3567 = vmatpush.bf16.xpose.msra.mxu0 0
        %3568 = vmatpush.bf16.xpose.msra.mxu0 0
        %3569 = vmatpush.bf16.xpose.msra.mxu0 0
        %3570 = vmatpush.bf16.xpose.msra.mxu0 0
        %3571 = vmatpush.bf16.xpose.msra.mxu0 0
        %3572 = vmatpush.bf16.xpose.msra.mxu0 0
        %3573 = vmatpush.bf16.xpose.msra.mxu0 %v3565
        %3574 = vmatpush.bf16.xpose.msra.mxu0 %v3562
        %3575 = vmatmul.bf16.gmra.mxu0 %v3559
        %v3576 = vpop.f32.mrf.mxu0
        %v3577 = vadd.f32 %v862, %v3576
        %v3578 = vpop.f32.mrf.mxu0
        %3579 = vdwg.mxu0
        %v3583 = vunpack.c.l.b16 %v2550
        %v3584 = vunpack.c.l.b16 %v2551
        %v3585 = vunpack.c.l.b16 %v2552
        %v3586 = vpack.c.b16 %v3584, %v3583
        %v3587 = vpack.c.b16 %v3585, %v3585
        %v3589 = vsel %vm2999, %v2982, 0
        %v3592 = vsel %vm2999, %v3586, 0
        %v3595 = vsel %vm2999, %v3587, 0
        %3597 = vmatpush.bf16.xpose.msra.mxu0 0
        %3598 = vmatpush.bf16.xpose.msra.mxu0 0
        %3599 = vmatpush.bf16.xpose.msra.mxu0 0
        %3600 = vmatpush.bf16.xpose.msra.mxu0 0
        %3601 = vmatpush.bf16.xpose.msra.mxu0 0
        %3602 = vmatpush.bf16.xpose.msra.mxu0 0
        %3603 = vmatpush.bf16.xpose.msra.mxu0 %v3595
        %3604 = vmatpush.bf16.xpose.msra.mxu0 %v3592
        %3605 = vmatmul.bf16.gmra.mxu0 %v3589
        %v3606 = vpop.f32.mrf.mxu0
        %v3607 = vadd.f32 %v862, %v3606
        %v3608 = vpop.f32.mrf.mxu0
        %3609 = vdwg.mxu0
        %vm3610 = vcmask 188416
        %v3611 = vsel %vm3610, %v3517, -inf
        %3612 = vmax.xlane.f32.xlu0 %v3611
        %v3613 = vpop.xlane.xlu0 %3612
        %v3614 = vsel %vm3610, %v3547, -inf
        %3615 = vmax.xlane.f32.xlu0 %v3614
        %v3616 = vpop.xlane.xlu0 %3615
        %v3617 = vsel %vm3610, %v3577, -inf
        %3618 = vmax.xlane.f32.xlu0 %v3617
        %v3619 = vpop.xlane.xlu0 %3618
        %v3620 = vsel %vm3610, %v3607, -inf
        %3621 = vmax.xlane.f32.xlu0 %v3620
        %v3622 = vpop.xlane.xlu0 %3621
        %v3623 = vsub.f32 %v3517, %v3613
        %v3624 = vsub.f32 %v3547, %v3616
        %v3625 = vsub.f32 %v3577, %v3619
        %v3626 = vsub.f32 %v3607, %v3622
        %v3627 = vmul.f32 %v3623, 1.442695
        %v3628 = vpow.pop %v3627
        %v3629 = vmul.f32 %v3624, 1.442695
        %v3630 = vpow.pop %v3629
        %v3631 = vmul.f32 %v3625, 1.442695
        %v3632 = vpow.pop %v3631
        %v3633 = vmul.f32 %v3626, 1.442695
        %v3634 = vpow.pop %v3633
        %v3635 = vsel %vm3610, %v3628, 0.0
        %3636 = vadd.xlane.f32.xlu0 %v3635
        %v3637 = vpop.xlane.xlu0 %3636
        %v3638 = vsel %vm3610, %v3630, 0.0
        %3639 = vadd.xlane.f32.xlu0 %v3638
        %v3640 = vpop.xlane.xlu0 %3639
        %v3641 = vsel %vm3610, %v3632, 0.0
        %3642 = vadd.xlane.f32.xlu0 %v3641
        %v3643 = vpop.xlane.xlu0 %3642
        %v3644 = vsel %vm3610, %v3634, 0.0
        %3645 = vadd.xlane.f32.xlu0 %v3644
        %v3646 = vpop.xlane.xlu0 %3645
        %v3647 = vrcp.pop %v3637
        %v3648 = vrcp.pop %v3640
        %v3649 = vrcp.pop %v3643
        %v3650 = vrcp.pop %v3646
        %v3651 = vmul.f32 %v3628, %v3647
        %v3652 = vmul.f32 %v3630, %v3648
        %v3653 = vmul.f32 %v3632, %v3649
        %v3654 = vmul.f32 %v3634, %v3650
        %v3655 = vpack.c.bf16 %v3651, %v3651
        %v3656 = vpack.c.bf16 %v3652, %v3652
        %v3657 = vpack.c.bf16 %v3653, %v3653
        %v3658 = vpack.c.bf16 %v3654, %v3654
        %v3662 = vunpack.c.l.b16 %v2919
        %v3663 = vunpack.c.l.b16 %v2920
        %v3664 = vunpack.c.l.b16 %v2921
        %v3665 = vpack.c.b16 %v3663, %v3662
        %v3666 = vpack.c.b16 %v3664, %v3664
        %v3669 = vsel %vm3168, %v3655, 0
        %v3672 = vsel %vm3336, %v3666, 0
        %3674 = vmatpush.bf16.msra.mxu0 0
        %3675 = vmatpush.bf16.msra.mxu0 0
        %3676 = vmatpush.bf16.msra.mxu0 0
        %3677 = vmatpush.bf16.msra.mxu0 0
        %3678 = vmatpush.bf16.msra.mxu0 0
        %3679 = vmatpush.bf16.msra.mxu0 0
        %3680 = vmatpush.bf16.msra.mxu0 %v3672
        %3681 = vmatpush.bf16.msra.mxu0 %v3665
        %3682 = vmatmul.bf16.gmra.mxu0 %v3669
        %v3683 = vpop.f32.mrf.mxu0
        %v3684 = vadd.f32 0.0, %v3683
        %v3685 = vpop.f32.mrf.mxu0
        %3686 = vdwg.mxu0
        %v3690 = vunpack.c.l.b16 %v2922
        %v3691 = vunpack.c.l.b16 %v2923
        %v3692 = vunpack.c.l.b16 %v2924
        %v3693 = vpack.c.b16 %v3691, %v3690
        %v3694 = vpack.c.b16 %v3692, %v3692
        %v3697 = vsel %vm3168, %v3656, 0
        %v3700 = vsel %vm3336, %v3694, 0
        %3702 = vmatpush.bf16.msra.mxu0 0
        %3703 = vmatpush.bf16.msra.mxu0 0
        %3704 = vmatpush.bf16.msra.mxu0 0
        %3705 = vmatpush.bf16.msra.mxu0 0
        %3706 = vmatpush.bf16.msra.mxu0 0
        %3707 = vmatpush.bf16.msra.mxu0 0
        %3708 = vmatpush.bf16.msra.mxu0 %v3700
        %3709 = vmatpush.bf16.msra.mxu0 %v3693
        %3710 = vmatmul.bf16.gmra.mxu0 %v3697
        %v3711 = vpop.f32.mrf.mxu0
        %v3712 = vadd.f32 0.0, %v3711
        %v3713 = vpop.f32.mrf.mxu0
        %3714 = vdwg.mxu0
        %v3718 = vunpack.c.l.b16 %v2925
        %v3719 = vunpack.c.l.b16 %v2926
        %v3720 = vunpack.c.l.b16 %v2927
        %v3721 = vpack.c.b16 %v3719, %v3718
        %v3722 = vpack.c.b16 %v3720, %v3720
        %v3725 = vsel %vm3168, %v3657, 0
        %v3728 = vsel %vm3336, %v3722, 0
        %3730 = vmatpush.bf16.msra.mxu0 0
        %3731 = vmatpush.bf16.msra.mxu0 0
        %3732 = vmatpush.bf16.msra.mxu0 0
        %3733 = vmatpush.bf16.msra.mxu0 0
        %3734 = vmatpush.bf16.msra.mxu0 0
        %3735 = vmatpush.bf16.msra.mxu0 0
        %3736 = vmatpush.bf16.msra.mxu0 %v3728
        %3737 = vmatpush.bf16.msra.mxu0 %v3721
        %3738 = vmatmul.bf16.gmra.mxu0 %v3725
        %v3739 = vpop.f32.mrf.mxu0
        %v3740 = vadd.f32 0.0, %v3739
        %v3741 = vpop.f32.mrf.mxu0
        %3742 = vdwg.mxu0
        %v3746 = vunpack.c.l.b16 %v2928
        %v3747 = vunpack.c.l.b16 %v2929
        %v3748 = vunpack.c.l.b16 %v2930
        %v3749 = vpack.c.b16 %v3747, %v3746
        %v3750 = vpack.c.b16 %v3748, %v3748
        %v3753 = vsel %vm3168, %v3658, 0
        %v3756 = vsel %vm3336, %v3750, 0
        %3758 = vmatpush.bf16.msra.mxu0 0
        %3759 = vmatpush.bf16.msra.mxu0 0
        %3760 = vmatpush.bf16.msra.mxu0 0
        %3761 = vmatpush.bf16.msra.mxu0 0
        %3762 = vmatpush.bf16.msra.mxu0 0
        %3763 = vmatpush.bf16.msra.mxu0 0
        %3764 = vmatpush.bf16.msra.mxu0 %v3756
        %3765 = vmatpush.bf16.msra.mxu0 %v3749
        %3766 = vmatmul.bf16.gmra.mxu0 %v3753
        %v3767 = vpop.f32.mrf.mxu0
        %v3768 = vadd.f32 0.0, %v3767
        %v3769 = vpop.f32.mrf.mxu0
        %3770 = vdwg.mxu0
        %v3771 = vperm.slane %v3684, 0
        %v3772 = vperm.slane %v3712, 0
        %v3773 = vperm.slane %v3740, 0
        %v3774 = vperm.slane %v3768, 0
        %v3775 = vsub.f32 %v3771, %v3350
        %v3776 = vsub.f32 %v3771, %v3352
        %v3777 = vsub.f32 %v3771, %v3355
        %v3778 = vsub.f32 %v3772, %v3394
        %v3779 = vsub.f32 %v3772, %v3396
        %v3780 = vsub.f32 %v3772, %v3399
        %v3781 = vsub.f32 %v3773, %v3438
        %v3782 = vsub.f32 %v3773, %v3440
        %v3783 = vsub.f32 %v3773, %v3443
        %v3784 = vsub.f32 %v3774, %v3482
        %v3785 = vsub.f32 %v3774, %v3484
        %v3786 = vsub.f32 %v3774, %v3487
        %3788 = vset.pattern.permute.xlu0 0
        %3789 = vperm.xlu0 %3788, %v863
        %v3790 = vpop.permute.xlu0 %3789
        %3793 = vset.pattern.permute.xlu0 0
        %3794 = vperm.xlu0 %3793, %v864
        %v3795 = vpop.permute.xlu0 %3794
        %3798 = vset.pattern.permute.xlu0 0
        %3799 = vperm.xlu0 %3798, %v865
        %v3800 = vpop.permute.xlu0 %3799
        %v3802 = vmul.f32 %v3790, %v3775
        %v3803 = vmul.f32 %v3795, %v3776
        %v3804 = vmul.f32 %v3800, %v3777
        %v3805 = vmul.f32 %v3790, %v3778
        %v3806 = vmul.f32 %v3795, %v3779
        %v3807 = vmul.f32 %v3800, %v3780
        %v3808 = vmul.f32 %v3790, %v3781
        %v3809 = vmul.f32 %v3795, %v3782
        %v3810 = vmul.f32 %v3800, %v3783
        %v3811 = vmul.f32 %v3790, %v3784
        %v3812 = vmul.f32 %v3795, %v3785
        %v3813 = vmul.f32 %v3800, %v3786
        %v3814 = vadd.f32 %v3350, %v3802
        %v3815 = vadd.f32 %v3352, %v3803
        %v3816 = vadd.f32 %v3355, %v3804
        %v3817 = vadd.f32 %v3394, %v3805
        %v3818 = vadd.f32 %v3396, %v3806
        %v3819 = vadd.f32 %v3399, %v3807
        %v3820 = vadd.f32 %v3438, %v3808
        %v3821 = vadd.f32 %v3440, %v3809
        %v3822 = vadd.f32 %v3443, %v3810
        %v3823 = vadd.f32 %v3482, %v3811
        %v3824 = vadd.f32 %v3484, %v3812
        %v3825 = vadd.f32 %v3487, %v3813
        %v3826 = vrot.slane %v3820, 4
        %v3827 = vsel %vm1062, %v3826, %v3814
        %v3828 = vrot.slane %v3814, 4
        %v3829 = vsel %vm1062, %v3820, %v3828
        %v3831 = vunpack.c.l.s4 1983009808
        %v3832 = vunpack.c.0.s8 %v3831
        %v3833 = vperm.slane %v3827, %v3832
        %v3835 = vunpack.c.l.s4 1983009808
        %v3836 = vunpack.c.0.s8 %v3835
        %v3837 = vperm.slane %v3829, %v3836
        %v3838 = vrot.slane %v3823, 4
        %v3839 = vsel %vm1062, %v3838, %v3817
        %v3840 = vrot.slane %v3817, 4
        %v3841 = vsel %vm1062, %v3823, %v3840
        %v3843 = vunpack.c.l.s4 1983009808
        %v3844 = vunpack.c.0.s8 %v3843
        %v3845 = vperm.slane %v3839, %v3844
        %v3847 = vunpack.c.l.s4 1983009808
        %v3848 = vunpack.c.0.s8 %v3847
        %v3849 = vperm.slane %v3841, %v3848
        %v3850 = vrot.slane %v3845, 4
        %v3851 = vsel %vm1062, %v3850, %v3833
        %v3852 = vrot.slane %v3833, 4
        %v3853 = vsel %vm1062, %v3845, %v3852
        %v3855 = vunpack.c.l.s4 1934713408
        %v3856 = vunpack.c.0.s8 %v3855
        %v3857 = vperm.slane %v3851, %v3856
        %v3859 = vunpack.c.l.s4 1934713408
        %v3860 = vunpack.c.0.s8 %v3859
        %v3861 = vperm.slane %v3853, %v3860
        %v3862 = vrot.slane %v3849, 4
        %v3863 = vsel %vm1062, %v3862, %v3837
        %v3864 = vrot.slane %v3837, 4
        %v3865 = vsel %vm1062, %v3849, %v3864
        %v3867 = vunpack.c.l.s4 1934713408
        %v3868 = vunpack.c.0.s8 %v3867
        %v3869 = vperm.slane %v3863, %v3868
        %v3871 = vunpack.c.l.s4 1934713408
        %v3872 = vunpack.c.0.s8 %v3871
        %v3873 = vperm.slane %v3865, %v3872
        %v3874 = vrot.slane %v3857, 4
        %v3875 = vsel %vm1062, 0.0, %v3874
        %v3876 = vrot.slane %v3861, 4
        %v3877 = vsel %vm1062, 0.0, %v3876
        %v3878 = vrot.slane %v3869, 4
        %v3879 = vsel %vm1062, 0.0, %v3878
        %v3880 = vrot.slane %v3873, 4
        %v3881 = vsel %vm1062, 0.0, %v3880
        %v3882 = vrot.slane %v3821, 4
        %v3883 = vsel %vm1062, %v3882, %v3815
        %v3884 = vrot.slane %v3815, 4
        %v3885 = vsel %vm1062, %v3821, %v3884
        %v3887 = vunpack.c.l.s4 1983009808
        %v3888 = vunpack.c.0.s8 %v3887
        %v3889 = vperm.slane %v3883, %v3888
        %v3891 = vunpack.c.l.s4 1983009808
        %v3892 = vunpack.c.0.s8 %v3891
        %v3893 = vperm.slane %v3885, %v3892
        %v3894 = vrot.slane %v3824, 4
        %v3895 = vsel %vm1062, %v3894, %v3818
        %v3896 = vrot.slane %v3818, 4
        %v3897 = vsel %vm1062, %v3824, %v3896
        %v3899 = vunpack.c.l.s4 1983009808
        %v3900 = vunpack.c.0.s8 %v3899
        %v3901 = vperm.slane %v3895, %v3900
        %v3903 = vunpack.c.l.s4 1983009808
        %v3904 = vunpack.c.0.s8 %v3903
        %v3905 = vperm.slane %v3897, %v3904
        %v3906 = vrot.slane %v3901, 4
        %v3907 = vsel %vm1062, %v3906, %v3889
        %v3908 = vrot.slane %v3889, 4
        %v3909 = vsel %vm1062, %v3901, %v3908
        %v3911 = vunpack.c.l.s4 1934713408
        %v3912 = vunpack.c.0.s8 %v3911
        %v3913 = vperm.slane %v3907, %v3912
        %v3915 = vunpack.c.l.s4 1934713408
        %v3916 = vunpack.c.0.s8 %v3915
        %v3917 = vperm.slane %v3909, %v3916
        %v3918 = vrot.slane %v3905, 4
        %v3919 = vsel %vm1062, %v3918, %v3893
        %v3920 = vrot.slane %v3893, 4
        %v3921 = vsel %vm1062, %v3905, %v3920
        %v3923 = vunpack.c.l.s4 1934713408
        %v3924 = vunpack.c.0.s8 %v3923
        %v3925 = vperm.slane %v3919, %v3924
        %v3927 = vunpack.c.l.s4 1934713408
        %v3928 = vunpack.c.0.s8 %v3927
        %v3929 = vperm.slane %v3921, %v3928
        %v3930 = vrot.slane %v3913, 4
        %v3931 = vsel %vm1062, 0.0, %v3930
        %v3932 = vrot.slane %v3917, 4
        %v3933 = vsel %vm1062, 0.0, %v3932
        %v3934 = vrot.slane %v3925, 4
        %v3935 = vsel %vm1062, 0.0, %v3934
        %v3936 = vrot.slane %v3929, 4
        %v3937 = vsel %vm1062, 0.0, %v3936
        %v3938 = vrot.slane %v3822, 4
        %v3939 = vsel %vm1062, %v3938, %v3816
        %v3940 = vrot.slane %v3816, 4
        %v3941 = vsel %vm1062, %v3822, %v3940
        %v3943 = vunpack.c.l.s4 1983009808
        %v3944 = vunpack.c.0.s8 %v3943
        %v3945 = vperm.slane %v3939, %v3944
        %v3947 = vunpack.c.l.s4 1983009808
        %v3948 = vunpack.c.0.s8 %v3947
        %v3949 = vperm.slane %v3941, %v3948
        %v3950 = vrot.slane %v3825, 4
        %v3951 = vsel %vm1062, %v3950, %v3819
        %v3952 = vrot.slane %v3819, 4
        %v3953 = vsel %vm1062, %v3825, %v3952
        %v3955 = vunpack.c.l.s4 1983009808
        %v3956 = vunpack.c.0.s8 %v3955
        %v3957 = vperm.slane %v3951, %v3956
        %v3959 = vunpack.c.l.s4 1983009808
        %v3960 = vunpack.c.0.s8 %v3959
        %v3961 = vperm.slane %v3953, %v3960
        %v3962 = vrot.slane %v3957, 4
        %v3963 = vsel %vm1062, %v3962, %v3945
        %v3964 = vrot.slane %v3945, 4
        %v3965 = vsel %vm1062, %v3957, %v3964
        %v3967 = vunpack.c.l.s4 1934713408
        %v3968 = vunpack.c.0.s8 %v3967
        %v3969 = vperm.slane %v3963, %v3968
        %v3971 = vunpack.c.l.s4 1934713408
        %v3972 = vunpack.c.0.s8 %v3971
        %v3973 = vperm.slane %v3965, %v3972
        %v3974 = vrot.slane %v3961, 4
        %v3975 = vsel %vm1062, %v3974, %v3949
        %v3976 = vrot.slane %v3949, 4
        %v3977 = vsel %vm1062, %v3961, %v3976
        %v3979 = vunpack.c.l.s4 1934713408
        %v3980 = vunpack.c.0.s8 %v3979
        %v3981 = vperm.slane %v3975, %v3980
        %v3983 = vunpack.c.l.s4 1934713408
        %v3984 = vunpack.c.0.s8 %v3983
        %v3985 = vperm.slane %v3977, %v3984
        %v3986 = vrot.slane %v3969, 4
        %v3987 = vsel %vm1062, 0.0, %v3986
        %v3988 = vrot.slane %v3973, 4
        %v3989 = vsel %vm1062, 0.0, %v3988
        %v3990 = vrot.slane %v3981, 4
        %v3991 = vsel %vm1062, 0.0, %v3990
        %v3992 = vrot.slane %v3985, 4
        %v3993 = vsel %vm1062, 0.0, %v3992
        %v3994 = vsel %vm1062, %v3876, %v3857
        %v3996 = vunpack.c.l.s4 1983009808
        %v3997 = vunpack.c.0.s8 %v3996
        %v3998 = vperm.slane %v3994, %v3997
        %v3999 = vrot.slane %v3877, 4
        %v4000 = vsel %vm1062, %v3999, %v3875
        %v4002 = vunpack.c.l.s4 1983009808
        %v4003 = vunpack.c.0.s8 %v4002
        %v4004 = vperm.slane %v4000, %v4003
        %v4005 = vsel %vm1062, %v3880, %v3869
        %v4007 = vunpack.c.l.s4 1983009808
        %v4008 = vunpack.c.0.s8 %v4007
        %v4009 = vperm.slane %v4005, %v4008
        %v4010 = vrot.slane %v3881, 4
        %v4011 = vsel %vm1062, %v4010, %v3879
        %v4013 = vunpack.c.l.s4 1983009808
        %v4014 = vunpack.c.0.s8 %v4013
        %v4015 = vperm.slane %v4011, %v4014
        %v4016 = vrot.slane %v4004, 4
        %v4017 = vsel %vm1062, %v4016, %v3998
        %v4018 = vrot.slane %v3998, 4
        %v4019 = vsel %vm1062, %v4004, %v4018
        %v4021 = vunpack.c.l.s4 1934713408
        %v4022 = vunpack.c.0.s8 %v4021
        %v4023 = vperm.slane %v4017, %v4022
        %v4025 = vunpack.c.l.s4 1934713408
        %v4026 = vunpack.c.0.s8 %v4025
        %v4027 = vperm.slane %v4019, %v4026
        %v4028 = vrot.slane %v4015, 4
        %v4029 = vsel %vm1062, %v4028, %v4009
        %v4030 = vrot.slane %v4009, 4
        %v4031 = vsel %vm1062, %v4015, %v4030
        %v4033 = vunpack.c.l.s4 1934713408
        %v4034 = vunpack.c.0.s8 %v4033
        %v4035 = vperm.slane %v4029, %v4034
        %v4037 = vunpack.c.l.s4 1934713408
        %v4038 = vunpack.c.0.s8 %v4037
        %v4039 = vperm.slane %v4031, %v4038
        %v4040 = vrot.slane %v4035, 4
        %v4041 = vsel %vm1062, %v4040, %v4023
        %v4042 = vrot.slane %v4023, 4
        %v4043 = vsel %vm1062, %v4035, %v4042
        %v4044 = vrot.slane %v4039, 4
        %v4045 = vsel %vm1062, %v4044, %v4027
        %v4046 = vrot.slane %v4027, 4
        %v4047 = vsel %vm1062, %v4039, %v4046
        %v4048 = vsel %vm1062, %v3932, %v3913
        %v4050 = vunpack.c.l.s4 1983009808
        %v4051 = vunpack.c.0.s8 %v4050
        %v4052 = vperm.slane %v4048, %v4051
        %v4053 = vrot.slane %v3933, 4
        %v4054 = vsel %vm1062, %v4053, %v3931
        %v4056 = vunpack.c.l.s4 1983009808
        %v4057 = vunpack.c.0.s8 %v4056
        %v4058 = vperm.slane %v4054, %v4057
        %v4059 = vsel %vm1062, %v3936, %v3925
        %v4061 = vunpack.c.l.s4 1983009808
        %v4062 = vunpack.c.0.s8 %v4061
        %v4063 = vperm.slane %v4059, %v4062
        %v4064 = vrot.slane %v3937, 4
        %v4065 = vsel %vm1062, %v4064, %v3935
        %v4067 = vunpack.c.l.s4 1983009808
        %v4068 = vunpack.c.0.s8 %v4067
        %v4069 = vperm.slane %v4065, %v4068
        %v4070 = vrot.slane %v4058, 4
        %v4071 = vsel %vm1062, %v4070, %v4052
        %v4072 = vrot.slane %v4052, 4
        %v4073 = vsel %vm1062, %v4058, %v4072
        %v4075 = vunpack.c.l.s4 1934713408
        %v4076 = vunpack.c.0.s8 %v4075
        %v4077 = vperm.slane %v4071, %v4076
        %v4079 = vunpack.c.l.s4 1934713408
        %v4080 = vunpack.c.0.s8 %v4079
        %v4081 = vperm.slane %v4073, %v4080
        %v4082 = vrot.slane %v4069, 4
        %v4083 = vsel %vm1062, %v4082, %v4063
        %v4084 = vrot.slane %v4063, 4
        %v4085 = vsel %vm1062, %v4069, %v4084
        %v4087 = vunpack.c.l.s4 1934713408
        %v4088 = vunpack.c.0.s8 %v4087
        %v4089 = vperm.slane %v4083, %v4088
        %v4091 = vunpack.c.l.s4 1934713408
        %v4092 = vunpack.c.0.s8 %v4091
        %v4093 = vperm.slane %v4085, %v4092
        %v4094 = vrot.slane %v4089, 4
        %v4095 = vsel %vm1062, %v4094, %v4077
        %v4096 = vrot.slane %v4077, 4
        %v4097 = vsel %vm1062, %v4089, %v4096
        %v4098 = vrot.slane %v4093, 4
        %v4099 = vsel %vm1062, %v4098, %v4081
        %v4100 = vrot.slane %v4081, 4
        %v4101 = vsel %vm1062, %v4093, %v4100
        %v4102 = vsel %vm1062, %v3988, %v3969
        %v4104 = vunpack.c.l.s4 1983009808
        %v4105 = vunpack.c.0.s8 %v4104
        %v4106 = vperm.slane %v4102, %v4105
        %v4107 = vrot.slane %v3989, 4
        %v4108 = vsel %vm1062, %v4107, %v3987
        %v4110 = vunpack.c.l.s4 1983009808
        %v4111 = vunpack.c.0.s8 %v4110
        %v4112 = vperm.slane %v4108, %v4111
        %v4113 = vsel %vm1062, %v3992, %v3981
        %v4115 = vunpack.c.l.s4 1983009808
        %v4116 = vunpack.c.0.s8 %v4115
        %v4117 = vperm.slane %v4113, %v4116
        %v4118 = vrot.slane %v3993, 4
        %v4119 = vsel %vm1062, %v4118, %v3991
        %v4121 = vunpack.c.l.s4 1983009808
        %v4122 = vunpack.c.0.s8 %v4121
        %v4123 = vperm.slane %v4119, %v4122
        %v4124 = vrot.slane %v4112, 4
        %v4125 = vsel %vm1062, %v4124, %v4106
        %v4126 = vrot.slane %v4106, 4
        %v4127 = vsel %vm1062, %v4112, %v4126
        %v4129 = vunpack.c.l.s4 1934713408
        %v4130 = vunpack.c.0.s8 %v4129
        %v4131 = vperm.slane %v4125, %v4130
        %v4133 = vunpack.c.l.s4 1934713408
        %v4134 = vunpack.c.0.s8 %v4133
        %v4135 = vperm.slane %v4127, %v4134
        %v4136 = vrot.slane %v4123, 4
        %v4137 = vsel %vm1062, %v4136, %v4117
        %v4138 = vrot.slane %v4117, 4
        %v4139 = vsel %vm1062, %v4123, %v4138
        %v4141 = vunpack.c.l.s4 1934713408
        %v4142 = vunpack.c.0.s8 %v4141
        %v4143 = vperm.slane %v4137, %v4142
        %v4145 = vunpack.c.l.s4 1934713408
        %v4146 = vunpack.c.0.s8 %v4145
        %v4147 = vperm.slane %v4139, %v4146
        %v4148 = vrot.slane %v4143, 4
        %v4149 = vsel %vm1062, %v4148, %v4131
        %v4150 = vrot.slane %v4131, 4
        %v4151 = vsel %vm1062, %v4143, %v4150
        %v4152 = vrot.slane %v4147, 4
        %v4153 = vsel %vm1062, %v4152, %v4135
        %v4154 = vrot.slane %v4135, 4
        %v4155 = vsel %vm1062, %v4147, %v4154
        %4159 = vrot.lane.b32.xlu0 %v4043, 8
        %v4160 = vpop.permute.xlu0 %4159
        %4161 = vrot.lane.b32.xlu0 %v4097, 8
        %v4162 = vpop.permute.xlu0 %4161
        %4163 = vrot.lane.b32.xlu0 %v4151, 8
        %v4164 = vpop.permute.xlu0 %4163
        %4171 = vrot.lane.b32.xlu0 %v4045, 16
        %v4172 = vpop.permute.xlu0 %4171
        %4173 = vrot.lane.b32.xlu0 %v4099, 16
        %v4174 = vpop.permute.xlu0 %4173
        %4175 = vrot.lane.b32.xlu0 %v4153, 16
        %v4176 = vpop.permute.xlu0 %4175
        %4183 = vrot.lane.b32.xlu0 %v4047, 24
        %v4184 = vpop.permute.xlu0 %4183
        %4185 = vrot.lane.b32.xlu0 %v4101, 24
        %v4186 = vpop.permute.xlu0 %4185
        %4187 = vrot.lane.b32.xlu0 %v4155, 24
        %v4188 = vpop.permute.xlu0 %4187
        %v4192 = vsel %vm2999, %v4041, %v4160
        %v4193 = vsel %vm2999, %v4095, %v4162
        %v4194 = vsel %vm2999, %v4149, %v4164
        %vm4195 = vcmask 130048
        %v4196 = vsel %vm4195, %v4192, %v4172
        %v4197 = vsel %vm4195, %v4193, %v4174
        %v4198 = vsel %vm4195, %v4194, %v4176
        %v4199 = vsel %vm3168, %v4196, %v4184
        %v4200 = vsel %vm3168, %v4197, %v4186
        %v4201 = vsel %vm3168, %v4198, %v4188
        %v4202 = vadd.f32 %v856, %v4199
        %v4203 = vadd.f32 %v857, %v4200
        %v4204 = vadd.f32 %v858, %v4201
        %v4205 = vld [vmem:[%s16] sm:$0x1]
        %v4206 = vld [vmem:[%s17] sm:$0x1]
        %v4207 = vsel %vm868, %v4202, 0.0
        %4208 = vadd.xlane.f32.xlu0 %v4207
        %v4209 = vpop.xlane.xlu0 %4208
        %v4210 = vsel %vm868, %v4203, 0.0
        %4211 = vadd.xlane.f32.xlu0 %v4210
        %v4212 = vpop.xlane.xlu0 %4211
        %v4213 = vsel %vm868, %v4204, 0.0
        %4214 = vadd.xlane.f32.xlu0 %v4213
        %v4215 = vpop.xlane.xlu0 %4214
        %v4216 = vmul.f32 %v4209, %v884
        %v4217 = vmul.f32 %v4212, %v884
        %v4218 = vmul.f32 %v4215, %v884
        %v4219 = vsub.f32 %v4202, %v4216
        %v4220 = vsub.f32 %v4203, %v4217
        %v4221 = vsub.f32 %v4204, %v4218
        %v4222 = vmul.f32 %v4219, %v4219
        %v4223 = vmul.f32 %v4220, %v4220
        %v4224 = vmul.f32 %v4221, %v4221
        %v4225 = vsel %vm868, %v4222, 0.0
        %4226 = vadd.xlane.f32.xlu0 %v4225
        %v4227 = vpop.xlane.xlu0 %4226
        %v4228 = vsel %vm868, %v4223, 0.0
        %4229 = vadd.xlane.f32.xlu0 %v4228
        %v4230 = vpop.xlane.xlu0 %4229
        %v4231 = vsel %vm868, %v4224, 0.0
        %4232 = vadd.xlane.f32.xlu0 %v4231
        %v4233 = vpop.xlane.xlu0 %4232
        %v4234 = vmul.f32 %v4227, %v884
        %v4235 = vmul.f32 %v4230, %v884
        %v4236 = vmul.f32 %v4233, %v884
        %v4237 = vadd.f32 %v4234, 1e-05
        %v4238 = vadd.f32 %v4235, 1e-05
        %v4239 = vadd.f32 %v4236, 1e-05
        %v4240 = vrsqrt.pop %v4237
        %v4241 = vmul.f32 %v4240, %v4237
        %v4242 = vmul.f32 %v4241, %v4240
        %v4243 = vmul.f32 0.5, %v4242
        %v4244 = vsub.f32 1.5, %v4243
        %v4245 = vmul.f32 %v4240, %v4244
        %vm4246 = vweird.f32 %v4237
        %vm4247 = vweird.f32 %v4240
        %vm4248 = vmor %vm4246, %vm4247
        %v4249 = vsel %vm4248, %v4240, %v4245
        %v4250 = vrsqrt.pop %v4238
        %v4251 = vmul.f32 %v4250, %v4238
        %v4252 = vmul.f32 %v4251, %v4250
        %v4253 = vmul.f32 0.5, %v4252
        %v4254 = vsub.f32 1.5, %v4253
        %v4255 = vmul.f32 %v4250, %v4254
        %vm4256 = vweird.f32 %v4238
        %vm4257 = vweird.f32 %v4250
        %vm4258 = vmor %vm4256, %vm4257
        %v4259 = vsel %vm4258, %v4250, %v4255
        %v4260 = vrsqrt.pop %v4239
        %v4261 = vmul.f32 %v4260, %v4239
        %v4262 = vmul.f32 %v4261, %v4260
        %v4263 = vmul.f32 0.5, %v4262
        %v4264 = vsub.f32 1.5, %v4263
        %v4265 = vmul.f32 %v4260, %v4264
        %vm4266 = vweird.f32 %v4239
        %vm4267 = vweird.f32 %v4260
        %vm4268 = vmor %vm4266, %vm4267
        %v4269 = vsel %vm4268, %v4260, %v4265
        %v4270 = vmul.f32 %v4219, %v4249
        %v4271 = vmul.f32 %v4220, %v4259
        %v4272 = vmul.f32 %v4221, %v4269
        %v4274 = vperm.slane %v4205, 0
        %v4276 = vmul.f32 %v4270, %v4274
        %v4277 = vmul.f32 %v4271, %v4274
        %v4278 = vmul.f32 %v4272, %v4274
        %v4280 = vperm.slane %v4206, 0
        %v4282 = vadd.f32 %v4276, %v4280
        %v4283 = vadd.f32 %v4277, %v4280
        %v4284 = vadd.f32 %v4278, %v4280
        %v4285 = vpack.c.bf16 %v4283, %v4282
        %v4286 = vpack.c.bf16 %v4284, %v4284
        %v4287 = vld [vmem:[%s18] sm:$0xf]
        %v4288 = vld [vmem:[%s18 + $0x4] sm:$0xf]
        %v4289 = vld [vmem:[%s18 + $0x8] sm:$0xf]
        %v4290 = vld [vmem:[%s18 + $0xc] sm:$0xf]
        %v4291 = vld [vmem:[%s19] sm:$0x1]
        %v4293 = vperm.slane %v4291, 0
        %v4299 = vunpack.c.l.b16 %v4287
        %v4300 = vunpack.c.l.b16 %v4288
        %v4301 = vunpack.c.l.b16 %v4289
        %v4302 = vunpack.c.l.b16 %v4290
        %v4303 = vpack.c.b16 %v4300, %v4299
        %v4304 = vpack.c.b16 %v4302, %v4301
        %v4308 = vsel %vm868, %v4285, 0
        %v4311 = vsel %vm868, %v4286, 0
        %4313 = vmatpush.bf16.msra.mxu0 0
        %4314 = vmatpush.bf16.msra.mxu0 0
        %4315 = vmatpush.bf16.msra.mxu0 0
        %4316 = vmatpush.bf16.msra.mxu0 0
        %4317 = vmatpush.bf16.msra.mxu0 0
        %4318 = vmatpush.bf16.msra.mxu0 0
        %4319 = vmatpush.bf16.msra.mxu0 %v4304
        %4320 = vmatpush.bf16.msra.mxu0 %v4303
        %4321 = vmatmul.bf16.gmra.mxu0 %v4308
        %v4322 = vpop.f32.mrf.mxu0
        %v4323 = vadd.f32 %v4293, %v4322
        %v4324 = vpop.f32.mrf.mxu0
        %v4325 = vadd.f32 %v4293, %v4324
        %4326 = vmatmul.bf16.gmra.mxu0 %v4311
        %v4327 = vpop.f32.mrf.mxu0
        %v4328 = vadd.f32 %v4293, %v4327
        %v4329 = vpop.f32.mrf.mxu0
        %4330 = vdwg.mxu0
        %v4331 = vmul.f32 %v4323, 0.5
        %v4332 = vmul.f32 %v4325, 0.5
        %v4333 = vmul.f32 %v4328, 0.5
        %v4334 = vmul.f32 %v4323, 0.044715
        %v4335 = vmul.f32 %v4325, 0.044715
        %v4336 = vmul.f32 %v4328, 0.044715
        %v4337 = vmul.f32 %v4334, %v4323
        %v4338 = vmul.f32 %v4335, %v4325
        %v4339 = vmul.f32 %v4336, %v4328
        %v4340 = vmul.f32 %v4337, %v4323
        %v4341 = vmul.f32 %v4338, %v4325
        %v4342 = vmul.f32 %v4339, %v4328
        %v4343 = vadd.f32 %v4323, %v4340
        %v4344 = vadd.f32 %v4325, %v4341
        %v4345 = vadd.f32 %v4328, %v4342
        %v4346 = vmul.f32 %v4343, 0.7978846
        %v4347 = vmul.f32 %v4344, 0.7978846
        %v4348 = vmul.f32 %v4345, 0.7978846
        %v4349 = vtanh.pop %v4346
        %v4350 = vtanh.pop %v4347
        %v4351 = vtanh.pop %v4348
        %v4352 = vadd.f32 %v4349, 1.0
        %v4353 = vadd.f32 %v4350, 1.0
        %v4354 = vadd.f32 %v4351, 1.0
        %v4355 = vmul.f32 %v4331, %v4352
        %v4356 = vmul.f32 %v4332, %v4353
        %v4357 = vmul.f32 %v4333, %v4354
        %v4358 = vpack.c.bf16 %v4356, %v4355
        %v4359 = vpack.c.bf16 %v4357, %v4357
        %v4360 = vld [vmem:[%s20] sm:$0xf]
        %v4361 = vld [vmem:[%s20 + $0x4] sm:$0xf]
        %v4362 = vld [vmem:[%s20 + $0x8] sm:$0xf]
        %v4363 = vld [vmem:[%s20 + $0xc] sm:$0xf]
        %v4364 = vld [vmem:[%s20 + $0x10] sm:$0xf]
        %v4365 = vld [vmem:[%s20 + $0x14] sm:$0xf]
        %v4366 = vld [vmem:[%s20 + $0x18] sm:$0xf]
        %v4367 = vld [vmem:[%s20 + $0x1c] sm:$0xf]
        %v4368 = vld [vmem:[%s21] sm:$0x1]
        %v4370 = vperm.slane %v4368, 0
        %v4380 = vunpack.c.l.b16 %v4360
        %v4381 = vunpack.c.l.b16 %v4361
        %v4382 = vunpack.c.l.b16 %v4362
        %v4383 = vunpack.c.l.b16 %v4363
        %v4384 = vunpack.c.l.b16 %v4364
        %v4385 = vunpack.c.l.b16 %v4365
        %v4386 = vunpack.c.l.b16 %v4366
        %v4387 = vunpack.c.l.b16 %v4367
        %v4388 = vpack.c.b16 %v4381, %v4380
        %v4389 = vpack.c.b16 %v4383, %v4382
        %v4390 = vpack.c.b16 %v4385, %v4384
        %v4391 = vpack.c.b16 %v4387, %v4386
        %vm4396 = vcmask 523264
        %v4398 = vsel %vm4396, %v4358, 0
        %v4401 = vsel %vm4396, %v4359, 0
        %4403 = vmatpush.bf16.msra.mxu0 0
        %4404 = vmatpush.bf16.msra.mxu0 0
        %4405 = vmatpush.bf16.msra.mxu0 0
        %4406 = vmatpush.bf16.msra.mxu0 0
        %4407 = vmatpush.bf16.msra.mxu0 %v4391
        %4408 = vmatpush.bf16.msra.mxu0 %v4390
        %4409 = vmatpush.bf16.msra.mxu0 %v4389
        %4410 = vmatpush.bf16.msra.mxu0 %v4388
        %4411 = vmatmul.bf16.gmra.mxu0 %v4398
        %v4412 = vpop.f32.mrf.mxu0
        %v4413 = vadd.f32 %v4370, %v4412
        %v4414 = vpop.f32.mrf.mxu0
        %v4415 = vadd.f32 %v4370, %v4414
        %4416 = vmatmul.bf16.gmra.mxu0 %v4401
        %v4417 = vpop.f32.mrf.mxu0
        %v4418 = vadd.f32 %v4370, %v4417
        %v4419 = vpop.f32.mrf.mxu0
        %4420 = vdwg.mxu0
        %v4421 = vadd.f32 %v4202, %v4413
        %v4422 = vadd.f32 %v4203, %v4415
        %v4423 = vadd.f32 %v4204, %v4418
        %s4424 = scalar_lea.vmem %s12, 1
        %v4425 = vld [vmem:[%s4424] sm:$0x1]
        %s4426 = scalar_lea.vmem %s13, 1
        %v4427 = vld [vmem:[%s4426] sm:$0x1]
        %v4428 = vsel %vm868, %v4421, 0.0
        %4429 = vadd.xlane.f32.xlu0 %v4428
        %v4430 = vpop.xlane.xlu0 %4429
        %v4431 = vsel %vm868, %v4422, 0.0
        %4432 = vadd.xlane.f32.xlu0 %v4431
        %v4433 = vpop.xlane.xlu0 %4432
        %v4434 = vsel %vm868, %v4423, 0.0
        %4435 = vadd.xlane.f32.xlu0 %v4434
        %v4436 = vpop.xlane.xlu0 %4435
        %v4437 = vmul.f32 %v4430, %v884
        %v4438 = vmul.f32 %v4433, %v884
        %v4439 = vmul.f32 %v4436, %v884
        %v4440 = vsub.f32 %v4421, %v4437
        %v4441 = vsub.f32 %v4422, %v4438
        %v4442 = vsub.f32 %v4423, %v4439
        %v4443 = vmul.f32 %v4440, %v4440
        %v4444 = vmul.f32 %v4441, %v4441
        %v4445 = vmul.f32 %v4442, %v4442
        %v4446 = vsel %vm868, %v4443, 0.0
        %4447 = vadd.xlane.f32.xlu0 %v4446
        %v4448 = vpop.xlane.xlu0 %4447
        %v4449 = vsel %vm868, %v4444, 0.0
        %4450 = vadd.xlane.f32.xlu0 %v4449
        %v4451 = vpop.xlane.xlu0 %4450
        %v4452 = vsel %vm868, %v4445, 0.0
        %4453 = vadd.xlane.f32.xlu0 %v4452
        %v4454 = vpop.xlane.xlu0 %4453
        %v4455 = vmul.f32 %v4448, %v884
        %v4456 = vmul.f32 %v4451, %v884
        %v4457 = vmul.f32 %v4454, %v884
        %v4458 = vadd.f32 %v4455, 1e-05
        %v4459 = vadd.f32 %v4456, 1e-05
        %v4460 = vadd.f32 %v4457, 1e-05
        %v4461 = vrsqrt.pop %v4458
        %v4462 = vmul.f32 %v4461, %v4458
        %v4463 = vmul.f32 %v4462, %v4461
        %v4464 = vmul.f32 0.5, %v4463
        %v4465 = vsub.f32 1.5, %v4464
        %v4466 = vmul.f32 %v4461, %v4465
        %vm4467 = vweird.f32 %v4458
        %vm4468 = vweird.f32 %v4461
        %vm4469 = vmor %vm4467, %vm4468
        %v4470 = vsel %vm4469, %v4461, %v4466
        %v4471 = vrsqrt.pop %v4459
        %v4472 = vmul.f32 %v4471, %v4459
        %v4473 = vmul.f32 %v4472, %v4471
        %v4474 = vmul.f32 0.5, %v4473
        %v4475 = vsub.f32 1.5, %v4474
        %v4476 = vmul.f32 %v4471, %v4475
        %vm4477 = vweird.f32 %v4459
        %vm4478 = vweird.f32 %v4471
        %vm4479 = vmor %vm4477, %vm4478
        %v4480 = vsel %vm4479, %v4471, %v4476
        %v4481 = vrsqrt.pop %v4460
        %v4482 = vmul.f32 %v4481, %v4460
        %v4483 = vmul.f32 %v4482, %v4481
        %v4484 = vmul.f32 0.5, %v4483
        %v4485 = vsub.f32 1.5, %v4484
        %v4486 = vmul.f32 %v4481, %v4485
        %vm4487 = vweird.f32 %v4460
        %vm4488 = vweird.f32 %v4481
        %vm4489 = vmor %vm4487, %vm4488
        %v4490 = vsel %vm4489, %v4481, %v4486
        %v4491 = vmul.f32 %v4440, %v4470
        %v4492 = vmul.f32 %v4441, %v4480
        %v4493 = vmul.f32 %v4442, %v4490
        %v4495 = vperm.slane %v4425, 0
        %v4497 = vmul.f32 %v4491, %v4495
        %v4498 = vmul.f32 %v4492, %v4495
        %v4499 = vmul.f32 %v4493, %v4495
        %v4501 = vperm.slane %v4427, 0
        %v4503 = vadd.f32 %v4497, %v4501
        %v4504 = vadd.f32 %v4498, %v4501
        %v4505 = vadd.f32 %v4499, %v4501
        %v4506 = vpack.c.bf16 %v4504, %v4503
        %v4507 = vpack.c.bf16 %v4505, %v4505
        %s4508 = scalar_lea.vmem %s14, 32
        %v4509 = vld [vmem:[%s4508] sm:$0xff]
        %v4510 = vld [vmem:[%s4508 + $0x8] sm:$0xff]
        %v4511 = vld [vmem:[%s4508 + $0x10] sm:$0xff]
        %v4512 = vld [vmem:[%s4508 + $0x18] sm:$0xff]
        %s4513 = scalar_lea.vmem %s15, 2
        %v4514 = vld [vmem:[%s4513] sm:$0x3]
        %v4516 = vperm.slane %v4514, 0
        %v4517 = vperm.slane %v4514, 1
        %v4524 = vunpack.c.l.b16 %v4509
        %v4525 = vunpack.c.h.b16 %v4509
        %v4526 = vunpack.c.l.b16 %v4510
        %v4527 = vunpack.c.h.b16 %v4510
        %v4528 = vunpack.c.l.b16 %v4511
        %v4529 = vunpack.c.h.b16 %v4511
        %v4530 = vunpack.c.l.b16 %v4512
        %v4531 = vunpack.c.h.b16 %v4512
        %v4532 = vpack.c.b16 %v4526, %v4524
        %v4533 = vpack.c.b16 %v4527, %v4525
        %v4534 = vpack.c.b16 %v4530, %v4528
        %v4535 = vpack.c.b16 %v4531, %v4529
        %v4541 = vsel %vm868, %v4506, 0
        %v4544 = vsel %vm868, %v4507, 0
        %4546 = vmatpush.bf16.msra.mxu0 0
        %4547 = vmatpush.bf16.msra.mxu0 0
        %4548 = vmatpush.bf16.msra.mxu0 0
        %4549 = vmatpush.bf16.msra.mxu0 0
        %4550 = vmatpush.bf16.msra.mxu0 0
        %4551 = vmatpush.bf16.msra.mxu0 0
        %4552 = vmatpush.bf16.msra.mxu0 %v4534
        %4553 = vmatpush.bf16.msra.mxu0 %v4532
        %4554 = vmatmul.bf16.gmra.mxu0 %v4541
        %v4555 = vpop.f32.mrf.mxu0
        %v4556 = vadd.f32 %v4516, %v4555
        %v4557 = vpop.f32.mrf.mxu0
        %v4558 = vadd.f32 %v4516, %v4557
        %4559 = vmatmul.bf16.gmra.mxu0 %v4544
        %v4560 = vpop.f32.mrf.mxu0
        %v4561 = vadd.f32 %v4516, %v4560
        %v4562 = vpop.f32.mrf.mxu0
        %4563 = vdwg.mxu0
        %4564 = vmatpush.bf16.msra.mxu0 0
        %4565 = vmatpush.bf16.msra.mxu0 0
        %4566 = vmatpush.bf16.msra.mxu0 0
        %4567 = vmatpush.bf16.msra.mxu0 0
        %4568 = vmatpush.bf16.msra.mxu0 0
        %4569 = vmatpush.bf16.msra.mxu0 0
        %4570 = vmatpush.bf16.msra.mxu0 %v4535
        %4571 = vmatpush.bf16.msra.mxu0 %v4533
        %4572 = vmatmul.bf16.gmra.mxu0 %v4541
        %v4573 = vpop.f32.mrf.mxu0
        %v4574 = vadd.f32 %v4517, %v4573
        %v4575 = vpop.f32.mrf.mxu0
        %v4576 = vadd.f32 %v4517, %v4575
        %4577 = vmatmul.bf16.gmra.mxu0 %v4544
        %v4578 = vpop.f32.mrf.mxu0
        %v4579 = vadd.f32 %v4517, %v4578
        %v4580 = vpop.f32.mrf.mxu0
        %4581 = vdwg.mxu0
        %v4582 = vmul.f32 %v4556, 0.35355338
        %v4583 = vmul.f32 %v4558, 0.35355338
        %v4584 = vmul.f32 %v4561, 0.35355338
        %4588 = vrot.lane.b32.xlu0 %v4582, 120
        %v4589 = vpop.permute.xlu0 %4588
        %4590 = vrot.lane.b32.xlu0 %v4583, 120
        %v4591 = vpop.permute.xlu0 %4590
        %4592 = vrot.lane.b32.xlu0 %v4584, 120
        %v4593 = vpop.permute.xlu0 %4592
        %4597 = vrot.lane.b32.xlu0 %v4582, 112
        %v4598 = vpop.permute.xlu0 %4597
        %4599 = vrot.lane.b32.xlu0 %v4583, 112
        %v4600 = vpop.permute.xlu0 %4599
        %4601 = vrot.lane.b32.xlu0 %v4584, 112
        %v4602 = vpop.permute.xlu0 %4601
        %4606 = vrot.lane.b32.xlu0 %v4582, 104
        %v4607 = vpop.permute.xlu0 %4606
        %4608 = vrot.lane.b32.xlu0 %v4583, 104
        %v4609 = vpop.permute.xlu0 %4608
        %4610 = vrot.lane.b32.xlu0 %v4584, 104
        %v4611 = vpop.permute.xlu0 %4610
        %v4615 = vrot.slane %v4598, 4
        %v4616 = vsel %vm1062, %v4615, %v4582
        %v4617 = vrot.slane %v4582, 4
        %v4618 = vsel %vm1062, %v4598, %v4617
        %v4620 = vunpack.c.l.s4 1983009808
        %v4621 = vunpack.c.0.s8 %v4620
        %v4622 = vperm.slane %v4616, %v4621
        %v4624 = vunpack.c.l.s4 1983009808
        %v4625 = vunpack.c.0.s8 %v4624
        %v4626 = vperm.slane %v4618, %v4625
        %v4627 = vrot.slane %v4607, 4
        %v4628 = vsel %vm1062, %v4627, %v4589
        %v4629 = vrot.slane %v4589, 4
        %v4630 = vsel %vm1062, %v4607, %v4629
        %v4632 = vunpack.c.l.s4 1983009808
        %v4633 = vunpack.c.0.s8 %v4632
        %v4634 = vperm.slane %v4628, %v4633
        %v4636 = vunpack.c.l.s4 1983009808
        %v4637 = vunpack.c.0.s8 %v4636
        %v4638 = vperm.slane %v4630, %v4637
        %v4639 = vrot.slane %v4634, 4
        %v4640 = vsel %vm1062, %v4639, %v4622
        %v4641 = vrot.slane %v4622, 4
        %v4642 = vsel %vm1062, %v4634, %v4641
        %v4644 = vunpack.c.l.s4 1934713408
        %v4645 = vunpack.c.0.s8 %v4644
        %v4646 = vperm.slane %v4640, %v4645
        %v4648 = vunpack.c.l.s4 1934713408
        %v4649 = vunpack.c.0.s8 %v4648
        %v4650 = vperm.slane %v4642, %v4649
        %v4651 = vrot.slane %v4638, 4
        %v4652 = vsel %vm1062, %v4651, %v4626
        %v4653 = vrot.slane %v4626, 4
        %v4654 = vsel %vm1062, %v4638, %v4653
        %v4656 = vunpack.c.l.s4 1934713408
        %v4657 = vunpack.c.0.s8 %v4656
        %v4658 = vperm.slane %v4652, %v4657
        %v4660 = vunpack.c.l.s4 1934713408
        %v4661 = vunpack.c.0.s8 %v4660
        %v4662 = vperm.slane %v4654, %v4661
        %v4663 = vrot.slane %v4646, 4
        %v4664 = vsel %vm1062, 0.0, %v4663
        %v4665 = vrot.slane %v4650, 4
        %v4666 = vsel %vm1062, 0.0, %v4665
        %v4667 = vrot.slane %v4658, 4
        %v4668 = vsel %vm1062, 0.0, %v4667
        %v4669 = vrot.slane %v4662, 4
        %v4670 = vsel %vm1062, 0.0, %v4669
        %v4671 = vrot.slane %v4600, 4
        %v4672 = vsel %vm1062, %v4671, %v4583
        %v4673 = vrot.slane %v4583, 4
        %v4674 = vsel %vm1062, %v4600, %v4673
        %v4676 = vunpack.c.l.s4 1983009808
        %v4677 = vunpack.c.0.s8 %v4676
        %v4678 = vperm.slane %v4672, %v4677
        %v4680 = vunpack.c.l.s4 1983009808
        %v4681 = vunpack.c.0.s8 %v4680
        %v4682 = vperm.slane %v4674, %v4681
        %v4683 = vrot.slane %v4609, 4
        %v4684 = vsel %vm1062, %v4683, %v4591
        %v4685 = vrot.slane %v4591, 4
        %v4686 = vsel %vm1062, %v4609, %v4685
        %v4688 = vunpack.c.l.s4 1983009808
        %v4689 = vunpack.c.0.s8 %v4688
        %v4690 = vperm.slane %v4684, %v4689
        %v4692 = vunpack.c.l.s4 1983009808
        %v4693 = vunpack.c.0.s8 %v4692
        %v4694 = vperm.slane %v4686, %v4693
        %v4695 = vrot.slane %v4690, 4
        %v4696 = vsel %vm1062, %v4695, %v4678
        %v4697 = vrot.slane %v4678, 4
        %v4698 = vsel %vm1062, %v4690, %v4697
        %v4700 = vunpack.c.l.s4 1934713408
        %v4701 = vunpack.c.0.s8 %v4700
        %v4702 = vperm.slane %v4696, %v4701
        %v4704 = vunpack.c.l.s4 1934713408
        %v4705 = vunpack.c.0.s8 %v4704
        %v4706 = vperm.slane %v4698, %v4705
        %v4707 = vrot.slane %v4694, 4
        %v4708 = vsel %vm1062, %v4707, %v4682
        %v4709 = vrot.slane %v4682, 4
        %v4710 = vsel %vm1062, %v4694, %v4709
        %v4712 = vunpack.c.l.s4 1934713408
        %v4713 = vunpack.c.0.s8 %v4712
        %v4714 = vperm.slane %v4708, %v4713
        %v4716 = vunpack.c.l.s4 1934713408
        %v4717 = vunpack.c.0.s8 %v4716
        %v4718 = vperm.slane %v4710, %v4717
        %v4719 = vrot.slane %v4702, 4
        %v4720 = vsel %vm1062, 0.0, %v4719
        %v4721 = vrot.slane %v4706, 4
        %v4722 = vsel %vm1062, 0.0, %v4721
        %v4723 = vrot.slane %v4714, 4
        %v4724 = vsel %vm1062, 0.0, %v4723
        %v4725 = vrot.slane %v4718, 4
        %v4726 = vsel %vm1062, 0.0, %v4725
        %v4727 = vrot.slane %v4602, 4
        %v4728 = vsel %vm1062, %v4727, %v4584
        %v4729 = vrot.slane %v4584, 4
        %v4730 = vsel %vm1062, %v4602, %v4729
        %v4732 = vunpack.c.l.s4 1983009808
        %v4733 = vunpack.c.0.s8 %v4732
        %v4734 = vperm.slane %v4728, %v4733
        %v4736 = vunpack.c.l.s4 1983009808
        %v4737 = vunpack.c.0.s8 %v4736
        %v4738 = vperm.slane %v4730, %v4737
        %v4739 = vrot.slane %v4611, 4
        %v4740 = vsel %vm1062, %v4739, %v4593
        %v4741 = vrot.slane %v4593, 4
        %v4742 = vsel %vm1062, %v4611, %v4741
        %v4744 = vunpack.c.l.s4 1983009808
        %v4745 = vunpack.c.0.s8 %v4744
        %v4746 = vperm.slane %v4740, %v4745
        %v4748 = vunpack.c.l.s4 1983009808
        %v4749 = vunpack.c.0.s8 %v4748
        %v4750 = vperm.slane %v4742, %v4749
        %v4751 = vrot.slane %v4746, 4
        %v4752 = vsel %vm1062, %v4751, %v4734
        %v4753 = vrot.slane %v4734, 4
        %v4754 = vsel %vm1062, %v4746, %v4753
        %v4756 = vunpack.c.l.s4 1934713408
        %v4757 = vunpack.c.0.s8 %v4756
        %v4758 = vperm.slane %v4752, %v4757
        %v4760 = vunpack.c.l.s4 1934713408
        %v4761 = vunpack.c.0.s8 %v4760
        %v4762 = vperm.slane %v4754, %v4761
        %v4763 = vrot.slane %v4750, 4
        %v4764 = vsel %vm1062, %v4763, %v4738
        %v4765 = vrot.slane %v4738, 4
        %v4766 = vsel %vm1062, %v4750, %v4765
        %v4768 = vunpack.c.l.s4 1934713408
        %v4769 = vunpack.c.0.s8 %v4768
        %v4770 = vperm.slane %v4764, %v4769
        %v4772 = vunpack.c.l.s4 1934713408
        %v4773 = vunpack.c.0.s8 %v4772
        %v4774 = vperm.slane %v4766, %v4773
        %v4775 = vrot.slane %v4758, 4
        %v4776 = vsel %vm1062, 0.0, %v4775
        %v4777 = vrot.slane %v4762, 4
        %v4778 = vsel %vm1062, 0.0, %v4777
        %v4779 = vrot.slane %v4770, 4
        %v4780 = vsel %vm1062, 0.0, %v4779
        %v4781 = vrot.slane %v4774, 4
        %v4782 = vsel %vm1062, 0.0, %v4781
        %v4783 = vsel %vm1062, %v4665, %v4646
        %v4785 = vunpack.c.l.s4 1983009808
        %v4786 = vunpack.c.0.s8 %v4785
        %v4787 = vperm.slane %v4783, %v4786
        %v4788 = vrot.slane %v4666, 4
        %v4789 = vsel %vm1062, %v4788, %v4664
        %v4791 = vunpack.c.l.s4 1983009808
        %v4792 = vunpack.c.0.s8 %v4791
        %v4793 = vperm.slane %v4789, %v4792
        %v4794 = vsel %vm1062, %v4669, %v4658
        %v4796 = vunpack.c.l.s4 1983009808
        %v4797 = vunpack.c.0.s8 %v4796
        %v4798 = vperm.slane %v4794, %v4797
        %v4799 = vrot.slane %v4670, 4
        %v4800 = vsel %vm1062, %v4799, %v4668
        %v4802 = vunpack.c.l.s4 1983009808
        %v4803 = vunpack.c.0.s8 %v4802
        %v4804 = vperm.slane %v4800, %v4803
        %v4805 = vrot.slane %v4793, 4
        %v4806 = vsel %vm1062, %v4805, %v4787
        %v4807 = vrot.slane %v4787, 4
        %v4808 = vsel %vm1062, %v4793, %v4807
        %v4810 = vunpack.c.l.s4 1934713408
        %v4811 = vunpack.c.0.s8 %v4810
        %v4812 = vperm.slane %v4806, %v4811
        %v4814 = vunpack.c.l.s4 1934713408
        %v4815 = vunpack.c.0.s8 %v4814
        %v4816 = vperm.slane %v4808, %v4815
        %v4817 = vrot.slane %v4804, 4
        %v4818 = vsel %vm1062, %v4817, %v4798
        %v4819 = vrot.slane %v4798, 4
        %v4820 = vsel %vm1062, %v4804, %v4819
        %v4822 = vunpack.c.l.s4 1934713408
        %v4823 = vunpack.c.0.s8 %v4822
        %v4824 = vperm.slane %v4818, %v4823
        %v4826 = vunpack.c.l.s4 1934713408
        %v4827 = vunpack.c.0.s8 %v4826
        %v4828 = vperm.slane %v4820, %v4827
        %v4829 = vrot.slane %v4824, 4
        %v4830 = vsel %vm1062, %v4829, %v4812
        %v4831 = vrot.slane %v4812, 4
        %v4832 = vsel %vm1062, %v4824, %v4831
        %v4833 = vrot.slane %v4828, 4
        %v4834 = vsel %vm1062, %v4833, %v4816
        %v4835 = vrot.slane %v4816, 4
        %v4836 = vsel %vm1062, %v4828, %v4835
        %v4837 = vsel %vm1062, %v4721, %v4702
        %v4839 = vunpack.c.l.s4 1983009808
        %v4840 = vunpack.c.0.s8 %v4839
        %v4841 = vperm.slane %v4837, %v4840
        %v4842 = vrot.slane %v4722, 4
        %v4843 = vsel %vm1062, %v4842, %v4720
        %v4845 = vunpack.c.l.s4 1983009808
        %v4846 = vunpack.c.0.s8 %v4845
        %v4847 = vperm.slane %v4843, %v4846
        %v4848 = vsel %vm1062, %v4725, %v4714
        %v4850 = vunpack.c.l.s4 1983009808
        %v4851 = vunpack.c.0.s8 %v4850
        %v4852 = vperm.slane %v4848, %v4851
        %v4853 = vrot.slane %v4726, 4
        %v4854 = vsel %vm1062, %v4853, %v4724
        %v4856 = vunpack.c.l.s4 1983009808
        %v4857 = vunpack.c.0.s8 %v4856
        %v4858 = vperm.slane %v4854, %v4857
        %v4859 = vrot.slane %v4847, 4
        %v4860 = vsel %vm1062, %v4859, %v4841
        %v4861 = vrot.slane %v4841, 4
        %v4862 = vsel %vm1062, %v4847, %v4861
        %v4864 = vunpack.c.l.s4 1934713408
        %v4865 = vunpack.c.0.s8 %v4864
        %v4866 = vperm.slane %v4860, %v4865
        %v4868 = vunpack.c.l.s4 1934713408
        %v4869 = vunpack.c.0.s8 %v4868
        %v4870 = vperm.slane %v4862, %v4869
        %v4871 = vrot.slane %v4858, 4
        %v4872 = vsel %vm1062, %v4871, %v4852
        %v4873 = vrot.slane %v4852, 4
        %v4874 = vsel %vm1062, %v4858, %v4873
        %v4876 = vunpack.c.l.s4 1934713408
        %v4877 = vunpack.c.0.s8 %v4876
        %v4878 = vperm.slane %v4872, %v4877
        %v4880 = vunpack.c.l.s4 1934713408
        %v4881 = vunpack.c.0.s8 %v4880
        %v4882 = vperm.slane %v4874, %v4881
        %v4883 = vrot.slane %v4878, 4
        %v4884 = vsel %vm1062, %v4883, %v4866
        %v4885 = vrot.slane %v4866, 4
        %v4886 = vsel %vm1062, %v4878, %v4885
        %v4887 = vrot.slane %v4882, 4
        %v4888 = vsel %vm1062, %v4887, %v4870
        %v4889 = vrot.slane %v4870, 4
        %v4890 = vsel %vm1062, %v4882, %v4889
        %v4891 = vsel %vm1062, %v4777, %v4758
        %v4893 = vunpack.c.l.s4 1983009808
        %v4894 = vunpack.c.0.s8 %v4893
        %v4895 = vperm.slane %v4891, %v4894
        %v4896 = vrot.slane %v4778, 4
        %v4897 = vsel %vm1062, %v4896, %v4776
        %v4899 = vunpack.c.l.s4 1983009808
        %v4900 = vunpack.c.0.s8 %v4899
        %v4901 = vperm.slane %v4897, %v4900
        %v4902 = vsel %vm1062, %v4781, %v4770
        %v4904 = vunpack.c.l.s4 1983009808
        %v4905 = vunpack.c.0.s8 %v4904
        %v4906 = vperm.slane %v4902, %v4905
        %v4907 = vrot.slane %v4782, 4
        %v4908 = vsel %vm1062, %v4907, %v4780
        %v4910 = vunpack.c.l.s4 1983009808
        %v4911 = vunpack.c.0.s8 %v4910
        %v4912 = vperm.slane %v4908, %v4911
        %v4913 = vrot.slane %v4901, 4
        %v4914 = vsel %vm1062, %v4913, %v4895
        %v4915 = vrot.slane %v4895, 4
        %v4916 = vsel %vm1062, %v4901, %v4915
        %v4918 = vunpack.c.l.s4 1934713408
        %v4919 = vunpack.c.0.s8 %v4918
        %v4920 = vperm.slane %v4914, %v4919
        %v4922 = vunpack.c.l.s4 1934713408
        %v4923 = vunpack.c.0.s8 %v4922
        %v4924 = vperm.slane %v4916, %v4923
        %v4925 = vrot.slane %v4912, 4
        %v4926 = vsel %vm1062, %v4925, %v4906
        %v4927 = vrot.slane %v4906, 4
        %v4928 = vsel %vm1062, %v4912, %v4927
        %v4930 = vunpack.c.l.s4 1934713408
        %v4931 = vunpack.c.0.s8 %v4930
        %v4932 = vperm.slane %v4926, %v4931
        %v4934 = vunpack.c.l.s4 1934713408
        %v4935 = vunpack.c.0.s8 %v4934
        %v4936 = vperm.slane %v4928, %v4935
        %v4937 = vrot.slane %v4932, 4
        %v4938 = vsel %vm1062, %v4937, %v4920
        %v4939 = vrot.slane %v4920, 4
        %v4940 = vsel %vm1062, %v4932, %v4939
        %v4941 = vrot.slane %v4936, 4
        %v4942 = vsel %vm1062, %v4941, %v4924
        %v4943 = vrot.slane %v4924, 4
        %v4944 = vsel %vm1062, %v4936, %v4943
        %v4945 = vpack.c.bf16 %v4830, %v4830
        %v4946 = vpack.c.bf16 %v4884, %v4884
        %v4947 = vpack.c.bf16 %v4938, %v4938
        %v4948 = vpack.c.bf16 %v4832, %v4832
        %v4949 = vpack.c.bf16 %v4886, %v4886
        %v4950 = vpack.c.bf16 %v4940, %v4940
        %v4951 = vpack.c.bf16 %v4834, %v4834
        %v4952 = vpack.c.bf16 %v4888, %v4888
        %v4953 = vpack.c.bf16 %v4942, %v4942
        %v4954 = vpack.c.bf16 %v4836, %v4836
        %v4955 = vpack.c.bf16 %v4890, %v4890
        %v4956 = vpack.c.bf16 %v4944, %v4944
        %4960 = vrot.lane.b32.xlu0 %v4556, 120
        %v4961 = vpop.permute.xlu0 %4960
        %4962 = vrot.lane.b32.xlu0 %v4558, 120
        %v4963 = vpop.permute.xlu0 %4962
        %4964 = vrot.lane.b32.xlu0 %v4561, 120
        %v4965 = vpop.permute.xlu0 %4964
        %4966 = vrot.lane.b32.xlu0 %v4556, 112
        %v4967 = vpop.permute.xlu0 %4966
        %4968 = vrot.lane.b32.xlu0 %v4558, 112
        %v4969 = vpop.permute.xlu0 %4968
        %4970 = vrot.lane.b32.xlu0 %v4561, 112
        %v4971 = vpop.permute.xlu0 %4970
        %4972 = vrot.lane.b32.xlu0 %v4556, 104
        %v4973 = vpop.permute.xlu0 %4972
        %4974 = vrot.lane.b32.xlu0 %v4558, 104
        %v4975 = vpop.permute.xlu0 %4974
        %4976 = vrot.lane.b32.xlu0 %v4561, 104
        %v4977 = vpop.permute.xlu0 %4976
        %4978 = vrot.lane.b32.xlu0 %v4556, 96
        %v4979 = vpop.permute.xlu0 %4978
        %4980 = vrot.lane.b32.xlu0 %v4558, 96
        %v4981 = vpop.permute.xlu0 %4980
        %4982 = vrot.lane.b32.xlu0 %v4561, 96
        %v4983 = vpop.permute.xlu0 %4982
        %4984 = vrot.lane.b32.xlu0 %v4961, 96
        %v4985 = vpop.permute.xlu0 %4984
        %4986 = vrot.lane.b32.xlu0 %v4963, 96
        %v4987 = vpop.permute.xlu0 %4986
        %4988 = vrot.lane.b32.xlu0 %v4965, 96
        %v4989 = vpop.permute.xlu0 %4988
        %4990 = vrot.lane.b32.xlu0 %v4967, 96
        %v4991 = vpop.permute.xlu0 %4990
        %4992 = vrot.lane.b32.xlu0 %v4969, 96
        %v4993 = vpop.permute.xlu0 %4992
        %4994 = vrot.lane.b32.xlu0 %v4971, 96
        %v4995 = vpop.permute.xlu0 %4994
        %4996 = vrot.lane.b32.xlu0 %v4973, 96
        %v4997 = vpop.permute.xlu0 %4996
        %4998 = vrot.lane.b32.xlu0 %v4975, 96
        %v4999 = vpop.permute.xlu0 %4998
        %5000 = vrot.lane.b32.xlu0 %v4977, 96
        %v5001 = vpop.permute.xlu0 %5000
        %v5014 = vrot.slane %v4991, 4
        %v5015 = vsel %vm1062, %v5014, %v4979
        %v5016 = vrot.slane %v4979, 4
        %v5017 = vsel %vm1062, %v4991, %v5016
        %v5019 = vunpack.c.l.s4 1983009808
        %v5020 = vunpack.c.0.s8 %v5019
        %v5021 = vperm.slane %v5015, %v5020
        %v5023 = vunpack.c.l.s4 1983009808
        %v5024 = vunpack.c.0.s8 %v5023
        %v5025 = vperm.slane %v5017, %v5024
        %v5026 = vrot.slane %v4997, 4
        %v5027 = vsel %vm1062, %v5026, %v4985
        %v5028 = vrot.slane %v4985, 4
        %v5029 = vsel %vm1062, %v4997, %v5028
        %v5031 = vunpack.c.l.s4 1983009808
        %v5032 = vunpack.c.0.s8 %v5031
        %v5033 = vperm.slane %v5027, %v5032
        %v5035 = vunpack.c.l.s4 1983009808
        %v5036 = vunpack.c.0.s8 %v5035
        %v5037 = vperm.slane %v5029, %v5036
        %v5038 = vrot.slane %v5033, 4
        %v5039 = vsel %vm1062, %v5038, %v5021
        %v5040 = vrot.slane %v5021, 4
        %v5041 = vsel %vm1062, %v5033, %v5040
        %v5043 = vunpack.c.l.s4 1934713408
        %v5044 = vunpack.c.0.s8 %v5043
        %v5045 = vperm.slane %v5039, %v5044
        %v5047 = vunpack.c.l.s4 1934713408
        %v5048 = vunpack.c.0.s8 %v5047
        %v5049 = vperm.slane %v5041, %v5048
        %v5050 = vrot.slane %v5037, 4
        %v5051 = vsel %vm1062, %v5050, %v5025
        %v5052 = vrot.slane %v5025, 4
        %v5053 = vsel %vm1062, %v5037, %v5052
        %v5055 = vunpack.c.l.s4 1934713408
        %v5056 = vunpack.c.0.s8 %v5055
        %v5057 = vperm.slane %v5051, %v5056
        %v5059 = vunpack.c.l.s4 1934713408
        %v5060 = vunpack.c.0.s8 %v5059
        %v5061 = vperm.slane %v5053, %v5060
        %v5062 = vrot.slane %v5045, 4
        %v5063 = vsel %vm1062, 0.0, %v5062
        %v5064 = vrot.slane %v5049, 4
        %v5065 = vsel %vm1062, 0.0, %v5064
        %v5066 = vrot.slane %v5057, 4
        %v5067 = vsel %vm1062, 0.0, %v5066
        %v5068 = vrot.slane %v5061, 4
        %v5069 = vsel %vm1062, 0.0, %v5068
        %v5070 = vrot.slane %v4993, 4
        %v5071 = vsel %vm1062, %v5070, %v4981
        %v5072 = vrot.slane %v4981, 4
        %v5073 = vsel %vm1062, %v4993, %v5072
        %v5075 = vunpack.c.l.s4 1983009808
        %v5076 = vunpack.c.0.s8 %v5075
        %v5077 = vperm.slane %v5071, %v5076
        %v5079 = vunpack.c.l.s4 1983009808
        %v5080 = vunpack.c.0.s8 %v5079
        %v5081 = vperm.slane %v5073, %v5080
        %v5082 = vrot.slane %v4999, 4
        %v5083 = vsel %vm1062, %v5082, %v4987
        %v5084 = vrot.slane %v4987, 4
        %v5085 = vsel %vm1062, %v4999, %v5084
        %v5087 = vunpack.c.l.s4 1983009808
        %v5088 = vunpack.c.0.s8 %v5087
        %v5089 = vperm.slane %v5083, %v5088
        %v5091 = vunpack.c.l.s4 1983009808
        %v5092 = vunpack.c.0.s8 %v5091
        %v5093 = vperm.slane %v5085, %v5092
        %v5094 = vrot.slane %v5089, 4
        %v5095 = vsel %vm1062, %v5094, %v5077
        %v5096 = vrot.slane %v5077, 4
        %v5097 = vsel %vm1062, %v5089, %v5096
        %v5099 = vunpack.c.l.s4 1934713408
        %v5100 = vunpack.c.0.s8 %v5099
        %v5101 = vperm.slane %v5095, %v5100
        %v5103 = vunpack.c.l.s4 1934713408
        %v5104 = vunpack.c.0.s8 %v5103
        %v5105 = vperm.slane %v5097, %v5104
        %v5106 = vrot.slane %v5093, 4
        %v5107 = vsel %vm1062, %v5106, %v5081
        %v5108 = vrot.slane %v5081, 4
        %v5109 = vsel %vm1062, %v5093, %v5108
        %v5111 = vunpack.c.l.s4 1934713408
        %v5112 = vunpack.c.0.s8 %v5111
        %v5113 = vperm.slane %v5107, %v5112
        %v5115 = vunpack.c.l.s4 1934713408
        %v5116 = vunpack.c.0.s8 %v5115
        %v5117 = vperm.slane %v5109, %v5116
        %v5118 = vrot.slane %v5101, 4
        %v5119 = vsel %vm1062, 0.0, %v5118
        %v5120 = vrot.slane %v5105, 4
        %v5121 = vsel %vm1062, 0.0, %v5120
        %v5122 = vrot.slane %v5113, 4
        %v5123 = vsel %vm1062, 0.0, %v5122
        %v5124 = vrot.slane %v5117, 4
        %v5125 = vsel %vm1062, 0.0, %v5124
        %v5126 = vrot.slane %v4995, 4
        %v5127 = vsel %vm1062, %v5126, %v4983
        %v5128 = vrot.slane %v4983, 4
        %v5129 = vsel %vm1062, %v4995, %v5128
        %v5131 = vunpack.c.l.s4 1983009808
        %v5132 = vunpack.c.0.s8 %v5131
        %v5133 = vperm.slane %v5127, %v5132
        %v5135 = vunpack.c.l.s4 1983009808
        %v5136 = vunpack.c.0.s8 %v5135
        %v5137 = vperm.slane %v5129, %v5136
        %v5138 = vrot.slane %v5001, 4
        %v5139 = vsel %vm1062, %v5138, %v4989
        %v5140 = vrot.slane %v4989, 4
        %v5141 = vsel %vm1062, %v5001, %v5140
        %v5143 = vunpack.c.l.s4 1983009808
        %v5144 = vunpack.c.0.s8 %v5143
        %v5145 = vperm.slane %v5139, %v5144
        %v5147 = vunpack.c.l.s4 1983009808
        %v5148 = vunpack.c.0.s8 %v5147
        %v5149 = vperm.slane %v5141, %v5148
        %v5150 = vrot.slane %v5145, 4
        %v5151 = vsel %vm1062, %v5150, %v5133
        %v5152 = vrot.slane %v5133, 4
        %v5153 = vsel %vm1062, %v5145, %v5152
        %v5155 = vunpack.c.l.s4 1934713408
        %v5156 = vunpack.c.0.s8 %v5155
        %v5157 = vperm.slane %v5151, %v5156
        %v5159 = vunpack.c.l.s4 1934713408
        %v5160 = vunpack.c.0.s8 %v5159
        %v5161 = vperm.slane %v5153, %v5160
        %v5162 = vrot.slane %v5149, 4
        %v5163 = vsel %vm1062, %v5162, %v5137
        %v5164 = vrot.slane %v5137, 4
        %v5165 = vsel %vm1062, %v5149, %v5164
        %v5167 = vunpack.c.l.s4 1934713408
        %v5168 = vunpack.c.0.s8 %v5167
        %v5169 = vperm.slane %v5163, %v5168
        %v5171 = vunpack.c.l.s4 1934713408
        %v5172 = vunpack.c.0.s8 %v5171
        %v5173 = vperm.slane %v5165, %v5172
        %v5174 = vrot.slane %v5157, 4
        %v5175 = vsel %vm1062, 0.0, %v5174
        %v5176 = vrot.slane %v5161, 4
        %v5177 = vsel %vm1062, 0.0, %v5176
        %v5178 = vrot.slane %v5169, 4
        %v5179 = vsel %vm1062, 0.0, %v5178
        %v5180 = vrot.slane %v5173, 4
        %v5181 = vsel %vm1062, 0.0, %v5180
        %v5182 = vsel %vm1062, %v5064, %v5045
        %v5184 = vunpack.c.l.s4 1983009808
        %v5185 = vunpack.c.0.s8 %v5184
        %v5186 = vperm.slane %v5182, %v5185
        %v5187 = vrot.slane %v5065, 4
        %v5188 = vsel %vm1062, %v5187, %v5063
        %v5190 = vunpack.c.l.s4 1983009808
        %v5191 = vunpack.c.0.s8 %v5190
        %v5192 = vperm.slane %v5188, %v5191
        %v5193 = vsel %vm1062, %v5068, %v5057
        %v5195 = vunpack.c.l.s4 1983009808
        %v5196 = vunpack.c.0.s8 %v5195
        %v5197 = vperm.slane %v5193, %v5196
        %v5198 = vrot.slane %v5069, 4
        %v5199 = vsel %vm1062, %v5198, %v5067
        %v5201 = vunpack.c.l.s4 1983009808
        %v5202 = vunpack.c.0.s8 %v5201
        %v5203 = vperm.slane %v5199, %v5202
        %v5204 = vrot.slane %v5192, 4
        %v5205 = vsel %vm1062, %v5204, %v5186
        %v5206 = vrot.slane %v5186, 4
        %v5207 = vsel %vm1062, %v5192, %v5206
        %v5209 = vunpack.c.l.s4 1934713408
        %v5210 = vunpack.c.0.s8 %v5209
        %v5211 = vperm.slane %v5205, %v5210
        %v5213 = vunpack.c.l.s4 1934713408
        %v5214 = vunpack.c.0.s8 %v5213
        %v5215 = vperm.slane %v5207, %v5214
        %v5216 = vrot.slane %v5203, 4
        %v5217 = vsel %vm1062, %v5216, %v5197
        %v5218 = vrot.slane %v5197, 4
        %v5219 = vsel %vm1062, %v5203, %v5218
        %v5221 = vunpack.c.l.s4 1934713408
        %v5222 = vunpack.c.0.s8 %v5221
        %v5223 = vperm.slane %v5217, %v5222
        %v5225 = vunpack.c.l.s4 1934713408
        %v5226 = vunpack.c.0.s8 %v5225
        %v5227 = vperm.slane %v5219, %v5226
        %v5228 = vrot.slane %v5223, 4
        %v5229 = vsel %vm1062, %v5228, %v5211
        %v5230 = vrot.slane %v5211, 4
        %v5231 = vsel %vm1062, %v5223, %v5230
        %v5232 = vrot.slane %v5227, 4
        %v5233 = vsel %vm1062, %v5232, %v5215
        %v5234 = vrot.slane %v5215, 4
        %v5235 = vsel %vm1062, %v5227, %v5234
        %v5236 = vsel %vm1062, %v5120, %v5101
        %v5238 = vunpack.c.l.s4 1983009808
        %v5239 = vunpack.c.0.s8 %v5238
        %v5240 = vperm.slane %v5236, %v5239
        %v5241 = vrot.slane %v5121, 4
        %v5242 = vsel %vm1062, %v5241, %v5119
        %v5244 = vunpack.c.l.s4 1983009808
        %v5245 = vunpack.c.0.s8 %v5244
        %v5246 = vperm.slane %v5242, %v5245
        %v5247 = vsel %vm1062, %v5124, %v5113
        %v5249 = vunpack.c.l.s4 1983009808
        %v5250 = vunpack.c.0.s8 %v5249
        %v5251 = vperm.slane %v5247, %v5250
        %v5252 = vrot.slane %v5125, 4
        %v5253 = vsel %vm1062, %v5252, %v5123
        %v5255 = vunpack.c.l.s4 1983009808
        %v5256 = vunpack.c.0.s8 %v5255
        %v5257 = vperm.slane %v5253, %v5256
        %v5258 = vrot.slane %v5246, 4
        %v5259 = vsel %vm1062, %v5258, %v5240
        %v5260 = vrot.slane %v5240, 4
        %v5261 = vsel %vm1062, %v5246, %v5260
        %v5263 = vunpack.c.l.s4 1934713408
        %v5264 = vunpack.c.0.s8 %v5263
        %v5265 = vperm.slane %v5259, %v5264
        %v5267 = vunpack.c.l.s4 1934713408
        %v5268 = vunpack.c.0.s8 %v5267
        %v5269 = vperm.slane %v5261, %v5268
        %v5270 = vrot.slane %v5257, 4
        %v5271 = vsel %vm1062, %v5270, %v5251
        %v5272 = vrot.slane %v5251, 4
        %v5273 = vsel %vm1062, %v5257, %v5272
        %v5275 = vunpack.c.l.s4 1934713408
        %v5276 = vunpack.c.0.s8 %v5275
        %v5277 = vperm.slane %v5271, %v5276
        %v5279 = vunpack.c.l.s4 1934713408
        %v5280 = vunpack.c.0.s8 %v5279
        %v5281 = vperm.slane %v5273, %v5280
        %v5282 = vrot.slane %v5277, 4
        %v5283 = vsel %vm1062, %v5282, %v5265
        %v5284 = vrot.slane %v5265, 4
        %v5285 = vsel %vm1062, %v5277, %v5284
        %v5286 = vrot.slane %v5281, 4
        %v5287 = vsel %vm1062, %v5286, %v5269
        %v5288 = vrot.slane %v5269, 4
        %v5289 = vsel %vm1062, %v5281, %v5288
        %v5290 = vsel %vm1062, %v5176, %v5157
        %v5292 = vunpack.c.l.s4 1983009808
        %v5293 = vunpack.c.0.s8 %v5292
        %v5294 = vperm.slane %v5290, %v5293
        %v5295 = vrot.slane %v5177, 4
        %v5296 = vsel %vm1062, %v5295, %v5175
        %v5298 = vunpack.c.l.s4 1983009808
        %v5299 = vunpack.c.0.s8 %v5298
        %v5300 = vperm.slane %v5296, %v5299
        %v5301 = vsel %vm1062, %v5180, %v5169
        %v5303 = vunpack.c.l.s4 1983009808
        %v5304 = vunpack.c.0.s8 %v5303
        %v5305 = vperm.slane %v5301, %v5304
        %v5306 = vrot.slane %v5181, 4
        %v5307 = vsel %vm1062, %v5306, %v5179
        %v5309 = vunpack.c.l.s4 1983009808
        %v5310 = vunpack.c.0.s8 %v5309
        %v5311 = vperm.slane %v5307, %v5310
        %v5312 = vrot.slane %v5300, 4
        %v5313 = vsel %vm1062, %v5312, %v5294
        %v5314 = vrot.slane %v5294, 4
        %v5315 = vsel %vm1062, %v5300, %v5314
        %v5317 = vunpack.c.l.s4 1934713408
        %v5318 = vunpack.c.0.s8 %v5317
        %v5319 = vperm.slane %v5313, %v5318
        %v5321 = vunpack.c.l.s4 1934713408
        %v5322 = vunpack.c.0.s8 %v5321
        %v5323 = vperm.slane %v5315, %v5322
        %v5324 = vrot.slane %v5311, 4
        %v5325 = vsel %vm1062, %v5324, %v5305
        %v5326 = vrot.slane %v5305, 4
        %v5327 = vsel %vm1062, %v5311, %v5326
        %v5329 = vunpack.c.l.s4 1934713408
        %v5330 = vunpack.c.0.s8 %v5329
        %v5331 = vperm.slane %v5325, %v5330
        %v5333 = vunpack.c.l.s4 1934713408
        %v5334 = vunpack.c.0.s8 %v5333
        %v5335 = vperm.slane %v5327, %v5334
        %v5336 = vrot.slane %v5331, 4
        %v5337 = vsel %vm1062, %v5336, %v5319
        %v5338 = vrot.slane %v5319, 4
        %v5339 = vsel %vm1062, %v5331, %v5338
        %v5340 = vrot.slane %v5335, 4
        %v5341 = vsel %vm1062, %v5340, %v5323
        %v5342 = vrot.slane %v5323, 4
        %v5343 = vsel %vm1062, %v5335, %v5342
        %v5344 = vpack.c.bf16 %v5229, %v5229
        %v5345 = vpack.c.bf16 %v5283, %v5283
        %v5346 = vpack.c.bf16 %v5337, %v5337
        %v5347 = vpack.c.bf16 %v5231, %v5231
        %v5348 = vpack.c.bf16 %v5285, %v5285
        %v5349 = vpack.c.bf16 %v5339, %v5339
        %v5350 = vpack.c.bf16 %v5233, %v5233
        %v5351 = vpack.c.bf16 %v5287, %v5287
        %v5352 = vpack.c.bf16 %v5341, %v5341
        %v5353 = vpack.c.bf16 %v5235, %v5235
        %v5354 = vpack.c.bf16 %v5289, %v5289
        %v5355 = vpack.c.bf16 %v5343, %v5343
        %5356 = vrot.lane.b32.xlu0 %v4556, 64
        %v5357 = vpop.permute.xlu0 %5356
        %5358 = vrot.lane.b32.xlu0 %v4558, 64
        %v5359 = vpop.permute.xlu0 %5358
        %5360 = vrot.lane.b32.xlu0 %v4561, 64
        %v5361 = vpop.permute.xlu0 %5360
        %5362 = vrot.lane.b32.xlu0 %v4961, 64
        %v5363 = vpop.permute.xlu0 %5362
        %5364 = vrot.lane.b32.xlu0 %v4963, 64
        %v5365 = vpop.permute.xlu0 %5364
        %5366 = vrot.lane.b32.xlu0 %v4965, 64
        %v5367 = vpop.permute.xlu0 %5366
        %5368 = vrot.lane.b32.xlu0 %v4967, 64
        %v5369 = vpop.permute.xlu0 %5368
        %5370 = vrot.lane.b32.xlu0 %v4969, 64
        %v5371 = vpop.permute.xlu0 %5370
        %5372 = vrot.lane.b32.xlu0 %v4971, 64
        %v5373 = vpop.permute.xlu0 %5372
        %5374 = vrot.lane.b32.xlu0 %v4973, 64
        %v5375 = vpop.permute.xlu0 %5374
        %5376 = vrot.lane.b32.xlu0 %v4975, 64
        %v5377 = vpop.permute.xlu0 %5376
        %5378 = vrot.lane.b32.xlu0 %v4977, 64
        %v5379 = vpop.permute.xlu0 %5378
        %v5392 = vrot.slane %v5369, 4
        %v5393 = vsel %vm1062, %v5392, %v5357
        %v5394 = vrot.slane %v5357, 4
        %v5395 = vsel %vm1062, %v5369, %v5394
        %v5397 = vunpack.c.l.s4 1983009808
        %v5398 = vunpack.c.0.s8 %v5397
        %v5399 = vperm.slane %v5393, %v5398
        %v5401 = vunpack.c.l.s4 1983009808
        %v5402 = vunpack.c.0.s8 %v5401
        %v5403 = vperm.slane %v5395, %v5402
        %v5404 = vrot.slane %v5375, 4
        %v5405 = vsel %vm1062, %v5404, %v5363
        %v5406 = vrot.slane %v5363, 4
        %v5407 = vsel %vm1062, %v5375, %v5406
        %v5409 = vunpack.c.l.s4 1983009808
        %v5410 = vunpack.c.0.s8 %v5409
        %v5411 = vperm.slane %v5405, %v5410
        %v5413 = vunpack.c.l.s4 1983009808
        %v5414 = vunpack.c.0.s8 %v5413
        %v5415 = vperm.slane %v5407, %v5414
        %v5416 = vrot.slane %v5411, 4
        %v5417 = vsel %vm1062, %v5416, %v5399
        %v5418 = vrot.slane %v5399, 4
        %v5419 = vsel %vm1062, %v5411, %v5418
        %v5421 = vunpack.c.l.s4 1934713408
        %v5422 = vunpack.c.0.s8 %v5421
        %v5423 = vperm.slane %v5417, %v5422
        %v5425 = vunpack.c.l.s4 1934713408
        %v5426 = vunpack.c.0.s8 %v5425
        %v5427 = vperm.slane %v5419, %v5426
        %v5428 = vrot.slane %v5415, 4
        %v5429 = vsel %vm1062, %v5428, %v5403
        %v5430 = vrot.slane %v5403, 4
        %v5431 = vsel %vm1062, %v5415, %v5430
        %v5433 = vunpack.c.l.s4 1934713408
        %v5434 = vunpack.c.0.s8 %v5433
        %v5435 = vperm.slane %v5429, %v5434
        %v5437 = vunpack.c.l.s4 1934713408
        %v5438 = vunpack.c.0.s8 %v5437
        %v5439 = vperm.slane %v5431, %v5438
        %v5440 = vrot.slane %v5423, 4
        %v5441 = vsel %vm1062, 0.0, %v5440
        %v5442 = vrot.slane %v5427, 4
        %v5443 = vsel %vm1062, 0.0, %v5442
        %v5444 = vrot.slane %v5435, 4
        %v5445 = vsel %vm1062, 0.0, %v5444
        %v5446 = vrot.slane %v5439, 4
        %v5447 = vsel %vm1062, 0.0, %v5446
        %v5448 = vrot.slane %v5371, 4
        %v5449 = vsel %vm1062, %v5448, %v5359
        %v5450 = vrot.slane %v5359, 4
        %v5451 = vsel %vm1062, %v5371, %v5450
        %v5453 = vunpack.c.l.s4 1983009808
        %v5454 = vunpack.c.0.s8 %v5453
        %v5455 = vperm.slane %v5449, %v5454
        %v5457 = vunpack.c.l.s4 1983009808
        %v5458 = vunpack.c.0.s8 %v5457
        %v5459 = vperm.slane %v5451, %v5458
        %v5460 = vrot.slane %v5377, 4
        %v5461 = vsel %vm1062, %v5460, %v5365
        %v5462 = vrot.slane %v5365, 4
        %v5463 = vsel %vm1062, %v5377, %v5462
        %v5465 = vunpack.c.l.s4 1983009808
        %v5466 = vunpack.c.0.s8 %v5465
        %v5467 = vperm.slane %v5461, %v5466
        %v5469 = vunpack.c.l.s4 1983009808
        %v5470 = vunpack.c.0.s8 %v5469
        %v5471 = vperm.slane %v5463, %v5470
        %v5472 = vrot.slane %v5467, 4
        %v5473 = vsel %vm1062, %v5472, %v5455
        %v5474 = vrot.slane %v5455, 4
        %v5475 = vsel %vm1062, %v5467, %v5474
        %v5477 = vunpack.c.l.s4 1934713408
        %v5478 = vunpack.c.0.s8 %v5477
        %v5479 = vperm.slane %v5473, %v5478
        %v5481 = vunpack.c.l.s4 1934713408
        %v5482 = vunpack.c.0.s8 %v5481
        %v5483 = vperm.slane %v5475, %v5482
        %v5484 = vrot.slane %v5471, 4
        %v5485 = vsel %vm1062, %v5484, %v5459
        %v5486 = vrot.slane %v5459, 4
        %v5487 = vsel %vm1062, %v5471, %v5486
        %v5489 = vunpack.c.l.s4 1934713408
        %v5490 = vunpack.c.0.s8 %v5489
        %v5491 = vperm.slane %v5485, %v5490
        %v5493 = vunpack.c.l.s4 1934713408
        %v5494 = vunpack.c.0.s8 %v5493
        %v5495 = vperm.slane %v5487, %v5494
        %v5496 = vrot.slane %v5479, 4
        %v5497 = vsel %vm1062, 0.0, %v5496
        %v5498 = vrot.slane %v5483, 4
        %v5499 = vsel %vm1062, 0.0, %v5498
        %v5500 = vrot.slane %v5491, 4
        %v5501 = vsel %vm1062, 0.0, %v5500
        %v5502 = vrot.slane %v5495, 4
        %v5503 = vsel %vm1062, 0.0, %v5502
        %v5504 = vrot.slane %v5373, 4
        %v5505 = vsel %vm1062, %v5504, %v5361
        %v5506 = vrot.slane %v5361, 4
        %v5507 = vsel %vm1062, %v5373, %v5506
        %v5509 = vunpack.c.l.s4 1983009808
        %v5510 = vunpack.c.0.s8 %v5509
        %v5511 = vperm.slane %v5505, %v5510
        %v5513 = vunpack.c.l.s4 1983009808
        %v5514 = vunpack.c.0.s8 %v5513
        %v5515 = vperm.slane %v5507, %v5514
        %v5516 = vrot.slane %v5379, 4
        %v5517 = vsel %vm1062, %v5516, %v5367
        %v5518 = vrot.slane %v5367, 4
        %v5519 = vsel %vm1062, %v5379, %v5518
        %v5521 = vunpack.c.l.s4 1983009808
        %v5522 = vunpack.c.0.s8 %v5521
        %v5523 = vperm.slane %v5517, %v5522
        %v5525 = vunpack.c.l.s4 1983009808
        %v5526 = vunpack.c.0.s8 %v5525
        %v5527 = vperm.slane %v5519, %v5526
        %v5528 = vrot.slane %v5523, 4
        %v5529 = vsel %vm1062, %v5528, %v5511
        %v5530 = vrot.slane %v5511, 4
        %v5531 = vsel %vm1062, %v5523, %v5530
        %v5533 = vunpack.c.l.s4 1934713408
        %v5534 = vunpack.c.0.s8 %v5533
        %v5535 = vperm.slane %v5529, %v5534
        %v5537 = vunpack.c.l.s4 1934713408
        %v5538 = vunpack.c.0.s8 %v5537
        %v5539 = vperm.slane %v5531, %v5538
        %v5540 = vrot.slane %v5527, 4
        %v5541 = vsel %vm1062, %v5540, %v5515
        %v5542 = vrot.slane %v5515, 4
        %v5543 = vsel %vm1062, %v5527, %v5542
        %v5545 = vunpack.c.l.s4 1934713408
        %v5546 = vunpack.c.0.s8 %v5545
        %v5547 = vperm.slane %v5541, %v5546
        %v5549 = vunpack.c.l.s4 1934713408
        %v5550 = vunpack.c.0.s8 %v5549
        %v5551 = vperm.slane %v5543, %v5550
        %v5552 = vrot.slane %v5535, 4
        %v5553 = vsel %vm1062, 0.0, %v5552
        %v5554 = vrot.slane %v5539, 4
        %v5555 = vsel %vm1062, 0.0, %v5554
        %v5556 = vrot.slane %v5547, 4
        %v5557 = vsel %vm1062, 0.0, %v5556
        %v5558 = vrot.slane %v5551, 4
        %v5559 = vsel %vm1062, 0.0, %v5558
        %v5560 = vsel %vm1062, %v5442, %v5423
        %v5562 = vunpack.c.l.s4 1983009808
        %v5563 = vunpack.c.0.s8 %v5562
        %v5564 = vperm.slane %v5560, %v5563
        %v5565 = vrot.slane %v5443, 4
        %v5566 = vsel %vm1062, %v5565, %v5441
        %v5568 = vunpack.c.l.s4 1983009808
        %v5569 = vunpack.c.0.s8 %v5568
        %v5570 = vperm.slane %v5566, %v5569
        %v5571 = vsel %vm1062, %v5446, %v5435
        %v5573 = vunpack.c.l.s4 1983009808
        %v5574 = vunpack.c.0.s8 %v5573
        %v5575 = vperm.slane %v5571, %v5574
        %v5576 = vrot.slane %v5447, 4
        %v5577 = vsel %vm1062, %v5576, %v5445
        %v5579 = vunpack.c.l.s4 1983009808
        %v5580 = vunpack.c.0.s8 %v5579
        %v5581 = vperm.slane %v5577, %v5580
        %v5582 = vrot.slane %v5570, 4
        %v5583 = vsel %vm1062, %v5582, %v5564
        %v5584 = vrot.slane %v5564, 4
        %v5585 = vsel %vm1062, %v5570, %v5584
        %v5587 = vunpack.c.l.s4 1934713408
        %v5588 = vunpack.c.0.s8 %v5587
        %v5589 = vperm.slane %v5583, %v5588
        %v5591 = vunpack.c.l.s4 1934713408
        %v5592 = vunpack.c.0.s8 %v5591
        %v5593 = vperm.slane %v5585, %v5592
        %v5594 = vrot.slane %v5581, 4
        %v5595 = vsel %vm1062, %v5594, %v5575
        %v5596 = vrot.slane %v5575, 4
        %v5597 = vsel %vm1062, %v5581, %v5596
        %v5599 = vunpack.c.l.s4 1934713408
        %v5600 = vunpack.c.0.s8 %v5599
        %v5601 = vperm.slane %v5595, %v5600
        %v5603 = vunpack.c.l.s4 1934713408
        %v5604 = vunpack.c.0.s8 %v5603
        %v5605 = vperm.slane %v5597, %v5604
        %v5606 = vrot.slane %v5601, 4
        %v5607 = vsel %vm1062, %v5606, %v5589
        %v5608 = vrot.slane %v5589, 4
        %v5609 = vsel %vm1062, %v5601, %v5608
        %v5610 = vrot.slane %v5605, 4
        %v5611 = vsel %vm1062, %v5610, %v5593
        %v5612 = vrot.slane %v5593, 4
        %v5613 = vsel %vm1062, %v5605, %v5612
        %v5614 = vsel %vm1062, %v5498, %v5479
        %v5616 = vunpack.c.l.s4 1983009808
        %v5617 = vunpack.c.0.s8 %v5616
        %v5618 = vperm.slane %v5614, %v5617
        %v5619 = vrot.slane %v5499, 4
        %v5620 = vsel %vm1062, %v5619, %v5497
        %v5622 = vunpack.c.l.s4 1983009808
        %v5623 = vunpack.c.0.s8 %v5622
        %v5624 = vperm.slane %v5620, %v5623
        %v5625 = vsel %vm1062, %v5502, %v5491
        %v5627 = vunpack.c.l.s4 1983009808
        %v5628 = vunpack.c.0.s8 %v5627
        %v5629 = vperm.slane %v5625, %v5628
        %v5630 = vrot.slane %v5503, 4
        %v5631 = vsel %vm1062, %v5630, %v5501
        %v5633 = vunpack.c.l.s4 1983009808
        %v5634 = vunpack.c.0.s8 %v5633
        %v5635 = vperm.slane %v5631, %v5634
        %v5636 = vrot.slane %v5624, 4
        %v5637 = vsel %vm1062, %v5636, %v5618
        %v5638 = vrot.slane %v5618, 4
        %v5639 = vsel %vm1062, %v5624, %v5638
        %v5641 = vunpack.c.l.s4 1934713408
        %v5642 = vunpack.c.0.s8 %v5641
        %v5643 = vperm.slane %v5637, %v5642
        %v5645 = vunpack.c.l.s4 1934713408
        %v5646 = vunpack.c.0.s8 %v5645
        %v5647 = vperm.slane %v5639, %v5646
        %v5648 = vrot.slane %v5635, 4
        %v5649 = vsel %vm1062, %v5648, %v5629
        %v5650 = vrot.slane %v5629, 4
        %v5651 = vsel %vm1062, %v5635, %v5650
        %v5653 = vunpack.c.l.s4 1934713408
        %v5654 = vunpack.c.0.s8 %v5653
        %v5655 = vperm.slane %v5649, %v5654
        %v5657 = vunpack.c.l.s4 1934713408
        %v5658 = vunpack.c.0.s8 %v5657
        %v5659 = vperm.slane %v5651, %v5658
        %v5660 = vrot.slane %v5655, 4
        %v5661 = vsel %vm1062, %v5660, %v5643
        %v5662 = vrot.slane %v5643, 4
        %v5663 = vsel %vm1062, %v5655, %v5662
        %v5664 = vrot.slane %v5659, 4
        %v5665 = vsel %vm1062, %v5664, %v5647
        %v5666 = vrot.slane %v5647, 4
        %v5667 = vsel %vm1062, %v5659, %v5666
        %v5668 = vsel %vm1062, %v5554, %v5535
        %v5670 = vunpack.c.l.s4 1983009808
        %v5671 = vunpack.c.0.s8 %v5670
        %v5672 = vperm.slane %v5668, %v5671
        %v5673 = vrot.slane %v5555, 4
        %v5674 = vsel %vm1062, %v5673, %v5553
        %v5676 = vunpack.c.l.s4 1983009808
        %v5677 = vunpack.c.0.s8 %v5676
        %v5678 = vperm.slane %v5674, %v5677
        %v5679 = vsel %vm1062, %v5558, %v5547
        %v5681 = vunpack.c.l.s4 1983009808
        %v5682 = vunpack.c.0.s8 %v5681
        %v5683 = vperm.slane %v5679, %v5682
        %v5684 = vrot.slane %v5559, 4
        %v5685 = vsel %vm1062, %v5684, %v5557
        %v5687 = vunpack.c.l.s4 1983009808
        %v5688 = vunpack.c.0.s8 %v5687
        %v5689 = vperm.slane %v5685, %v5688
        %v5690 = vrot.slane %v5678, 4
        %v5691 = vsel %vm1062, %v5690, %v5672
        %v5692 = vrot.slane %v5672, 4
        %v5693 = vsel %vm1062, %v5678, %v5692
        %v5695 = vunpack.c.l.s4 1934713408
        %v5696 = vunpack.c.0.s8 %v5695
        %v5697 = vperm.slane %v5691, %v5696
        %v5699 = vunpack.c.l.s4 1934713408
        %v5700 = vunpack.c.0.s8 %v5699
        %v5701 = vperm.slane %v5693, %v5700
        %v5702 = vrot.slane %v5689, 4
        %v5703 = vsel %vm1062, %v5702, %v5683
        %v5704 = vrot.slane %v5683, 4
        %v5705 = vsel %vm1062, %v5689, %v5704
        %v5707 = vunpack.c.l.s4 1934713408
        %v5708 = vunpack.c.0.s8 %v5707
        %v5709 = vperm.slane %v5703, %v5708
        %v5711 = vunpack.c.l.s4 1934713408
        %v5712 = vunpack.c.0.s8 %v5711
        %v5713 = vperm.slane %v5705, %v5712
        %v5714 = vrot.slane %v5709, 4
        %v5715 = vsel %vm1062, %v5714, %v5697
        %v5716 = vrot.slane %v5697, 4
        %v5717 = vsel %vm1062, %v5709, %v5716
        %v5718 = vrot.slane %v5713, 4
        %v5719 = vsel %vm1062, %v5718, %v5701
        %v5720 = vrot.slane %v5701, 4
        %v5721 = vsel %vm1062, %v5713, %v5720
        %v5722 = vpack.c.bf16 %v5607, %v5607
        %v5723 = vpack.c.bf16 %v5661, %v5661
        %v5724 = vpack.c.bf16 %v5715, %v5715
        %v5725 = vpack.c.bf16 %v5609, %v5609
        %v5726 = vpack.c.bf16 %v5663, %v5663
        %v5727 = vpack.c.bf16 %v5717, %v5717
        %v5728 = vpack.c.bf16 %v5611, %v5611
        %v5729 = vpack.c.bf16 %v5665, %v5665
        %v5730 = vpack.c.bf16 %v5719, %v5719
        %v5731 = vpack.c.bf16 %v5613, %v5613
        %v5732 = vpack.c.bf16 %v5667, %v5667
        %v5733 = vpack.c.bf16 %v5721, %v5721
        %5737 = vrot.lane.b32.xlu0 %v4574, 120
        %v5738 = vpop.permute.xlu0 %5737
        %5739 = vrot.lane.b32.xlu0 %v4576, 120
        %v5740 = vpop.permute.xlu0 %5739
        %5741 = vrot.lane.b32.xlu0 %v4579, 120
        %v5742 = vpop.permute.xlu0 %5741
        %5746 = vrot.lane.b32.xlu0 %v4574, 112
        %v5747 = vpop.permute.xlu0 %5746
        %5748 = vrot.lane.b32.xlu0 %v4576, 112
        %v5749 = vpop.permute.xlu0 %5748
        %5750 = vrot.lane.b32.xlu0 %v4579, 112
        %v5751 = vpop.permute.xlu0 %5750
        %5755 = vrot.lane.b32.xlu0 %v4574, 104
        %v5756 = vpop.permute.xlu0 %5755
        %5757 = vrot.lane.b32.xlu0 %v4576, 104
        %v5758 = vpop.permute.xlu0 %5757
        %5759 = vrot.lane.b32.xlu0 %v4579, 104
        %v5760 = vpop.permute.xlu0 %5759
        %v5764 = vrot.slane %v5747, 4
        %v5765 = vsel %vm1062, %v5764, %v4574
        %v5766 = vrot.slane %v4574, 4
        %v5767 = vsel %vm1062, %v5747, %v5766
        %v5769 = vunpack.c.l.s4 1983009808
        %v5770 = vunpack.c.0.s8 %v5769
        %v5771 = vperm.slane %v5765, %v5770
        %v5773 = vunpack.c.l.s4 1983009808
        %v5774 = vunpack.c.0.s8 %v5773
        %v5775 = vperm.slane %v5767, %v5774
        %v5776 = vrot.slane %v5756, 4
        %v5777 = vsel %vm1062, %v5776, %v5738
        %v5778 = vrot.slane %v5738, 4
        %v5779 = vsel %vm1062, %v5756, %v5778
        %v5781 = vunpack.c.l.s4 1983009808
        %v5782 = vunpack.c.0.s8 %v5781
        %v5783 = vperm.slane %v5777, %v5782
        %v5785 = vunpack.c.l.s4 1983009808
        %v5786 = vunpack.c.0.s8 %v5785
        %v5787 = vperm.slane %v5779, %v5786
        %v5788 = vrot.slane %v5783, 4
        %v5789 = vsel %vm1062, %v5788, %v5771
        %v5790 = vrot.slane %v5771, 4
        %v5791 = vsel %vm1062, %v5783, %v5790
        %v5793 = vunpack.c.l.s4 1934713408
        %v5794 = vunpack.c.0.s8 %v5793
        %v5795 = vperm.slane %v5789, %v5794
        %v5797 = vunpack.c.l.s4 1934713408
        %v5798 = vunpack.c.0.s8 %v5797
        %v5799 = vperm.slane %v5791, %v5798
        %v5800 = vrot.slane %v5787, 4
        %v5801 = vsel %vm1062, %v5800, %v5775
        %v5802 = vrot.slane %v5775, 4
        %v5803 = vsel %vm1062, %v5787, %v5802
        %v5805 = vunpack.c.l.s4 1934713408
        %v5806 = vunpack.c.0.s8 %v5805
        %v5807 = vperm.slane %v5801, %v5806
        %v5809 = vunpack.c.l.s4 1934713408
        %v5810 = vunpack.c.0.s8 %v5809
        %v5811 = vperm.slane %v5803, %v5810
        %v5812 = vrot.slane %v5795, 4
        %v5813 = vsel %vm1062, 0.0, %v5812
        %v5814 = vrot.slane %v5799, 4
        %v5815 = vsel %vm1062, 0.0, %v5814
        %v5816 = vrot.slane %v5807, 4
        %v5817 = vsel %vm1062, 0.0, %v5816
        %v5818 = vrot.slane %v5811, 4
        %v5819 = vsel %vm1062, 0.0, %v5818
        %v5820 = vrot.slane %v5749, 4
        %v5821 = vsel %vm1062, %v5820, %v4576
        %v5822 = vrot.slane %v4576, 4
        %v5823 = vsel %vm1062, %v5749, %v5822
        %v5825 = vunpack.c.l.s4 1983009808
        %v5826 = vunpack.c.0.s8 %v5825
        %v5827 = vperm.slane %v5821, %v5826
        %v5829 = vunpack.c.l.s4 1983009808
        %v5830 = vunpack.c.0.s8 %v5829
        %v5831 = vperm.slane %v5823, %v5830
        %v5832 = vrot.slane %v5758, 4
        %v5833 = vsel %vm1062, %v5832, %v5740
        %v5834 = vrot.slane %v5740, 4
        %v5835 = vsel %vm1062, %v5758, %v5834
        %v5837 = vunpack.c.l.s4 1983009808
        %v5838 = vunpack.c.0.s8 %v5837
        %v5839 = vperm.slane %v5833, %v5838
        %v5841 = vunpack.c.l.s4 1983009808
        %v5842 = vunpack.c.0.s8 %v5841
        %v5843 = vperm.slane %v5835, %v5842
        %v5844 = vrot.slane %v5839, 4
        %v5845 = vsel %vm1062, %v5844, %v5827
        %v5846 = vrot.slane %v5827, 4
        %v5847 = vsel %vm1062, %v5839, %v5846
        %v5849 = vunpack.c.l.s4 1934713408
        %v5850 = vunpack.c.0.s8 %v5849
        %v5851 = vperm.slane %v5845, %v5850
        %v5853 = vunpack.c.l.s4 1934713408
        %v5854 = vunpack.c.0.s8 %v5853
        %v5855 = vperm.slane %v5847, %v5854
        %v5856 = vrot.slane %v5843, 4
        %v5857 = vsel %vm1062, %v5856, %v5831
        %v5858 = vrot.slane %v5831, 4
        %v5859 = vsel %vm1062, %v5843, %v5858
        %v5861 = vunpack.c.l.s4 1934713408
        %v5862 = vunpack.c.0.s8 %v5861
        %v5863 = vperm.slane %v5857, %v5862
        %v5865 = vunpack.c.l.s4 1934713408
        %v5866 = vunpack.c.0.s8 %v5865
        %v5867 = vperm.slane %v5859, %v5866
        %v5868 = vrot.slane %v5851, 4
        %v5869 = vsel %vm1062, 0.0, %v5868
        %v5870 = vrot.slane %v5855, 4
        %v5871 = vsel %vm1062, 0.0, %v5870
        %v5872 = vrot.slane %v5863, 4
        %v5873 = vsel %vm1062, 0.0, %v5872
        %v5874 = vrot.slane %v5867, 4
        %v5875 = vsel %vm1062, 0.0, %v5874
        %v5876 = vrot.slane %v5751, 4
        %v5877 = vsel %vm1062, %v5876, %v4579
        %v5878 = vrot.slane %v4579, 4
        %v5879 = vsel %vm1062, %v5751, %v5878
        %v5881 = vunpack.c.l.s4 1983009808
        %v5882 = vunpack.c.0.s8 %v5881
        %v5883 = vperm.slane %v5877, %v5882
        %v5885 = vunpack.c.l.s4 1983009808
        %v5886 = vunpack.c.0.s8 %v5885
        %v5887 = vperm.slane %v5879, %v5886
        %v5888 = vrot.slane %v5760, 4
        %v5889 = vsel %vm1062, %v5888, %v5742
        %v5890 = vrot.slane %v5742, 4
        %v5891 = vsel %vm1062, %v5760, %v5890
        %v5893 = vunpack.c.l.s4 1983009808
        %v5894 = vunpack.c.0.s8 %v5893
        %v5895 = vperm.slane %v5889, %v5894
        %v5897 = vunpack.c.l.s4 1983009808
        %v5898 = vunpack.c.0.s8 %v5897
        %v5899 = vperm.slane %v5891, %v5898
        %v5900 = vrot.slane %v5895, 4
        %v5901 = vsel %vm1062, %v5900, %v5883
        %v5902 = vrot.slane %v5883, 4
        %v5903 = vsel %vm1062, %v5895, %v5902
        %v5905 = vunpack.c.l.s4 1934713408
        %v5906 = vunpack.c.0.s8 %v5905
        %v5907 = vperm.slane %v5901, %v5906
        %v5909 = vunpack.c.l.s4 1934713408
        %v5910 = vunpack.c.0.s8 %v5909
        %v5911 = vperm.slane %v5903, %v5910
        %v5912 = vrot.slane %v5899, 4
        %v5913 = vsel %vm1062, %v5912, %v5887
        %v5914 = vrot.slane %v5887, 4
        %v5915 = vsel %vm1062, %v5899, %v5914
        %v5917 = vunpack.c.l.s4 1934713408
        %v5918 = vunpack.c.0.s8 %v5917
        %v5919 = vperm.slane %v5913, %v5918
        %v5921 = vunpack.c.l.s4 1934713408
        %v5922 = vunpack.c.0.s8 %v5921
        %v5923 = vperm.slane %v5915, %v5922
        %v5924 = vrot.slane %v5907, 4
        %v5925 = vsel %vm1062, 0.0, %v5924
        %v5926 = vrot.slane %v5911, 4
        %v5927 = vsel %vm1062, 0.0, %v5926
        %v5928 = vrot.slane %v5919, 4
        %v5929 = vsel %vm1062, 0.0, %v5928
        %v5930 = vrot.slane %v5923, 4
        %v5931 = vsel %vm1062, 0.0, %v5930
        %v5932 = vsel %vm1062, %v5814, %v5795
        %v5934 = vunpack.c.l.s4 1983009808
        %v5935 = vunpack.c.0.s8 %v5934
        %v5936 = vperm.slane %v5932, %v5935
        %v5937 = vrot.slane %v5815, 4
        %v5938 = vsel %vm1062, %v5937, %v5813
        %v5940 = vunpack.c.l.s4 1983009808
        %v5941 = vunpack.c.0.s8 %v5940
        %v5942 = vperm.slane %v5938, %v5941
        %v5943 = vsel %vm1062, %v5818, %v5807
        %v5945 = vunpack.c.l.s4 1983009808
        %v5946 = vunpack.c.0.s8 %v5945
        %v5947 = vperm.slane %v5943, %v5946
        %v5948 = vrot.slane %v5819, 4
        %v5949 = vsel %vm1062, %v5948, %v5817
        %v5951 = vunpack.c.l.s4 1983009808
        %v5952 = vunpack.c.0.s8 %v5951
        %v5953 = vperm.slane %v5949, %v5952
        %v5954 = vrot.slane %v5942, 4
        %v5955 = vsel %vm1062, %v5954, %v5936
        %v5956 = vrot.slane %v5936, 4
        %v5957 = vsel %vm1062, %v5942, %v5956
        %v5959 = vunpack.c.l.s4 1934713408
        %v5960 = vunpack.c.0.s8 %v5959
        %v5961 = vperm.slane %v5955, %v5960
        %v5963 = vunpack.c.l.s4 1934713408
        %v5964 = vunpack.c.0.s8 %v5963
        %v5965 = vperm.slane %v5957, %v5964
        %v5966 = vrot.slane %v5953, 4
        %v5967 = vsel %vm1062, %v5966, %v5947
        %v5968 = vrot.slane %v5947, 4
        %v5969 = vsel %vm1062, %v5953, %v5968
        %v5971 = vunpack.c.l.s4 1934713408
        %v5972 = vunpack.c.0.s8 %v5971
        %v5973 = vperm.slane %v5967, %v5972
        %v5975 = vunpack.c.l.s4 1934713408
        %v5976 = vunpack.c.0.s8 %v5975
        %v5977 = vperm.slane %v5969, %v5976
        %v5978 = vrot.slane %v5973, 4
        %v5979 = vsel %vm1062, %v5978, %v5961
        %v5980 = vrot.slane %v5961, 4
        %v5981 = vsel %vm1062, %v5973, %v5980
        %v5982 = vrot.slane %v5977, 4
        %v5983 = vsel %vm1062, %v5982, %v5965
        %v5984 = vrot.slane %v5965, 4
        %v5985 = vsel %vm1062, %v5977, %v5984
        %v5986 = vsel %vm1062, %v5870, %v5851
        %v5988 = vunpack.c.l.s4 1983009808
        %v5989 = vunpack.c.0.s8 %v5988
        %v5990 = vperm.slane %v5986, %v5989
        %v5991 = vrot.slane %v5871, 4
        %v5992 = vsel %vm1062, %v5991, %v5869
        %v5994 = vunpack.c.l.s4 1983009808
        %v5995 = vunpack.c.0.s8 %v5994
        %v5996 = vperm.slane %v5992, %v5995
        %v5997 = vsel %vm1062, %v5874, %v5863
        %v5999 = vunpack.c.l.s4 1983009808
        %v6000 = vunpack.c.0.s8 %v5999
        %v6001 = vperm.slane %v5997, %v6000
        %v6002 = vrot.slane %v5875, 4
        %v6003 = vsel %vm1062, %v6002, %v5873
        %v6005 = vunpack.c.l.s4 1983009808
        %v6006 = vunpack.c.0.s8 %v6005
        %v6007 = vperm.slane %v6003, %v6006
        %v6008 = vrot.slane %v5996, 4
        %v6009 = vsel %vm1062, %v6008, %v5990
        %v6010 = vrot.slane %v5990, 4
        %v6011 = vsel %vm1062, %v5996, %v6010
        %v6013 = vunpack.c.l.s4 1934713408
        %v6014 = vunpack.c.0.s8 %v6013
        %v6015 = vperm.slane %v6009, %v6014
        %v6017 = vunpack.c.l.s4 1934713408
        %v6018 = vunpack.c.0.s8 %v6017
        %v6019 = vperm.slane %v6011, %v6018
        %v6020 = vrot.slane %v6007, 4
        %v6021 = vsel %vm1062, %v6020, %v6001
        %v6022 = vrot.slane %v6001, 4
        %v6023 = vsel %vm1062, %v6007, %v6022
        %v6025 = vunpack.c.l.s4 1934713408
        %v6026 = vunpack.c.0.s8 %v6025
        %v6027 = vperm.slane %v6021, %v6026
        %v6029 = vunpack.c.l.s4 1934713408
        %v6030 = vunpack.c.0.s8 %v6029
        %v6031 = vperm.slane %v6023, %v6030
        %v6032 = vrot.slane %v6027, 4
        %v6033 = vsel %vm1062, %v6032, %v6015
        %v6034 = vrot.slane %v6015, 4
        %v6035 = vsel %vm1062, %v6027, %v6034
        %v6036 = vrot.slane %v6031, 4
        %v6037 = vsel %vm1062, %v6036, %v6019
        %v6038 = vrot.slane %v6019, 4
        %v6039 = vsel %vm1062, %v6031, %v6038
        %v6040 = vsel %vm1062, %v5926, %v5907
        %v6042 = vunpack.c.l.s4 1983009808
        %v6043 = vunpack.c.0.s8 %v6042
        %v6044 = vperm.slane %v6040, %v6043
        %v6045 = vrot.slane %v5927, 4
        %v6046 = vsel %vm1062, %v6045, %v5925
        %v6048 = vunpack.c.l.s4 1983009808
        %v6049 = vunpack.c.0.s8 %v6048
        %v6050 = vperm.slane %v6046, %v6049
        %v6051 = vsel %vm1062, %v5930, %v5919
        %v6053 = vunpack.c.l.s4 1983009808
        %v6054 = vunpack.c.0.s8 %v6053
        %v6055 = vperm.slane %v6051, %v6054
        %v6056 = vrot.slane %v5931, 4
        %v6057 = vsel %vm1062, %v6056, %v5929
        %v6059 = vunpack.c.l.s4 1983009808
        %v6060 = vunpack.c.0.s8 %v6059
        %v6061 = vperm.slane %v6057, %v6060
        %v6062 = vrot.slane %v6050, 4
        %v6063 = vsel %vm1062, %v6062, %v6044
        %v6064 = vrot.slane %v6044, 4
        %v6065 = vsel %vm1062, %v6050, %v6064
        %v6067 = vunpack.c.l.s4 1934713408
        %v6068 = vunpack.c.0.s8 %v6067
        %v6069 = vperm.slane %v6063, %v6068
        %v6071 = vunpack.c.l.s4 1934713408
        %v6072 = vunpack.c.0.s8 %v6071
        %v6073 = vperm.slane %v6065, %v6072
        %v6074 = vrot.slane %v6061, 4
        %v6075 = vsel %vm1062, %v6074, %v6055
        %v6076 = vrot.slane %v6055, 4
        %v6077 = vsel %vm1062, %v6061, %v6076
        %v6079 = vunpack.c.l.s4 1934713408
        %v6080 = vunpack.c.0.s8 %v6079
        %v6081 = vperm.slane %v6075, %v6080
        %v6083 = vunpack.c.l.s4 1934713408
        %v6084 = vunpack.c.0.s8 %v6083
        %v6085 = vperm.slane %v6077, %v6084
        %v6086 = vrot.slane %v6081, 4
        %v6087 = vsel %vm1062, %v6086, %v6069
        %v6088 = vrot.slane %v6069, 4
        %v6089 = vsel %vm1062, %v6081, %v6088
        %v6090 = vrot.slane %v6085, 4
        %v6091 = vsel %vm1062, %v6090, %v6073
        %v6092 = vrot.slane %v6073, 4
        %v6093 = vsel %vm1062, %v6085, %v6092
        %v6094 = vpack.c.bf16 %v5979, %v5979
        %v6095 = vpack.c.bf16 %v6033, %v6033
        %v6096 = vpack.c.bf16 %v6087, %v6087
        %v6097 = vpack.c.bf16 %v5981, %v5981
        %v6098 = vpack.c.bf16 %v6035, %v6035
        %v6099 = vpack.c.bf16 %v6089, %v6089
        %v6100 = vpack.c.bf16 %v5983, %v5983
        %v6101 = vpack.c.bf16 %v6037, %v6037
        %v6102 = vpack.c.bf16 %v6091, %v6091
        %v6103 = vpack.c.bf16 %v5985, %v5985
        %v6104 = vpack.c.bf16 %v6039, %v6039
        %v6105 = vpack.c.bf16 %v6093, %v6093
        %6106 = vrot.lane.b32.xlu0 %v4574, 96
        %v6107 = vpop.permute.xlu0 %6106
        %6108 = vrot.lane.b32.xlu0 %v4576, 96
        %v6109 = vpop.permute.xlu0 %6108
        %6110 = vrot.lane.b32.xlu0 %v4579, 96
        %v6111 = vpop.permute.xlu0 %6110
        %6112 = vrot.lane.b32.xlu0 %v5738, 96
        %v6113 = vpop.permute.xlu0 %6112
        %6114 = vrot.lane.b32.xlu0 %v5740, 96
        %v6115 = vpop.permute.xlu0 %6114
        %6116 = vrot.lane.b32.xlu0 %v5742, 96
        %v6117 = vpop.permute.xlu0 %6116
        %6118 = vrot.lane.b32.xlu0 %v5747, 96
        %v6119 = vpop.permute.xlu0 %6118
        %6120 = vrot.lane.b32.xlu0 %v5749, 96
        %v6121 = vpop.permute.xlu0 %6120
        %6122 = vrot.lane.b32.xlu0 %v5751, 96
        %v6123 = vpop.permute.xlu0 %6122
        %6124 = vrot.lane.b32.xlu0 %v5756, 96
        %v6125 = vpop.permute.xlu0 %6124
        %6126 = vrot.lane.b32.xlu0 %v5758, 96
        %v6127 = vpop.permute.xlu0 %6126
        %6128 = vrot.lane.b32.xlu0 %v5760, 96
        %v6129 = vpop.permute.xlu0 %6128
        %v6142 = vrot.slane %v6119, 4
        %v6143 = vsel %vm1062, %v6142, %v6107
        %v6144 = vrot.slane %v6107, 4
        %v6145 = vsel %vm1062, %v6119, %v6144
        %v6147 = vunpack.c.l.s4 1983009808
        %v6148 = vunpack.c.0.s8 %v6147
        %v6149 = vperm.slane %v6143, %v6148
        %v6151 = vunpack.c.l.s4 1983009808
        %v6152 = vunpack.c.0.s8 %v6151
        %v6153 = vperm.slane %v6145, %v6152
        %v6154 = vrot.slane %v6125, 4
        %v6155 = vsel %vm1062, %v6154, %v6113
        %v6156 = vrot.slane %v6113, 4
        %v6157 = vsel %vm1062, %v6125, %v6156
        %v6159 = vunpack.c.l.s4 1983009808
        %v6160 = vunpack.c.0.s8 %v6159
        %v6161 = vperm.slane %v6155, %v6160
        %v6163 = vunpack.c.l.s4 1983009808
        %v6164 = vunpack.c.0.s8 %v6163
        %v6165 = vperm.slane %v6157, %v6164
        %v6166 = vrot.slane %v6161, 4
        %v6167 = vsel %vm1062, %v6166, %v6149
        %v6168 = vrot.slane %v6149, 4
        %v6169 = vsel %vm1062, %v6161, %v6168
        %v6171 = vunpack.c.l.s4 1934713408
        %v6172 = vunpack.c.0.s8 %v6171
        %v6173 = vperm.slane %v6167, %v6172
        %v6175 = vunpack.c.l.s4 1934713408
        %v6176 = vunpack.c.0.s8 %v6175
        %v6177 = vperm.slane %v6169, %v6176
        %v6178 = vrot.slane %v6165, 4
        %v6179 = vsel %vm1062, %v6178, %v6153
        %v6180 = vrot.slane %v6153, 4
        %v6181 = vsel %vm1062, %v6165, %v6180
        %v6183 = vunpack.c.l.s4 1934713408
        %v6184 = vunpack.c.0.s8 %v6183
        %v6185 = vperm.slane %v6179, %v6184
        %v6187 = vunpack.c.l.s4 1934713408
        %v6188 = vunpack.c.0.s8 %v6187
        %v6189 = vperm.slane %v6181, %v6188
        %v6190 = vrot.slane %v6173, 4
        %v6191 = vsel %vm1062, 0.0, %v6190
        %v6192 = vrot.slane %v6177, 4
        %v6193 = vsel %vm1062, 0.0, %v6192
        %v6194 = vrot.slane %v6185, 4
        %v6195 = vsel %vm1062, 0.0, %v6194
        %v6196 = vrot.slane %v6189, 4
        %v6197 = vsel %vm1062, 0.0, %v6196
        %v6198 = vrot.slane %v6121, 4
        %v6199 = vsel %vm1062, %v6198, %v6109
        %v6200 = vrot.slane %v6109, 4
        %v6201 = vsel %vm1062, %v6121, %v6200
        %v6203 = vunpack.c.l.s4 1983009808
        %v6204 = vunpack.c.0.s8 %v6203
        %v6205 = vperm.slane %v6199, %v6204
        %v6207 = vunpack.c.l.s4 1983009808
        %v6208 = vunpack.c.0.s8 %v6207
        %v6209 = vperm.slane %v6201, %v6208
        %v6210 = vrot.slane %v6127, 4
        %v6211 = vsel %vm1062, %v6210, %v6115
        %v6212 = vrot.slane %v6115, 4
        %v6213 = vsel %vm1062, %v6127, %v6212
        %v6215 = vunpack.c.l.s4 1983009808
        %v6216 = vunpack.c.0.s8 %v6215
        %v6217 = vperm.slane %v6211, %v6216
        %v6219 = vunpack.c.l.s4 1983009808
        %v6220 = vunpack.c.0.s8 %v6219
        %v6221 = vperm.slane %v6213, %v6220
        %v6222 = vrot.slane %v6217, 4
        %v6223 = vsel %vm1062, %v6222, %v6205
        %v6224 = vrot.slane %v6205, 4
        %v6225 = vsel %vm1062, %v6217, %v6224
        %v6227 = vunpack.c.l.s4 1934713408
        %v6228 = vunpack.c.0.s8 %v6227
        %v6229 = vperm.slane %v6223, %v6228
        %v6231 = vunpack.c.l.s4 1934713408
        %v6232 = vunpack.c.0.s8 %v6231
        %v6233 = vperm.slane %v6225, %v6232
        %v6234 = vrot.slane %v6221, 4
        %v6235 = vsel %vm1062, %v6234, %v6209
        %v6236 = vrot.slane %v6209, 4
        %v6237 = vsel %vm1062, %v6221, %v6236
        %v6239 = vunpack.c.l.s4 1934713408
        %v6240 = vunpack.c.0.s8 %v6239
        %v6241 = vperm.slane %v6235, %v6240
        %v6243 = vunpack.c.l.s4 1934713408
        %v6244 = vunpack.c.0.s8 %v6243
        %v6245 = vperm.slane %v6237, %v6244
        %v6246 = vrot.slane %v6229, 4
        %v6247 = vsel %vm1062, 0.0, %v6246
        %v6248 = vrot.slane %v6233, 4
        %v6249 = vsel %vm1062, 0.0, %v6248
        %v6250 = vrot.slane %v6241, 4
        %v6251 = vsel %vm1062, 0.0, %v6250
        %v6252 = vrot.slane %v6245, 4
        %v6253 = vsel %vm1062, 0.0, %v6252
        %v6254 = vrot.slane %v6123, 4
        %v6255 = vsel %vm1062, %v6254, %v6111
        %v6256 = vrot.slane %v6111, 4
        %v6257 = vsel %vm1062, %v6123, %v6256
        %v6259 = vunpack.c.l.s4 1983009808
        %v6260 = vunpack.c.0.s8 %v6259
        %v6261 = vperm.slane %v6255, %v6260
        %v6263 = vunpack.c.l.s4 1983009808
        %v6264 = vunpack.c.0.s8 %v6263
        %v6265 = vperm.slane %v6257, %v6264
        %v6266 = vrot.slane %v6129, 4
        %v6267 = vsel %vm1062, %v6266, %v6117
        %v6268 = vrot.slane %v6117, 4
        %v6269 = vsel %vm1062, %v6129, %v6268
        %v6271 = vunpack.c.l.s4 1983009808
        %v6272 = vunpack.c.0.s8 %v6271
        %v6273 = vperm.slane %v6267, %v6272
        %v6275 = vunpack.c.l.s4 1983009808
        %v6276 = vunpack.c.0.s8 %v6275
        %v6277 = vperm.slane %v6269, %v6276
        %v6278 = vrot.slane %v6273, 4
        %v6279 = vsel %vm1062, %v6278, %v6261
        %v6280 = vrot.slane %v6261, 4
        %v6281 = vsel %vm1062, %v6273, %v6280
        %v6283 = vunpack.c.l.s4 1934713408
        %v6284 = vunpack.c.0.s8 %v6283
        %v6285 = vperm.slane %v6279, %v6284
        %v6287 = vunpack.c.l.s4 1934713408
        %v6288 = vunpack.c.0.s8 %v6287
        %v6289 = vperm.slane %v6281, %v6288
        %v6290 = vrot.slane %v6277, 4
        %v6291 = vsel %vm1062, %v6290, %v6265
        %v6292 = vrot.slane %v6265, 4
        %v6293 = vsel %vm1062, %v6277, %v6292
        %v6295 = vunpack.c.l.s4 1934713408
        %v6296 = vunpack.c.0.s8 %v6295
        %v6297 = vperm.slane %v6291, %v6296
        %v6299 = vunpack.c.l.s4 1934713408
        %v6300 = vunpack.c.0.s8 %v6299
        %v6301 = vperm.slane %v6293, %v6300
        %v6302 = vrot.slane %v6285, 4
        %v6303 = vsel %vm1062, 0.0, %v6302
        %v6304 = vrot.slane %v6289, 4
        %v6305 = vsel %vm1062, 0.0, %v6304
        %v6306 = vrot.slane %v6297, 4
        %v6307 = vsel %vm1062, 0.0, %v6306
        %v6308 = vrot.slane %v6301, 4
        %v6309 = vsel %vm1062, 0.0, %v6308
        %v6310 = vsel %vm1062, %v6192, %v6173
        %v6312 = vunpack.c.l.s4 1983009808
        %v6313 = vunpack.c.0.s8 %v6312
        %v6314 = vperm.slane %v6310, %v6313
        %v6315 = vrot.slane %v6193, 4
        %v6316 = vsel %vm1062, %v6315, %v6191
        %v6318 = vunpack.c.l.s4 1983009808
        %v6319 = vunpack.c.0.s8 %v6318
        %v6320 = vperm.slane %v6316, %v6319
        %v6321 = vsel %vm1062, %v6196, %v6185
        %v6323 = vunpack.c.l.s4 1983009808
        %v6324 = vunpack.c.0.s8 %v6323
        %v6325 = vperm.slane %v6321, %v6324
        %v6326 = vrot.slane %v6197, 4
        %v6327 = vsel %vm1062, %v6326, %v6195
        %v6329 = vunpack.c.l.s4 1983009808
        %v6330 = vunpack.c.0.s8 %v6329
        %v6331 = vperm.slane %v6327, %v6330
        %v6332 = vrot.slane %v6320, 4
        %v6333 = vsel %vm1062, %v6332, %v6314
        %v6334 = vrot.slane %v6314, 4
        %v6335 = vsel %vm1062, %v6320, %v6334
        %v6337 = vunpack.c.l.s4 1934713408
        %v6338 = vunpack.c.0.s8 %v6337
        %v6339 = vperm.slane %v6333, %v6338
        %v6341 = vunpack.c.l.s4 1934713408
        %v6342 = vunpack.c.0.s8 %v6341
        %v6343 = vperm.slane %v6335, %v6342
        %v6344 = vrot.slane %v6331, 4
        %v6345 = vsel %vm1062, %v6344, %v6325
        %v6346 = vrot.slane %v6325, 4
        %v6347 = vsel %vm1062, %v6331, %v6346
        %v6349 = vunpack.c.l.s4 1934713408
        %v6350 = vunpack.c.0.s8 %v6349
        %v6351 = vperm.slane %v6345, %v6350
        %v6353 = vunpack.c.l.s4 1934713408
        %v6354 = vunpack.c.0.s8 %v6353
        %v6355 = vperm.slane %v6347, %v6354
        %v6356 = vrot.slane %v6351, 4
        %v6357 = vsel %vm1062, %v6356, %v6339
        %v6358 = vrot.slane %v6339, 4
        %v6359 = vsel %vm1062, %v6351, %v6358
        %v6360 = vrot.slane %v6355, 4
        %v6361 = vsel %vm1062, %v6360, %v6343
        %v6362 = vrot.slane %v6343, 4
        %v6363 = vsel %vm1062, %v6355, %v6362
        %v6364 = vsel %vm1062, %v6248, %v6229
        %v6366 = vunpack.c.l.s4 1983009808
        %v6367 = vunpack.c.0.s8 %v6366
        %v6368 = vperm.slane %v6364, %v6367
        %v6369 = vrot.slane %v6249, 4
        %v6370 = vsel %vm1062, %v6369, %v6247
        %v6372 = vunpack.c.l.s4 1983009808
        %v6373 = vunpack.c.0.s8 %v6372
        %v6374 = vperm.slane %v6370, %v6373
        %v6375 = vsel %vm1062, %v6252, %v6241
        %v6377 = vunpack.c.l.s4 1983009808
        %v6378 = vunpack.c.0.s8 %v6377
        %v6379 = vperm.slane %v6375, %v6378
        %v6380 = vrot.slane %v6253, 4
        %v6381 = vsel %vm1062, %v6380, %v6251
        %v6383 = vunpack.c.l.s4 1983009808
        %v6384 = vunpack.c.0.s8 %v6383
        %v6385 = vperm.slane %v6381, %v6384
        %v6386 = vrot.slane %v6374, 4
        %v6387 = vsel %vm1062, %v6386, %v6368
        %v6388 = vrot.slane %v6368, 4
        %v6389 = vsel %vm1062, %v6374, %v6388
        %v6391 = vunpack.c.l.s4 1934713408
        %v6392 = vunpack.c.0.s8 %v6391
        %v6393 = vperm.slane %v6387, %v6392
        %v6395 = vunpack.c.l.s4 1934713408
        %v6396 = vunpack.c.0.s8 %v6395
        %v6397 = vperm.slane %v6389, %v6396
        %v6398 = vrot.slane %v6385, 4
        %v6399 = vsel %vm1062, %v6398, %v6379
        %v6400 = vrot.slane %v6379, 4
        %v6401 = vsel %vm1062, %v6385, %v6400
        %v6403 = vunpack.c.l.s4 1934713408
        %v6404 = vunpack.c.0.s8 %v6403
        %v6405 = vperm.slane %v6399, %v6404
        %v6407 = vunpack.c.l.s4 1934713408
        %v6408 = vunpack.c.0.s8 %v6407
        %v6409 = vperm.slane %v6401, %v6408
        %v6410 = vrot.slane %v6405, 4
        %v6411 = vsel %vm1062, %v6410, %v6393
        %v6412 = vrot.slane %v6393, 4
        %v6413 = vsel %vm1062, %v6405, %v6412
        %v6414 = vrot.slane %v6409, 4
        %v6415 = vsel %vm1062, %v6414, %v6397
        %v6416 = vrot.slane %v6397, 4
        %v6417 = vsel %vm1062, %v6409, %v6416
        %v6418 = vsel %vm1062, %v6304, %v6285
        %v6420 = vunpack.c.l.s4 1983009808
        %v6421 = vunpack.c.0.s8 %v6420
        %v6422 = vperm.slane %v6418, %v6421
        %v6423 = vrot.slane %v6305, 4
        %v6424 = vsel %vm1062, %v6423, %v6303
        %v6426 = vunpack.c.l.s4 1983009808
        %v6427 = vunpack.c.0.s8 %v6426
        %v6428 = vperm.slane %v6424, %v6427
        %v6429 = vsel %vm1062, %v6308, %v6297
        %v6431 = vunpack.c.l.s4 1983009808
        %v6432 = vunpack.c.0.s8 %v6431
        %v6433 = vperm.slane %v6429, %v6432
        %v6434 = vrot.slane %v6309, 4
        %v6435 = vsel %vm1062, %v6434, %v6307
        %v6437 = vunpack.c.l.s4 1983009808
        %v6438 = vunpack.c.0.s8 %v6437
        %v6439 = vperm.slane %v6435, %v6438
        %v6440 = vrot.slane %v6428, 4
        %v6441 = vsel %vm1062, %v6440, %v6422
        %v6442 = vrot.slane %v6422, 4
        %v6443 = vsel %vm1062, %v6428, %v6442
        %v6445 = vunpack.c.l.s4 1934713408
        %v6446 = vunpack.c.0.s8 %v6445
        %v6447 = vperm.slane %v6441, %v6446
        %v6449 = vunpack.c.l.s4 1934713408
        %v6450 = vunpack.c.0.s8 %v6449
        %v6451 = vperm.slane %v6443, %v6450
        %v6452 = vrot.slane %v6439, 4
        %v6453 = vsel %vm1062, %v6452, %v6433
        %v6454 = vrot.slane %v6433, 4
        %v6455 = vsel %vm1062, %v6439, %v6454
        %v6457 = vunpack.c.l.s4 1934713408
        %v6458 = vunpack.c.0.s8 %v6457
        %v6459 = vperm.slane %v6453, %v6458
        %v6461 = vunpack.c.l.s4 1934713408
        %v6462 = vunpack.c.0.s8 %v6461
        %v6463 = vperm.slane %v6455, %v6462
        %v6464 = vrot.slane %v6459, 4
        %v6465 = vsel %vm1062, %v6464, %v6447
        %v6466 = vrot.slane %v6447, 4
        %v6467 = vsel %vm1062, %v6459, %v6466
        %v6468 = vrot.slane %v6463, 4
        %v6469 = vsel %vm1062, %v6468, %v6451
        %v6470 = vrot.slane %v6451, 4
        %v6471 = vsel %vm1062, %v6463, %v6470
        %v6472 = vpack.c.bf16 %v6357, %v6357
        %v6473 = vpack.c.bf16 %v6411, %v6411
        %v6474 = vpack.c.bf16 %v6465, %v6465
        %v6475 = vpack.c.bf16 %v6359, %v6359
        %v6476 = vpack.c.bf16 %v6413, %v6413
        %v6477 = vpack.c.bf16 %v6467, %v6467
        %v6478 = vpack.c.bf16 %v6361, %v6361
        %v6479 = vpack.c.bf16 %v6415, %v6415
        %v6480 = vpack.c.bf16 %v6469, %v6469
        %v6481 = vpack.c.bf16 %v6363, %v6363
        %v6482 = vpack.c.bf16 %v6417, %v6417
        %v6483 = vpack.c.bf16 %v6471, %v6471
        %6484 = vrot.lane.b32.xlu0 %v4582, 32
        %v6485 = vpop.permute.xlu0 %6484
        %6486 = vrot.lane.b32.xlu0 %v4589, 32
        %v6487 = vpop.permute.xlu0 %6486
        %6488 = vrot.lane.b32.xlu0 %v4598, 32
        %v6489 = vpop.permute.xlu0 %6488
        %6490 = vrot.lane.b32.xlu0 %v4607, 32
        %v6491 = vpop.permute.xlu0 %6490
        %v6496 = vrot.slane %v6489, 4
        %v6497 = vsel %vm1062, %v6496, %v6485
        %v6499 = vunpack.c.l.s4 1983009808
        %v6500 = vunpack.c.0.s8 %v6499
        %v6501 = vperm.slane %v6497, %v6500
        %v6502 = vrot.slane %v6491, 4
        %v6503 = vsel %vm1062, %v6502, %v6487
        %v6505 = vunpack.c.l.s4 1983009808
        %v6506 = vunpack.c.0.s8 %v6505
        %v6507 = vperm.slane %v6503, %v6506
        %v6508 = vrot.slane %v6507, 4
        %v6509 = vsel %vm1062, %v6508, %v6501
        %v6511 = vunpack.c.l.s4 1934713408
        %v6512 = vunpack.c.0.s8 %v6511
        %v6513 = vperm.slane %v6509, %v6512
        %v6515 = vunpack.c.l.s4 1983009808
        %v6516 = vunpack.c.0.s8 %v6515
        %v6517 = vperm.slane %v6513, %v6516
        %v6518 = vrot.slane %v6517, 4
        %v6519 = vsel %vm1062, 0.0, %v6518
        %v6521 = vunpack.c.l.s4 1934713408
        %v6522 = vunpack.c.0.s8 %v6521
        %v6523 = vperm.slane %v6517, %v6522
        %v6525 = vunpack.c.l.s4 1934713408
        %v6526 = vunpack.c.0.s8 %v6525
        %v6527 = vperm.slane %v6519, %v6526
        %v6528 = vrot.slane %v6523, 4
        %v6529 = vsel %vm1062, 0.0, %v6528
        %v6530 = vrot.slane %v6527, 4
        %v6531 = vsel %vm1062, 0.0, %v6530
        %v6532 = vpack.c.bf16 %v6523, %v6523
        %v6533 = vpack.c.bf16 %v6529, %v6529
        %v6534 = vpack.c.bf16 %v6527, %v6527
        %v6535 = vpack.c.bf16 %v6531, %v6531
        %v6539 = vunpack.c.l.b16 %v4945
        %v6540 = vunpack.c.l.b16 %v4946
        %v6541 = vunpack.c.l.b16 %v4947
        %v6542 = vpack.c.b16 %v6540, %v6539
        %v6543 = vpack.c.b16 %v6541, %v6541
        %v6547 = vunpack.c.l.b16 %v5344
        %v6548 = vunpack.c.l.b16 %v5345
        %v6549 = vunpack.c.l.b16 %v5346
        %v6550 = vpack.c.b16 %v6548, %v6547
        %v6551 = vpack.c.b16 %v6549, %v6549
        %v6553 = vsel %vm2999, %v6542, 0
        %v6556 = vsel %vm2999, %v6543, 0
        %v6559 = vsel %vm2999, %v6550, 0
        %v6562 = vsel %vm2999, %v6551, 0
        %6564 = vmatpush.bf16.xpose.msra.mxu0 0
        %6565 = vmatpush.bf16.xpose.msra.mxu0 0
        %6566 = vmatpush.bf16.xpose.msra.mxu0 0
        %6567 = vmatpush.bf16.xpose.msra.mxu0 0
        %6568 = vmatpush.bf16.xpose.msra.mxu0 0
        %6569 = vmatpush.bf16.xpose.msra.mxu0 0
        %6570 = vmatpush.bf16.xpose.msra.mxu0 %v6562
        %6571 = vmatpush.bf16.xpose.msra.mxu0 %v6559
        %6572 = vmatmul.bf16.gmra.mxu0 %v6553
        %v6573 = vpop.f32.mrf.mxu0
        %v6574 = vadd.f32 %v859, %v6573
        %v6575 = vpop.f32.mrf.mxu0
        %v6576 = vadd.f32 %v860, %v6575
        %6577 = vmatmul.bf16.gmra.mxu0 %v6556
        %v6578 = vpop.f32.mrf.mxu0
        %v6579 = vadd.f32 %v861, %v6578
        %v6580 = vpop.f32.mrf.mxu0
        %6581 = vdwg.mxu0
        %v6585 = vunpack.c.l.b16 %v4948
        %v6586 = vunpack.c.l.b16 %v4949
        %v6587 = vunpack.c.l.b16 %v4950
        %v6588 = vpack.c.b16 %v6586, %v6585
        %v6589 = vpack.c.b16 %v6587, %v6587
        %v6593 = vunpack.c.l.b16 %v5347
        %v6594 = vunpack.c.l.b16 %v5348
        %v6595 = vunpack.c.l.b16 %v5349
        %v6596 = vpack.c.b16 %v6594, %v6593
        %v6597 = vpack.c.b16 %v6595, %v6595
        %v6599 = vsel %vm2999, %v6588, 0
        %v6602 = vsel %vm2999, %v6589, 0
        %v6605 = vsel %vm2999, %v6596, 0
        %v6608 = vsel %vm2999, %v6597, 0
        %6610 = vmatpush.bf16.xpose.msra.mxu0 0
        %6611 = vmatpush.bf16.xpose.msra.mxu0 0
        %6612 = vmatpush.bf16.xpose.msra.mxu0 0
        %6613 = vmatpush.bf16.xpose.msra.mxu0 0
        %6614 = vmatpush.bf16.xpose.msra.mxu0 0
        %6615 = vmatpush.bf16.xpose.msra.mxu0 0
        %6616 = vmatpush.bf16.xpose.msra.mxu0 %v6608
        %6617 = vmatpush.bf16.xpose.msra.mxu0 %v6605
        %6618 = vmatmul.bf16.gmra.mxu0 %v6599
        %v6619 = vpop.f32.mrf.mxu0
        %v6620 = vadd.f32 %v859, %v6619
        %v6621 = vpop.f32.mrf.mxu0
        %v6622 = vadd.f32 %v860, %v6621
        %6623 = vmatmul.bf16.gmra.mxu0 %v6602
        %v6624 = vpop.f32.mrf.mxu0
        %v6625 = vadd.f32 %v861, %v6624
        %v6626 = vpop.f32.mrf.mxu0
        %6627 = vdwg.mxu0
        %v6631 = vunpack.c.l.b16 %v4951
        %v6632 = vunpack.c.l.b16 %v4952
        %v6633 = vunpack.c.l.b16 %v4953
        %v6634 = vpack.c.b16 %v6632, %v6631
        %v6635 = vpack.c.b16 %v6633, %v6633
        %v6639 = vunpack.c.l.b16 %v5350
        %v6640 = vunpack.c.l.b16 %v5351
        %v6641 = vunpack.c.l.b16 %v5352
        %v6642 = vpack.c.b16 %v6640, %v6639
        %v6643 = vpack.c.b16 %v6641, %v6641
        %v6645 = vsel %vm2999, %v6634, 0
        %v6648 = vsel %vm2999, %v6635, 0
        %v6651 = vsel %vm2999, %v6642, 0
        %v6654 = vsel %vm2999, %v6643, 0
        %6656 = vmatpush.bf16.xpose.msra.mxu0 0
        %6657 = vmatpush.bf16.xpose.msra.mxu0 0
        %6658 = vmatpush.bf16.xpose.msra.mxu0 0
        %6659 = vmatpush.bf16.xpose.msra.mxu0 0
        %6660 = vmatpush.bf16.xpose.msra.mxu0 0
        %6661 = vmatpush.bf16.xpose.msra.mxu0 0
        %6662 = vmatpush.bf16.xpose.msra.mxu0 %v6654
        %6663 = vmatpush.bf16.xpose.msra.mxu0 %v6651
        %6664 = vmatmul.bf16.gmra.mxu0 %v6645
        %v6665 = vpop.f32.mrf.mxu0
        %v6666 = vadd.f32 %v859, %v6665
        %v6667 = vpop.f32.mrf.mxu0
        %v6668 = vadd.f32 %v860, %v6667
        %6669 = vmatmul.bf16.gmra.mxu0 %v6648
        %v6670 = vpop.f32.mrf.mxu0
        %v6671 = vadd.f32 %v861, %v6670
        %v6672 = vpop.f32.mrf.mxu0
        %6673 = vdwg.mxu0
        %v6677 = vunpack.c.l.b16 %v4954
        %v6678 = vunpack.c.l.b16 %v4955
        %v6679 = vunpack.c.l.b16 %v4956
        %v6680 = vpack.c.b16 %v6678, %v6677
        %v6681 = vpack.c.b16 %v6679, %v6679
        %v6685 = vunpack.c.l.b16 %v5353
        %v6686 = vunpack.c.l.b16 %v5354
        %v6687 = vunpack.c.l.b16 %v5355
        %v6688 = vpack.c.b16 %v6686, %v6685
        %v6689 = vpack.c.b16 %v6687, %v6687
        %v6691 = vsel %vm2999, %v6680, 0
        %v6694 = vsel %vm2999, %v6681, 0
        %v6697 = vsel %vm2999, %v6688, 0
        %v6700 = vsel %vm2999, %v6689, 0
        %6702 = vmatpush.bf16.xpose.msra.mxu0 0
        %6703 = vmatpush.bf16.xpose.msra.mxu0 0
        %6704 = vmatpush.bf16.xpose.msra.mxu0 0
        %6705 = vmatpush.bf16.xpose.msra.mxu0 0
        %6706 = vmatpush.bf16.xpose.msra.mxu0 0
        %6707 = vmatpush.bf16.xpose.msra.mxu0 0
        %6708 = vmatpush.bf16.xpose.msra.mxu0 %v6700
        %6709 = vmatpush.bf16.xpose.msra.mxu0 %v6697
        %6710 = vmatmul.bf16.gmra.mxu0 %v6691
        %v6711 = vpop.f32.mrf.mxu0
        %v6712 = vadd.f32 %v859, %v6711
        %v6713 = vpop.f32.mrf.mxu0
        %v6714 = vadd.f32 %v860, %v6713
        %6715 = vmatmul.bf16.gmra.mxu0 %v6694
        %v6716 = vpop.f32.mrf.mxu0
        %v6717 = vadd.f32 %v861, %v6716
        %v6718 = vpop.f32.mrf.mxu0
        %6719 = vdwg.mxu0
        %v6720 = vsel %vm3168, %v6574, -inf
        %6721 = vmax.xlane.f32.xlu0 %v6720
        %v6722 = vpop.xlane.xlu0 %6721
        %v6723 = vsel %vm3168, %v6576, -inf
        %6724 = vmax.xlane.f32.xlu0 %v6723
        %v6725 = vpop.xlane.xlu0 %6724
        %v6726 = vsel %vm3168, %v6579, -inf
        %6727 = vmax.xlane.f32.xlu0 %v6726
        %v6728 = vpop.xlane.xlu0 %6727
        %v6729 = vsel %vm3168, %v6620, -inf
        %6730 = vmax.xlane.f32.xlu0 %v6729
        %v6731 = vpop.xlane.xlu0 %6730
        %v6732 = vsel %vm3168, %v6622, -inf
        %6733 = vmax.xlane.f32.xlu0 %v6732
        %v6734 = vpop.xlane.xlu0 %6733
        %v6735 = vsel %vm3168, %v6625, -inf
        %6736 = vmax.xlane.f32.xlu0 %v6735
        %v6737 = vpop.xlane.xlu0 %6736
        %v6738 = vsel %vm3168, %v6666, -inf
        %6739 = vmax.xlane.f32.xlu0 %v6738
        %v6740 = vpop.xlane.xlu0 %6739
        %v6741 = vsel %vm3168, %v6668, -inf
        %6742 = vmax.xlane.f32.xlu0 %v6741
        %v6743 = vpop.xlane.xlu0 %6742
        %v6744 = vsel %vm3168, %v6671, -inf
        %6745 = vmax.xlane.f32.xlu0 %v6744
        %v6746 = vpop.xlane.xlu0 %6745
        %v6747 = vsel %vm3168, %v6712, -inf
        %6748 = vmax.xlane.f32.xlu0 %v6747
        %v6749 = vpop.xlane.xlu0 %6748
        %v6750 = vsel %vm3168, %v6714, -inf
        %6751 = vmax.xlane.f32.xlu0 %v6750
        %v6752 = vpop.xlane.xlu0 %6751
        %v6753 = vsel %vm3168, %v6717, -inf
        %6754 = vmax.xlane.f32.xlu0 %v6753
        %v6755 = vpop.xlane.xlu0 %6754
        %v6756 = vsub.f32 %v6574, %v6722
        %v6757 = vsub.f32 %v6576, %v6725
        %v6758 = vsub.f32 %v6579, %v6728
        %v6759 = vsub.f32 %v6620, %v6731
        %v6760 = vsub.f32 %v6622, %v6734
        %v6761 = vsub.f32 %v6625, %v6737
        %v6762 = vsub.f32 %v6666, %v6740
        %v6763 = vsub.f32 %v6668, %v6743
        %v6764 = vsub.f32 %v6671, %v6746
        %v6765 = vsub.f32 %v6712, %v6749
        %v6766 = vsub.f32 %v6714, %v6752
        %v6767 = vsub.f32 %v6717, %v6755
        %v6768 = vmul.f32 %v6756, 1.442695
        %v6769 = vpow.pop %v6768
        %v6770 = vmul.f32 %v6757, 1.442695
        %v6771 = vpow.pop %v6770
        %v6772 = vmul.f32 %v6758, 1.442695
        %v6773 = vpow.pop %v6772
        %v6774 = vmul.f32 %v6759, 1.442695
        %v6775 = vpow.pop %v6774
        %v6776 = vmul.f32 %v6760, 1.442695
        %v6777 = vpow.pop %v6776
        %v6778 = vmul.f32 %v6761, 1.442695
        %v6779 = vpow.pop %v6778
        %v6780 = vmul.f32 %v6762, 1.442695
        %v6781 = vpow.pop %v6780
        %v6782 = vmul.f32 %v6763, 1.442695
        %v6783 = vpow.pop %v6782
        %v6784 = vmul.f32 %v6764, 1.442695
        %v6785 = vpow.pop %v6784
        %v6786 = vmul.f32 %v6765, 1.442695
        %v6787 = vpow.pop %v6786
        %v6788 = vmul.f32 %v6766, 1.442695
        %v6789 = vpow.pop %v6788
        %v6790 = vmul.f32 %v6767, 1.442695
        %v6791 = vpow.pop %v6790
        %v6792 = vsel %vm3168, %v6769, 0.0
        %6793 = vadd.xlane.f32.xlu0 %v6792
        %v6794 = vpop.xlane.xlu0 %6793
        %v6795 = vsel %vm3168, %v6771, 0.0
        %6796 = vadd.xlane.f32.xlu0 %v6795
        %v6797 = vpop.xlane.xlu0 %6796
        %v6798 = vsel %vm3168, %v6773, 0.0
        %6799 = vadd.xlane.f32.xlu0 %v6798
        %v6800 = vpop.xlane.xlu0 %6799
        %v6801 = vsel %vm3168, %v6775, 0.0
        %6802 = vadd.xlane.f32.xlu0 %v6801
        %v6803 = vpop.xlane.xlu0 %6802
        %v6804 = vsel %vm3168, %v6777, 0.0
        %6805 = vadd.xlane.f32.xlu0 %v6804
        %v6806 = vpop.xlane.xlu0 %6805
        %v6807 = vsel %vm3168, %v6779, 0.0
        %6808 = vadd.xlane.f32.xlu0 %v6807
        %v6809 = vpop.xlane.xlu0 %6808
        %v6810 = vsel %vm3168, %v6781, 0.0
        %6811 = vadd.xlane.f32.xlu0 %v6810
        %v6812 = vpop.xlane.xlu0 %6811
        %v6813 = vsel %vm3168, %v6783, 0.0
        %6814 = vadd.xlane.f32.xlu0 %v6813
        %v6815 = vpop.xlane.xlu0 %6814
        %v6816 = vsel %vm3168, %v6785, 0.0
        %6817 = vadd.xlane.f32.xlu0 %v6816
        %v6818 = vpop.xlane.xlu0 %6817
        %v6819 = vsel %vm3168, %v6787, 0.0
        %6820 = vadd.xlane.f32.xlu0 %v6819
        %v6821 = vpop.xlane.xlu0 %6820
        %v6822 = vsel %vm3168, %v6789, 0.0
        %6823 = vadd.xlane.f32.xlu0 %v6822
        %v6824 = vpop.xlane.xlu0 %6823
        %v6825 = vsel %vm3168, %v6791, 0.0
        %6826 = vadd.xlane.f32.xlu0 %v6825
        %v6827 = vpop.xlane.xlu0 %6826
        %v6828 = vrcp.pop %v6794
        %v6829 = vrcp.pop %v6797
        %v6830 = vrcp.pop %v6800
        %v6831 = vrcp.pop %v6803
        %v6832 = vrcp.pop %v6806
        %v6833 = vrcp.pop %v6809
        %v6834 = vrcp.pop %v6812
        %v6835 = vrcp.pop %v6815
        %v6836 = vrcp.pop %v6818
        %v6837 = vrcp.pop %v6821
        %v6838 = vrcp.pop %v6824
        %v6839 = vrcp.pop %v6827
        %v6840 = vmul.f32 %v6769, %v6828
        %v6841 = vmul.f32 %v6771, %v6829
        %v6842 = vmul.f32 %v6773, %v6830
        %v6843 = vmul.f32 %v6775, %v6831
        %v6844 = vmul.f32 %v6777, %v6832
        %v6845 = vmul.f32 %v6779, %v6833
        %v6846 = vmul.f32 %v6781, %v6834
        %v6847 = vmul.f32 %v6783, %v6835
        %v6848 = vmul.f32 %v6785, %v6836
        %v6849 = vmul.f32 %v6787, %v6837
        %v6850 = vmul.f32 %v6789, %v6838
        %v6851 = vmul.f32 %v6791, %v6839
        %v6852 = vpack.c.bf16 %v6840, %v6840
        %v6853 = vpack.c.bf16 %v6841, %v6841
        %v6854 = vpack.c.bf16 %v6842, %v6842
        %v6855 = vpack.c.bf16 %v6843, %v6843
        %v6856 = vpack.c.bf16 %v6844, %v6844
        %v6857 = vpack.c.bf16 %v6845, %v6845
        %v6858 = vpack.c.bf16 %v6846, %v6846
        %v6859 = vpack.c.bf16 %v6847, %v6847
        %v6860 = vpack.c.bf16 %v6848, %v6848
        %v6861 = vpack.c.bf16 %v6849, %v6849
        %v6862 = vpack.c.bf16 %v6850, %v6850
        %v6863 = vpack.c.bf16 %v6851, %v6851
        %v6867 = vunpack.c.l.b16 %v6852
        %v6868 = vunpack.c.l.b16 %v6853
        %v6869 = vunpack.c.l.b16 %v6854
        %v6870 = vpack.c.b16 %v6868, %v6867
        %v6871 = vpack.c.b16 %v6869, %v6869
        %v6875 = vunpack.c.l.b16 %v5722
        %v6876 = vunpack.c.l.b16 %v5723
        %v6877 = vunpack.c.l.b16 %v5724
        %v6878 = vpack.c.b16 %v6876, %v6875
        %v6879 = vpack.c.b16 %v6877, %v6877
        %v6882 = vsel %vm3168, %v6870, 0
        %v6885 = vsel %vm3168, %v6871, 0
        %v6888 = vsel %vm3336, %v6879, 0
        %6890 = vmatpush.bf16.msra.mxu0 0
        %6891 = vmatpush.bf16.msra.mxu0 0
        %6892 = vmatpush.bf16.msra.mxu0 0
        %6893 = vmatpush.bf16.msra.mxu0 0
        %6894 = vmatpush.bf16.msra.mxu0 0
        %6895 = vmatpush.bf16.msra.mxu0 0
        %6896 = vmatpush.bf16.msra.mxu0 %v6888
        %6897 = vmatpush.bf16.msra.mxu0 %v6878
        %6898 = vmatmul.bf16.gmra.mxu0 %v6882
        %v6899 = vpop.f32.mrf.mxu0
        %v6900 = vadd.f32 0.0, %v6899
        %v6901 = vpop.f32.mrf.mxu0
        %v6902 = vadd.f32 0.0, %v6901
        %6903 = vmatmul.bf16.gmra.mxu0 %v6885
        %v6904 = vpop.f32.mrf.mxu0
        %v6905 = vadd.f32 0.0, %v6904
        %v6906 = vpop.f32.mrf.mxu0
        %6907 = vdwg.mxu0
        %v6911 = vunpack.c.l.b16 %v6855
        %v6912 = vunpack.c.l.b16 %v6856
        %v6913 = vunpack.c.l.b16 %v6857
        %v6914 = vpack.c.b16 %v6912, %v6911
        %v6915 = vpack.c.b16 %v6913, %v6913
        %v6919 = vunpack.c.l.b16 %v5725
        %v6920 = vunpack.c.l.b16 %v5726
        %v6921 = vunpack.c.l.b16 %v5727
        %v6922 = vpack.c.b16 %v6920, %v6919
        %v6923 = vpack.c.b16 %v6921, %v6921
        %v6926 = vsel %vm3168, %v6914, 0
        %v6929 = vsel %vm3168, %v6915, 0
        %v6932 = vsel %vm3336, %v6923, 0
        %6934 = vmatpush.bf16.msra.mxu0 0
        %6935 = vmatpush.bf16.msra.mxu0 0
        %6936 = vmatpush.bf16.msra.mxu0 0
        %6937 = vmatpush.bf16.msra.mxu0 0
        %6938 = vmatpush.bf16.msra.mxu0 0
        %6939 = vmatpush.bf16.msra.mxu0 0
        %6940 = vmatpush.bf16.msra.mxu0 %v6932
        %6941 = vmatpush.bf16.msra.mxu0 %v6922
        %6942 = vmatmul.bf16.gmra.mxu0 %v6926
        %v6943 = vpop.f32.mrf.mxu0
        %v6944 = vadd.f32 0.0, %v6943
        %v6945 = vpop.f32.mrf.mxu0
        %v6946 = vadd.f32 0.0, %v6945
        %6947 = vmatmul.bf16.gmra.mxu0 %v6929
        %v6948 = vpop.f32.mrf.mxu0
        %v6949 = vadd.f32 0.0, %v6948
        %v6950 = vpop.f32.mrf.mxu0
        %6951 = vdwg.mxu0
        %v6955 = vunpack.c.l.b16 %v6858
        %v6956 = vunpack.c.l.b16 %v6859
        %v6957 = vunpack.c.l.b16 %v6860
        %v6958 = vpack.c.b16 %v6956, %v6955
        %v6959 = vpack.c.b16 %v6957, %v6957
        %v6963 = vunpack.c.l.b16 %v5728
        %v6964 = vunpack.c.l.b16 %v5729
        %v6965 = vunpack.c.l.b16 %v5730
        %v6966 = vpack.c.b16 %v6964, %v6963
        %v6967 = vpack.c.b16 %v6965, %v6965
        %v6970 = vsel %vm3168, %v6958, 0
        %v6973 = vsel %vm3168, %v6959, 0
        %v6976 = vsel %vm3336, %v6967, 0
        %6978 = vmatpush.bf16.msra.mxu0 0
        %6979 = vmatpush.bf16.msra.mxu0 0
        %6980 = vmatpush.bf16.msra.mxu0 0
        %6981 = vmatpush.bf16.msra.mxu0 0
        %6982 = vmatpush.bf16.msra.mxu0 0
        %6983 = vmatpush.bf16.msra.mxu0 0
        %6984 = vmatpush.bf16.msra.mxu0 %v6976
        %6985 = vmatpush.bf16.msra.mxu0 %v6966
        %6986 = vmatmul.bf16.gmra.mxu0 %v6970
        %v6987 = vpop.f32.mrf.mxu0
        %v6988 = vadd.f32 0.0, %v6987
        %v6989 = vpop.f32.mrf.mxu0
        %v6990 = vadd.f32 0.0, %v6989
        %6991 = vmatmul.bf16.gmra.mxu0 %v6973
        %v6992 = vpop.f32.mrf.mxu0
        %v6993 = vadd.f32 0.0, %v6992
        %v6994 = vpop.f32.mrf.mxu0
        %6995 = vdwg.mxu0
        %v6999 = vunpack.c.l.b16 %v6861
        %v7000 = vunpack.c.l.b16 %v6862
        %v7001 = vunpack.c.l.b16 %v6863
        %v7002 = vpack.c.b16 %v7000, %v6999
        %v7003 = vpack.c.b16 %v7001, %v7001
        %v7007 = vunpack.c.l.b16 %v5731
        %v7008 = vunpack.c.l.b16 %v5732
        %v7009 = vunpack.c.l.b16 %v5733
        %v7010 = vpack.c.b16 %v7008, %v7007
        %v7011 = vpack.c.b16 %v7009, %v7009
        %v7014 = vsel %vm3168, %v7002, 0
        %v7017 = vsel %vm3168, %v7003, 0
        %v7020 = vsel %vm3336, %v7011, 0
        %7022 = vmatpush.bf16.msra.mxu0 0
        %7023 = vmatpush.bf16.msra.mxu0 0
        %7024 = vmatpush.bf16.msra.mxu0 0
        %7025 = vmatpush.bf16.msra.mxu0 0
        %7026 = vmatpush.bf16.msra.mxu0 0
        %7027 = vmatpush.bf16.msra.mxu0 0
        %7028 = vmatpush.bf16.msra.mxu0 %v7020
        %7029 = vmatpush.bf16.msra.mxu0 %v7010
        %7030 = vmatmul.bf16.gmra.mxu0 %v7014
        %v7031 = vpop.f32.mrf.mxu0
        %v7032 = vadd.f32 0.0, %v7031
        %v7033 = vpop.f32.mrf.mxu0
        %v7034 = vadd.f32 0.0, %v7033
        %7035 = vmatmul.bf16.gmra.mxu0 %v7017
        %v7036 = vpop.f32.mrf.mxu0
        %v7037 = vadd.f32 0.0, %v7036
        %v7038 = vpop.f32.mrf.mxu0
        %7039 = vdwg.mxu0
        %v7043 = vunpack.c.l.b16 %v6094
        %v7044 = vunpack.c.l.b16 %v6095
        %v7045 = vunpack.c.l.b16 %v6096
        %v7046 = vpack.c.b16 %v7044, %v7043
        %v7047 = vpack.c.b16 %v7045, %v7045
        %v7049 = vsel %vm2999, %v6532, 0
        %v7052 = vsel %vm2999, %v7046, 0
        %v7055 = vsel %vm2999, %v7047, 0
        %7057 = vmatpush.bf16.xpose.msra.mxu0 0
        %7058 = vmatpush.bf16.xpose.msra.mxu0 0
        %7059 = vmatpush.bf16.xpose.msra.mxu0 0
        %7060 = vmatpush.bf16.xpose.msra.mxu0 0
        %7061 = vmatpush.bf16.xpose.msra.mxu0 0
        %7062 = vmatpush.bf16.xpose.msra.mxu0 0
        %7063 = vmatpush.bf16.xpose.msra.mxu0 %v7055
        %7064 = vmatpush.bf16.xpose.msra.mxu0 %v7052
        %7065 = vmatmul.bf16.gmra.mxu0 %v7049
        %v7066 = vpop.f32.mrf.mxu0
        %v7067 = vadd.f32 %v862, %v7066
        %v7068 = vpop.f32.mrf.mxu0
        %7069 = vdwg.mxu0
        %v7073 = vunpack.c.l.b16 %v6097
        %v7074 = vunpack.c.l.b16 %v6098
        %v7075 = vunpack.c.l.b16 %v6099
        %v7076 = vpack.c.b16 %v7074, %v7073
        %v7077 = vpack.c.b16 %v7075, %v7075
        %v7079 = vsel %vm2999, %v6533, 0
        %v7082 = vsel %vm2999, %v7076, 0
        %v7085 = vsel %vm2999, %v7077, 0
        %7087 = vmatpush.bf16.xpose.msra.mxu0 0
        %7088 = vmatpush.bf16.xpose.msra.mxu0 0
        %7089 = vmatpush.bf16.xpose.msra.mxu0 0
        %7090 = vmatpush.bf16.xpose.msra.mxu0 0
        %7091 = vmatpush.bf16.xpose.msra.mxu0 0
        %7092 = vmatpush.bf16.xpose.msra.mxu0 0
        %7093 = vmatpush.bf16.xpose.msra.mxu0 %v7085
        %7094 = vmatpush.bf16.xpose.msra.mxu0 %v7082
        %7095 = vmatmul.bf16.gmra.mxu0 %v7079
        %v7096 = vpop.f32.mrf.mxu0
        %v7097 = vadd.f32 %v862, %v7096
        %v7098 = vpop.f32.mrf.mxu0
        %7099 = vdwg.mxu0
        %v7103 = vunpack.c.l.b16 %v6100
        %v7104 = vunpack.c.l.b16 %v6101
        %v7105 = vunpack.c.l.b16 %v6102
        %v7106 = vpack.c.b16 %v7104, %v7103
        %v7107 = vpack.c.b16 %v7105, %v7105
        %v7109 = vsel %vm2999, %v6534, 0
        %v7112 = vsel %vm2999, %v7106, 0
        %v7115 = vsel %vm2999, %v7107, 0
        %7117 = vmatpush.bf16.xpose.msra.mxu0 0
        %7118 = vmatpush.bf16.xpose.msra.mxu0 0
        %7119 = vmatpush.bf16.xpose.msra.mxu0 0
        %7120 = vmatpush.bf16.xpose.msra.mxu0 0
        %7121 = vmatpush.bf16.xpose.msra.mxu0 0
        %7122 = vmatpush.bf16.xpose.msra.mxu0 0
        %7123 = vmatpush.bf16.xpose.msra.mxu0 %v7115
        %7124 = vmatpush.bf16.xpose.msra.mxu0 %v7112
        %7125 = vmatmul.bf16.gmra.mxu0 %v7109
        %v7126 = vpop.f32.mrf.mxu0
        %v7127 = vadd.f32 %v862, %v7126
        %v7128 = vpop.f32.mrf.mxu0
        %7129 = vdwg.mxu0
        %v7133 = vunpack.c.l.b16 %v6103
        %v7134 = vunpack.c.l.b16 %v6104
        %v7135 = vunpack.c.l.b16 %v6105
        %v7136 = vpack.c.b16 %v7134, %v7133
        %v7137 = vpack.c.b16 %v7135, %v7135
        %v7139 = vsel %vm2999, %v6535, 0
        %v7142 = vsel %vm2999, %v7136, 0
        %v7145 = vsel %vm2999, %v7137, 0
        %7147 = vmatpush.bf16.xpose.msra.mxu0 0
        %7148 = vmatpush.bf16.xpose.msra.mxu0 0
        %7149 = vmatpush.bf16.xpose.msra.mxu0 0
        %7150 = vmatpush.bf16.xpose.msra.mxu0 0
        %7151 = vmatpush.bf16.xpose.msra.mxu0 0
        %7152 = vmatpush.bf16.xpose.msra.mxu0 0
        %7153 = vmatpush.bf16.xpose.msra.mxu0 %v7145
        %7154 = vmatpush.bf16.xpose.msra.mxu0 %v7142
        %7155 = vmatmul.bf16.gmra.mxu0 %v7139
        %v7156 = vpop.f32.mrf.mxu0
        %v7157 = vadd.f32 %v862, %v7156
        %v7158 = vpop.f32.mrf.mxu0
        %7159 = vdwg.mxu0
        %v7160 = vsel %vm3610, %v7067, -inf
        %7161 = vmax.xlane.f32.xlu0 %v7160
        %v7162 = vpop.xlane.xlu0 %7161
        %v7163 = vsel %vm3610, %v7097, -inf
        %7164 = vmax.xlane.f32.xlu0 %v7163
        %v7165 = vpop.xlane.xlu0 %7164
        %v7166 = vsel %vm3610, %v7127, -inf
        %7167 = vmax.xlane.f32.xlu0 %v7166
        %v7168 = vpop.xlane.xlu0 %7167
        %v7169 = vsel %vm3610, %v7157, -inf
        %7170 = vmax.xlane.f32.xlu0 %v7169
        %v7171 = vpop.xlane.xlu0 %7170
        %v7172 = vsub.f32 %v7067, %v7162
        %v7173 = vsub.f32 %v7097, %v7165
        %v7174 = vsub.f32 %v7127, %v7168
        %v7175 = vsub.f32 %v7157, %v7171
        %v7176 = vmul.f32 %v7172, 1.442695
        %v7177 = vpow.pop %v7176
        %v7178 = vmul.f32 %v7173, 1.442695
        %v7179 = vpow.pop %v7178
        %v7180 = vmul.f32 %v7174, 1.442695
        %v7181 = vpow.pop %v7180
        %v7182 = vmul.f32 %v7175, 1.442695
        %v7183 = vpow.pop %v7182
        %v7184 = vsel %vm3610, %v7177, 0.0
        %7185 = vadd.xlane.f32.xlu0 %v7184
        %v7186 = vpop.xlane.xlu0 %7185
        %v7187 = vsel %vm3610, %v7179, 0.0
        %7188 = vadd.xlane.f32.xlu0 %v7187
        %v7189 = vpop.xlane.xlu0 %7188
        %v7190 = vsel %vm3610, %v7181, 0.0
        %7191 = vadd.xlane.f32.xlu0 %v7190
        %v7192 = vpop.xlane.xlu0 %7191
        %v7193 = vsel %vm3610, %v7183, 0.0
        %7194 = vadd.xlane.f32.xlu0 %v7193
        %v7195 = vpop.xlane.xlu0 %7194
        %v7196 = vrcp.pop %v7186
        %v7197 = vrcp.pop %v7189
        %v7198 = vrcp.pop %v7192
        %v7199 = vrcp.pop %v7195
        %v7200 = vmul.f32 %v7177, %v7196
        %v7201 = vmul.f32 %v7179, %v7197
        %v7202 = vmul.f32 %v7181, %v7198
        %v7203 = vmul.f32 %v7183, %v7199
        %v7204 = vpack.c.bf16 %v7200, %v7200
        %v7205 = vpack.c.bf16 %v7201, %v7201
        %v7206 = vpack.c.bf16 %v7202, %v7202
        %v7207 = vpack.c.bf16 %v7203, %v7203
        %v7211 = vunpack.c.l.b16 %v6472
        %v7212 = vunpack.c.l.b16 %v6473
        %v7213 = vunpack.c.l.b16 %v6474
        %v7214 = vpack.c.b16 %v7212, %v7211
        %v7215 = vpack.c.b16 %v7213, %v7213
        %v7218 = vsel %vm3168, %v7204, 0
        %v7221 = vsel %vm3336, %v7215, 0
        %7223 = vmatpush.bf16.msra.mxu0 0
        %7224 = vmatpush.bf16.msra.mxu0 0
        %7225 = vmatpush.bf16.msra.mxu0 0
        %7226 = vmatpush.bf16.msra.mxu0 0
        %7227 = vmatpush.bf16.msra.mxu0 0
        %7228 = vmatpush.bf16.msra.mxu0 0
        %7229 = vmatpush.bf16.msra.mxu0 %v7221
        %7230 = vmatpush.bf16.msra.mxu0 %v7214
        %7231 = vmatmul.bf16.gmra.mxu0 %v7218
        %v7232 = vpop.f32.mrf.mxu0
        %v7233 = vadd.f32 0.0, %v7232
        %v7234 = vpop.f32.mrf.mxu0
        %7235 = vdwg.mxu0
        %v7239 = vunpack.c.l.b16 %v6475
        %v7240 = vunpack.c.l.b16 %v6476
        %v7241 = vunpack.c.l.b16 %v6477
        %v7242 = vpack.c.b16 %v7240, %v7239
        %v7243 = vpack.c.b16 %v7241, %v7241
        %v7246 = vsel %vm3168, %v7205, 0
        %v7249 = vsel %vm3336, %v7243, 0
        %7251 = vmatpush.bf16.msra.mxu0 0
        %7252 = vmatpush.bf16.msra.mxu0 0
        %7253 = vmatpush.bf16.msra.mxu0 0
        %7254 = vmatpush.bf16.msra.mxu0 0
        %7255 = vmatpush.bf16.msra.mxu0 0
        %7256 = vmatpush.bf16.msra.mxu0 0
        %7257 = vmatpush.bf16.msra.mxu0 %v7249
        %7258 = vmatpush.bf16.msra.mxu0 %v7242
        %7259 = vmatmul.bf16.gmra.mxu0 %v7246
        %v7260 = vpop.f32.mrf.mxu0
        %v7261 = vadd.f32 0.0, %v7260
        %v7262 = vpop.f32.mrf.mxu0
        %7263 = vdwg.mxu0
        %v7267 = vunpack.c.l.b16 %v6478
        %v7268 = vunpack.c.l.b16 %v6479
        %v7269 = vunpack.c.l.b16 %v6480
        %v7270 = vpack.c.b16 %v7268, %v7267
        %v7271 = vpack.c.b16 %v7269, %v7269
        %v7274 = vsel %vm3168, %v7206, 0
        %v7277 = vsel %vm3336, %v7271, 0
        %7279 = vmatpush.bf16.msra.mxu0 0
        %7280 = vmatpush.bf16.msra.mxu0 0
        %7281 = vmatpush.bf16.msra.mxu0 0
        %7282 = vmatpush.bf16.msra.mxu0 0
        %7283 = vmatpush.bf16.msra.mxu0 0
        %7284 = vmatpush.bf16.msra.mxu0 0
        %7285 = vmatpush.bf16.msra.mxu0 %v7277
        %7286 = vmatpush.bf16.msra.mxu0 %v7270
        %7287 = vmatmul.bf16.gmra.mxu0 %v7274
        %v7288 = vpop.f32.mrf.mxu0
        %v7289 = vadd.f32 0.0, %v7288
        %v7290 = vpop.f32.mrf.mxu0
        %7291 = vdwg.mxu0
        %v7295 = vunpack.c.l.b16 %v6481
        %v7296 = vunpack.c.l.b16 %v6482
        %v7297 = vunpack.c.l.b16 %v6483
        %v7298 = vpack.c.b16 %v7296, %v7295
        %v7299 = vpack.c.b16 %v7297, %v7297
        %v7302 = vsel %vm3168, %v7207, 0
        %v7305 = vsel %vm3336, %v7299, 0
        %7307 = vmatpush.bf16.msra.mxu0 0
        %7308 = vmatpush.bf16.msra.mxu0 0
        %7309 = vmatpush.bf16.msra.mxu0 0
        %7310 = vmatpush.bf16.msra.mxu0 0
        %7311 = vmatpush.bf16.msra.mxu0 0
        %7312 = vmatpush.bf16.msra.mxu0 0
        %7313 = vmatpush.bf16.msra.mxu0 %v7305
        %7314 = vmatpush.bf16.msra.mxu0 %v7298
        %7315 = vmatmul.bf16.gmra.mxu0 %v7302
        %v7316 = vpop.f32.mrf.mxu0
        %v7317 = vadd.f32 0.0, %v7316
        %v7318 = vpop.f32.mrf.mxu0
        %7319 = vdwg.mxu0
        %v7320 = vperm.slane %v7233, 0
        %v7321 = vperm.slane %v7261, 0
        %v7322 = vperm.slane %v7289, 0
        %v7323 = vperm.slane %v7317, 0
        %v7324 = vsub.f32 %v7320, %v6900
        %v7325 = vsub.f32 %v7320, %v6902
        %v7326 = vsub.f32 %v7320, %v6905
        %v7327 = vsub.f32 %v7321, %v6944
        %v7328 = vsub.f32 %v7321, %v6946
        %v7329 = vsub.f32 %v7321, %v6949
        %v7330 = vsub.f32 %v7322, %v6988
        %v7331 = vsub.f32 %v7322, %v6990
        %v7332 = vsub.f32 %v7322, %v6993
        %v7333 = vsub.f32 %v7323, %v7032
        %v7334 = vsub.f32 %v7323, %v7034
        %v7335 = vsub.f32 %v7323, %v7037
        %v7336 = vmul.f32 %v3790, %v7324
        %v7337 = vmul.f32 %v3795, %v7325
        %v7338 = vmul.f32 %v3800, %v7326
        %v7339 = vmul.f32 %v3790, %v7327
        %v7340 = vmul.f32 %v3795, %v7328
        %v7341 = vmul.f32 %v3800, %v7329
        %v7342 = vmul.f32 %v3790, %v7330
        %v7343 = vmul.f32 %v3795, %v7331
        %v7344 = vmul.f32 %v3800, %v7332
        %v7345 = vmul.f32 %v3790, %v7333
        %v7346 = vmul.f32 %v3795, %v7334
        %v7347 = vmul.f32 %v3800, %v7335
        %v7348 = vadd.f32 %v6900, %v7336
        %v7349 = vadd.f32 %v6902, %v7337
        %v7350 = vadd.f32 %v6905, %v7338
        %v7351 = vadd.f32 %v6944, %v7339
        %v7352 = vadd.f32 %v6946, %v7340
        %v7353 = vadd.f32 %v6949, %v7341
        %v7354 = vadd.f32 %v6988, %v7342
        %v7355 = vadd.f32 %v6990, %v7343
        %v7356 = vadd.f32 %v6993, %v7344
        %v7357 = vadd.f32 %v7032, %v7345
        %v7358 = vadd.f32 %v7034, %v7346
        %v7359 = vadd.f32 %v7037, %v7347
        %v7360 = vrot.slane %v7354, 4
        %v7361 = vsel %vm1062, %v7360, %v7348
        %v7362 = vrot.slane %v7348, 4
        %v7363 = vsel %vm1062, %v7354, %v7362
        %v7365 = vunpack.c.l.s4 1983009808
        %v7366 = vunpack.c.0.s8 %v7365
        %v7367 = vperm.slane %v7361, %v7366
        %v7369 = vunpack.c.l.s4 1983009808
        %v7370 = vunpack.c.0.s8 %v7369
        %v7371 = vperm.slane %v7363, %v7370
        %v7372 = vrot.slane %v7357, 4
        %v7373 = vsel %vm1062, %v7372, %v7351
        %v7374 = vrot.slane %v7351, 4
        %v7375 = vsel %vm1062, %v7357, %v7374
        %v7377 = vunpack.c.l.s4 1983009808
        %v7378 = vunpack.c.0.s8 %v7377
        %v7379 = vperm.slane %v7373, %v7378
        %v7381 = vunpack.c.l.s4 1983009808
        %v7382 = vunpack.c.0.s8 %v7381
        %v7383 = vperm.slane %v7375, %v7382
        %v7384 = vrot.slane %v7379, 4
        %v7385 = vsel %vm1062, %v7384, %v7367
        %v7386 = vrot.slane %v7367, 4
        %v7387 = vsel %vm1062, %v7379, %v7386
        %v7389 = vunpack.c.l.s4 1934713408
        %v7390 = vunpack.c.0.s8 %v7389
        %v7391 = vperm.slane %v7385, %v7390
        %v7393 = vunpack.c.l.s4 1934713408
        %v7394 = vunpack.c.0.s8 %v7393
        %v7395 = vperm.slane %v7387, %v7394
        %v7396 = vrot.slane %v7383, 4
        %v7397 = vsel %vm1062, %v7396, %v7371
        %v7398 = vrot.slane %v7371, 4
        %v7399 = vsel %vm1062, %v7383, %v7398
        %v7401 = vunpack.c.l.s4 1934713408
        %v7402 = vunpack.c.0.s8 %v7401
        %v7403 = vperm.slane %v7397, %v7402
        %v7405 = vunpack.c.l.s4 1934713408
        %v7406 = vunpack.c.0.s8 %v7405
        %v7407 = vperm.slane %v7399, %v7406
        %v7408 = vrot.slane %v7391, 4
        %v7409 = vsel %vm1062, 0.0, %v7408
        %v7410 = vrot.slane %v7395, 4
        %v7411 = vsel %vm1062, 0.0, %v7410
        %v7412 = vrot.slane %v7403, 4
        %v7413 = vsel %vm1062, 0.0, %v7412
        %v7414 = vrot.slane %v7407, 4
        %v7415 = vsel %vm1062, 0.0, %v7414
        %v7416 = vrot.slane %v7355, 4
        %v7417 = vsel %vm1062, %v7416, %v7349
        %v7418 = vrot.slane %v7349, 4
        %v7419 = vsel %vm1062, %v7355, %v7418
        %v7421 = vunpack.c.l.s4 1983009808
        %v7422 = vunpack.c.0.s8 %v7421
        %v7423 = vperm.slane %v7417, %v7422
        %v7425 = vunpack.c.l.s4 1983009808
        %v7426 = vunpack.c.0.s8 %v7425
        %v7427 = vperm.slane %v7419, %v7426
        %v7428 = vrot.slane %v7358, 4
        %v7429 = vsel %vm1062, %v7428, %v7352
        %v7430 = vrot.slane %v7352, 4
        %v7431 = vsel %vm1062, %v7358, %v7430
        %v7433 = vunpack.c.l.s4 1983009808
        %v7434 = vunpack.c.0.s8 %v7433
        %v7435 = vperm.slane %v7429, %v7434
        %v7437 = vunpack.c.l.s4 1983009808
        %v7438 = vunpack.c.0.s8 %v7437
        %v7439 = vperm.slane %v7431, %v7438
        %v7440 = vrot.slane %v7435, 4
        %v7441 = vsel %vm1062, %v7440, %v7423
        %v7442 = vrot.slane %v7423, 4
        %v7443 = vsel %vm1062, %v7435, %v7442
        %v7445 = vunpack.c.l.s4 1934713408
        %v7446 = vunpack.c.0.s8 %v7445
        %v7447 = vperm.slane %v7441, %v7446
        %v7449 = vunpack.c.l.s4 1934713408
        %v7450 = vunpack.c.0.s8 %v7449
        %v7451 = vperm.slane %v7443, %v7450
        %v7452 = vrot.slane %v7439, 4
        %v7453 = vsel %vm1062, %v7452, %v7427
        %v7454 = vrot.slane %v7427, 4
        %v7455 = vsel %vm1062, %v7439, %v7454
        %v7457 = vunpack.c.l.s4 1934713408
        %v7458 = vunpack.c.0.s8 %v7457
        %v7459 = vperm.slane %v7453, %v7458
        %v7461 = vunpack.c.l.s4 1934713408
        %v7462 = vunpack.c.0.s8 %v7461
        %v7463 = vperm.slane %v7455, %v7462
        %v7464 = vrot.slane %v7447, 4
        %v7465 = vsel %vm1062, 0.0, %v7464
        %v7466 = vrot.slane %v7451, 4
        %v7467 = vsel %vm1062, 0.0, %v7466
        %v7468 = vrot.slane %v7459, 4
        %v7469 = vsel %vm1062, 0.0, %v7468
        %v7470 = vrot.slane %v7463, 4
        %v7471 = vsel %vm1062, 0.0, %v7470
        %v7472 = vrot.slane %v7356, 4
        %v7473 = vsel %vm1062, %v7472, %v7350
        %v7474 = vrot.slane %v7350, 4
        %v7475 = vsel %vm1062, %v7356, %v7474
        %v7477 = vunpack.c.l.s4 1983009808
        %v7478 = vunpack.c.0.s8 %v7477
        %v7479 = vperm.slane %v7473, %v7478
        %v7481 = vunpack.c.l.s4 1983009808
        %v7482 = vunpack.c.0.s8 %v7481
        %v7483 = vperm.slane %v7475, %v7482
        %v7484 = vrot.slane %v7359, 4
        %v7485 = vsel %vm1062, %v7484, %v7353
        %v7486 = vrot.slane %v7353, 4
        %v7487 = vsel %vm1062, %v7359, %v7486
        %v7489 = vunpack.c.l.s4 1983009808
        %v7490 = vunpack.c.0.s8 %v7489
        %v7491 = vperm.slane %v7485, %v7490
        %v7493 = vunpack.c.l.s4 1983009808
        %v7494 = vunpack.c.0.s8 %v7493
        %v7495 = vperm.slane %v7487, %v7494
        %v7496 = vrot.slane %v7491, 4
        %v7497 = vsel %vm1062, %v7496, %v7479
        %v7498 = vrot.slane %v7479, 4
        %v7499 = vsel %vm1062, %v7491, %v7498
        %v7501 = vunpack.c.l.s4 1934713408
        %v7502 = vunpack.c.0.s8 %v7501
        %v7503 = vperm.slane %v7497, %v7502
        %v7505 = vunpack.c.l.s4 1934713408
        %v7506 = vunpack.c.0.s8 %v7505
        %v7507 = vperm.slane %v7499, %v7506
        %v7508 = vrot.slane %v7495, 4
        %v7509 = vsel %vm1062, %v7508, %v7483
        %v7510 = vrot.slane %v7483, 4
        %v7511 = vsel %vm1062, %v7495, %v7510
        %v7513 = vunpack.c.l.s4 1934713408
        %v7514 = vunpack.c.0.s8 %v7513
        %v7515 = vperm.slane %v7509, %v7514
        %v7517 = vunpack.c.l.s4 1934713408
        %v7518 = vunpack.c.0.s8 %v7517
        %v7519 = vperm.slane %v7511, %v7518
        %v7520 = vrot.slane %v7503, 4
        %v7521 = vsel %vm1062, 0.0, %v7520
        %v7522 = vrot.slane %v7507, 4
        %v7523 = vsel %vm1062, 0.0, %v7522
        %v7524 = vrot.slane %v7515, 4
        %v7525 = vsel %vm1062, 0.0, %v7524
        %v7526 = vrot.slane %v7519, 4
        %v7527 = vsel %vm1062, 0.0, %v7526
        %v7528 = vsel %vm1062, %v7410, %v7391
        %v7530 = vunpack.c.l.s4 1983009808
        %v7531 = vunpack.c.0.s8 %v7530
        %v7532 = vperm.slane %v7528, %v7531
        %v7533 = vrot.slane %v7411, 4
        %v7534 = vsel %vm1062, %v7533, %v7409
        %v7536 = vunpack.c.l.s4 1983009808
        %v7537 = vunpack.c.0.s8 %v7536
        %v7538 = vperm.slane %v7534, %v7537
        %v7539 = vsel %vm1062, %v7414, %v7403
        %v7541 = vunpack.c.l.s4 1983009808
        %v7542 = vunpack.c.0.s8 %v7541
        %v7543 = vperm.slane %v7539, %v7542
        %v7544 = vrot.slane %v7415, 4
        %v7545 = vsel %vm1062, %v7544, %v7413
        %v7547 = vunpack.c.l.s4 1983009808
        %v7548 = vunpack.c.0.s8 %v7547
        %v7549 = vperm.slane %v7545, %v7548
        %v7550 = vrot.slane %v7538, 4
        %v7551 = vsel %vm1062, %v7550, %v7532
        %v7552 = vrot.slane %v7532, 4
        %v7553 = vsel %vm1062, %v7538, %v7552
        %v7555 = vunpack.c.l.s4 1934713408
        %v7556 = vunpack.c.0.s8 %v7555
        %v7557 = vperm.slane %v7551, %v7556
        %v7559 = vunpack.c.l.s4 1934713408
        %v7560 = vunpack.c.0.s8 %v7559
        %v7561 = vperm.slane %v7553, %v7560
        %v7562 = vrot.slane %v7549, 4
        %v7563 = vsel %vm1062, %v7562, %v7543
        %v7564 = vrot.slane %v7543, 4
        %v7565 = vsel %vm1062, %v7549, %v7564
        %v7567 = vunpack.c.l.s4 1934713408
        %v7568 = vunpack.c.0.s8 %v7567
        %v7569 = vperm.slane %v7563, %v7568
        %v7571 = vunpack.c.l.s4 1934713408
        %v7572 = vunpack.c.0.s8 %v7571
        %v7573 = vperm.slane %v7565, %v7572
        %v7574 = vrot.slane %v7569, 4
        %v7575 = vsel %vm1062, %v7574, %v7557
        %v7576 = vrot.slane %v7557, 4
        %v7577 = vsel %vm1062, %v7569, %v7576
        %v7578 = vrot.slane %v7573, 4
        %v7579 = vsel %vm1062, %v7578, %v7561
        %v7580 = vrot.slane %v7561, 4
        %v7581 = vsel %vm1062, %v7573, %v7580
        %v7582 = vsel %vm1062, %v7466, %v7447
        %v7584 = vunpack.c.l.s4 1983009808
        %v7585 = vunpack.c.0.s8 %v7584
        %v7586 = vperm.slane %v7582, %v7585
        %v7587 = vrot.slane %v7467, 4
        %v7588 = vsel %vm1062, %v7587, %v7465
        %v7590 = vunpack.c.l.s4 1983009808
        %v7591 = vunpack.c.0.s8 %v7590
        %v7592 = vperm.slane %v7588, %v7591
        %v7593 = vsel %vm1062, %v7470, %v7459
        %v7595 = vunpack.c.l.s4 1983009808
        %v7596 = vunpack.c.0.s8 %v7595
        %v7597 = vperm.slane %v7593, %v7596
        %v7598 = vrot.slane %v7471, 4
        %v7599 = vsel %vm1062, %v7598, %v7469
        %v7601 = vunpack.c.l.s4 1983009808
        %v7602 = vunpack.c.0.s8 %v7601
        %v7603 = vperm.slane %v7599, %v7602
        %v7604 = vrot.slane %v7592, 4
        %v7605 = vsel %vm1062, %v7604, %v7586
        %v7606 = vrot.slane %v7586, 4
        %v7607 = vsel %vm1062, %v7592, %v7606
        %v7609 = vunpack.c.l.s4 1934713408
        %v7610 = vunpack.c.0.s8 %v7609
        %v7611 = vperm.slane %v7605, %v7610
        %v7613 = vunpack.c.l.s4 1934713408
        %v7614 = vunpack.c.0.s8 %v7613
        %v7615 = vperm.slane %v7607, %v7614
        %v7616 = vrot.slane %v7603, 4
        %v7617 = vsel %vm1062, %v7616, %v7597
        %v7618 = vrot.slane %v7597, 4
        %v7619 = vsel %vm1062, %v7603, %v7618
        %v7621 = vunpack.c.l.s4 1934713408
        %v7622 = vunpack.c.0.s8 %v7621
        %v7623 = vperm.slane %v7617, %v7622
        %v7625 = vunpack.c.l.s4 1934713408
        %v7626 = vunpack.c.0.s8 %v7625
        %v7627 = vperm.slane %v7619, %v7626
        %v7628 = vrot.slane %v7623, 4
        %v7629 = vsel %vm1062, %v7628, %v7611
        %v7630 = vrot.slane %v7611, 4
        %v7631 = vsel %vm1062, %v7623, %v7630
        %v7632 = vrot.slane %v7627, 4
        %v7633 = vsel %vm1062, %v7632, %v7615
        %v7634 = vrot.slane %v7615, 4
        %v7635 = vsel %vm1062, %v7627, %v7634
        %v7636 = vsel %vm1062, %v7522, %v7503
        %v7638 = vunpack.c.l.s4 1983009808
        %v7639 = vunpack.c.0.s8 %v7638
        %v7640 = vperm.slane %v7636, %v7639
        %v7641 = vrot.slane %v7523, 4
        %v7642 = vsel %vm1062, %v7641, %v7521
        %v7644 = vunpack.c.l.s4 1983009808
        %v7645 = vunpack.c.0.s8 %v7644
        %v7646 = vperm.slane %v7642, %v7645
        %v7647 = vsel %vm1062, %v7526, %v7515
        %v7649 = vunpack.c.l.s4 1983009808
        %v7650 = vunpack.c.0.s8 %v7649
        %v7651 = vperm.slane %v7647, %v7650
        %v7652 = vrot.slane %v7527, 4
        %v7653 = vsel %vm1062, %v7652, %v7525
        %v7655 = vunpack.c.l.s4 1983009808
        %v7656 = vunpack.c.0.s8 %v7655
        %v7657 = vperm.slane %v7653, %v7656
        %v7658 = vrot.slane %v7646, 4
        %v7659 = vsel %vm1062, %v7658, %v7640
        %v7660 = vrot.slane %v7640, 4
        %v7661 = vsel %vm1062, %v7646, %v7660
        %v7663 = vunpack.c.l.s4 1934713408
        %v7664 = vunpack.c.0.s8 %v7663
        %v7665 = vperm.slane %v7659, %v7664
        %v7667 = vunpack.c.l.s4 1934713408
        %v7668 = vunpack.c.0.s8 %v7667
        %v7669 = vperm.slane %v7661, %v7668
        %v7670 = vrot.slane %v7657, 4
        %v7671 = vsel %vm1062, %v7670, %v7651
        %v7672 = vrot.slane %v7651, 4
        %v7673 = vsel %vm1062, %v7657, %v7672
        %v7675 = vunpack.c.l.s4 1934713408
        %v7676 = vunpack.c.0.s8 %v7675
        %v7677 = vperm.slane %v7671, %v7676
        %v7679 = vunpack.c.l.s4 1934713408
        %v7680 = vunpack.c.0.s8 %v7679
        %v7681 = vperm.slane %v7673, %v7680
        %v7682 = vrot.slane %v7677, 4
        %v7683 = vsel %vm1062, %v7682, %v7665
        %v7684 = vrot.slane %v7665, 4
        %v7685 = vsel %vm1062, %v7677, %v7684
        %v7686 = vrot.slane %v7681, 4
        %v7687 = vsel %vm1062, %v7686, %v7669
        %v7688 = vrot.slane %v7669, 4
        %v7689 = vsel %vm1062, %v7681, %v7688
        %7693 = vrot.lane.b32.xlu0 %v7577, 8
        %v7694 = vpop.permute.xlu0 %7693
        %7695 = vrot.lane.b32.xlu0 %v7631, 8
        %v7696 = vpop.permute.xlu0 %7695
        %7697 = vrot.lane.b32.xlu0 %v7685, 8
        %v7698 = vpop.permute.xlu0 %7697
        %7705 = vrot.lane.b32.xlu0 %v7579, 16
        %v7706 = vpop.permute.xlu0 %7705
        %7707 = vrot.lane.b32.xlu0 %v7633, 16
        %v7708 = vpop.permute.xlu0 %7707
        %7709 = vrot.lane.b32.xlu0 %v7687, 16
        %v7710 = vpop.permute.xlu0 %7709
        %7717 = vrot.lane.b32.xlu0 %v7581, 24
        %v7718 = vpop.permute.xlu0 %7717
        %7719 = vrot.lane.b32.xlu0 %v7635, 24
        %v7720 = vpop.permute.xlu0 %7719
        %7721 = vrot.lane.b32.xlu0 %v7689, 24
        %v7722 = vpop.permute.xlu0 %7721
        %v7726 = vsel %vm2999, %v7575, %v7694
        %v7727 = vsel %vm2999, %v7629, %v7696
        %v7728 = vsel %vm2999, %v7683, %v7698
        %v7729 = vsel %vm4195, %v7726, %v7706
        %v7730 = vsel %vm4195, %v7727, %v7708
        %v7731 = vsel %vm4195, %v7728, %v7710
        %v7732 = vsel %vm3168, %v7729, %v7718
        %v7733 = vsel %vm3168, %v7730, %v7720
        %v7734 = vsel %vm3168, %v7731, %v7722
        %v7735 = vadd.f32 %v4421, %v7732
        %v7736 = vadd.f32 %v4422, %v7733
        %v7737 = vadd.f32 %v4423, %v7734
        %s7738 = scalar_lea.vmem %s16, 1
        %v7739 = vld [vmem:[%s7738] sm:$0x1]
        %s7740 = scalar_lea.vmem %s17, 1
        %v7741 = vld [vmem:[%s7740] sm:$0x1]
        %v7742 = vsel %vm868, %v7735, 0.0
        %7743 = vadd.xlane.f32.xlu0 %v7742
        %v7744 = vpop.xlane.xlu0 %7743
        %v7745 = vsel %vm868, %v7736, 0.0
        %7746 = vadd.xlane.f32.xlu0 %v7745
        %v7747 = vpop.xlane.xlu0 %7746
        %v7748 = vsel %vm868, %v7737, 0.0
        %7749 = vadd.xlane.f32.xlu0 %v7748
        %v7750 = vpop.xlane.xlu0 %7749
        %v7751 = vmul.f32 %v7744, %v884
        %v7752 = vmul.f32 %v7747, %v884
        %v7753 = vmul.f32 %v7750, %v884
        %v7754 = vsub.f32 %v7735, %v7751
        %v7755 = vsub.f32 %v7736, %v7752
        %v7756 = vsub.f32 %v7737, %v7753
        %v7757 = vmul.f32 %v7754, %v7754
        %v7758 = vmul.f32 %v7755, %v7755
        %v7759 = vmul.f32 %v7756, %v7756
        %v7760 = vsel %vm868, %v7757, 0.0
        %7761 = vadd.xlane.f32.xlu0 %v7760
        %v7762 = vpop.xlane.xlu0 %7761
        %v7763 = vsel %vm868, %v7758, 0.0
        %7764 = vadd.xlane.f32.xlu0 %v7763
        %v7765 = vpop.xlane.xlu0 %7764
        %v7766 = vsel %vm868, %v7759, 0.0
        %7767 = vadd.xlane.f32.xlu0 %v7766
        %v7768 = vpop.xlane.xlu0 %7767
        %v7769 = vmul.f32 %v7762, %v884
        %v7770 = vmul.f32 %v7765, %v884
        %v7771 = vmul.f32 %v7768, %v884
        %v7772 = vadd.f32 %v7769, 1e-05
        %v7773 = vadd.f32 %v7770, 1e-05
        %v7774 = vadd.f32 %v7771, 1e-05
        %v7775 = vrsqrt.pop %v7772
        %v7776 = vmul.f32 %v7775, %v7772
        %v7777 = vmul.f32 %v7776, %v7775
        %v7778 = vmul.f32 0.5, %v7777
        %v7779 = vsub.f32 1.5, %v7778
        %v7780 = vmul.f32 %v7775, %v7779
        %vm7781 = vweird.f32 %v7772
        %vm7782 = vweird.f32 %v7775
        %vm7783 = vmor %vm7781, %vm7782
        %v7784 = vsel %vm7783, %v7775, %v7780
        %v7785 = vrsqrt.pop %v7773
        %v7786 = vmul.f32 %v7785, %v7773
        %v7787 = vmul.f32 %v7786, %v7785
        %v7788 = vmul.f32 0.5, %v7787
        %v7789 = vsub.f32 1.5, %v7788
        %v7790 = vmul.f32 %v7785, %v7789
        %vm7791 = vweird.f32 %v7773
        %vm7792 = vweird.f32 %v7785
        %vm7793 = vmor %vm7791, %vm7792
        %v7794 = vsel %vm7793, %v7785, %v7790
        %v7795 = vrsqrt.pop %v7774
        %v7796 = vmul.f32 %v7795, %v7774
        %v7797 = vmul.f32 %v7796, %v7795
        %v7798 = vmul.f32 0.5, %v7797
        %v7799 = vsub.f32 1.5, %v7798
        %v7800 = vmul.f32 %v7795, %v7799
        %vm7801 = vweird.f32 %v7774
        %vm7802 = vweird.f32 %v7795
        %vm7803 = vmor %vm7801, %vm7802
        %v7804 = vsel %vm7803, %v7795, %v7800
        %v7805 = vmul.f32 %v7754, %v7784
        %v7806 = vmul.f32 %v7755, %v7794
        %v7807 = vmul.f32 %v7756, %v7804
        %v7809 = vperm.slane %v7739, 0
        %v7811 = vmul.f32 %v7805, %v7809
        %v7812 = vmul.f32 %v7806, %v7809
        %v7813 = vmul.f32 %v7807, %v7809
        %v7815 = vperm.slane %v7741, 0
        %v7817 = vadd.f32 %v7811, %v7815
        %v7818 = vadd.f32 %v7812, %v7815
        %v7819 = vadd.f32 %v7813, %v7815
        %v7820 = vpack.c.bf16 %v7818, %v7817
        %v7821 = vpack.c.bf16 %v7819, %v7819
        %s7822 = scalar_lea.vmem %s18, 16
        %v7823 = vld [vmem:[%s7822] sm:$0xf]
        %v7824 = vld [vmem:[%s7822 + $0x4] sm:$0xf]
        %v7825 = vld [vmem:[%s7822 + $0x8] sm:$0xf]
        %v7826 = vld [vmem:[%s7822 + $0xc] sm:$0xf]
        %s7827 = scalar_lea.vmem %s19, 1
        %v7828 = vld [vmem:[%s7827] sm:$0x1]
        %v7830 = vperm.slane %v7828, 0
        %v7836 = vunpack.c.l.b16 %v7823
        %v7837 = vunpack.c.l.b16 %v7824
        %v7838 = vunpack.c.l.b16 %v7825
        %v7839 = vunpack.c.l.b16 %v7826
        %v7840 = vpack.c.b16 %v7837, %v7836
        %v7841 = vpack.c.b16 %v7839, %v7838
        %v7845 = vsel %vm868, %v7820, 0
        %v7848 = vsel %vm868, %v7821, 0
        %7850 = vmatpush.bf16.msra.mxu0 0
        %7851 = vmatpush.bf16.msra.mxu0 0
        %7852 = vmatpush.bf16.msra.mxu0 0
        %7853 = vmatpush.bf16.msra.mxu0 0
        %7854 = vmatpush.bf16.msra.mxu0 0
        %7855 = vmatpush.bf16.msra.mxu0 0
        %7856 = vmatpush.bf16.msra.mxu0 %v7841
        %7857 = vmatpush.bf16.msra.mxu0 %v7840
        %7858 = vmatmul.bf16.gmra.mxu0 %v7845
        %v7859 = vpop.f32.mrf.mxu0
        %v7860 = vadd.f32 %v7830, %v7859
        %v7861 = vpop.f32.mrf.mxu0
        %v7862 = vadd.f32 %v7830, %v7861
        %7863 = vmatmul.bf16.gmra.mxu0 %v7848
        %v7864 = vpop.f32.mrf.mxu0
        %v7865 = vadd.f32 %v7830, %v7864
        %v7866 = vpop.f32.mrf.mxu0
        %7867 = vdwg.mxu0
        %v7868 = vmul.f32 %v7860, 0.5
        %v7869 = vmul.f32 %v7862, 0.5
        %v7870 = vmul.f32 %v7865, 0.5
        %v7871 = vmul.f32 %v7860, 0.044715
        %v7872 = vmul.f32 %v7862, 0.044715
        %v7873 = vmul.f32 %v7865, 0.044715
        %v7874 = vmul.f32 %v7871, %v7860
        %v7875 = vmul.f32 %v7872, %v7862
        %v7876 = vmul.f32 %v7873, %v7865
        %v7877 = vmul.f32 %v7874, %v7860
        %v7878 = vmul.f32 %v7875, %v7862
        %v7879 = vmul.f32 %v7876, %v7865
        %v7880 = vadd.f32 %v7860, %v7877
        %v7881 = vadd.f32 %v7862, %v7878
        %v7882 = vadd.f32 %v7865, %v7879
        %v7883 = vmul.f32 %v7880, 0.7978846
        %v7884 = vmul.f32 %v7881, 0.7978846
        %v7885 = vmul.f32 %v7882, 0.7978846
        %v7886 = vtanh.pop %v7883
        %v7887 = vtanh.pop %v7884
        %v7888 = vtanh.pop %v7885
        %v7889 = vadd.f32 %v7886, 1.0
        %v7890 = vadd.f32 %v7887, 1.0
        %v7891 = vadd.f32 %v7888, 1.0
        %v7892 = vmul.f32 %v7868, %v7889
        %v7893 = vmul.f32 %v7869, %v7890
        %v7894 = vmul.f32 %v7870, %v7891
        %v7895 = vpack.c.bf16 %v7893, %v7892
        %v7896 = vpack.c.bf16 %v7894, %v7894
        %s7897 = scalar_lea.vmem %s20, 32
        %v7898 = vld [vmem:[%s7897] sm:$0xf]
        %v7899 = vld [vmem:[%s7897 + $0x4] sm:$0xf]
        %v7900 = vld [vmem:[%s7897 + $0x8] sm:$0xf]
        %v7901 = vld [vmem:[%s7897 + $0xc] sm:$0xf]
        %v7902 = vld [vmem:[%s7897 + $0x10] sm:$0xf]
        %v7903 = vld [vmem:[%s7897 + $0x14] sm:$0xf]
        %v7904 = vld [vmem:[%s7897 + $0x18] sm:$0xf]
        %v7905 = vld [vmem:[%s7897 + $0x1c] sm:$0xf]
        %s7906 = scalar_lea.vmem %s21, 1
        %v7907 = vld [vmem:[%s7906] sm:$0x1]
        %v7909 = vperm.slane %v7907, 0
        %v7919 = vunpack.c.l.b16 %v7898
        %v7920 = vunpack.c.l.b16 %v7899
        %v7921 = vunpack.c.l.b16 %v7900
        %v7922 = vunpack.c.l.b16 %v7901
        %v7923 = vunpack.c.l.b16 %v7902
        %v7924 = vunpack.c.l.b16 %v7903
        %v7925 = vunpack.c.l.b16 %v7904
        %v7926 = vunpack.c.l.b16 %v7905
        %v7927 = vpack.c.b16 %v7920, %v7919
        %v7928 = vpack.c.b16 %v7922, %v7921
        %v7929 = vpack.c.b16 %v7924, %v7923
        %v7930 = vpack.c.b16 %v7926, %v7925
        %v7936 = vsel %vm4396, %v7895, 0
        %v7939 = vsel %vm4396, %v7896, 0
        %7941 = vmatpush.bf16.msra.mxu0 0
        %7942 = vmatpush.bf16.msra.mxu0 0
        %7943 = vmatpush.bf16.msra.mxu0 0
        %7944 = vmatpush.bf16.msra.mxu0 0
        %7945 = vmatpush.bf16.msra.mxu0 %v7930
        %7946 = vmatpush.bf16.msra.mxu0 %v7929
        %7947 = vmatpush.bf16.msra.mxu0 %v7928
        %7948 = vmatpush.bf16.msra.mxu0 %v7927
        %7949 = vmatmul.bf16.gmra.mxu0 %v7936
        %v7950 = vpop.f32.mrf.mxu0
        %v7951 = vadd.f32 %v7909, %v7950
        %v7952 = vpop.f32.mrf.mxu0
        %7953 = vmatmul.bf16.gmra.mxu0 %v7939
        %v7954 = vpop.f32.mrf.mxu0
        %v7955 = vpop.f32.mrf.mxu0
        %7956 = vdwg.mxu0
        %v7957 = vadd.f32 %v7735, %v7951
        %v7958 = vld [vmem:[#allocation8] sm:$0x1]
        %v7959 = vld [vmem:[#allocation10] sm:$0x1]
        %vm7960 = vcmask 253952
        %v7961 = vsel %vm7960, %v7957, 0.0
        %7962 = vadd.xlane.f32.xlu0 %v7961
        %v7963 = vpop.xlane.xlu0 %7962
        %v7964 = vmul.f32 %v7963, %v884
        %v7965 = vsub.f32 %v7957, %v7964
        %v7966 = vmul.f32 %v7965, %v7965
        %v7967 = vsel %vm7960, %v7966, 0.0
        %7968 = vadd.xlane.f32.xlu0 %v7967
        %v7969 = vpop.xlane.xlu0 %7968
        %v7970 = vmul.f32 %v7969, %v884
        %v7971 = vadd.f32 %v7970, 1e-05
        %v7972 = vrsqrt.pop %v7971
        %v7973 = vmul.f32 %v7972, %v7971
        %v7974 = vmul.f32 %v7973, %v7972
        %v7975 = vmul.f32 0.5, %v7974
        %v7976 = vsub.f32 1.5, %v7975
        %v7977 = vmul.f32 %v7972, %v7976
        %vm7978 = vweird.f32 %v7971
        %vm7979 = vweird.f32 %v7972
        %vm7980 = vmor %vm7978, %vm7979
        %v7981 = vsel %vm7980, %v7972, %v7977
        %v7982 = vmul.f32 %v7965, %v7981
        %v7983 = vmul.f32 %v7982, %v7958
        %v7984 = vadd.f32 %v7983, %v7959
        %v7985 = vpack.c.bf16 %v7984, %v7984
        %v7986 = vld [vmem:[%s10] sm:$0xf]
        %v7987 = vld [vmem:[%s10 + $0x4] sm:$0xf]
        %v7988 = vld [vmem:[%s10 + $0x8] sm:$0xf]
        %v7989 = vld [vmem:[%s10 + $0xc] sm:$0xf]
        %v7990 = vld [vmem:[#allocation11] sm:$0x1]
        %v7995 = vunpack.c.l.b16 %v7986
        %v7996 = vunpack.c.l.b16 %v7987
        %v7997 = vunpack.c.l.b16 %v7988
        %v7998 = vunpack.c.l.b16 %v7989
        %v7999 = vpack.c.b16 %v7996, %v7995
        %v8000 = vpack.c.b16 %v7998, %v7997
        %v8004 = vsel %vm868, %v7985, 0
        %8006 = vmatpush.bf16.msra.mxu0 0
        %8007 = vmatpush.bf16.msra.mxu0 0
        %8008 = vmatpush.bf16.msra.mxu0 0
        %8009 = vmatpush.bf16.msra.mxu0 0
        %8010 = vmatpush.bf16.msra.mxu0 0
        %8011 = vmatpush.bf16.msra.mxu0 0
        %8012 = vmatpush.bf16.msra.mxu0 %v8000
        %8013 = vmatpush.bf16.msra.mxu0 %v7999
        %8014 = vmatmul.bf16.gmra.mxu0 %v8004
        %v8015 = vpop.f32.mrf.mxu0
        %v8016 = vadd.f32 %v7990, %v8015
        %v8017 = vpop.f32.mrf.mxu0
        %8018 = vdwg.mxu0
        %vm8019 = vcmask 73728
        %8020 = vst.msk [vmem:[%s767] sm:$0x1] %vm8019, %v8016
        %s8021 = sand.u32 %s515, 1
        %s8022 = scalar_lea.sflag [#allocation4], %s8021
        %s8023 = sand.u32 %s515, 1
        %s8024 = scalar_lea.vmem [#allocation13], %s8023
        // Predicated region
        $region133: #{tpu_custom_call.1} parent=107 // pred_check
          %p8025 = pneg %p525
        $region134: #{tpu_custom_call.1} parent=107 // pred_check_branch
          %8027 = sbr.rel (%p8025) target = $region136
        $region135: #{tpu_custom_call.1} parent=107 // pred_region
          %8029 = vsyncadd %s8022, 0
          %s8030 = scalar_lea.hbm %s22, %s40
          %s8032 = sshll.u32 %s8024, 4
          %s8033 = int_to_ptr.vmem [resolvable:$true] %s8032
          %s8034 = sshll.u32 %s8030, 4
          %s8035 = int_to_ptr.hbm [resolvable:$true] %s8034
          %8037 = dma.vmem_to_hbm [thread:$0]  %s8033, 16, %s8035, %s8022
        $region136: #{tpu_custom_call.1} parent=107 // pred_fallthru
          _
      $region108: #{tpu_custom_call.1} parent=5 // pred_fallthru
        _
      %p8038 = scmp.le.s32.totalorder 2, %s35
      // Predicated region
      $region137: #{tpu_custom_call.1} parent=5 // pred_check
        %p8039 = pneg %p8038
      $region138: #{tpu_custom_call.1} parent=5 // pred_check_branch
        %8041 = sbr.rel (%p8039) target = $region140
      $region139: #{tpu_custom_call.1} parent=5 // pred_region
        %s8042 = ssub.s32 %s35, 2
        // Predicated region
        $region141: #{tpu_custom_call.1} parent=139 // pred_check
          %p8043 = pneg %p531
        $region142: #{tpu_custom_call.1} parent=139 // pred_check_branch
          %8045 = sbr.rel (%p8043) target = $region144
        $region143: #{tpu_custom_call.1} parent=139 // pred_region
          %s8046 = sand.u32 %s516, 1
          %s8047 = scalar_lea.sflag [#allocation4], %s8046
          %s8048 = sand.u32 %s516, 1
          %s8049 = scalar_lea.vmem [#allocation13], %s8048
          %8051 = dma.done %s8047, 16
        $region144: #{tpu_custom_call.1} parent=139 // pred_fallthru
          _
      $region140: #{tpu_custom_call.1} parent=5 // pred_fallthru
        _
    $region6: #{tpu_custom_call.1} parent=1 // loop_footer
      %s39 = sadd.s32 1, %s35
    $region7: #{tpu_custom_call.1} parent=1 // loop_footer_branch
      %34 = sbr.rel target = $region3
    $region8: #{tpu_custom_call.1} parent=1 // loop_exit
      _
    %8052 = vsyncpa [#allocation3], 1
    %s8053 = scalar_lea.sflag [#allocation3], 1
    %8054 = vsyncpa %s8053, 1
    %8055 = vsyncpa [#allocation6], 1
    %8056 = vsyncpa [#allocation9], 1
    %8057 = vsyncpa [#allocation12], 1
    %8058 = vsyncpa [#allocation4], 1
    %s8059 = scalar_lea.sflag [#allocation4], 1
    %8060 = vsyncpa %s8059, 1

</llo_original>
